<compile_context>
chip_gen: v7x
topology: tpu7x:2x2x1
jax: 0.10.0
libtpu: 0.0.40
codegen_flags: <defaults>
</compile_context>

<pallas_src>
import functools

import jax
import jax.numpy as jnp
from jax import lax
from jax.experimental import pallas as pl
from jax.experimental.pallas import tpu as pltpu


# --------------------------------------------------------------------------
# Fused Pallas kernel: qkv projection -> multi-head attention -> out proj
# --------------------------------------------------------------------------
def _fused_global_attention_kernel(
    x_ref, wqkv_ref, wproj_ref, bproj_ref, o_ref, *, num_heads, head_dim, scale
):
    # x_ref: (1, L, dim) bf16   wqkv_ref: (dim, 3*dim) bf16
    # wproj_ref: (dim, dim) bf16   bproj_ref: (1, dim) f32
    # o_ref: (1, L, dim) f32
    dim = num_heads * head_dim
    x = x_ref[0]  # (L, dim) bf16

    # Fused q/k/v projection: columns [0:dim]=q, [dim:2dim]=k, [2dim:3dim]=v
    qkv = jnp.dot(x, wqkv_ref[...], preferred_element_type=jnp.float32)  # (L, 3*dim) f32

    head_outs = []
    for h in range(num_heads):  # static unrolled loop over heads
        c0 = h * head_dim
        qh = (qkv[:, c0:c0 + head_dim] * scale).astype(jnp.bfloat16)            # (L, hd)
        kh = qkv[:, dim + c0:dim + c0 + head_dim].astype(jnp.bfloat16)          # (L, hd)
        vh = qkv[:, 2 * dim + c0:2 * dim + c0 + head_dim].astype(jnp.bfloat16)  # (L, hd)

        # scores = (q * scale) @ k^T  -> (L, L), f32 accumulation
        s = lax.dot_general(
            qh, kh, (((1,), (1,)), ((), ())), preferred_element_type=jnp.float32
        )
        # numerically-stable softmax (f32); divide deferred past the PV matmul
        m = jnp.max(s, axis=-1, keepdims=True)
        p = jnp.exp(s - m)
        denom = jnp.sum(p, axis=-1, keepdims=True)

        oh = jnp.dot(p.astype(jnp.bfloat16), vh, preferred_element_type=jnp.float32)
        oh = oh * pl.reciprocal(denom, approx=True)  # (L, hd) f32
        head_outs.append(oh)

    # heads-major concatenation matches (attn @ v).transpose(1, 2).reshape(...)
    o = jnp.concatenate(head_outs, axis=1)  # (L, dim) f32

    out = (
        jnp.dot(o.astype(jnp.bfloat16), wproj_ref[...], preferred_element_type=jnp.float32)
        + bproj_ref[...]
    )
    o_ref[0] = out


# --------------------------------------------------------------------------
# GlobalAttention forward (sr_ratio == 1), single fused pallas_call
# --------------------------------------------------------------------------
def global_attention_forward(x, H, W, w_q, w_kv, w_proj, b_proj, num_heads):
    del W  # unused on the sr_ratio == 1 path (matches the reference)
    B, N, C, D = x.shape  # the reference reshapes force C == dim and H == dim
    dim = D
    head_dim = C // num_heads
    scale = head_dim ** (-0.5)
    L = N * C

    # bf16 operands (halved HBM traffic, bf16 MXU); bias stays f32.
    x_bld = x.reshape(B, L, dim).astype(jnp.bfloat16)
    w_qkv = jnp.concatenate([w_q, w_kv], axis=1).astype(jnp.bfloat16)  # (dim, 3*dim)
    w_p = w_proj.astype(jnp.bfloat16)
    b_p = b_proj.reshape(1, dim).astype(jnp.float32)

    kern = functools.partial(
        _fused_global_attention_kernel,
        num_heads=num_heads,
        head_dim=head_dim,
        scale=scale,
    )

    out = pl.pallas_call(
        kern,
        out_shape=jax.ShapeDtypeStruct((B, L, dim), jnp.float32),
        grid=(B,),
        in_specs=[
            pl.BlockSpec((1, L, dim), lambda b: (b, 0, 0)),       # x (per-batch slab)
            pl.BlockSpec((dim, 3 * dim), lambda b: (0, 0)),       # fused qkv weight
            pl.BlockSpec((dim, dim), lambda b: (0, 0)),           # proj weight
            pl.BlockSpec((1, dim), lambda b: (0, 0)),             # proj bias
        ],
        out_specs=pl.BlockSpec((1, L, dim), lambda b: (b, 0, 0)),
        compiler_params=pltpu.CompilerParams(
            dimension_semantics=("parallel",),        # megacore / v7x 2-TC sharding
            vmem_limit_bytes=32 * 1024 * 1024,        # valid budget on v5e/v6e/v7x
        ),
    )(x_bld, w_qkv, w_p, b_p)

    return out.reshape(B, N, C, dim)


# --------------------------------------------------------------------------
# Pure-JAX f32 reference (mirrors the PyTorch forward) for validation
# --------------------------------------------------------------------------
def reference_forward(x, H, w_q, w_kv, w_proj, b_proj, num_heads):
    B, N, C, dim = x.shape
    head_dim = C // num_heads
    scale = head_dim ** (-0.5)
    L = N * C
    q = (x @ w_q).reshape(B, L, num_heads, head_dim).transpose(0, 2, 1, 3)
    kv = (x @ w_kv).reshape(B, L, 2, num_heads, head_dim).transpose(2, 0, 3, 1, 4)
    k, v = kv[0], kv[1]
    attn = jnp.einsum("bhqd,bhkd->bhqk", q, k) * scale
    attn = jax.nn.softmax(attn, axis=-1)
    o = jnp.einsum("bhqk,bhkd->bhqd", attn, v)
    o = o.transpose(0, 2, 1, 3).reshape(B, N, C, H)
    return o @ w_proj + b_proj


# --------------------------------------------------------------------------
if __name__ == "__main__":
    key = jax.random.PRNGKey(0)
    B, N, dim, num_heads = 2, 8, 32, 8
    C = dim            # forced by the reference reshapes
    H = dim            # reshape(B, N, C, H) requires H == dim
    W = 16             # unused on the sr_ratio == 1 path

    k1, k2, k3, k4, k5 = jax.random.split(key, 5)
    x = jax.random.normal(k1, (B, N, C, dim), jnp.float32)
    w_q = jax.random.normal(k2, (dim, dim), jnp.float32) * 0.05
    w_kv = jax.random.normal(k3, (dim, 2 * dim), jnp.float32) * 0.05
    w_proj = jax.random.normal(k4, (dim, dim), jnp.float32) * 0.05
    b_proj = jax.random.normal(k5, (dim,), jnp.float32) * 0.05

    out = global_attention_forward(x, H, W, w_q, w_kv, w_proj, b_proj, num_heads)
    out = jax.block_until_ready(out)

    ref = reference_forward(x, H, w_q, w_kv, w_proj, b_proj, num_heads)
    assert out.shape == (B, N, C, dim), out.shape
    # bf16 matmuls (f32 accumulation) + approx reciprocal vs f32 reference.
    assert jnp.allclose(out, ref, rtol=2e-2, atol=2e-2), (
        "mismatch vs reference: max abs diff = "
        f"{float(jnp.max(jnp.abs(out - ref)))}"
    )

    print("KERNEL_OK")
</pallas_src>

<mosaic_0001>
module attributes {stable_mosaic.version = 11 : i64} {
  func.func @_fused_global_attention_kernel(%arg0: i32, %arg1: memref<1x256x32xbf16, #tpu.memory_space<vmem>>, %arg2: memref<32x96xbf16, #tpu.memory_space<vmem>>, %arg3: memref<32x32xbf16, #tpu.memory_space<vmem>>, %arg4: memref<1x32xf32, #tpu.memory_space<vmem>>, %arg5: memref<1x256x32xf32, #tpu.memory_space<vmem>>) attributes {dimension_semantics = [#tpu.dimension_semantics<parallel>], iteration_bounds = array<i64: 2>, scalar_prefetch = 0 : i64, scratch_operands = 0 : i64, tpu.core_type = #tpu.core_type<tc>, window_params = [{transform_indices = @transform_0, window_bounds = array<i64: 1, 256, 32>}, {pipeline_mode = #tpu.pipeline_mode<synchronous>, transform_indices = @transform_1, window_bounds = array<i64: 32, 96>}, {pipeline_mode = #tpu.pipeline_mode<synchronous>, transform_indices = @transform_2, window_bounds = array<i64: 32, 32>}, {pipeline_mode = #tpu.pipeline_mode<synchronous>, transform_indices = @transform_3, window_bounds = array<i64: 1, 32>}, {transform_indices = @transform_4, window_bounds = array<i64: 1, 256, 32>}]} {
    %c0 = arith.constant 0 : index
    %c0_0 = arith.constant 0 : index
    %c0_1 = arith.constant 0 : index
    %0 = vector.load %arg1[%c0, %c0_0, %c0_1] : memref<1x256x32xbf16, #tpu.memory_space<vmem>>, vector<1x256x32xbf16>
    %1 = vector.shape_cast %0 : vector<1x256x32xbf16> to vector<256x32xbf16>
    %c0_2 = arith.constant 0 : index
    %c0_3 = arith.constant 0 : index
    %2 = vector.load %arg2[%c0_2, %c0_3] : memref<32x96xbf16, #tpu.memory_space<vmem>>, vector<32x96xbf16>
    %cst = arith.constant dense<0.000000e+00> : vector<256x96xf32>
    %3 = tpu.matmul %1, %2, %cst {dimension_numbers = #tpu.dot_dimension_numbers<[1], [0], [0], [1], [0, 0, 1, 1], [], []>} : vector<256x32xbf16>, vector<32x96xbf16>, vector<256x96xf32> -> vector<256x96xf32>
    %4 = vector.extract_strided_slice %3 {offsets = [0, 0], sizes = [256, 4], strides = [1, 1]} : vector<256x96xf32> to vector<256x4xf32>
    %cst_4 = arith.constant 5.000000e-01 : f32
    %5 = vector.broadcast %cst_4 : f32 to vector<256x4xf32>
    %6 = arith.mulf %4, %5 : vector<256x4xf32>
    %7 = arith.truncf %6 : vector<256x4xf32> to vector<256x4xbf16>
    %8 = vector.extract_strided_slice %3 {offsets = [0, 32], sizes = [256, 4], strides = [1, 1]} : vector<256x96xf32> to vector<256x4xf32>
    %9 = arith.truncf %8 : vector<256x4xf32> to vector<256x4xbf16>
    %10 = vector.extract_strided_slice %3 {offsets = [0, 64], sizes = [256, 4], strides = [1, 1]} : vector<256x96xf32> to vector<256x4xf32>
    %11 = arith.truncf %10 : vector<256x4xf32> to vector<256x4xbf16>
    %cst_5 = arith.constant dense<0.000000e+00> : vector<256x256xf32>
    %12 = tpu.matmul %7, %9, %cst_5 {dimension_numbers = #tpu.dot_dimension_numbers<[1], [1], [0], [0], [0, 0, 1, 0], [], []>} : vector<256x4xbf16>, vector<256x4xbf16>, vector<256x256xf32> -> vector<256x256xf32>
    %cst_6 = arith.constant dense<0xFF800000> : vector<256xf32>
    %13 = vector.multi_reduction <maximumf>, %12, %cst_6 [1] : vector<256x256xf32> to vector<256xf32>
    %14 = vector.shape_cast %13 : vector<256xf32> to vector<256x1xf32>
    %15 = vector.broadcast %14 : vector<256x1xf32> to vector<256x256xf32>
    %16 = arith.subf %12, %15 : vector<256x256xf32>
    %17 = math.exp %16 : vector<256x256xf32>
    %cst_7 = arith.constant dense<0.000000e+00> : vector<256xf32>
    %18 = vector.multi_reduction <add>, %17, %cst_7 [1] : vector<256x256xf32> to vector<256xf32>
    %19 = vector.shape_cast %18 : vector<256xf32> to vector<256x1xf32>
    %20 = arith.truncf %17 : vector<256x256xf32> to vector<256x256xbf16>
    %cst_8 = arith.constant dense<0.000000e+00> : vector<256x4xf32>
    %21 = tpu.matmul %20, %11, %cst_8 {dimension_numbers = #tpu.dot_dimension_numbers<[1], [0], [0], [1], [0, 0, 1, 1], [], []>} : vector<256x256xbf16>, vector<256x4xbf16>, vector<256x4xf32> -> vector<256x4xf32>
    %22 = tpu.reciprocal %19 {approx = true} : vector<256x1xf32> -> vector<256x1xf32>
    %23 = vector.broadcast %22 : vector<256x1xf32> to vector<256x4xf32>
    %24 = arith.mulf %21, %23 : vector<256x4xf32>
    %25 = vector.extract_strided_slice %3 {offsets = [0, 4], sizes = [256, 4], strides = [1, 1]} : vector<256x96xf32> to vector<256x4xf32>
    %cst_9 = arith.constant 5.000000e-01 : f32
    %26 = vector.broadcast %cst_9 : f32 to vector<256x4xf32>
    %27 = arith.mulf %25, %26 : vector<256x4xf32>
    %28 = arith.truncf %27 : vector<256x4xf32> to vector<256x4xbf16>
    %29 = vector.extract_strided_slice %3 {offsets = [0, 36], sizes = [256, 4], strides = [1, 1]} : vector<256x96xf32> to vector<256x4xf32>
    %30 = arith.truncf %29 : vector<256x4xf32> to vector<256x4xbf16>
    %31 = vector.extract_strided_slice %3 {offsets = [0, 68], sizes = [256, 4], strides = [1, 1]} : vector<256x96xf32> to vector<256x4xf32>
    %32 = arith.truncf %31 : vector<256x4xf32> to vector<256x4xbf16>
    %cst_10 = arith.constant dense<0.000000e+00> : vector<256x256xf32>
    %33 = tpu.matmul %28, %30, %cst_10 {dimension_numbers = #tpu.dot_dimension_numbers<[1], [1], [0], [0], [0, 0, 1, 0], [], []>} : vector<256x4xbf16>, vector<256x4xbf16>, vector<256x256xf32> -> vector<256x256xf32>
    %cst_11 = arith.constant dense<0xFF800000> : vector<256xf32>
    %34 = vector.multi_reduction <maximumf>, %33, %cst_11 [1] : vector<256x256xf32> to vector<256xf32>
    %35 = vector.shape_cast %34 : vector<256xf32> to vector<256x1xf32>
    %36 = vector.broadcast %35 : vector<256x1xf32> to vector<256x256xf32>
    %37 = arith.subf %33, %36 : vector<256x256xf32>
    %38 = math.exp %37 : vector<256x256xf32>
    %cst_12 = arith.constant dense<0.000000e+00> : vector<256xf32>
    %39 = vector.multi_reduction <add>, %38, %cst_12 [1] : vector<256x256xf32> to vector<256xf32>
    %40 = vector.shape_cast %39 : vector<256xf32> to vector<256x1xf32>
    %41 = arith.truncf %38 : vector<256x256xf32> to vector<256x256xbf16>
    %cst_13 = arith.constant dense<0.000000e+00> : vector<256x4xf32>
    %42 = tpu.matmul %41, %32, %cst_13 {dimension_numbers = #tpu.dot_dimension_numbers<[1], [0], [0], [1], [0, 0, 1, 1], [], []>} : vector<256x256xbf16>, vector<256x4xbf16>, vector<256x4xf32> -> vector<256x4xf32>
    %43 = tpu.reciprocal %40 {approx = true} : vector<256x1xf32> -> vector<256x1xf32>
    %44 = vector.broadcast %43 : vector<256x1xf32> to vector<256x4xf32>
    %45 = arith.mulf %42, %44 : vector<256x4xf32>
    %46 = vector.extract_strided_slice %3 {offsets = [0, 8], sizes = [256, 4], strides = [1, 1]} : vector<256x96xf32> to vector<256x4xf32>
    %cst_14 = arith.constant 5.000000e-01 : f32
    %47 = vector.broadcast %cst_14 : f32 to vector<256x4xf32>
    %48 = arith.mulf %46, %47 : vector<256x4xf32>
    %49 = arith.truncf %48 : vector<256x4xf32> to vector<256x4xbf16>
    %50 = vector.extract_strided_slice %3 {offsets = [0, 40], sizes = [256, 4], strides = [1, 1]} : vector<256x96xf32> to vector<256x4xf32>
    %51 = arith.truncf %50 : vector<256x4xf32> to vector<256x4xbf16>
    %52 = vector.extract_strided_slice %3 {offsets = [0, 72], sizes = [256, 4], strides = [1, 1]} : vector<256x96xf32> to vector<256x4xf32>
    %53 = arith.truncf %52 : vector<256x4xf32> to vector<256x4xbf16>
    %cst_15 = arith.constant dense<0.000000e+00> : vector<256x256xf32>
    %54 = tpu.matmul %49, %51, %cst_15 {dimension_numbers = #tpu.dot_dimension_numbers<[1], [1], [0], [0], [0, 0, 1, 0], [], []>} : vector<256x4xbf16>, vector<256x4xbf16>, vector<256x256xf32> -> vector<256x256xf32>
    %cst_16 = arith.constant dense<0xFF800000> : vector<256xf32>
    %55 = vector.multi_reduction <maximumf>, %54, %cst_16 [1] : vector<256x256xf32> to vector<256xf32>
    %56 = vector.shape_cast %55 : vector<256xf32> to vector<256x1xf32>
    %57 = vector.broadcast %56 : vector<256x1xf32> to vector<256x256xf32>
    %58 = arith.subf %54, %57 : vector<256x256xf32>
    %59 = math.exp %58 : vector<256x256xf32>
    %cst_17 = arith.constant dense<0.000000e+00> : vector<256xf32>
    %60 = vector.multi_reduction <add>, %59, %cst_17 [1] : vector<256x256xf32> to vector<256xf32>
    %61 = vector.shape_cast %60 : vector<256xf32> to vector<256x1xf32>
    %62 = arith.truncf %59 : vector<256x256xf32> to vector<256x256xbf16>
    %cst_18 = arith.constant dense<0.000000e+00> : vector<256x4xf32>
    %63 = tpu.matmul %62, %53, %cst_18 {dimension_numbers = #tpu.dot_dimension_numbers<[1], [0], [0], [1], [0, 0, 1, 1], [], []>} : vector<256x256xbf16>, vector<256x4xbf16>, vector<256x4xf32> -> vector<256x4xf32>
    %64 = tpu.reciprocal %61 {approx = true} : vector<256x1xf32> -> vector<256x1xf32>
    %65 = vector.broadcast %64 : vector<256x1xf32> to vector<256x4xf32>
    %66 = arith.mulf %63, %65 : vector<256x4xf32>
    %67 = vector.extract_strided_slice %3 {offsets = [0, 12], sizes = [256, 4], strides = [1, 1]} : vector<256x96xf32> to vector<256x4xf32>
    %cst_19 = arith.constant 5.000000e-01 : f32
    %68 = vector.broadcast %cst_19 : f32 to vector<256x4xf32>
    %69 = arith.mulf %67, %68 : vector<256x4xf32>
    %70 = arith.truncf %69 : vector<256x4xf32> to vector<256x4xbf16>
    %71 = vector.extract_strided_slice %3 {offsets = [0, 44], sizes = [256, 4], strides = [1, 1]} : vector<256x96xf32> to vector<256x4xf32>
    %72 = arith.truncf %71 : vector<256x4xf32> to vector<256x4xbf16>
    %73 = vector.extract_strided_slice %3 {offsets = [0, 76], sizes = [256, 4], strides = [1, 1]} : vector<256x96xf32> to vector<256x4xf32>
    %74 = arith.truncf %73 : vector<256x4xf32> to vector<256x4xbf16>
    %cst_20 = arith.constant dense<0.000000e+00> : vector<256x256xf32>
    %75 = tpu.matmul %70, %72, %cst_20 {dimension_numbers = #tpu.dot_dimension_numbers<[1], [1], [0], [0], [0, 0, 1, 0], [], []>} : vector<256x4xbf16>, vector<256x4xbf16>, vector<256x256xf32> -> vector<256x256xf32>
    %cst_21 = arith.constant dense<0xFF800000> : vector<256xf32>
    %76 = vector.multi_reduction <maximumf>, %75, %cst_21 [1] : vector<256x256xf32> to vector<256xf32>
    %77 = vector.shape_cast %76 : vector<256xf32> to vector<256x1xf32>
    %78 = vector.broadcast %77 : vector<256x1xf32> to vector<256x256xf32>
    %79 = arith.subf %75, %78 : vector<256x256xf32>
    %80 = math.exp %79 : vector<256x256xf32>
    %cst_22 = arith.constant dense<0.000000e+00> : vector<256xf32>
    %81 = vector.multi_reduction <add>, %80, %cst_22 [1] : vector<256x256xf32> to vector<256xf32>
    %82 = vector.shape_cast %81 : vector<256xf32> to vector<256x1xf32>
    %83 = arith.truncf %80 : vector<256x256xf32> to vector<256x256xbf16>
    %cst_23 = arith.constant dense<0.000000e+00> : vector<256x4xf32>
    %84 = tpu.matmul %83, %74, %cst_23 {dimension_numbers = #tpu.dot_dimension_numbers<[1], [0], [0], [1], [0, 0, 1, 1], [], []>} : vector<256x256xbf16>, vector<256x4xbf16>, vector<256x4xf32> -> vector<256x4xf32>
    %85 = tpu.reciprocal %82 {approx = true} : vector<256x1xf32> -> vector<256x1xf32>
    %86 = vector.broadcast %85 : vector<256x1xf32> to vector<256x4xf32>
    %87 = arith.mulf %84, %86 : vector<256x4xf32>
    %88 = vector.extract_strided_slice %3 {offsets = [0, 16], sizes = [256, 4], strides = [1, 1]} : vector<256x96xf32> to vector<256x4xf32>
    %cst_24 = arith.constant 5.000000e-01 : f32
    %89 = vector.broadcast %cst_24 : f32 to vector<256x4xf32>
    %90 = arith.mulf %88, %89 : vector<256x4xf32>
    %91 = arith.truncf %90 : vector<256x4xf32> to vector<256x4xbf16>
    %92 = vector.extract_strided_slice %3 {offsets = [0, 48], sizes = [256, 4], strides = [1, 1]} : vector<256x96xf32> to vector<256x4xf32>
    %93 = arith.truncf %92 : vector<256x4xf32> to vector<256x4xbf16>
    %94 = vector.extract_strided_slice %3 {offsets = [0, 80], sizes = [256, 4], strides = [1, 1]} : vector<256x96xf32> to vector<256x4xf32>
    %95 = arith.truncf %94 : vector<256x4xf32> to vector<256x4xbf16>
    %cst_25 = arith.constant dense<0.000000e+00> : vector<256x256xf32>
    %96 = tpu.matmul %91, %93, %cst_25 {dimension_numbers = #tpu.dot_dimension_numbers<[1], [1], [0], [0], [0, 0, 1, 0], [], []>} : vector<256x4xbf16>, vector<256x4xbf16>, vector<256x256xf32> -> vector<256x256xf32>
    %cst_26 = arith.constant dense<0xFF800000> : vector<256xf32>
    %97 = vector.multi_reduction <maximumf>, %96, %cst_26 [1] : vector<256x256xf32> to vector<256xf32>
    %98 = vector.shape_cast %97 : vector<256xf32> to vector<256x1xf32>
    %99 = vector.broadcast %98 : vector<256x1xf32> to vector<256x256xf32>
    %100 = arith.subf %96, %99 : vector<256x256xf32>
    %101 = math.exp %100 : vector<256x256xf32>
    %cst_27 = arith.constant dense<0.000000e+00> : vector<256xf32>
    %102 = vector.multi_reduction <add>, %101, %cst_27 [1] : vector<256x256xf32> to vector<256xf32>
    %103 = vector.shape_cast %102 : vector<256xf32> to vector<256x1xf32>
    %104 = arith.truncf %101 : vector<256x256xf32> to vector<256x256xbf16>
    %cst_28 = arith.constant dense<0.000000e+00> : vector<256x4xf32>
    %105 = tpu.matmul %104, %95, %cst_28 {dimension_numbers = #tpu.dot_dimension_numbers<[1], [0], [0], [1], [0, 0, 1, 1], [], []>} : vector<256x256xbf16>, vector<256x4xbf16>, vector<256x4xf32> -> vector<256x4xf32>
    %106 = tpu.reciprocal %103 {approx = true} : vector<256x1xf32> -> vector<256x1xf32>
    %107 = vector.broadcast %106 : vector<256x1xf32> to vector<256x4xf32>
    %108 = arith.mulf %105, %107 : vector<256x4xf32>
    %109 = vector.extract_strided_slice %3 {offsets = [0, 20], sizes = [256, 4], strides = [1, 1]} : vector<256x96xf32> to vector<256x4xf32>
    %cst_29 = arith.constant 5.000000e-01 : f32
    %110 = vector.broadcast %cst_29 : f32 to vector<256x4xf32>
    %111 = arith.mulf %109, %110 : vector<256x4xf32>
    %112 = arith.truncf %111 : vector<256x4xf32> to vector<256x4xbf16>
    %113 = vector.extract_strided_slice %3 {offsets = [0, 52], sizes = [256, 4], strides = [1, 1]} : vector<256x96xf32> to vector<256x4xf32>
    %114 = arith.truncf %113 : vector<256x4xf32> to vector<256x4xbf16>
    %115 = vector.extract_strided_slice %3 {offsets = [0, 84], sizes = [256, 4], strides = [1, 1]} : vector<256x96xf32> to vector<256x4xf32>
    %116 = arith.truncf %115 : vector<256x4xf32> to vector<256x4xbf16>
    %cst_30 = arith.constant dense<0.000000e+00> : vector<256x256xf32>
    %117 = tpu.matmul %112, %114, %cst_30 {dimension_numbers = #tpu.dot_dimension_numbers<[1], [1], [0], [0], [0, 0, 1, 0], [], []>} : vector<256x4xbf16>, vector<256x4xbf16>, vector<256x256xf32> -> vector<256x256xf32>
    %cst_31 = arith.constant dense<0xFF800000> : vector<256xf32>
    %118 = vector.multi_reduction <maximumf>, %117, %cst_31 [1] : vector<256x256xf32> to vector<256xf32>
    %119 = vector.shape_cast %118 : vector<256xf32> to vector<256x1xf32>
    %120 = vector.broadcast %119 : vector<256x1xf32> to vector<256x256xf32>
    %121 = arith.subf %117, %120 : vector<256x256xf32>
    %122 = math.exp %121 : vector<256x256xf32>
    %cst_32 = arith.constant dense<0.000000e+00> : vector<256xf32>
    %123 = vector.multi_reduction <add>, %122, %cst_32 [1] : vector<256x256xf32> to vector<256xf32>
    %124 = vector.shape_cast %123 : vector<256xf32> to vector<256x1xf32>
    %125 = arith.truncf %122 : vector<256x256xf32> to vector<256x256xbf16>
    %cst_33 = arith.constant dense<0.000000e+00> : vector<256x4xf32>
    %126 = tpu.matmul %125, %116, %cst_33 {dimension_numbers = #tpu.dot_dimension_numbers<[1], [0], [0], [1], [0, 0, 1, 1], [], []>} : vector<256x256xbf16>, vector<256x4xbf16>, vector<256x4xf32> -> vector<256x4xf32>
    %127 = tpu.reciprocal %124 {approx = true} : vector<256x1xf32> -> vector<256x1xf32>
    %128 = vector.broadcast %127 : vector<256x1xf32> to vector<256x4xf32>
    %129 = arith.mulf %126, %128 : vector<256x4xf32>
    %130 = vector.extract_strided_slice %3 {offsets = [0, 24], sizes = [256, 4], strides = [1, 1]} : vector<256x96xf32> to vector<256x4xf32>
    %cst_34 = arith.constant 5.000000e-01 : f32
    %131 = vector.broadcast %cst_34 : f32 to vector<256x4xf32>
    %132 = arith.mulf %130, %131 : vector<256x4xf32>
    %133 = arith.truncf %132 : vector<256x4xf32> to vector<256x4xbf16>
    %134 = vector.extract_strided_slice %3 {offsets = [0, 56], sizes = [256, 4], strides = [1, 1]} : vector<256x96xf32> to vector<256x4xf32>
    %135 = arith.truncf %134 : vector<256x4xf32> to vector<256x4xbf16>
    %136 = vector.extract_strided_slice %3 {offsets = [0, 88], sizes = [256, 4], strides = [1, 1]} : vector<256x96xf32> to vector<256x4xf32>
    %137 = arith.truncf %136 : vector<256x4xf32> to vector<256x4xbf16>
    %cst_35 = arith.constant dense<0.000000e+00> : vector<256x256xf32>
    %138 = tpu.matmul %133, %135, %cst_35 {dimension_numbers = #tpu.dot_dimension_numbers<[1], [1], [0], [0], [0, 0, 1, 0], [], []>} : vector<256x4xbf16>, vector<256x4xbf16>, vector<256x256xf32> -> vector<256x256xf32>
    %cst_36 = arith.constant dense<0xFF800000> : vector<256xf32>
    %139 = vector.multi_reduction <maximumf>, %138, %cst_36 [1] : vector<256x256xf32> to vector<256xf32>
    %140 = vector.shape_cast %139 : vector<256xf32> to vector<256x1xf32>
    %141 = vector.broadcast %140 : vector<256x1xf32> to vector<256x256xf32>
    %142 = arith.subf %138, %141 : vector<256x256xf32>
    %143 = math.exp %142 : vector<256x256xf32>
    %cst_37 = arith.constant dense<0.000000e+00> : vector<256xf32>
    %144 = vector.multi_reduction <add>, %143, %cst_37 [1] : vector<256x256xf32> to vector<256xf32>
    %145 = vector.shape_cast %144 : vector<256xf32> to vector<256x1xf32>
    %146 = arith.truncf %143 : vector<256x256xf32> to vector<256x256xbf16>
    %cst_38 = arith.constant dense<0.000000e+00> : vector<256x4xf32>
    %147 = tpu.matmul %146, %137, %cst_38 {dimension_numbers = #tpu.dot_dimension_numbers<[1], [0], [0], [1], [0, 0, 1, 1], [], []>} : vector<256x256xbf16>, vector<256x4xbf16>, vector<256x4xf32> -> vector<256x4xf32>
    %148 = tpu.reciprocal %145 {approx = true} : vector<256x1xf32> -> vector<256x1xf32>
    %149 = vector.broadcast %148 : vector<256x1xf32> to vector<256x4xf32>
    %150 = arith.mulf %147, %149 : vector<256x4xf32>
    %151 = vector.extract_strided_slice %3 {offsets = [0, 28], sizes = [256, 4], strides = [1, 1]} : vector<256x96xf32> to vector<256x4xf32>
    %cst_39 = arith.constant 5.000000e-01 : f32
    %152 = vector.broadcast %cst_39 : f32 to vector<256x4xf32>
    %153 = arith.mulf %151, %152 : vector<256x4xf32>
    %154 = arith.truncf %153 : vector<256x4xf32> to vector<256x4xbf16>
    %155 = vector.extract_strided_slice %3 {offsets = [0, 60], sizes = [256, 4], strides = [1, 1]} : vector<256x96xf32> to vector<256x4xf32>
    %156 = arith.truncf %155 : vector<256x4xf32> to vector<256x4xbf16>
    %157 = vector.extract_strided_slice %3 {offsets = [0, 92], sizes = [256, 4], strides = [1, 1]} : vector<256x96xf32> to vector<256x4xf32>
    %158 = arith.truncf %157 : vector<256x4xf32> to vector<256x4xbf16>
    %cst_40 = arith.constant dense<0.000000e+00> : vector<256x256xf32>
    %159 = tpu.matmul %154, %156, %cst_40 {dimension_numbers = #tpu.dot_dimension_numbers<[1], [1], [0], [0], [0, 0, 1, 0], [], []>} : vector<256x4xbf16>, vector<256x4xbf16>, vector<256x256xf32> -> vector<256x256xf32>
    %cst_41 = arith.constant dense<0xFF800000> : vector<256xf32>
    %160 = vector.multi_reduction <maximumf>, %159, %cst_41 [1] : vector<256x256xf32> to vector<256xf32>
    %161 = vector.shape_cast %160 : vector<256xf32> to vector<256x1xf32>
    %162 = vector.broadcast %161 : vector<256x1xf32> to vector<256x256xf32>
    %163 = arith.subf %159, %162 : vector<256x256xf32>
    %164 = math.exp %163 : vector<256x256xf32>
    %cst_42 = arith.constant dense<0.000000e+00> : vector<256xf32>
    %165 = vector.multi_reduction <add>, %164, %cst_42 [1] : vector<256x256xf32> to vector<256xf32>
    %166 = vector.shape_cast %165 : vector<256xf32> to vector<256x1xf32>
    %167 = arith.truncf %164 : vector<256x256xf32> to vector<256x256xbf16>
    %cst_43 = arith.constant dense<0.000000e+00> : vector<256x4xf32>
    %168 = tpu.matmul %167, %158, %cst_43 {dimension_numbers = #tpu.dot_dimension_numbers<[1], [0], [0], [1], [0, 0, 1, 1], [], []>} : vector<256x256xbf16>, vector<256x4xbf16>, vector<256x4xf32> -> vector<256x4xf32>
    %169 = tpu.reciprocal %166 {approx = true} : vector<256x1xf32> -> vector<256x1xf32>
    %170 = vector.broadcast %169 : vector<256x1xf32> to vector<256x4xf32>
    %171 = arith.mulf %168, %170 : vector<256x4xf32>
    %172 = tpu.concatenate %24, %45, %66, %87, %108, %129, %150, %171 in 1 : vector<256x4xf32>, vector<256x4xf32>, vector<256x4xf32>, vector<256x4xf32>, vector<256x4xf32>, vector<256x4xf32>, vector<256x4xf32>, vector<256x4xf32> -> vector<256x32xf32>
    %173 = arith.truncf %172 : vector<256x32xf32> to vector<256x32xbf16>
    %c0_44 = arith.constant 0 : index
    %c0_45 = arith.constant 0 : index
    %174 = vector.load %arg3[%c0_44, %c0_45] : memref<32x32xbf16, #tpu.memory_space<vmem>>, vector<32x32xbf16>
    %cst_46 = arith.constant dense<0.000000e+00> : vector<256x32xf32>
    %175 = tpu.matmul %173, %174, %cst_46 {dimension_numbers = #tpu.dot_dimension_numbers<[1], [0], [0], [1], [0, 0, 1, 1], [], []>} : vector<256x32xbf16>, vector<32x32xbf16>, vector<256x32xf32> -> vector<256x32xf32>
    %c0_47 = arith.constant 0 : index
    %c0_48 = arith.constant 0 : index
    %176 = vector.load %arg4[%c0_47, %c0_48] : memref<1x32xf32, #tpu.memory_space<vmem>>, vector<1x32xf32>
    %177 = vector.broadcast %176 : vector<1x32xf32> to vector<256x32xf32>
    %178 = arith.addf %175, %177 : vector<256x32xf32>
    %c0_49 = arith.constant 0 : index
    %c0_50 = arith.constant 0 : index
    %c0_51 = arith.constant 0 : index
    %179 = vector.load %arg5[%c0_49, %c0_50, %c0_51] : memref<1x256x32xf32, #tpu.memory_space<vmem>>, vector<1x256x32xf32>
    %180 = vector.shape_cast %179 : vector<1x256x32xf32> to vector<256x32xf32>
    %181 = vector.shape_cast %178 : vector<256x32xf32> to vector<1x256x32xf32>
    tpu.vector_store %arg5[%c0_49, %c0_50, %c0_51], %181 {strides = array<i32>} : memref<1x256x32xf32, #tpu.memory_space<vmem>>, vector<1x256x32xf32>,
    return
  }
  func.func @transform_0(%arg0: i32) -> (i32, i32, i32) {
    %c0_i32 = arith.constant 0 : i32
    %c0_i32_0 = arith.constant 0 : i32
    %c0_i32_1 = arith.constant 0 : i32
    return %arg0, %c0_i32, %c0_i32_0 : i32, i32, i32
  }
  func.func @transform_1(%arg0: i32) -> (i32, i32) {
    %c0_i32 = arith.constant 0 : i32
    %c0_i32_0 = arith.constant 0 : i32
    %c0_i32_1 = arith.constant 0 : i32
    return %c0_i32, %c0_i32_0 : i32, i32
  }
  func.func @transform_2(%arg0: i32) -> (i32, i32) {
    %c0_i32 = arith.constant 0 : i32
    %c0_i32_0 = arith.constant 0 : i32
    %c0_i32_1 = arith.constant 0 : i32
    return %c0_i32, %c0_i32_0 : i32, i32
  }
  func.func @transform_3(%arg0: i32) -> (i32, i32) {
    %c0_i32 = arith.constant 0 : i32
    %c0_i32_0 = arith.constant 0 : i32
    %c0_i32_1 = arith.constant 0 : i32
    return %c0_i32, %c0_i32_0 : i32, i32
  }
  func.func @transform_4(%arg0: i32) -> (i32, i32, i32) {
    %c0_i32 = arith.constant 0 : i32
    %c0_i32_0 = arith.constant 0 : i32
    %c0_i32_1 = arith.constant 0 : i32
    return %arg0, %c0_i32, %c0_i32_0 : i32, i32, i32
  }
}

</mosaic_0001>

<llo_original>
// kernel: tpu_custom_call.1
$region0: #{tpu_custom_call.1}
  #allocation0 [shape = 'u32[]', space=smem, size = 0x4, offset = 0x4, fixed_abs, tag = 'smem constant byte address 0x4 - core index']
  #allocation1 [shape = 'u32[144,128]{1,0:T(1,128)}', space=vmem, size = 0x12000, scoped, tag = 'internal scratch']
  %s0 = inlined_call_operand.vmem [shape: bf16[2,256,32], index: 0, kind: input, shape index: {}]
  %s1 = inlined_call_operand.vmem [shape: bf16[32,96], index: 1, kind: input, shape index: {}]
  %s2 = inlined_call_operand.vmem [shape: bf16[32,32], index: 2, kind: input, shape index: {}]
  %s3 = inlined_call_operand.vmem [shape: f32[1,32], index: 3, kind: input, shape index: {}]
  %s4 = inlined_call_operand.vmem [shape: f32[2,256,32], index: 4, kind: output, shape index: {}]
  %s5 = sld [smem:[#allocation0]]
  $region49: #{tpu_custom_call.1} parent=0
    _
  %s7 = ssub.s32 1, %s5
  %s8 = scalar_select 0, %s7, %s5
  loop: start=0, step=1, limit=4
  $region2: #{tpu_custom_call.1} parent=0 // loop_pre_header
    _
  $region3: #{tpu_custom_call.1} parent=0 // loop_header
    %s10 = sphi 0, %s14
    %p11 = scmp.ge.s32.totalorder %s10, 4
    %s20 = sphi 0, %s22
    %s23 = sphi 0, %s20
    %s24 = sphi 0, %s23
    %s40 = sphi 0, %s24
    %s44 = sphi 0, %s44
    %s46 = sphi 0, %s44
    %s47 = sphi 0, %s46
    %s61 = sphi 0, %s47
    %s65 = sphi 0, %s65
    %s67 = sphi 0, %s65
    %s68 = sphi 0, %s67
    %s82 = sphi 0, %s68
    %s86 = sphi 0, %s86
    %s88 = sphi 0, %s86
    %s89 = sphi 0, %s88
    %s103 = sphi 0, %s89
    %s109 = sphi 0, %s111
    %s112 = sphi 0, %s109
    %s113 = sphi 0, %s112
    %s129 = sphi 0, %s113
  $region4: #{tpu_custom_call.1} parent=0 // loop_header_branch
    %13 = sbr.rel (%p11) target = $region8
  $region5: #{tpu_custom_call.1} parent=0 // loop_body
    %s15 = ssub.s32 %s10, 1
    %s16 = ssub.s32 %s10, 2
    %s17 = sadd.s32 %s10, 1
    %s18 = ssub.s32 %s10, %s17
    %p19 = scmp.eq.s32.totalorder %s18, 0
    %s21 = sadd.s32 %s20, 1
    %s22 = scalar_select %p19, %s20, %s21
    %p25 = pneg %p19
    %p26 = scmp.eq.s32.totalorder %s10, 1
    %p27 = por %p25, %p26
    %p28 = scmp.ne.s32.totalorder %s20, %s23
    %p29 = scmp.eq.s32.totalorder %s10, 0
    %p30 = por %p28, %p29
    %p31 = scmp.ne.s32.totalorder %s20, %s23
    %p32 = scmp.eq.s32.totalorder %s15, 1
    %p33 = por %p31, %p32
    %p34 = scmp.ne.s32.totalorder %s23, %s24
    %p35 = scmp.eq.s32.totalorder %s15, 0
    %p36 = por %p34, %p35
    %p37 = scmp.ne.s32.totalorder %s23, %s24
    %p38 = scmp.eq.s32.totalorder %s16, 1
    %p39 = por %p37, %p38
    %p41 = scmp.ne.s32.totalorder %s24, %s40
    %p42 = scmp.eq.s32.totalorder %s16, 0
    %p43 = por %p41, %p42
    %s45 = sadd.s32 %s44, 1
    %p48 = scmp.eq.s32.totalorder %s10, 1
    %p49 = scmp.ne.s32.totalorder %s44, %s46
    %p50 = scmp.eq.s32.totalorder %s10, 0
    %p51 = por %p49, %p50
    %p52 = scmp.ne.s32.totalorder %s44, %s46
    %p53 = scmp.eq.s32.totalorder %s15, 1
    %p54 = por %p52, %p53
    %p55 = scmp.ne.s32.totalorder %s46, %s47
    %p56 = scmp.eq.s32.totalorder %s15, 0
    %p57 = por %p55, %p56
    %p58 = scmp.ne.s32.totalorder %s46, %s47
    %p59 = scmp.eq.s32.totalorder %s16, 1
    %p60 = por %p58, %p59
    %p62 = scmp.ne.s32.totalorder %s47, %s61
    %p63 = scmp.eq.s32.totalorder %s16, 0
    %p64 = por %p62, %p63
    %s66 = sadd.s32 %s65, 1
    %p69 = scmp.eq.s32.totalorder %s10, 1
    %p70 = scmp.ne.s32.totalorder %s65, %s67
    %p71 = scmp.eq.s32.totalorder %s10, 0
    %p72 = por %p70, %p71
    %p73 = scmp.ne.s32.totalorder %s65, %s67
    %p74 = scmp.eq.s32.totalorder %s15, 1
    %p75 = por %p73, %p74
    %p76 = scmp.ne.s32.totalorder %s67, %s68
    %p77 = scmp.eq.s32.totalorder %s15, 0
    %p78 = por %p76, %p77
    %p79 = scmp.ne.s32.totalorder %s67, %s68
    %p80 = scmp.eq.s32.totalorder %s16, 1
    %p81 = por %p79, %p80
    %p83 = scmp.ne.s32.totalorder %s68, %s82
    %p84 = scmp.eq.s32.totalorder %s16, 0
    %p85 = por %p83, %p84
    %s87 = sadd.s32 %s86, 1
    %p90 = scmp.eq.s32.totalorder %s10, 1
    %p91 = scmp.ne.s32.totalorder %s86, %s88
    %p92 = scmp.eq.s32.totalorder %s10, 0
    %p93 = por %p91, %p92
    %p94 = scmp.ne.s32.totalorder %s86, %s88
    %p95 = scmp.eq.s32.totalorder %s15, 1
    %p96 = por %p94, %p95
    %p97 = scmp.ne.s32.totalorder %s88, %s89
    %p98 = scmp.eq.s32.totalorder %s15, 0
    %p99 = por %p97, %p98
    %p100 = scmp.ne.s32.totalorder %s88, %s89
    %p101 = scmp.eq.s32.totalorder %s16, 1
    %p102 = por %p100, %p101
    %p104 = scmp.ne.s32.totalorder %s89, %s103
    %p105 = scmp.eq.s32.totalorder %s16, 0
    %p106 = por %p104, %p105
    %s107 = ssub.s32 %s10, %s17
    %p108 = scmp.eq.s32.totalorder %s107, 0
    %s110 = sadd.s32 %s109, 1
    %s111 = scalar_select %p108, %s109, %s110
    %p114 = pneg %p108
    %p115 = scmp.eq.s32.totalorder %s10, 1
    %p116 = por %p114, %p115
    %p117 = scmp.ne.s32.totalorder %s109, %s112
    %p118 = scmp.eq.s32.totalorder %s10, 0
    %p119 = por %p117, %p118
    %p120 = scmp.ne.s32.totalorder %s109, %s112
    %p121 = scmp.eq.s32.totalorder %s15, 1
    %p122 = por %p120, %p121
    %p123 = scmp.ne.s32.totalorder %s112, %s113
    %p124 = scmp.eq.s32.totalorder %s15, 0
    %p125 = por %p123, %p124
    %p126 = scmp.ne.s32.totalorder %s112, %s113
    %p127 = scmp.eq.s32.totalorder %s16, 1
    %p128 = por %p126, %p127
    %p130 = scmp.ne.s32.totalorder %s113, %s129
    %p131 = scmp.eq.s32.totalorder %s16, 0
    %p132 = por %p130, %p131
    %p133 = scmp.le.s32.totalorder 1, %s10
    %p134 = scmp.lt.s32.totalorder %s10, 3
    %p135 = pnand %p133, %p134
    %p136 = pneg %p135
    // Predicated region
    $region9: #{tpu_custom_call.1} parent=5 // pred_check
      _
    $region10: #{tpu_custom_call.1} parent=5 // pred_check_branch
      %138 = sbr.rel (%p135) target = $region12
    $region11: #{tpu_custom_call.1} parent=5 // pred_region
      %s139 = ssub.s32 %s10, 1
      // Predicated region
      $region13: #{tpu_custom_call.1} parent=11 // pred_check
        %p140 = pneg %p57
      $region14: #{tpu_custom_call.1} parent=11 // pred_check_branch
        %142 = sbr.rel (%p140) target = $region16
      $region15: #{tpu_custom_call.1} parent=11 // pred_region
        _
      $region16: #{tpu_custom_call.1} parent=11 // pred_fallthru
        _
      // Predicated region
      $region17: #{tpu_custom_call.1} parent=11 // pred_check
        %p143 = pneg %p78
      $region18: #{tpu_custom_call.1} parent=11 // pred_check_branch
        %145 = sbr.rel (%p143) target = $region20
      $region19: #{tpu_custom_call.1} parent=11 // pred_region
        _
      $region20: #{tpu_custom_call.1} parent=11 // pred_fallthru
        _
      // Predicated region
      $region21: #{tpu_custom_call.1} parent=11 // pred_check
        %p146 = pneg %p99
      $region22: #{tpu_custom_call.1} parent=11 // pred_check_branch
        %148 = sbr.rel (%p146) target = $region24
      $region23: #{tpu_custom_call.1} parent=11 // pred_region
        _
      $region24: #{tpu_custom_call.1} parent=11 // pred_fallthru
        _
    $region12: #{tpu_custom_call.1} parent=5 // pred_fallthru
      _
    %p149 = scmp.lt.s32.totalorder %s10, 2
    // Predicated region
    $region25: #{tpu_custom_call.1} parent=5 // pred_check
      %p150 = pneg %p149
    $region26: #{tpu_custom_call.1} parent=5 // pred_check_branch
      %152 = sbr.rel (%p150) target = $region28
    $region27: #{tpu_custom_call.1} parent=5 // pred_region
      // Predicated region
      $region29: #{tpu_custom_call.1} parent=27 // pred_check
        %p153 = pneg %p30
      $region30: #{tpu_custom_call.1} parent=27 // pred_check_branch
        %155 = sbr.rel (%p153) target = $region32
      $region31: #{tpu_custom_call.1} parent=27 // pred_region
        %p156 = scmp.lt.s32.totalorder %s10, 1
        %s157 = scalar_select %p156, %s10, 1
        %s158 = smul.addr %s157, 32
        %s159 = smul.addr %s158, 4
        %s160 = scalar_lea.vmem %s0, %s159
      $region32: #{tpu_custom_call.1} parent=27 // pred_fallthru
        _
    $region28: #{tpu_custom_call.1} parent=5 // pred_fallthru
      _
    %p161 = scmp.le.s32.totalorder 1, %s10
    %p162 = scmp.lt.s32.totalorder %s10, 3
    %p163 = pnand %p161, %p162
    %p164 = pneg %p163
    // Predicated region
    $region33: #{tpu_custom_call.1} parent=5 // pred_check
      _
    $region34: #{tpu_custom_call.1} parent=5 // pred_check_branch
      %166 = sbr.rel (%p163) target = $region36
    $region35: #{tpu_custom_call.1} parent=5 // pred_region
      %s167 = ssub.s32 %s10, 1
      %p168 = scmp.lt.s32.totalorder %s15, 1
      %s169 = scalar_select %p168, %s15, 1
      %s170 = smul.addr %s169, 32
      %s171 = smul.addr %s170, 4
      %s172 = scalar_lea.vmem %s0, %s171
      %p173 = pneg %p36
      %p174 = pneg %p33
      %p175 = pneg %p57
      %p176 = pneg %p54
      %p177 = pneg %p78
      %p178 = pneg %p75
      %p179 = pneg %p99
      %p180 = pneg %p96
      %p181 = pneg %p125
      %p182 = pneg %p122
      %p183 = scmp.lt.s32.totalorder %s15, 1
      %s184 = scalar_select %p183, %s15, 1
      %s185 = smul.addr %s184, 32
      %s186 = smul.addr %s185, 8
      %s187 = scalar_lea.vmem %s4, %s186
      %p188 = scmp.lt.s32.totalorder %s15, 1
      %s189 = scalar_select %p188, %s15, 1
      %s190 = smul.addr %s189, 32
      %s191 = smul.addr %s190, 4
      %s192 = scalar_lea.vmem %s0, %s191
      %p193 = scmp.lt.s32.totalorder %s15, 1
      %s194 = scalar_select %p193, %s15, 1
      %s195 = smul.addr %s194, 32
      %s196 = smul.addr %s195, 8
      %s197 = scalar_lea.vmem %s4, %s196
      %v199 = vld [vmem:[%s192] sm:$0xf]
      %v200 = vld [vmem:[%s192 + $0x4] sm:$0xf]
      %v201 = vld [vmem:[%s192 + $0x8] sm:$0xf]
      %v202 = vld [vmem:[%s192 + $0xc] sm:$0xf]
      %v203 = vld [vmem:[%s192 + $0x10] sm:$0xf]
      %v204 = vld [vmem:[%s192 + $0x14] sm:$0xf]
      %v205 = vld [vmem:[%s192 + $0x18] sm:$0xf]
      %v206 = vld [vmem:[%s192 + $0x1c] sm:$0xf]
      %v207 = vld [vmem:[%s192 + $0x20] sm:$0xf]
      %v208 = vld [vmem:[%s192 + $0x24] sm:$0xf]
      %v209 = vld [vmem:[%s192 + $0x28] sm:$0xf]
      %v210 = vld [vmem:[%s192 + $0x2c] sm:$0xf]
      %v211 = vld [vmem:[%s192 + $0x30] sm:$0xf]
      %v212 = vld [vmem:[%s192 + $0x34] sm:$0xf]
      %v213 = vld [vmem:[%s192 + $0x38] sm:$0xf]
      %v214 = vld [vmem:[%s192 + $0x3c] sm:$0xf]
      %v215 = vld [vmem:[%s192 + $0x40] sm:$0xf]
      %v216 = vld [vmem:[%s192 + $0x44] sm:$0xf]
      %v217 = vld [vmem:[%s192 + $0x48] sm:$0xf]
      %v218 = vld [vmem:[%s192 + $0x4c] sm:$0xf]
      %v219 = vld [vmem:[%s192 + $0x50] sm:$0xf]
      %v220 = vld [vmem:[%s192 + $0x54] sm:$0xf]
      %v221 = vld [vmem:[%s192 + $0x58] sm:$0xf]
      %v222 = vld [vmem:[%s192 + $0x5c] sm:$0xf]
      %v223 = vld [vmem:[%s192 + $0x60] sm:$0xf]
      %v224 = vld [vmem:[%s192 + $0x64] sm:$0xf]
      %v225 = vld [vmem:[%s192 + $0x68] sm:$0xf]
      %v226 = vld [vmem:[%s192 + $0x6c] sm:$0xf]
      %v227 = vld [vmem:[%s192 + $0x70] sm:$0xf]
      %v228 = vld [vmem:[%s192 + $0x74] sm:$0xf]
      %v229 = vld [vmem:[%s192 + $0x78] sm:$0xf]
      %v230 = vld [vmem:[%s192 + $0x7c] sm:$0xf]
      %v231 = vld [vmem:[%s1] sm:$0xf]
      %v232 = vld [vmem:[%s1 + $0x4] sm:$0xf]
      %v233 = vld [vmem:[%s1 + $0x8] sm:$0xf]
      %v234 = vld [vmem:[%s1 + $0xc] sm:$0xf]
      %v267 = vunpack.c.l.b16 %v199
      %v268 = vunpack.c.l.b16 %v200
      %v269 = vunpack.c.l.b16 %v201
      %v270 = vunpack.c.l.b16 %v202
      %v271 = vunpack.c.l.b16 %v203
      %v272 = vunpack.c.l.b16 %v204
      %v273 = vunpack.c.l.b16 %v205
      %v274 = vunpack.c.l.b16 %v206
      %v275 = vunpack.c.l.b16 %v207
      %v276 = vunpack.c.l.b16 %v208
      %v277 = vunpack.c.l.b16 %v209
      %v278 = vunpack.c.l.b16 %v210
      %v279 = vunpack.c.l.b16 %v211
      %v280 = vunpack.c.l.b16 %v212
      %v281 = vunpack.c.l.b16 %v213
      %v282 = vunpack.c.l.b16 %v214
      %v283 = vunpack.c.l.b16 %v215
      %v284 = vunpack.c.l.b16 %v216
      %v285 = vunpack.c.l.b16 %v217
      %v286 = vunpack.c.l.b16 %v218
      %v287 = vunpack.c.l.b16 %v219
      %v288 = vunpack.c.l.b16 %v220
      %v289 = vunpack.c.l.b16 %v221
      %v290 = vunpack.c.l.b16 %v222
      %v291 = vunpack.c.l.b16 %v223
      %v292 = vunpack.c.l.b16 %v224
      %v293 = vunpack.c.l.b16 %v225
      %v294 = vunpack.c.l.b16 %v226
      %v295 = vunpack.c.l.b16 %v227
      %v296 = vunpack.c.l.b16 %v228
      %v297 = vunpack.c.l.b16 %v229
      %v298 = vunpack.c.l.b16 %v230
      %v299 = vpack.c.b16 %v268, %v267
      %v300 = vpack.c.b16 %v270, %v269
      %v301 = vpack.c.b16 %v272, %v271
      %v302 = vpack.c.b16 %v274, %v273
      %v303 = vpack.c.b16 %v276, %v275
      %v304 = vpack.c.b16 %v278, %v277
      %v305 = vpack.c.b16 %v280, %v279
      %v306 = vpack.c.b16 %v282, %v281
      %v307 = vpack.c.b16 %v284, %v283
      %v308 = vpack.c.b16 %v286, %v285
      %v309 = vpack.c.b16 %v288, %v287
      %v310 = vpack.c.b16 %v290, %v289
      %v311 = vpack.c.b16 %v292, %v291
      %v312 = vpack.c.b16 %v294, %v293
      %v313 = vpack.c.b16 %v296, %v295
      %v314 = vpack.c.b16 %v298, %v297
      %v319 = vunpack.c.l.b16 %v231
      %v320 = vunpack.c.l.b16 %v232
      %v321 = vunpack.c.l.b16 %v233
      %v322 = vunpack.c.l.b16 %v234
      %v323 = vpack.c.b16 %v320, %v319
      %v324 = vpack.c.b16 %v322, %v321
      %vm327 = vcmask 261120
      %v329 = vsel %vm327, %v299, 0
      %v332 = vsel %vm327, %v300, 0
      %v335 = vsel %vm327, %v301, 0
      %v338 = vsel %vm327, %v302, 0
      %v341 = vsel %vm327, %v303, 0
      %v344 = vsel %vm327, %v304, 0
      %v347 = vsel %vm327, %v305, 0
      %v350 = vsel %vm327, %v306, 0
      %v353 = vsel %vm327, %v307, 0
      %v356 = vsel %vm327, %v308, 0
      %v359 = vsel %vm327, %v309, 0
      %v362 = vsel %vm327, %v310, 0
      %v365 = vsel %vm327, %v311, 0
      %v368 = vsel %vm327, %v312, 0
      %v371 = vsel %vm327, %v313, 0
      %v374 = vsel %vm327, %v314, 0
      %376 = vmatprep.subr.bf16.mxu0 0
      %377 = vmatpush1.bf16.msra.mxu0 %v323
      %378 = vmatprep.subr.bf16.mxu0 0
      %379 = vmatpush1.bf16.msra.mxu0 %v324
      %380 = vmatprep.subr.bf16.mxu0 0
      %381 = vmatpush1.bf16.msra.mxu0 0
      %382 = vmatprep.subr.bf16.mxu0 0
      %383 = vmatpush1.bf16.msra.mxu0 0
      %384 = vmatprep.subr.bf16.mxu0 0
      %385 = vmatpush1.bf16.msra.mxu0 0
      %386 = vmatprep.subr.bf16.mxu0 0
      %387 = vmatpush1.bf16.msra.mxu0 0
      %388 = vmatprep.subr.bf16.mxu0 0
      %389 = vmatpush1.bf16.msra.mxu0 0
      %390 = vmatprep.subr.bf16.mxu0 0
      %391 = vmatpush1.bf16.msra.mxu0 0
      %392 = vmatprep.subr.bf16.mxu0 0
      %393 = vmatpush1.bf16.msra.mxu0 0
      %394 = vmatprep.subr.bf16.mxu0 0
      %395 = vmatpush1.bf16.msra.mxu0 0
      %396 = vmatprep.subr.bf16.mxu0 0
      %397 = vmatpush1.bf16.msra.mxu0 0
      %398 = vmatprep.subr.bf16.mxu0 0
      %399 = vmatpush1.bf16.msra.mxu0 0
      %400 = vmatprep.subr.bf16.mxu0 0
      %401 = vmatpush1.bf16.msra.mxu0 0
      %402 = vmatprep.subr.bf16.mxu0 0
      %403 = vmatpush1.bf16.msra.mxu0 0
      %404 = vmatprep.subr.bf16.mxu0 0
      %405 = vmatpush1.bf16.msra.mxu0 0
      %406 = vmatprep.subr.bf16.mxu0 0
      %407 = vmatpush1.bf16.msra.mxu0 0
      %408 = vmatprep.mubr.bf16.mxu0 0
      %409 = vmatmul.mubr.bf16.gmra.mrb[0].mxu0 %v329
      %v410 = vpop.f32.mrb[0].mxu0
      %v411 = vadd.f32 0.0, %v410
      %v412 = vpop.f32.mrb[0].mxu0
      %v413 = vpop.f32.mrb[0].mxu0
      %v414 = vadd.f32 0.0, %v413
      %v415 = vpop.f32.mrb[0].mxu0
      %416 = vmatprep.mubr.bf16.mxu0 0
      %417 = vmatmul.mubr.bf16.gmra.mrb[0].mxu0 %v332
      %v418 = vpop.f32.mrb[0].mxu0
      %v419 = vadd.f32 0.0, %v418
      %v420 = vpop.f32.mrb[0].mxu0
      %v421 = vpop.f32.mrb[0].mxu0
      %v422 = vadd.f32 0.0, %v421
      %v423 = vpop.f32.mrb[0].mxu0
      %424 = vmatprep.mubr.bf16.mxu0 0
      %425 = vmatmul.mubr.bf16.gmra.mrb[0].mxu0 %v335
      %v426 = vpop.f32.mrb[0].mxu0
      %v427 = vadd.f32 0.0, %v426
      %v428 = vpop.f32.mrb[0].mxu0
      %v429 = vpop.f32.mrb[0].mxu0
      %v430 = vadd.f32 0.0, %v429
      %v431 = vpop.f32.mrb[0].mxu0
      %432 = vmatprep.mubr.bf16.mxu0 0
      %433 = vmatmul.mubr.bf16.gmra.mrb[0].mxu0 %v338
      %v434 = vpop.f32.mrb[0].mxu0
      %v435 = vadd.f32 0.0, %v434
      %v436 = vpop.f32.mrb[0].mxu0
      %v437 = vpop.f32.mrb[0].mxu0
      %v438 = vadd.f32 0.0, %v437
      %v439 = vpop.f32.mrb[0].mxu0
      %440 = vmatprep.mubr.bf16.mxu0 0
      %441 = vmatmul.mubr.bf16.gmra.mrb[0].mxu0 %v341
      %v442 = vpop.f32.mrb[0].mxu0
      %v443 = vadd.f32 0.0, %v442
      %v444 = vpop.f32.mrb[0].mxu0
      %v445 = vpop.f32.mrb[0].mxu0
      %v446 = vadd.f32 0.0, %v445
      %v447 = vpop.f32.mrb[0].mxu0
      %448 = vmatprep.mubr.bf16.mxu0 0
      %449 = vmatmul.mubr.bf16.gmra.mrb[0].mxu0 %v344
      %v450 = vpop.f32.mrb[0].mxu0
      %v451 = vadd.f32 0.0, %v450
      %v452 = vpop.f32.mrb[0].mxu0
      %v453 = vpop.f32.mrb[0].mxu0
      %v454 = vadd.f32 0.0, %v453
      %v455 = vpop.f32.mrb[0].mxu0
      %456 = vmatprep.mubr.bf16.mxu0 0
      %457 = vmatmul.mubr.bf16.gmra.mrb[0].mxu0 %v347
      %v458 = vpop.f32.mrb[0].mxu0
      %v459 = vadd.f32 0.0, %v458
      %v460 = vpop.f32.mrb[0].mxu0
      %v461 = vpop.f32.mrb[0].mxu0
      %v462 = vadd.f32 0.0, %v461
      %v463 = vpop.f32.mrb[0].mxu0
      %464 = vmatprep.mubr.bf16.mxu0 0
      %465 = vmatmul.mubr.bf16.gmra.mrb[0].mxu0 %v350
      %v466 = vpop.f32.mrb[0].mxu0
      %v467 = vadd.f32 0.0, %v466
      %v468 = vpop.f32.mrb[0].mxu0
      %v469 = vpop.f32.mrb[0].mxu0
      %v470 = vadd.f32 0.0, %v469
      %v471 = vpop.f32.mrb[0].mxu0
      %472 = vmatprep.mubr.bf16.mxu0 0
      %473 = vmatmul.mubr.bf16.gmra.mrb[0].mxu0 %v353
      %v474 = vpop.f32.mrb[0].mxu0
      %v475 = vadd.f32 0.0, %v474
      %v476 = vpop.f32.mrb[0].mxu0
      %v477 = vpop.f32.mrb[0].mxu0
      %v478 = vadd.f32 0.0, %v477
      %v479 = vpop.f32.mrb[0].mxu0
      %480 = vmatprep.mubr.bf16.mxu0 0
      %481 = vmatmul.mubr.bf16.gmra.mrb[0].mxu0 %v356
      %v482 = vpop.f32.mrb[0].mxu0
      %v483 = vadd.f32 0.0, %v482
      %v484 = vpop.f32.mrb[0].mxu0
      %v485 = vpop.f32.mrb[0].mxu0
      %v486 = vadd.f32 0.0, %v485
      %v487 = vpop.f32.mrb[0].mxu0
      %488 = vmatprep.mubr.bf16.mxu0 0
      %489 = vmatmul.mubr.bf16.gmra.mrb[0].mxu0 %v359
      %v490 = vpop.f32.mrb[0].mxu0
      %v491 = vadd.f32 0.0, %v490
      %v492 = vpop.f32.mrb[0].mxu0
      %v493 = vpop.f32.mrb[0].mxu0
      %v494 = vadd.f32 0.0, %v493
      %v495 = vpop.f32.mrb[0].mxu0
      %496 = vmatprep.mubr.bf16.mxu0 0
      %497 = vmatmul.mubr.bf16.gmra.mrb[0].mxu0 %v362
      %v498 = vpop.f32.mrb[0].mxu0
      %v499 = vadd.f32 0.0, %v498
      %v500 = vpop.f32.mrb[0].mxu0
      %v501 = vpop.f32.mrb[0].mxu0
      %v502 = vadd.f32 0.0, %v501
      %v503 = vpop.f32.mrb[0].mxu0
      %504 = vmatprep.mubr.bf16.mxu0 0
      %505 = vmatmul.mubr.bf16.gmra.mrb[0].mxu0 %v365
      %v506 = vpop.f32.mrb[0].mxu0
      %v507 = vadd.f32 0.0, %v506
      %v508 = vpop.f32.mrb[0].mxu0
      %v509 = vpop.f32.mrb[0].mxu0
      %v510 = vadd.f32 0.0, %v509
      %v511 = vpop.f32.mrb[0].mxu0
      %512 = vmatprep.mubr.bf16.mxu0 0
      %513 = vmatmul.mubr.bf16.gmra.mrb[0].mxu0 %v368
      %v514 = vpop.f32.mrb[0].mxu0
      %v515 = vadd.f32 0.0, %v514
      %v516 = vpop.f32.mrb[0].mxu0
      %v517 = vpop.f32.mrb[0].mxu0
      %v518 = vadd.f32 0.0, %v517
      %v519 = vpop.f32.mrb[0].mxu0
      %520 = vmatprep.mubr.bf16.mxu0 0
      %521 = vmatmul.mubr.bf16.gmra.mrb[0].mxu0 %v371
      %v522 = vpop.f32.mrb[0].mxu0
      %v523 = vadd.f32 0.0, %v522
      %v524 = vpop.f32.mrb[0].mxu0
      %v525 = vpop.f32.mrb[0].mxu0
      %v526 = vadd.f32 0.0, %v525
      %v527 = vpop.f32.mrb[0].mxu0
      %528 = vmatprep.mubr.bf16.mxu0 0
      %529 = vmatmul.mubr.bf16.gmra.mrb[0].mxu0 %v374
      %v530 = vpop.f32.mrb[0].mxu0
      %v531 = vadd.f32 0.0, %v530
      %v532 = vpop.f32.mrb[0].mxu0
      %v533 = vpop.f32.mrb[0].mxu0
      %v534 = vadd.f32 0.0, %v533
      %v535 = vpop.f32.mrb[0].mxu0
      %536 = vdwg.mxu0
      %v537 = vmul.f32 %v411, 0.5
      %v538 = vmul.f32 %v414, 0.5
      %v539 = vmul.f32 %v419, 0.5
      %v540 = vmul.f32 %v422, 0.5
      %v541 = vmul.f32 %v427, 0.5
      %v542 = vmul.f32 %v430, 0.5
      %v543 = vmul.f32 %v435, 0.5
      %v544 = vmul.f32 %v438, 0.5
      %v545 = vmul.f32 %v443, 0.5
      %v546 = vmul.f32 %v446, 0.5
      %v547 = vmul.f32 %v451, 0.5
      %v548 = vmul.f32 %v454, 0.5
      %v549 = vmul.f32 %v459, 0.5
      %v550 = vmul.f32 %v462, 0.5
      %v551 = vmul.f32 %v467, 0.5
      %v552 = vmul.f32 %v470, 0.5
      %v553 = vmul.f32 %v475, 0.5
      %v554 = vmul.f32 %v478, 0.5
      %v555 = vmul.f32 %v483, 0.5
      %v556 = vmul.f32 %v486, 0.5
      %v557 = vmul.f32 %v491, 0.5
      %v558 = vmul.f32 %v494, 0.5
      %v559 = vmul.f32 %v499, 0.5
      %v560 = vmul.f32 %v502, 0.5
      %v561 = vmul.f32 %v507, 0.5
      %v562 = vmul.f32 %v510, 0.5
      %v563 = vmul.f32 %v515, 0.5
      %v564 = vmul.f32 %v518, 0.5
      %v565 = vmul.f32 %v523, 0.5
      %v566 = vmul.f32 %v526, 0.5
      %v567 = vmul.f32 %v531, 0.5
      %v568 = vmul.f32 %v534, 0.5
      %v569 = vpack.c.bf16 %v538, %v537
      %v570 = vpack.c.bf16 %v540, %v539
      %v571 = vpack.c.bf16 %v542, %v541
      %v572 = vpack.c.bf16 %v544, %v543
      %v573 = vpack.c.bf16 %v546, %v545
      %v574 = vpack.c.bf16 %v548, %v547
      %v575 = vpack.c.bf16 %v550, %v549
      %v576 = vpack.c.bf16 %v552, %v551
      %v577 = vpack.c.bf16 %v554, %v553
      %v578 = vpack.c.bf16 %v556, %v555
      %v579 = vpack.c.bf16 %v558, %v557
      %v580 = vpack.c.bf16 %v560, %v559
      %v581 = vpack.c.bf16 %v562, %v561
      %v582 = vpack.c.bf16 %v564, %v563
      %v583 = vpack.c.bf16 %v566, %v565
      %v584 = vpack.c.bf16 %v568, %v567
      %v585 = vpack.c.bf16 %v414, %v411
      %v586 = vpack.c.bf16 %v422, %v419
      %v587 = vpack.c.bf16 %v430, %v427
      %v588 = vpack.c.bf16 %v438, %v435
      %v589 = vpack.c.bf16 %v446, %v443
      %v590 = vpack.c.bf16 %v454, %v451
      %v591 = vpack.c.bf16 %v462, %v459
      %v592 = vpack.c.bf16 %v470, %v467
      %v593 = vpack.c.bf16 %v478, %v475
      %v594 = vpack.c.bf16 %v486, %v483
      %v595 = vpack.c.bf16 %v494, %v491
      %v596 = vpack.c.bf16 %v502, %v499
      %v597 = vpack.c.bf16 %v510, %v507
      %v598 = vpack.c.bf16 %v518, %v515
      %v599 = vpack.c.bf16 %v526, %v523
      %v600 = vpack.c.bf16 %v534, %v531
      %617 = vrot.lane.b32.xlu0 %v585, 96
      %v618 = vpop.permute.xlu0 %617
      %619 = vrot.lane.b32.xlu0 %v586, 96
      %v620 = vpop.permute.xlu0 %619
      %621 = vrot.lane.b32.xlu0 %v587, 96
      %v622 = vpop.permute.xlu0 %621
      %623 = vrot.lane.b32.xlu0 %v588, 96
      %v624 = vpop.permute.xlu0 %623
      %625 = vrot.lane.b32.xlu0 %v589, 96
      %v626 = vpop.permute.xlu0 %625
      %627 = vrot.lane.b32.xlu0 %v590, 96
      %v628 = vpop.permute.xlu0 %627
      %629 = vrot.lane.b32.xlu0 %v591, 96
      %v630 = vpop.permute.xlu0 %629
      %631 = vrot.lane.b32.xlu0 %v592, 96
      %v632 = vpop.permute.xlu0 %631
      %633 = vrot.lane.b32.xlu0 %v593, 96
      %v634 = vpop.permute.xlu0 %633
      %635 = vrot.lane.b32.xlu0 %v594, 96
      %v636 = vpop.permute.xlu0 %635
      %637 = vrot.lane.b32.xlu0 %v595, 96
      %v638 = vpop.permute.xlu0 %637
      %639 = vrot.lane.b32.xlu0 %v596, 96
      %v640 = vpop.permute.xlu0 %639
      %641 = vrot.lane.b32.xlu0 %v597, 96
      %v642 = vpop.permute.xlu0 %641
      %643 = vrot.lane.b32.xlu0 %v598, 96
      %v644 = vpop.permute.xlu0 %643
      %645 = vrot.lane.b32.xlu0 %v599, 96
      %v646 = vpop.permute.xlu0 %645
      %647 = vrot.lane.b32.xlu0 %v600, 96
      %v648 = vpop.permute.xlu0 %647
      %vm649 = vcmask 31744
      %v651 = vsel %vm649, %v569, 0
      %v654 = vsel %vm649, %v570, 0
      %v657 = vsel %vm649, %v571, 0
      %v660 = vsel %vm649, %v572, 0
      %v663 = vsel %vm649, %v573, 0
      %v666 = vsel %vm649, %v574, 0
      %v669 = vsel %vm649, %v575, 0
      %v672 = vsel %vm649, %v576, 0
      %v675 = vsel %vm649, %v577, 0
      %v678 = vsel %vm649, %v578, 0
      %v681 = vsel %vm649, %v579, 0
      %v684 = vsel %vm649, %v580, 0
      %v687 = vsel %vm649, %v581, 0
      %v690 = vsel %vm649, %v582, 0
      %v693 = vsel %vm649, %v583, 0
      %v696 = vsel %vm649, %v584, 0
      %v699 = vsel %vm649, %v618, 0
      %v702 = vsel %vm649, %v620, 0
      %v705 = vsel %vm649, %v622, 0
      %v708 = vsel %vm649, %v624, 0
      %v711 = vsel %vm649, %v626, 0
      %v714 = vsel %vm649, %v628, 0
      %v717 = vsel %vm649, %v630, 0
      %v720 = vsel %vm649, %v632, 0
      %v723 = vsel %vm649, %v634, 0
      %v726 = vsel %vm649, %v636, 0
      %v729 = vsel %vm649, %v638, 0
      %v732 = vsel %vm649, %v640, 0
      %v735 = vsel %vm649, %v642, 0
      %v738 = vsel %vm649, %v644, 0
      %v741 = vsel %vm649, %v646, 0
      %v744 = vsel %vm649, %v648, 0
      %746 = vmatprep.subr.bf16.mxu0 0
      %747 = vmatpush1.bf16.xpose.msra.mxu0 %v699
      %748 = vmatprep.subr.bf16.mxu0 0
      %749 = vmatpush1.bf16.xpose.msra.mxu0 %v702
      %750 = vmatprep.subr.bf16.mxu0 0
      %751 = vmatpush1.bf16.xpose.msra.mxu0 %v705
      %752 = vmatprep.subr.bf16.mxu0 0
      %753 = vmatpush1.bf16.xpose.msra.mxu0 %v708
      %754 = vmatprep.subr.bf16.mxu0 0
      %755 = vmatpush1.bf16.xpose.msra.mxu0 %v711
      %756 = vmatprep.subr.bf16.mxu0 0
      %757 = vmatpush1.bf16.xpose.msra.mxu0 %v714
      %758 = vmatprep.subr.bf16.mxu0 0
      %759 = vmatpush1.bf16.xpose.msra.mxu0 %v717
      %760 = vmatprep.subr.bf16.mxu0 0
      %761 = vmatpush1.bf16.xpose.msra.mxu0 %v720
      %762 = vmatprep.subr.bf16.mxu0 0
      %763 = vmatpush1.bf16.xpose.msra.mxu0 %v723
      %764 = vmatprep.subr.bf16.mxu0 0
      %765 = vmatpush1.bf16.xpose.msra.mxu0 %v726
      %766 = vmatprep.subr.bf16.mxu0 0
      %767 = vmatpush1.bf16.xpose.msra.mxu0 %v729
      %768 = vmatprep.subr.bf16.mxu0 0
      %769 = vmatpush1.bf16.xpose.msra.mxu0 %v732
      %770 = vmatprep.subr.bf16.mxu0 0
      %771 = vmatpush1.bf16.xpose.msra.mxu0 %v735
      %772 = vmatprep.subr.bf16.mxu0 0
      %773 = vmatpush1.bf16.xpose.msra.mxu0 %v738
      %774 = vmatprep.subr.bf16.mxu0 0
      %775 = vmatpush1.bf16.xpose.msra.mxu0 %v741
      %776 = vmatprep.subr.bf16.mxu0 0
      %777 = vmatpush1.bf16.xpose.msra.mxu0 %v744
      %778 = vmatprep.mubr.bf16.mxu0 0
      %779 = vmatmul.mubr.bf16.gmra.mrb[0].mxu0 %v651
      %v780 = vpop.f32.mrb[0].mxu0
      %v781 = vadd.f32 0.0, %v780
      %v782 = vpop.f32.mrb[0].mxu0
      %v783 = vadd.f32 0.0, %v782
      %v784 = vpop.f32.mrb[0].mxu0
      %v785 = vadd.f32 0.0, %v784
      %v786 = vpop.f32.mrb[0].mxu0
      %v787 = vadd.f32 0.0, %v786
      %788 = vmatprep.mubr.bf16.mxu0 0
      %789 = vmatmul.mubr.bf16.gmra.mrb[0].mxu0 %v654
      %v790 = vpop.f32.mrb[0].mxu0
      %v791 = vadd.f32 0.0, %v790
      %v792 = vpop.f32.mrb[0].mxu0
      %v793 = vadd.f32 0.0, %v792
      %v794 = vpop.f32.mrb[0].mxu0
      %v795 = vadd.f32 0.0, %v794
      %v796 = vpop.f32.mrb[0].mxu0
      %v797 = vadd.f32 0.0, %v796
      %798 = vmatprep.mubr.bf16.mxu0 0
      %799 = vmatmul.mubr.bf16.gmra.mrb[0].mxu0 %v657
      %v800 = vpop.f32.mrb[0].mxu0
      %v801 = vadd.f32 0.0, %v800
      %v802 = vpop.f32.mrb[0].mxu0
      %v803 = vadd.f32 0.0, %v802
      %v804 = vpop.f32.mrb[0].mxu0
      %v805 = vadd.f32 0.0, %v804
      %v806 = vpop.f32.mrb[0].mxu0
      %v807 = vadd.f32 0.0, %v806
      %808 = vmatprep.mubr.bf16.mxu0 0
      %809 = vmatmul.mubr.bf16.gmra.mrb[0].mxu0 %v660
      %v810 = vpop.f32.mrb[0].mxu0
      %v811 = vadd.f32 0.0, %v810
      %v812 = vpop.f32.mrb[0].mxu0
      %v813 = vadd.f32 0.0, %v812
      %v814 = vpop.f32.mrb[0].mxu0
      %v815 = vadd.f32 0.0, %v814
      %v816 = vpop.f32.mrb[0].mxu0
      %v817 = vadd.f32 0.0, %v816
      %818 = vmatprep.mubr.bf16.mxu0 0
      %819 = vmatmul.mubr.bf16.gmra.mrb[0].mxu0 %v663
      %v820 = vpop.f32.mrb[0].mxu0
      %v821 = vadd.f32 0.0, %v820
      %v822 = vpop.f32.mrb[0].mxu0
      %v823 = vadd.f32 0.0, %v822
      %v824 = vpop.f32.mrb[0].mxu0
      %v825 = vadd.f32 0.0, %v824
      %v826 = vpop.f32.mrb[0].mxu0
      %v827 = vadd.f32 0.0, %v826
      %828 = vmatprep.mubr.bf16.mxu0 0
      %829 = vmatmul.mubr.bf16.gmra.mrb[0].mxu0 %v666
      %v830 = vpop.f32.mrb[0].mxu0
      %v831 = vadd.f32 0.0, %v830
      %v832 = vpop.f32.mrb[0].mxu0
      %v833 = vadd.f32 0.0, %v832
      %v834 = vpop.f32.mrb[0].mxu0
      %v835 = vadd.f32 0.0, %v834
      %v836 = vpop.f32.mrb[0].mxu0
      %v837 = vadd.f32 0.0, %v836
      %838 = vmatprep.mubr.bf16.mxu0 0
      %839 = vmatmul.mubr.bf16.gmra.mrb[0].mxu0 %v669
      %v840 = vpop.f32.mrb[0].mxu0
      %v841 = vadd.f32 0.0, %v840
      %v842 = vpop.f32.mrb[0].mxu0
      %v843 = vadd.f32 0.0, %v842
      %v844 = vpop.f32.mrb[0].mxu0
      %v845 = vadd.f32 0.0, %v844
      %v846 = vpop.f32.mrb[0].mxu0
      %v847 = vadd.f32 0.0, %v846
      %848 = vmatprep.mubr.bf16.mxu0 0
      %849 = vmatmul.mubr.bf16.gmra.mrb[0].mxu0 %v672
      %v850 = vpop.f32.mrb[0].mxu0
      %v851 = vadd.f32 0.0, %v850
      %v852 = vpop.f32.mrb[0].mxu0
      %v853 = vadd.f32 0.0, %v852
      %v854 = vpop.f32.mrb[0].mxu0
      %v855 = vadd.f32 0.0, %v854
      %v856 = vpop.f32.mrb[0].mxu0
      %v857 = vadd.f32 0.0, %v856
      %858 = vmatprep.mubr.bf16.mxu0 0
      %859 = vmatmul.mubr.bf16.gmra.mrb[0].mxu0 %v675
      %v860 = vpop.f32.mrb[0].mxu0
      %v861 = vadd.f32 0.0, %v860
      %v862 = vpop.f32.mrb[0].mxu0
      %v863 = vadd.f32 0.0, %v862
      %v864 = vpop.f32.mrb[0].mxu0
      %v865 = vadd.f32 0.0, %v864
      %v866 = vpop.f32.mrb[0].mxu0
      %v867 = vadd.f32 0.0, %v866
      %868 = vmatprep.mubr.bf16.mxu0 0
      %869 = vmatmul.mubr.bf16.gmra.mrb[0].mxu0 %v678
      %v870 = vpop.f32.mrb[0].mxu0
      %v871 = vadd.f32 0.0, %v870
      %v872 = vpop.f32.mrb[0].mxu0
      %v873 = vadd.f32 0.0, %v872
      %v874 = vpop.f32.mrb[0].mxu0
      %v875 = vadd.f32 0.0, %v874
      %v876 = vpop.f32.mrb[0].mxu0
      %v877 = vadd.f32 0.0, %v876
      %878 = vmatprep.mubr.bf16.mxu0 0
      %879 = vmatmul.mubr.bf16.gmra.mrb[0].mxu0 %v681
      %v880 = vpop.f32.mrb[0].mxu0
      %v881 = vadd.f32 0.0, %v880
      %v882 = vpop.f32.mrb[0].mxu0
      %v883 = vadd.f32 0.0, %v882
      %v884 = vpop.f32.mrb[0].mxu0
      %v885 = vadd.f32 0.0, %v884
      %v886 = vpop.f32.mrb[0].mxu0
      %v887 = vadd.f32 0.0, %v886
      %888 = vmatprep.mubr.bf16.mxu0 0
      %889 = vmatmul.mubr.bf16.gmra.mrb[0].mxu0 %v684
      %v890 = vpop.f32.mrb[0].mxu0
      %v891 = vadd.f32 0.0, %v890
      %v892 = vpop.f32.mrb[0].mxu0
      %v893 = vadd.f32 0.0, %v892
      %v894 = vpop.f32.mrb[0].mxu0
      %v895 = vadd.f32 0.0, %v894
      %v896 = vpop.f32.mrb[0].mxu0
      %v897 = vadd.f32 0.0, %v896
      %898 = vmatprep.mubr.bf16.mxu0 0
      %899 = vmatmul.mubr.bf16.gmra.mrb[0].mxu0 %v687
      %v900 = vpop.f32.mrb[0].mxu0
      %v901 = vadd.f32 0.0, %v900
      %v902 = vpop.f32.mrb[0].mxu0
      %v903 = vadd.f32 0.0, %v902
      %v904 = vpop.f32.mrb[0].mxu0
      %v905 = vadd.f32 0.0, %v904
      %v906 = vpop.f32.mrb[0].mxu0
      %v907 = vadd.f32 0.0, %v906
      %908 = vmatprep.mubr.bf16.mxu0 0
      %909 = vmatmul.mubr.bf16.gmra.mrb[0].mxu0 %v690
      %v910 = vpop.f32.mrb[0].mxu0
      %v911 = vadd.f32 0.0, %v910
      %v912 = vpop.f32.mrb[0].mxu0
      %v913 = vadd.f32 0.0, %v912
      %v914 = vpop.f32.mrb[0].mxu0
      %v915 = vadd.f32 0.0, %v914
      %v916 = vpop.f32.mrb[0].mxu0
      %v917 = vadd.f32 0.0, %v916
      %918 = vmatprep.mubr.bf16.mxu0 0
      %919 = vmatmul.mubr.bf16.gmra.mrb[0].mxu0 %v693
      %v920 = vpop.f32.mrb[0].mxu0
      %v921 = vadd.f32 0.0, %v920
      %v922 = vpop.f32.mrb[0].mxu0
      %v923 = vadd.f32 0.0, %v922
      %v924 = vpop.f32.mrb[0].mxu0
      %v925 = vadd.f32 0.0, %v924
      %v926 = vpop.f32.mrb[0].mxu0
      %v927 = vadd.f32 0.0, %v926
      %928 = vmatprep.mubr.bf16.mxu0 0
      %929 = vmatmul.mubr.bf16.gmra.mrb[0].mxu0 %v696
      %v930 = vpop.f32.mrb[0].mxu0
      %v931 = vadd.f32 0.0, %v930
      %v932 = vpop.f32.mrb[0].mxu0
      %v933 = vadd.f32 0.0, %v932
      %v934 = vpop.f32.mrb[0].mxu0
      %v935 = vadd.f32 0.0, %v934
      %v936 = vpop.f32.mrb[0].mxu0
      %v937 = vadd.f32 0.0, %v936
      %938 = vdwg.mxu0
      %v939 = vmax.f32 %v781, %v783
      %940 = vmax.xlane.f32.xlu0 %v939
      %v941 = vpop.xlane.xlu0 %940
      %v942 = vmax.f32 %v785, %v787
      %943 = vmax.xlane.f32.xlu0 %v942
      %v944 = vpop.xlane.xlu0 %943
      %v945 = vmax.f32 %v791, %v793
      %946 = vmax.xlane.f32.xlu0 %v945
      %v947 = vpop.xlane.xlu0 %946
      %v948 = vmax.f32 %v795, %v797
      %949 = vmax.xlane.f32.xlu0 %v948
      %v950 = vpop.xlane.xlu0 %949
      %v951 = vmax.f32 %v801, %v803
      %952 = vmax.xlane.f32.xlu0 %v951
      %v953 = vpop.xlane.xlu0 %952
      %v954 = vmax.f32 %v805, %v807
      %955 = vmax.xlane.f32.xlu0 %v954
      %v956 = vpop.xlane.xlu0 %955
      %v957 = vmax.f32 %v811, %v813
      %958 = vmax.xlane.f32.xlu0 %v957
      %v959 = vpop.xlane.xlu0 %958
      %v960 = vmax.f32 %v815, %v817
      %961 = vmax.xlane.f32.xlu0 %v960
      %v962 = vpop.xlane.xlu0 %961
      %v963 = vmax.f32 %v821, %v823
      %964 = vmax.xlane.f32.xlu0 %v963
      %v965 = vpop.xlane.xlu0 %964
      %v966 = vmax.f32 %v825, %v827
      %967 = vmax.xlane.f32.xlu0 %v966
      %v968 = vpop.xlane.xlu0 %967
      %v969 = vmax.f32 %v831, %v833
      %970 = vmax.xlane.f32.xlu0 %v969
      %v971 = vpop.xlane.xlu0 %970
      %v972 = vmax.f32 %v835, %v837
      %973 = vmax.xlane.f32.xlu0 %v972
      %v974 = vpop.xlane.xlu0 %973
      %v975 = vmax.f32 %v841, %v843
      %976 = vmax.xlane.f32.xlu0 %v975
      %v977 = vpop.xlane.xlu0 %976
      %v978 = vmax.f32 %v845, %v847
      %979 = vmax.xlane.f32.xlu0 %v978
      %v980 = vpop.xlane.xlu0 %979
      %v981 = vmax.f32 %v851, %v853
      %982 = vmax.xlane.f32.xlu0 %v981
      %v983 = vpop.xlane.xlu0 %982
      %v984 = vmax.f32 %v855, %v857
      %985 = vmax.xlane.f32.xlu0 %v984
      %v986 = vpop.xlane.xlu0 %985
      %v987 = vmax.f32 %v861, %v863
      %988 = vmax.xlane.f32.xlu0 %v987
      %v989 = vpop.xlane.xlu0 %988
      %v990 = vmax.f32 %v865, %v867
      %991 = vmax.xlane.f32.xlu0 %v990
      %v992 = vpop.xlane.xlu0 %991
      %v993 = vmax.f32 %v871, %v873
      %994 = vmax.xlane.f32.xlu0 %v993
      %v995 = vpop.xlane.xlu0 %994
      %v996 = vmax.f32 %v875, %v877
      %997 = vmax.xlane.f32.xlu0 %v996
      %v998 = vpop.xlane.xlu0 %997
      %v999 = vmax.f32 %v881, %v883
      %1000 = vmax.xlane.f32.xlu0 %v999
      %v1001 = vpop.xlane.xlu0 %1000
      %v1002 = vmax.f32 %v885, %v887
      %1003 = vmax.xlane.f32.xlu0 %v1002
      %v1004 = vpop.xlane.xlu0 %1003
      %v1005 = vmax.f32 %v891, %v893
      %1006 = vmax.xlane.f32.xlu0 %v1005
      %v1007 = vpop.xlane.xlu0 %1006
      %v1008 = vmax.f32 %v895, %v897
      %1009 = vmax.xlane.f32.xlu0 %v1008
      %v1010 = vpop.xlane.xlu0 %1009
      %v1011 = vmax.f32 %v901, %v903
      %1012 = vmax.xlane.f32.xlu0 %v1011
      %v1013 = vpop.xlane.xlu0 %1012
      %v1014 = vmax.f32 %v905, %v907
      %1015 = vmax.xlane.f32.xlu0 %v1014
      %v1016 = vpop.xlane.xlu0 %1015
      %v1017 = vmax.f32 %v911, %v913
      %1018 = vmax.xlane.f32.xlu0 %v1017
      %v1019 = vpop.xlane.xlu0 %1018
      %v1020 = vmax.f32 %v915, %v917
      %1021 = vmax.xlane.f32.xlu0 %v1020
      %v1022 = vpop.xlane.xlu0 %1021
      %v1023 = vmax.f32 %v921, %v923
      %1024 = vmax.xlane.f32.xlu0 %v1023
      %v1025 = vpop.xlane.xlu0 %1024
      %v1026 = vmax.f32 %v925, %v927
      %1027 = vmax.xlane.f32.xlu0 %v1026
      %v1028 = vpop.xlane.xlu0 %1027
      %v1029 = vmax.f32 %v931, %v933
      %1030 = vmax.xlane.f32.xlu0 %v1029
      %v1031 = vpop.xlane.xlu0 %1030
      %v1032 = vmax.f32 %v935, %v937
      %1033 = vmax.xlane.f32.xlu0 %v1032
      %v1034 = vpop.xlane.xlu0 %1033
      %v1035 = vsub.f32 %v781, %v941
      %v1036 = vsub.f32 %v783, %v941
      %v1037 = vsub.f32 %v785, %v944
      %v1038 = vsub.f32 %v787, %v944
      %v1039 = vsub.f32 %v791, %v947
      %v1040 = vsub.f32 %v793, %v947
      %v1041 = vsub.f32 %v795, %v950
      %v1042 = vsub.f32 %v797, %v950
      %v1043 = vsub.f32 %v801, %v953
      %v1044 = vsub.f32 %v803, %v953
      %v1045 = vsub.f32 %v805, %v956
      %v1046 = vsub.f32 %v807, %v956
      %v1047 = vsub.f32 %v811, %v959
      %v1048 = vsub.f32 %v813, %v959
      %v1049 = vsub.f32 %v815, %v962
      %v1050 = vsub.f32 %v817, %v962
      %v1051 = vsub.f32 %v821, %v965
      %v1052 = vsub.f32 %v823, %v965
      %v1053 = vsub.f32 %v825, %v968
      %v1054 = vsub.f32 %v827, %v968
      %v1055 = vsub.f32 %v831, %v971
      %v1056 = vsub.f32 %v833, %v971
      %v1057 = vsub.f32 %v835, %v974
      %v1058 = vsub.f32 %v837, %v974
      %v1059 = vsub.f32 %v841, %v977
      %v1060 = vsub.f32 %v843, %v977
      %v1061 = vsub.f32 %v845, %v980
      %v1062 = vsub.f32 %v847, %v980
      %v1063 = vsub.f32 %v851, %v983
      %v1064 = vsub.f32 %v853, %v983
      %v1065 = vsub.f32 %v855, %v986
      %v1066 = vsub.f32 %v857, %v986
      %v1067 = vsub.f32 %v861, %v989
      %v1068 = vsub.f32 %v863, %v989
      %v1069 = vsub.f32 %v865, %v992
      %v1070 = vsub.f32 %v867, %v992
      %v1071 = vsub.f32 %v871, %v995
      %v1072 = vsub.f32 %v873, %v995
      %v1073 = vsub.f32 %v875, %v998
      %v1074 = vsub.f32 %v877, %v998
      %v1075 = vsub.f32 %v881, %v1001
      %v1076 = vsub.f32 %v883, %v1001
      %v1077 = vsub.f32 %v885, %v1004
      %v1078 = vsub.f32 %v887, %v1004
      %v1079 = vsub.f32 %v891, %v1007
      %v1080 = vsub.f32 %v893, %v1007
      %v1081 = vsub.f32 %v895, %v1010
      %v1082 = vsub.f32 %v897, %v1010
      %v1083 = vsub.f32 %v901, %v1013
      %v1084 = vsub.f32 %v903, %v1013
      %v1085 = vsub.f32 %v905, %v1016
      %v1086 = vsub.f32 %v907, %v1016
      %v1087 = vsub.f32 %v911, %v1019
      %v1088 = vsub.f32 %v913, %v1019
      %v1089 = vsub.f32 %v915, %v1022
      %v1090 = vsub.f32 %v917, %v1022
      %v1091 = vsub.f32 %v921, %v1025
      %v1092 = vsub.f32 %v923, %v1025
      %v1093 = vsub.f32 %v925, %v1028
      %v1094 = vsub.f32 %v927, %v1028
      %v1095 = vsub.f32 %v931, %v1031
      %v1096 = vsub.f32 %v933, %v1031
      %v1097 = vsub.f32 %v935, %v1034
      %v1098 = vsub.f32 %v937, %v1034
      %v1099 = vmul.f32 %v1035, 1.442695
      %v1100 = vpow.pop %v1099
      %v1101 = vmul.f32 %v1036, 1.442695
      %v1102 = vpow.pop %v1101
      %v1103 = vmul.f32 %v1037, 1.442695
      %v1104 = vpow.pop %v1103
      %v1105 = vmul.f32 %v1038, 1.442695
      %v1106 = vpow.pop %v1105
      %v1107 = vmul.f32 %v1039, 1.442695
      %v1108 = vpow.pop %v1107
      %v1109 = vmul.f32 %v1040, 1.442695
      %v1110 = vpow.pop %v1109
      %v1111 = vmul.f32 %v1041, 1.442695
      %v1112 = vpow.pop %v1111
      %v1113 = vmul.f32 %v1042, 1.442695
      %v1114 = vpow.pop %v1113
      %v1115 = vmul.f32 %v1043, 1.442695
      %v1116 = vpow.pop %v1115
      %v1117 = vmul.f32 %v1044, 1.442695
      %v1118 = vpow.pop %v1117
      %v1119 = vmul.f32 %v1045, 1.442695
      %v1120 = vpow.pop %v1119
      %v1121 = vmul.f32 %v1046, 1.442695
      %v1122 = vpow.pop %v1121
      %v1123 = vmul.f32 %v1047, 1.442695
      %v1124 = vpow.pop %v1123
      %v1125 = vmul.f32 %v1048, 1.442695
      %v1126 = vpow.pop %v1125
      %v1127 = vmul.f32 %v1049, 1.442695
      %v1128 = vpow.pop %v1127
      %v1129 = vmul.f32 %v1050, 1.442695
      %v1130 = vpow.pop %v1129
      %v1131 = vmul.f32 %v1051, 1.442695
      %v1132 = vpow.pop %v1131
      %v1133 = vmul.f32 %v1052, 1.442695
      %v1134 = vpow.pop %v1133
      %v1135 = vmul.f32 %v1053, 1.442695
      %v1136 = vpow.pop %v1135
      %v1137 = vmul.f32 %v1054, 1.442695
      %v1138 = vpow.pop %v1137
      %v1139 = vmul.f32 %v1055, 1.442695
      %v1140 = vpow.pop %v1139
      %v1141 = vmul.f32 %v1056, 1.442695
      %v1142 = vpow.pop %v1141
      %v1143 = vmul.f32 %v1057, 1.442695
      %v1144 = vpow.pop %v1143
      %v1145 = vmul.f32 %v1058, 1.442695
      %v1146 = vpow.pop %v1145
      %v1147 = vmul.f32 %v1059, 1.442695
      %v1148 = vpow.pop %v1147
      %v1149 = vmul.f32 %v1060, 1.442695
      %v1150 = vpow.pop %v1149
      %v1151 = vmul.f32 %v1061, 1.442695
      %v1152 = vpow.pop %v1151
      %v1153 = vmul.f32 %v1062, 1.442695
      %v1154 = vpow.pop %v1153
      %v1155 = vmul.f32 %v1063, 1.442695
      %v1156 = vpow.pop %v1155
      %v1157 = vmul.f32 %v1064, 1.442695
      %v1158 = vpow.pop %v1157
      %v1159 = vmul.f32 %v1065, 1.442695
      %v1160 = vpow.pop %v1159
      %v1161 = vmul.f32 %v1066, 1.442695
      %v1162 = vpow.pop %v1161
      %v1163 = vmul.f32 %v1067, 1.442695
      %v1164 = vpow.pop %v1163
      %v1165 = vmul.f32 %v1068, 1.442695
      %v1166 = vpow.pop %v1165
      %v1167 = vmul.f32 %v1069, 1.442695
      %v1168 = vpow.pop %v1167
      %v1169 = vmul.f32 %v1070, 1.442695
      %v1170 = vpow.pop %v1169
      %v1171 = vmul.f32 %v1071, 1.442695
      %v1172 = vpow.pop %v1171
      %v1173 = vmul.f32 %v1072, 1.442695
      %v1174 = vpow.pop %v1173
      %v1175 = vmul.f32 %v1073, 1.442695
      %v1176 = vpow.pop %v1175
      %v1177 = vmul.f32 %v1074, 1.442695
      %v1178 = vpow.pop %v1177
      %v1179 = vmul.f32 %v1075, 1.442695
      %v1180 = vpow.pop %v1179
      %v1181 = vmul.f32 %v1076, 1.442695
      %v1182 = vpow.pop %v1181
      %v1183 = vmul.f32 %v1077, 1.442695
      %v1184 = vpow.pop %v1183
      %v1185 = vmul.f32 %v1078, 1.442695
      %v1186 = vpow.pop %v1185
      %v1187 = vmul.f32 %v1079, 1.442695
      %v1188 = vpow.pop %v1187
      %v1189 = vmul.f32 %v1080, 1.442695
      %v1190 = vpow.pop %v1189
      %v1191 = vmul.f32 %v1081, 1.442695
      %v1192 = vpow.pop %v1191
      %v1193 = vmul.f32 %v1082, 1.442695
      %v1194 = vpow.pop %v1193
      %v1195 = vmul.f32 %v1083, 1.442695
      %v1196 = vpow.pop %v1195
      %v1197 = vmul.f32 %v1084, 1.442695
      %v1198 = vpow.pop %v1197
      %v1199 = vmul.f32 %v1085, 1.442695
      %v1200 = vpow.pop %v1199
      %v1201 = vmul.f32 %v1086, 1.442695
      %v1202 = vpow.pop %v1201
      %v1203 = vmul.f32 %v1087, 1.442695
      %v1204 = vpow.pop %v1203
      %v1205 = vmul.f32 %v1088, 1.442695
      %v1206 = vpow.pop %v1205
      %v1207 = vmul.f32 %v1089, 1.442695
      %v1208 = vpow.pop %v1207
      %v1209 = vmul.f32 %v1090, 1.442695
      %v1210 = vpow.pop %v1209
      %v1211 = vmul.f32 %v1091, 1.442695
      %v1212 = vpow.pop %v1211
      %v1213 = vmul.f32 %v1092, 1.442695
      %v1214 = vpow.pop %v1213
      %v1215 = vmul.f32 %v1093, 1.442695
      %v1216 = vpow.pop %v1215
      %v1217 = vmul.f32 %v1094, 1.442695
      %v1218 = vpow.pop %v1217
      %v1219 = vmul.f32 %v1095, 1.442695
      %v1220 = vpow.pop %v1219
      %v1221 = vmul.f32 %v1096, 1.442695
      %v1222 = vpow.pop %v1221
      %v1223 = vmul.f32 %v1097, 1.442695
      %v1224 = vpow.pop %v1223
      %v1225 = vmul.f32 %v1098, 1.442695
      %v1226 = vpow.pop %v1225
      %v1227 = vadd.f32 %v1100, %v1102
      %1228 = vadd.xlane.f32.xlu0 %v1227
      %v1229 = vpop.xlane.xlu0 %1228
      %v1230 = vadd.f32 %v1104, %v1106
      %1231 = vadd.xlane.f32.xlu0 %v1230
      %v1232 = vpop.xlane.xlu0 %1231
      %v1233 = vadd.f32 %v1108, %v1110
      %1234 = vadd.xlane.f32.xlu0 %v1233
      %v1235 = vpop.xlane.xlu0 %1234
      %v1236 = vadd.f32 %v1112, %v1114
      %1237 = vadd.xlane.f32.xlu0 %v1236
      %v1238 = vpop.xlane.xlu0 %1237
      %v1239 = vadd.f32 %v1116, %v1118
      %1240 = vadd.xlane.f32.xlu0 %v1239
      %v1241 = vpop.xlane.xlu0 %1240
      %v1242 = vadd.f32 %v1120, %v1122
      %1243 = vadd.xlane.f32.xlu0 %v1242
      %v1244 = vpop.xlane.xlu0 %1243
      %v1245 = vadd.f32 %v1124, %v1126
      %1246 = vadd.xlane.f32.xlu0 %v1245
      %v1247 = vpop.xlane.xlu0 %1246
      %v1248 = vadd.f32 %v1128, %v1130
      %1249 = vadd.xlane.f32.xlu0 %v1248
      %v1250 = vpop.xlane.xlu0 %1249
      %v1251 = vadd.f32 %v1132, %v1134
      %1252 = vadd.xlane.f32.xlu0 %v1251
      %v1253 = vpop.xlane.xlu0 %1252
      %v1254 = vadd.f32 %v1136, %v1138
      %1255 = vadd.xlane.f32.xlu0 %v1254
      %v1256 = vpop.xlane.xlu0 %1255
      %v1257 = vadd.f32 %v1140, %v1142
      %1258 = vadd.xlane.f32.xlu0 %v1257
      %v1259 = vpop.xlane.xlu0 %1258
      %v1260 = vadd.f32 %v1144, %v1146
      %1261 = vadd.xlane.f32.xlu0 %v1260
      %v1262 = vpop.xlane.xlu0 %1261
      %v1263 = vadd.f32 %v1148, %v1150
      %1264 = vadd.xlane.f32.xlu0 %v1263
      %v1265 = vpop.xlane.xlu0 %1264
      %v1266 = vadd.f32 %v1152, %v1154
      %1267 = vadd.xlane.f32.xlu0 %v1266
      %v1268 = vpop.xlane.xlu0 %1267
      %v1269 = vadd.f32 %v1156, %v1158
      %1270 = vadd.xlane.f32.xlu0 %v1269
      %v1271 = vpop.xlane.xlu0 %1270
      %v1272 = vadd.f32 %v1160, %v1162
      %1273 = vadd.xlane.f32.xlu0 %v1272
      %v1274 = vpop.xlane.xlu0 %1273
      %v1275 = vadd.f32 %v1164, %v1166
      %1276 = vadd.xlane.f32.xlu0 %v1275
      %v1277 = vpop.xlane.xlu0 %1276
      %v1278 = vadd.f32 %v1168, %v1170
      %1279 = vadd.xlane.f32.xlu0 %v1278
      %v1280 = vpop.xlane.xlu0 %1279
      %v1281 = vadd.f32 %v1172, %v1174
      %1282 = vadd.xlane.f32.xlu0 %v1281
      %v1283 = vpop.xlane.xlu0 %1282
      %v1284 = vadd.f32 %v1176, %v1178
      %1285 = vadd.xlane.f32.xlu0 %v1284
      %v1286 = vpop.xlane.xlu0 %1285
      %v1287 = vadd.f32 %v1180, %v1182
      %1288 = vadd.xlane.f32.xlu0 %v1287
      %v1289 = vpop.xlane.xlu0 %1288
      %v1290 = vadd.f32 %v1184, %v1186
      %1291 = vadd.xlane.f32.xlu0 %v1290
      %v1292 = vpop.xlane.xlu0 %1291
      %v1293 = vadd.f32 %v1188, %v1190
      %1294 = vadd.xlane.f32.xlu0 %v1293
      %v1295 = vpop.xlane.xlu0 %1294
      %v1296 = vadd.f32 %v1192, %v1194
      %1297 = vadd.xlane.f32.xlu0 %v1296
      %v1298 = vpop.xlane.xlu0 %1297
      %v1299 = vadd.f32 %v1196, %v1198
      %1300 = vadd.xlane.f32.xlu0 %v1299
      %v1301 = vpop.xlane.xlu0 %1300
      %v1302 = vadd.f32 %v1200, %v1202
      %1303 = vadd.xlane.f32.xlu0 %v1302
      %v1304 = vpop.xlane.xlu0 %1303
      %v1305 = vadd.f32 %v1204, %v1206
      %1306 = vadd.xlane.f32.xlu0 %v1305
      %v1307 = vpop.xlane.xlu0 %1306
      %v1308 = vadd.f32 %v1208, %v1210
      %1309 = vadd.xlane.f32.xlu0 %v1308
      %v1310 = vpop.xlane.xlu0 %1309
      %v1311 = vadd.f32 %v1212, %v1214
      %1312 = vadd.xlane.f32.xlu0 %v1311
      %v1313 = vpop.xlane.xlu0 %1312
      %v1314 = vadd.f32 %v1216, %v1218
      %1315 = vadd.xlane.f32.xlu0 %v1314
      %v1316 = vpop.xlane.xlu0 %1315
      %v1317 = vadd.f32 %v1220, %v1222
      %1318 = vadd.xlane.f32.xlu0 %v1317
      %v1319 = vpop.xlane.xlu0 %1318
      %v1320 = vadd.f32 %v1224, %v1226
      %1321 = vadd.xlane.f32.xlu0 %v1320
      %v1322 = vpop.xlane.xlu0 %1321
      %v1323 = vpack.c.bf16 %v1104, %v1100
      %v1324 = vpack.c.bf16 %v1106, %v1102
      %v1325 = vpack.c.bf16 %v1112, %v1108
      %v1326 = vpack.c.bf16 %v1114, %v1110
      %v1327 = vpack.c.bf16 %v1120, %v1116
      %v1328 = vpack.c.bf16 %v1122, %v1118
      %v1329 = vpack.c.bf16 %v1128, %v1124
      %v1330 = vpack.c.bf16 %v1130, %v1126
      %v1331 = vpack.c.bf16 %v1136, %v1132
      %v1332 = vpack.c.bf16 %v1138, %v1134
      %v1333 = vpack.c.bf16 %v1144, %v1140
      %v1334 = vpack.c.bf16 %v1146, %v1142
      %v1335 = vpack.c.bf16 %v1152, %v1148
      %v1336 = vpack.c.bf16 %v1154, %v1150
      %v1337 = vpack.c.bf16 %v1160, %v1156
      %v1338 = vpack.c.bf16 %v1162, %v1158
      %v1339 = vpack.c.bf16 %v1168, %v1164
      %v1340 = vpack.c.bf16 %v1170, %v1166
      %v1341 = vpack.c.bf16 %v1176, %v1172
      %v1342 = vpack.c.bf16 %v1178, %v1174
      %v1343 = vpack.c.bf16 %v1184, %v1180
      %v1344 = vpack.c.bf16 %v1186, %v1182
      %v1345 = vpack.c.bf16 %v1192, %v1188
      %v1346 = vpack.c.bf16 %v1194, %v1190
      %v1347 = vpack.c.bf16 %v1200, %v1196
      %v1348 = vpack.c.bf16 %v1202, %v1198
      %v1349 = vpack.c.bf16 %v1208, %v1204
      %v1350 = vpack.c.bf16 %v1210, %v1206
      %v1351 = vpack.c.bf16 %v1216, %v1212
      %v1352 = vpack.c.bf16 %v1218, %v1214
      %v1353 = vpack.c.bf16 %v1224, %v1220
      %v1354 = vpack.c.bf16 %v1226, %v1222
      %1355 = vrot.lane.b32.xlu0 %v585, 64
      %v1356 = vpop.permute.xlu0 %1355
      %1357 = vrot.lane.b32.xlu0 %v586, 64
      %v1358 = vpop.permute.xlu0 %1357
      %1359 = vrot.lane.b32.xlu0 %v587, 64
      %v1360 = vpop.permute.xlu0 %1359
      %1361 = vrot.lane.b32.xlu0 %v588, 64
      %v1362 = vpop.permute.xlu0 %1361
      %1363 = vrot.lane.b32.xlu0 %v589, 64
      %v1364 = vpop.permute.xlu0 %1363
      %1365 = vrot.lane.b32.xlu0 %v590, 64
      %v1366 = vpop.permute.xlu0 %1365
      %1367 = vrot.lane.b32.xlu0 %v591, 64
      %v1368 = vpop.permute.xlu0 %1367
      %1369 = vrot.lane.b32.xlu0 %v592, 64
      %v1370 = vpop.permute.xlu0 %1369
      %1371 = vrot.lane.b32.xlu0 %v593, 64
      %v1372 = vpop.permute.xlu0 %1371
      %1373 = vrot.lane.b32.xlu0 %v594, 64
      %v1374 = vpop.permute.xlu0 %1373
      %1375 = vrot.lane.b32.xlu0 %v595, 64
      %v1376 = vpop.permute.xlu0 %1375
      %1377 = vrot.lane.b32.xlu0 %v596, 64
      %v1378 = vpop.permute.xlu0 %1377
      %1379 = vrot.lane.b32.xlu0 %v597, 64
      %v1380 = vpop.permute.xlu0 %1379
      %1381 = vrot.lane.b32.xlu0 %v598, 64
      %v1382 = vpop.permute.xlu0 %1381
      %1383 = vrot.lane.b32.xlu0 %v599, 64
      %v1384 = vpop.permute.xlu0 %1383
      %1385 = vrot.lane.b32.xlu0 %v600, 64
      %v1386 = vpop.permute.xlu0 %1385
      %1403 = vmatprep.subr.bf16.mxu0 0
      %1404 = vmatpush1.bf16.msra.mxu0 %v1356
      %1405 = vmatprep.subr.bf16.mxu0 0
      %1406 = vmatpush1.bf16.msra.mxu0 %v1358
      %1407 = vmatprep.subr.bf16.mxu0 0
      %1408 = vmatpush1.bf16.msra.mxu0 %v1360
      %1409 = vmatprep.subr.bf16.mxu0 0
      %1410 = vmatpush1.bf16.msra.mxu0 %v1362
      %1411 = vmatprep.subr.bf16.mxu0 0
      %1412 = vmatpush1.bf16.msra.mxu0 %v1364
      %1413 = vmatprep.subr.bf16.mxu0 0
      %1414 = vmatpush1.bf16.msra.mxu0 %v1366
      %1415 = vmatprep.subr.bf16.mxu0 0
      %1416 = vmatpush1.bf16.msra.mxu0 %v1368
      %1417 = vmatprep.subr.bf16.mxu0 0
      %1418 = vmatpush1.bf16.msra.mxu0 %v1370
      %1419 = vmatprep.subr.bf16.mxu0 0
      %1420 = vmatpush1.bf16.msra.mxu0 %v1372
      %1421 = vmatprep.subr.bf16.mxu0 0
      %1422 = vmatpush1.bf16.msra.mxu0 %v1374
      %1423 = vmatprep.subr.bf16.mxu0 0
      %1424 = vmatpush1.bf16.msra.mxu0 %v1376
      %1425 = vmatprep.subr.bf16.mxu0 0
      %1426 = vmatpush1.bf16.msra.mxu0 %v1378
      %1427 = vmatprep.subr.bf16.mxu0 0
      %1428 = vmatpush1.bf16.msra.mxu0 %v1380
      %1429 = vmatprep.subr.bf16.mxu0 0
      %1430 = vmatpush1.bf16.msra.mxu0 %v1382
      %1431 = vmatprep.subr.bf16.mxu0 0
      %1432 = vmatpush1.bf16.msra.mxu0 %v1384
      %1433 = vmatprep.subr.bf16.mxu0 0
      %1434 = vmatpush1.bf16.msra.mxu0 %v1386
      %1435 = vmatprep.mubr.bf16.mxu0 %v1324
      %1436 = vmatmul.mubr.bf16.gmra.mrb[0].mxu0 %v1323
      %v1437 = vpop.f32.mrb[0].mxu0
      %v1438 = vadd.f32 0.0, %v1437
      %v1439 = vpop.f32.mrb[0].mxu0
      %v1440 = vpop.f32.mrb[0].mxu0
      %v1441 = vadd.f32 0.0, %v1440
      %v1442 = vpop.f32.mrb[0].mxu0
      %1443 = vmatprep.mubr.bf16.mxu0 %v1326
      %1444 = vmatmul.mubr.bf16.gmra.mrb[0].mxu0 %v1325
      %v1445 = vpop.f32.mrb[0].mxu0
      %v1446 = vadd.f32 0.0, %v1445
      %v1447 = vpop.f32.mrb[0].mxu0
      %v1448 = vpop.f32.mrb[0].mxu0
      %v1449 = vadd.f32 0.0, %v1448
      %v1450 = vpop.f32.mrb[0].mxu0
      %1451 = vmatprep.mubr.bf16.mxu0 %v1328
      %1452 = vmatmul.mubr.bf16.gmra.mrb[0].mxu0 %v1327
      %v1453 = vpop.f32.mrb[0].mxu0
      %v1454 = vadd.f32 0.0, %v1453
      %v1455 = vpop.f32.mrb[0].mxu0
      %v1456 = vpop.f32.mrb[0].mxu0
      %v1457 = vadd.f32 0.0, %v1456
      %v1458 = vpop.f32.mrb[0].mxu0
      %1459 = vmatprep.mubr.bf16.mxu0 %v1330
      %1460 = vmatmul.mubr.bf16.gmra.mrb[0].mxu0 %v1329
      %v1461 = vpop.f32.mrb[0].mxu0
      %v1462 = vadd.f32 0.0, %v1461
      %v1463 = vpop.f32.mrb[0].mxu0
      %v1464 = vpop.f32.mrb[0].mxu0
      %v1465 = vadd.f32 0.0, %v1464
      %v1466 = vpop.f32.mrb[0].mxu0
      %1467 = vmatprep.mubr.bf16.mxu0 %v1332
      %1468 = vmatmul.mubr.bf16.gmra.mrb[0].mxu0 %v1331
      %v1469 = vpop.f32.mrb[0].mxu0
      %v1470 = vadd.f32 0.0, %v1469
      %v1471 = vpop.f32.mrb[0].mxu0
      %v1472 = vpop.f32.mrb[0].mxu0
      %v1473 = vadd.f32 0.0, %v1472
      %v1474 = vpop.f32.mrb[0].mxu0
      %1475 = vmatprep.mubr.bf16.mxu0 %v1334
      %1476 = vmatmul.mubr.bf16.gmra.mrb[0].mxu0 %v1333
      %v1477 = vpop.f32.mrb[0].mxu0
      %v1478 = vadd.f32 0.0, %v1477
      %v1479 = vpop.f32.mrb[0].mxu0
      %v1480 = vpop.f32.mrb[0].mxu0
      %v1481 = vadd.f32 0.0, %v1480
      %v1482 = vpop.f32.mrb[0].mxu0
      %1483 = vmatprep.mubr.bf16.mxu0 %v1336
      %1484 = vmatmul.mubr.bf16.gmra.mrb[0].mxu0 %v1335
      %v1485 = vpop.f32.mrb[0].mxu0
      %v1486 = vadd.f32 0.0, %v1485
      %v1487 = vpop.f32.mrb[0].mxu0
      %v1488 = vpop.f32.mrb[0].mxu0
      %v1489 = vadd.f32 0.0, %v1488
      %v1490 = vpop.f32.mrb[0].mxu0
      %1491 = vmatprep.mubr.bf16.mxu0 %v1338
      %1492 = vmatmul.mubr.bf16.gmra.mrb[0].mxu0 %v1337
      %v1493 = vpop.f32.mrb[0].mxu0
      %v1494 = vadd.f32 0.0, %v1493
      %v1495 = vpop.f32.mrb[0].mxu0
      %v1496 = vpop.f32.mrb[0].mxu0
      %v1497 = vadd.f32 0.0, %v1496
      %v1498 = vpop.f32.mrb[0].mxu0
      %1499 = vmatprep.mubr.bf16.mxu0 %v1340
      %1500 = vmatmul.mubr.bf16.gmra.mrb[0].mxu0 %v1339
      %v1501 = vpop.f32.mrb[0].mxu0
      %v1502 = vadd.f32 0.0, %v1501
      %v1503 = vpop.f32.mrb[0].mxu0
      %v1504 = vpop.f32.mrb[0].mxu0
      %v1505 = vadd.f32 0.0, %v1504
      %v1506 = vpop.f32.mrb[0].mxu0
      %1507 = vmatprep.mubr.bf16.mxu0 %v1342
      %1508 = vmatmul.mubr.bf16.gmra.mrb[0].mxu0 %v1341
      %v1509 = vpop.f32.mrb[0].mxu0
      %v1510 = vadd.f32 0.0, %v1509
      %v1511 = vpop.f32.mrb[0].mxu0
      %v1512 = vpop.f32.mrb[0].mxu0
      %v1513 = vadd.f32 0.0, %v1512
      %v1514 = vpop.f32.mrb[0].mxu0
      %1515 = vmatprep.mubr.bf16.mxu0 %v1344
      %1516 = vmatmul.mubr.bf16.gmra.mrb[0].mxu0 %v1343
      %v1517 = vpop.f32.mrb[0].mxu0
      %v1518 = vadd.f32 0.0, %v1517
      %v1519 = vpop.f32.mrb[0].mxu0
      %v1520 = vpop.f32.mrb[0].mxu0
      %v1521 = vadd.f32 0.0, %v1520
      %v1522 = vpop.f32.mrb[0].mxu0
      %1523 = vmatprep.mubr.bf16.mxu0 %v1346
      %1524 = vmatmul.mubr.bf16.gmra.mrb[0].mxu0 %v1345
      %v1525 = vpop.f32.mrb[0].mxu0
      %v1526 = vadd.f32 0.0, %v1525
      %v1527 = vpop.f32.mrb[0].mxu0
      %v1528 = vpop.f32.mrb[0].mxu0
      %v1529 = vadd.f32 0.0, %v1528
      %v1530 = vpop.f32.mrb[0].mxu0
      %1531 = vmatprep.mubr.bf16.mxu0 %v1348
      %1532 = vmatmul.mubr.bf16.gmra.mrb[0].mxu0 %v1347
      %v1533 = vpop.f32.mrb[0].mxu0
      %v1534 = vadd.f32 0.0, %v1533
      %v1535 = vpop.f32.mrb[0].mxu0
      %v1536 = vpop.f32.mrb[0].mxu0
      %v1537 = vadd.f32 0.0, %v1536
      %v1538 = vpop.f32.mrb[0].mxu0
      %1539 = vmatprep.mubr.bf16.mxu0 %v1350
      %1540 = vmatmul.mubr.bf16.gmra.mrb[0].mxu0 %v1349
      %v1541 = vpop.f32.mrb[0].mxu0
      %v1542 = vadd.f32 0.0, %v1541
      %v1543 = vpop.f32.mrb[0].mxu0
      %v1544 = vpop.f32.mrb[0].mxu0
      %v1545 = vadd.f32 0.0, %v1544
      %v1546 = vpop.f32.mrb[0].mxu0
      %1547 = vmatprep.mubr.bf16.mxu0 %v1352
      %1548 = vmatmul.mubr.bf16.gmra.mrb[0].mxu0 %v1351
      %v1549 = vpop.f32.mrb[0].mxu0
      %v1550 = vadd.f32 0.0, %v1549
      %v1551 = vpop.f32.mrb[0].mxu0
      %v1552 = vpop.f32.mrb[0].mxu0
      %v1553 = vadd.f32 0.0, %v1552
      %v1554 = vpop.f32.mrb[0].mxu0
      %1555 = vmatprep.mubr.bf16.mxu0 %v1354
      %1556 = vmatmul.mubr.bf16.gmra.mrb[0].mxu0 %v1353
      %v1557 = vpop.f32.mrb[0].mxu0
      %v1558 = vadd.f32 0.0, %v1557
      %v1559 = vpop.f32.mrb[0].mxu0
      %v1560 = vpop.f32.mrb[0].mxu0
      %v1561 = vadd.f32 0.0, %v1560
      %v1562 = vpop.f32.mrb[0].mxu0
      %1563 = vdwg.mxu0
      %v1564 = vrcp.pop %v1229
      %v1565 = vrcp.pop %v1232
      %v1566 = vrcp.pop %v1235
      %v1567 = vrcp.pop %v1238
      %v1568 = vrcp.pop %v1241
      %v1569 = vrcp.pop %v1244
      %v1570 = vrcp.pop %v1247
      %v1571 = vrcp.pop %v1250
      %v1572 = vrcp.pop %v1253
      %v1573 = vrcp.pop %v1256
      %v1574 = vrcp.pop %v1259
      %v1575 = vrcp.pop %v1262
      %v1576 = vrcp.pop %v1265
      %v1577 = vrcp.pop %v1268
      %v1578 = vrcp.pop %v1271
      %v1579 = vrcp.pop %v1274
      %v1580 = vrcp.pop %v1277
      %v1581 = vrcp.pop %v1280
      %v1582 = vrcp.pop %v1283
      %v1583 = vrcp.pop %v1286
      %v1584 = vrcp.pop %v1289
      %v1585 = vrcp.pop %v1292
      %v1586 = vrcp.pop %v1295
      %v1587 = vrcp.pop %v1298
      %v1588 = vrcp.pop %v1301
      %v1589 = vrcp.pop %v1304
      %v1590 = vrcp.pop %v1307
      %v1591 = vrcp.pop %v1310
      %v1592 = vrcp.pop %v1313
      %v1593 = vrcp.pop %v1316
      %v1594 = vrcp.pop %v1319
      %v1595 = vrcp.pop %v1322
      %v1596 = vmul.f32 %v1438, %v1564
      %v1597 = vmul.f32 %v1441, %v1565
      %v1598 = vmul.f32 %v1446, %v1566
      %v1599 = vmul.f32 %v1449, %v1567
      %v1600 = vmul.f32 %v1454, %v1568
      %v1601 = vmul.f32 %v1457, %v1569
      %v1602 = vmul.f32 %v1462, %v1570
      %v1603 = vmul.f32 %v1465, %v1571
      %v1604 = vmul.f32 %v1470, %v1572
      %v1605 = vmul.f32 %v1473, %v1573
      %v1606 = vmul.f32 %v1478, %v1574
      %v1607 = vmul.f32 %v1481, %v1575
      %v1608 = vmul.f32 %v1486, %v1576
      %v1609 = vmul.f32 %v1489, %v1577
      %v1610 = vmul.f32 %v1494, %v1578
      %v1611 = vmul.f32 %v1497, %v1579
      %v1612 = vmul.f32 %v1502, %v1580
      %v1613 = vmul.f32 %v1505, %v1581
      %v1614 = vmul.f32 %v1510, %v1582
      %v1615 = vmul.f32 %v1513, %v1583
      %v1616 = vmul.f32 %v1518, %v1584
      %v1617 = vmul.f32 %v1521, %v1585
      %v1618 = vmul.f32 %v1526, %v1586
      %v1619 = vmul.f32 %v1529, %v1587
      %v1620 = vmul.f32 %v1534, %v1588
      %v1621 = vmul.f32 %v1537, %v1589
      %v1622 = vmul.f32 %v1542, %v1590
      %v1623 = vmul.f32 %v1545, %v1591
      %v1624 = vmul.f32 %v1550, %v1592
      %v1625 = vmul.f32 %v1553, %v1593
      %v1626 = vmul.f32 %v1558, %v1594
      %v1627 = vmul.f32 %v1561, %v1595
      %1644 = vrot.lane.b32.xlu0 %v569, 124
      %v1645 = vpop.permute.xlu0 %1644
      %1646 = vrot.lane.b32.xlu0 %v570, 124
      %v1647 = vpop.permute.xlu0 %1646
      %1648 = vrot.lane.b32.xlu0 %v571, 124
      %v1649 = vpop.permute.xlu0 %1648
      %1650 = vrot.lane.b32.xlu0 %v572, 124
      %v1651 = vpop.permute.xlu0 %1650
      %1652 = vrot.lane.b32.xlu0 %v573, 124
      %v1653 = vpop.permute.xlu0 %1652
      %1654 = vrot.lane.b32.xlu0 %v574, 124
      %v1655 = vpop.permute.xlu0 %1654
      %1656 = vrot.lane.b32.xlu0 %v575, 124
      %v1657 = vpop.permute.xlu0 %1656
      %1658 = vrot.lane.b32.xlu0 %v576, 124
      %v1659 = vpop.permute.xlu0 %1658
      %1660 = vrot.lane.b32.xlu0 %v577, 124
      %v1661 = vpop.permute.xlu0 %1660
      %1662 = vrot.lane.b32.xlu0 %v578, 124
      %v1663 = vpop.permute.xlu0 %1662
      %1664 = vrot.lane.b32.xlu0 %v579, 124
      %v1665 = vpop.permute.xlu0 %1664
      %1666 = vrot.lane.b32.xlu0 %v580, 124
      %v1667 = vpop.permute.xlu0 %1666
      %1668 = vrot.lane.b32.xlu0 %v581, 124
      %v1669 = vpop.permute.xlu0 %1668
      %1670 = vrot.lane.b32.xlu0 %v582, 124
      %v1671 = vpop.permute.xlu0 %1670
      %1672 = vrot.lane.b32.xlu0 %v583, 124
      %v1673 = vpop.permute.xlu0 %1672
      %1674 = vrot.lane.b32.xlu0 %v584, 124
      %v1675 = vpop.permute.xlu0 %1674
      %1676 = vrot.lane.b32.xlu0 %v585, 92
      %v1677 = vpop.permute.xlu0 %1676
      %1678 = vrot.lane.b32.xlu0 %v586, 92
      %v1679 = vpop.permute.xlu0 %1678
      %1680 = vrot.lane.b32.xlu0 %v587, 92
      %v1681 = vpop.permute.xlu0 %1680
      %1682 = vrot.lane.b32.xlu0 %v588, 92
      %v1683 = vpop.permute.xlu0 %1682
      %1684 = vrot.lane.b32.xlu0 %v589, 92
      %v1685 = vpop.permute.xlu0 %1684
      %1686 = vrot.lane.b32.xlu0 %v590, 92
      %v1687 = vpop.permute.xlu0 %1686
      %1688 = vrot.lane.b32.xlu0 %v591, 92
      %v1689 = vpop.permute.xlu0 %1688
      %1690 = vrot.lane.b32.xlu0 %v592, 92
      %v1691 = vpop.permute.xlu0 %1690
      %1692 = vrot.lane.b32.xlu0 %v593, 92
      %v1693 = vpop.permute.xlu0 %1692
      %1694 = vrot.lane.b32.xlu0 %v594, 92
      %v1695 = vpop.permute.xlu0 %1694
      %1696 = vrot.lane.b32.xlu0 %v595, 92
      %v1697 = vpop.permute.xlu0 %1696
      %1698 = vrot.lane.b32.xlu0 %v596, 92
      %v1699 = vpop.permute.xlu0 %1698
      %1700 = vrot.lane.b32.xlu0 %v597, 92
      %v1701 = vpop.permute.xlu0 %1700
      %1702 = vrot.lane.b32.xlu0 %v598, 92
      %v1703 = vpop.permute.xlu0 %1702
      %1704 = vrot.lane.b32.xlu0 %v599, 92
      %v1705 = vpop.permute.xlu0 %1704
      %1706 = vrot.lane.b32.xlu0 %v600, 92
      %v1707 = vpop.permute.xlu0 %1706
      %v1709 = vsel %vm649, %v1645, 0
      %v1712 = vsel %vm649, %v1647, 0
      %v1715 = vsel %vm649, %v1649, 0
      %v1718 = vsel %vm649, %v1651, 0
      %v1721 = vsel %vm649, %v1653, 0
      %v1724 = vsel %vm649, %v1655, 0
      %v1727 = vsel %vm649, %v1657, 0
      %v1730 = vsel %vm649, %v1659, 0
      %v1733 = vsel %vm649, %v1661, 0
      %v1736 = vsel %vm649, %v1663, 0
      %v1739 = vsel %vm649, %v1665, 0
      %v1742 = vsel %vm649, %v1667, 0
      %v1745 = vsel %vm649, %v1669, 0
      %v1748 = vsel %vm649, %v1671, 0
      %v1751 = vsel %vm649, %v1673, 0
      %v1754 = vsel %vm649, %v1675, 0
      %v1757 = vsel %vm649, %v1677, 0
      %v1760 = vsel %vm649, %v1679, 0
      %v1763 = vsel %vm649, %v1681, 0
      %v1766 = vsel %vm649, %v1683, 0
      %v1769 = vsel %vm649, %v1685, 0
      %v1772 = vsel %vm649, %v1687, 0
      %v1775 = vsel %vm649, %v1689, 0
      %v1778 = vsel %vm649, %v1691, 0
      %v1781 = vsel %vm649, %v1693, 0
      %v1784 = vsel %vm649, %v1695, 0
      %v1787 = vsel %vm649, %v1697, 0
      %v1790 = vsel %vm649, %v1699, 0
      %v1793 = vsel %vm649, %v1701, 0
      %v1796 = vsel %vm649, %v1703, 0
      %v1799 = vsel %vm649, %v1705, 0
      %v1802 = vsel %vm649, %v1707, 0
      %1804 = vmatprep.subr.bf16.mxu0 0
      %1805 = vmatpush1.bf16.xpose.msra.mxu0 %v1757
      %1806 = vmatprep.subr.bf16.mxu0 0
      %1807 = vmatpush1.bf16.xpose.msra.mxu0 %v1760
      %1808 = vmatprep.subr.bf16.mxu0 0
      %1809 = vmatpush1.bf16.xpose.msra.mxu0 %v1763
      %1810 = vmatprep.subr.bf16.mxu0 0
      %1811 = vmatpush1.bf16.xpose.msra.mxu0 %v1766
      %1812 = vmatprep.subr.bf16.mxu0 0
      %1813 = vmatpush1.bf16.xpose.msra.mxu0 %v1769
      %1814 = vmatprep.subr.bf16.mxu0 0
      %1815 = vmatpush1.bf16.xpose.msra.mxu0 %v1772
      %1816 = vmatprep.subr.bf16.mxu0 0
      %1817 = vmatpush1.bf16.xpose.msra.mxu0 %v1775
      %1818 = vmatprep.subr.bf16.mxu0 0
      %1819 = vmatpush1.bf16.xpose.msra.mxu0 %v1778
      %1820 = vmatprep.subr.bf16.mxu0 0
      %1821 = vmatpush1.bf16.xpose.msra.mxu0 %v1781
      %1822 = vmatprep.subr.bf16.mxu0 0
      %1823 = vmatpush1.bf16.xpose.msra.mxu0 %v1784
      %1824 = vmatprep.subr.bf16.mxu0 0
      %1825 = vmatpush1.bf16.xpose.msra.mxu0 %v1787
      %1826 = vmatprep.subr.bf16.mxu0 0
      %1827 = vmatpush1.bf16.xpose.msra.mxu0 %v1790
      %1828 = vmatprep.subr.bf16.mxu0 0
      %1829 = vmatpush1.bf16.xpose.msra.mxu0 %v1793
      %1830 = vmatprep.subr.bf16.mxu0 0
      %1831 = vmatpush1.bf16.xpose.msra.mxu0 %v1796
      %1832 = vmatprep.subr.bf16.mxu0 0
      %1833 = vmatpush1.bf16.xpose.msra.mxu0 %v1799
      %1834 = vmatprep.subr.bf16.mxu0 0
      %1835 = vmatpush1.bf16.xpose.msra.mxu0 %v1802
      %1836 = vmatprep.mubr.bf16.mxu0 0
      %1837 = vmatmul.mubr.bf16.gmra.mrb[0].mxu0 %v1709
      %v1838 = vpop.f32.mrb[0].mxu0
      %v1839 = vadd.f32 0.0, %v1838
      %v1840 = vpop.f32.mrb[0].mxu0
      %v1841 = vadd.f32 0.0, %v1840
      %v1842 = vpop.f32.mrb[0].mxu0
      %v1843 = vadd.f32 0.0, %v1842
      %v1844 = vpop.f32.mrb[0].mxu0
      %v1845 = vadd.f32 0.0, %v1844
      %1846 = vmatprep.mubr.bf16.mxu0 0
      %1847 = vmatmul.mubr.bf16.gmra.mrb[0].mxu0 %v1712
      %v1848 = vpop.f32.mrb[0].mxu0
      %v1849 = vadd.f32 0.0, %v1848
      %v1850 = vpop.f32.mrb[0].mxu0
      %v1851 = vadd.f32 0.0, %v1850
      %v1852 = vpop.f32.mrb[0].mxu0
      %v1853 = vadd.f32 0.0, %v1852
      %v1854 = vpop.f32.mrb[0].mxu0
      %v1855 = vadd.f32 0.0, %v1854
      %1856 = vmatprep.mubr.bf16.mxu0 0
      %1857 = vmatmul.mubr.bf16.gmra.mrb[0].mxu0 %v1715
      %v1858 = vpop.f32.mrb[0].mxu0
      %v1859 = vadd.f32 0.0, %v1858
      %v1860 = vpop.f32.mrb[0].mxu0
      %v1861 = vadd.f32 0.0, %v1860
      %v1862 = vpop.f32.mrb[0].mxu0
      %v1863 = vadd.f32 0.0, %v1862
      %v1864 = vpop.f32.mrb[0].mxu0
      %v1865 = vadd.f32 0.0, %v1864
      %1866 = vmatprep.mubr.bf16.mxu0 0
      %1867 = vmatmul.mubr.bf16.gmra.mrb[0].mxu0 %v1718
      %v1868 = vpop.f32.mrb[0].mxu0
      %v1869 = vadd.f32 0.0, %v1868
      %v1870 = vpop.f32.mrb[0].mxu0
      %v1871 = vadd.f32 0.0, %v1870
      %v1872 = vpop.f32.mrb[0].mxu0
      %v1873 = vadd.f32 0.0, %v1872
      %v1874 = vpop.f32.mrb[0].mxu0
      %v1875 = vadd.f32 0.0, %v1874
      %1876 = vmatprep.mubr.bf16.mxu0 0
      %1877 = vmatmul.mubr.bf16.gmra.mrb[0].mxu0 %v1721
      %v1878 = vpop.f32.mrb[0].mxu0
      %v1879 = vadd.f32 0.0, %v1878
      %v1880 = vpop.f32.mrb[0].mxu0
      %v1881 = vadd.f32 0.0, %v1880
      %v1882 = vpop.f32.mrb[0].mxu0
      %v1883 = vadd.f32 0.0, %v1882
      %v1884 = vpop.f32.mrb[0].mxu0
      %v1885 = vadd.f32 0.0, %v1884
      %1886 = vmatprep.mubr.bf16.mxu0 0
      %1887 = vmatmul.mubr.bf16.gmra.mrb[0].mxu0 %v1724
      %v1888 = vpop.f32.mrb[0].mxu0
      %v1889 = vadd.f32 0.0, %v1888
      %v1890 = vpop.f32.mrb[0].mxu0
      %v1891 = vadd.f32 0.0, %v1890
      %v1892 = vpop.f32.mrb[0].mxu0
      %v1893 = vadd.f32 0.0, %v1892
      %v1894 = vpop.f32.mrb[0].mxu0
      %v1895 = vadd.f32 0.0, %v1894
      %1896 = vmatprep.mubr.bf16.mxu0 0
      %1897 = vmatmul.mubr.bf16.gmra.mrb[0].mxu0 %v1727
      %v1898 = vpop.f32.mrb[0].mxu0
      %v1899 = vadd.f32 0.0, %v1898
      %v1900 = vpop.f32.mrb[0].mxu0
      %v1901 = vadd.f32 0.0, %v1900
      %v1902 = vpop.f32.mrb[0].mxu0
      %v1903 = vadd.f32 0.0, %v1902
      %v1904 = vpop.f32.mrb[0].mxu0
      %v1905 = vadd.f32 0.0, %v1904
      %1906 = vmatprep.mubr.bf16.mxu0 0
      %1907 = vmatmul.mubr.bf16.gmra.mrb[0].mxu0 %v1730
      %v1908 = vpop.f32.mrb[0].mxu0
      %v1909 = vadd.f32 0.0, %v1908
      %v1910 = vpop.f32.mrb[0].mxu0
      %v1911 = vadd.f32 0.0, %v1910
      %v1912 = vpop.f32.mrb[0].mxu0
      %v1913 = vadd.f32 0.0, %v1912
      %v1914 = vpop.f32.mrb[0].mxu0
      %v1915 = vadd.f32 0.0, %v1914
      %1916 = vmatprep.mubr.bf16.mxu0 0
      %1917 = vmatmul.mubr.bf16.gmra.mrb[0].mxu0 %v1733
      %v1918 = vpop.f32.mrb[0].mxu0
      %v1919 = vadd.f32 0.0, %v1918
      %v1920 = vpop.f32.mrb[0].mxu0
      %v1921 = vadd.f32 0.0, %v1920
      %v1922 = vpop.f32.mrb[0].mxu0
      %v1923 = vadd.f32 0.0, %v1922
      %v1924 = vpop.f32.mrb[0].mxu0
      %v1925 = vadd.f32 0.0, %v1924
      %1926 = vmatprep.mubr.bf16.mxu0 0
      %1927 = vmatmul.mubr.bf16.gmra.mrb[0].mxu0 %v1736
      %v1928 = vpop.f32.mrb[0].mxu0
      %v1929 = vadd.f32 0.0, %v1928
      %v1930 = vpop.f32.mrb[0].mxu0
      %v1931 = vadd.f32 0.0, %v1930
      %v1932 = vpop.f32.mrb[0].mxu0
      %v1933 = vadd.f32 0.0, %v1932
      %v1934 = vpop.f32.mrb[0].mxu0
      %v1935 = vadd.f32 0.0, %v1934
      %1936 = vmatprep.mubr.bf16.mxu0 0
      %1937 = vmatmul.mubr.bf16.gmra.mrb[0].mxu0 %v1739
      %v1938 = vpop.f32.mrb[0].mxu0
      %v1939 = vadd.f32 0.0, %v1938
      %v1940 = vpop.f32.mrb[0].mxu0
      %v1941 = vadd.f32 0.0, %v1940
      %v1942 = vpop.f32.mrb[0].mxu0
      %v1943 = vadd.f32 0.0, %v1942
      %v1944 = vpop.f32.mrb[0].mxu0
      %v1945 = vadd.f32 0.0, %v1944
      %1946 = vmatprep.mubr.bf16.mxu0 0
      %1947 = vmatmul.mubr.bf16.gmra.mrb[0].mxu0 %v1742
      %v1948 = vpop.f32.mrb[0].mxu0
      %v1949 = vadd.f32 0.0, %v1948
      %v1950 = vpop.f32.mrb[0].mxu0
      %v1951 = vadd.f32 0.0, %v1950
      %v1952 = vpop.f32.mrb[0].mxu0
      %v1953 = vadd.f32 0.0, %v1952
      %v1954 = vpop.f32.mrb[0].mxu0
      %v1955 = vadd.f32 0.0, %v1954
      %1956 = vmatprep.mubr.bf16.mxu0 0
      %1957 = vmatmul.mubr.bf16.gmra.mrb[0].mxu0 %v1745
      %v1958 = vpop.f32.mrb[0].mxu0
      %v1959 = vadd.f32 0.0, %v1958
      %v1960 = vpop.f32.mrb[0].mxu0
      %v1961 = vadd.f32 0.0, %v1960
      %v1962 = vpop.f32.mrb[0].mxu0
      %v1963 = vadd.f32 0.0, %v1962
      %v1964 = vpop.f32.mrb[0].mxu0
      %v1965 = vadd.f32 0.0, %v1964
      %1966 = vmatprep.mubr.bf16.mxu0 0
      %1967 = vmatmul.mubr.bf16.gmra.mrb[0].mxu0 %v1748
      %v1968 = vpop.f32.mrb[0].mxu0
      %v1969 = vadd.f32 0.0, %v1968
      %v1970 = vpop.f32.mrb[0].mxu0
      %v1971 = vadd.f32 0.0, %v1970
      %v1972 = vpop.f32.mrb[0].mxu0
      %v1973 = vadd.f32 0.0, %v1972
      %v1974 = vpop.f32.mrb[0].mxu0
      %v1975 = vadd.f32 0.0, %v1974
      %1976 = vmatprep.mubr.bf16.mxu0 0
      %1977 = vmatmul.mubr.bf16.gmra.mrb[0].mxu0 %v1751
      %v1978 = vpop.f32.mrb[0].mxu0
      %v1979 = vadd.f32 0.0, %v1978
      %v1980 = vpop.f32.mrb[0].mxu0
      %v1981 = vadd.f32 0.0, %v1980
      %v1982 = vpop.f32.mrb[0].mxu0
      %v1983 = vadd.f32 0.0, %v1982
      %v1984 = vpop.f32.mrb[0].mxu0
      %v1985 = vadd.f32 0.0, %v1984
      %1986 = vmatprep.mubr.bf16.mxu0 0
      %1987 = vmatmul.mubr.bf16.gmra.mrb[0].mxu0 %v1754
      %v1988 = vpop.f32.mrb[0].mxu0
      %v1989 = vadd.f32 0.0, %v1988
      %v1990 = vpop.f32.mrb[0].mxu0
      %v1991 = vadd.f32 0.0, %v1990
      %v1992 = vpop.f32.mrb[0].mxu0
      %v1993 = vadd.f32 0.0, %v1992
      %v1994 = vpop.f32.mrb[0].mxu0
      %v1995 = vadd.f32 0.0, %v1994
      %1996 = vdwg.mxu0
      %v1997 = vmax.f32 %v1839, %v1841
      %1998 = vmax.xlane.f32.xlu0 %v1997
      %v1999 = vpop.xlane.xlu0 %1998
      %v2000 = vmax.f32 %v1843, %v1845
      %2001 = vmax.xlane.f32.xlu0 %v2000
      %v2002 = vpop.xlane.xlu0 %2001
      %v2003 = vmax.f32 %v1849, %v1851
      %2004 = vmax.xlane.f32.xlu0 %v2003
      %v2005 = vpop.xlane.xlu0 %2004
      %v2006 = vmax.f32 %v1853, %v1855
      %2007 = vmax.xlane.f32.xlu0 %v2006
      %v2008 = vpop.xlane.xlu0 %2007
      %v2009 = vmax.f32 %v1859, %v1861
      %2010 = vmax.xlane.f32.xlu0 %v2009
      %v2011 = vpop.xlane.xlu0 %2010
      %v2012 = vmax.f32 %v1863, %v1865
      %2013 = vmax.xlane.f32.xlu0 %v2012
      %v2014 = vpop.xlane.xlu0 %2013
      %v2015 = vmax.f32 %v1869, %v1871
      %2016 = vmax.xlane.f32.xlu0 %v2015
      %v2017 = vpop.xlane.xlu0 %2016
      %v2018 = vmax.f32 %v1873, %v1875
      %2019 = vmax.xlane.f32.xlu0 %v2018
      %v2020 = vpop.xlane.xlu0 %2019
      %v2021 = vmax.f32 %v1879, %v1881
      %2022 = vmax.xlane.f32.xlu0 %v2021
      %v2023 = vpop.xlane.xlu0 %2022
      %v2024 = vmax.f32 %v1883, %v1885
      %2025 = vmax.xlane.f32.xlu0 %v2024
      %v2026 = vpop.xlane.xlu0 %2025
      %v2027 = vmax.f32 %v1889, %v1891
      %2028 = vmax.xlane.f32.xlu0 %v2027
      %v2029 = vpop.xlane.xlu0 %2028
      %v2030 = vmax.f32 %v1893, %v1895
      %2031 = vmax.xlane.f32.xlu0 %v2030
      %v2032 = vpop.xlane.xlu0 %2031
      %v2033 = vmax.f32 %v1899, %v1901
      %2034 = vmax.xlane.f32.xlu0 %v2033
      %v2035 = vpop.xlane.xlu0 %2034
      %v2036 = vmax.f32 %v1903, %v1905
      %2037 = vmax.xlane.f32.xlu0 %v2036
      %v2038 = vpop.xlane.xlu0 %2037
      %v2039 = vmax.f32 %v1909, %v1911
      %2040 = vmax.xlane.f32.xlu0 %v2039
      %v2041 = vpop.xlane.xlu0 %2040
      %v2042 = vmax.f32 %v1913, %v1915
      %2043 = vmax.xlane.f32.xlu0 %v2042
      %v2044 = vpop.xlane.xlu0 %2043
      %v2045 = vmax.f32 %v1919, %v1921
      %2046 = vmax.xlane.f32.xlu0 %v2045
      %v2047 = vpop.xlane.xlu0 %2046
      %v2048 = vmax.f32 %v1923, %v1925
      %2049 = vmax.xlane.f32.xlu0 %v2048
      %v2050 = vpop.xlane.xlu0 %2049
      %v2051 = vmax.f32 %v1929, %v1931
      %2052 = vmax.xlane.f32.xlu0 %v2051
      %v2053 = vpop.xlane.xlu0 %2052
      %v2054 = vmax.f32 %v1933, %v1935
      %2055 = vmax.xlane.f32.xlu0 %v2054
      %v2056 = vpop.xlane.xlu0 %2055
      %v2057 = vmax.f32 %v1939, %v1941
      %2058 = vmax.xlane.f32.xlu0 %v2057
      %v2059 = vpop.xlane.xlu0 %2058
      %v2060 = vmax.f32 %v1943, %v1945
      %2061 = vmax.xlane.f32.xlu0 %v2060
      %v2062 = vpop.xlane.xlu0 %2061
      %v2063 = vmax.f32 %v1949, %v1951
      %2064 = vmax.xlane.f32.xlu0 %v2063
      %v2065 = vpop.xlane.xlu0 %2064
      %v2066 = vmax.f32 %v1953, %v1955
      %2067 = vmax.xlane.f32.xlu0 %v2066
      %v2068 = vpop.xlane.xlu0 %2067
      %v2069 = vmax.f32 %v1959, %v1961
      %2070 = vmax.xlane.f32.xlu0 %v2069
      %v2071 = vpop.xlane.xlu0 %2070
      %v2072 = vmax.f32 %v1963, %v1965
      %2073 = vmax.xlane.f32.xlu0 %v2072
      %v2074 = vpop.xlane.xlu0 %2073
      %v2075 = vmax.f32 %v1969, %v1971
      %2076 = vmax.xlane.f32.xlu0 %v2075
      %v2077 = vpop.xlane.xlu0 %2076
      %v2078 = vmax.f32 %v1973, %v1975
      %2079 = vmax.xlane.f32.xlu0 %v2078
      %v2080 = vpop.xlane.xlu0 %2079
      %v2081 = vmax.f32 %v1979, %v1981
      %2082 = vmax.xlane.f32.xlu0 %v2081
      %v2083 = vpop.xlane.xlu0 %2082
      %v2084 = vmax.f32 %v1983, %v1985
      %2085 = vmax.xlane.f32.xlu0 %v2084
      %v2086 = vpop.xlane.xlu0 %2085
      %v2087 = vmax.f32 %v1989, %v1991
      %2088 = vmax.xlane.f32.xlu0 %v2087
      %v2089 = vpop.xlane.xlu0 %2088
      %v2090 = vmax.f32 %v1993, %v1995
      %2091 = vmax.xlane.f32.xlu0 %v2090
      %v2092 = vpop.xlane.xlu0 %2091
      %v2093 = vsub.f32 %v1839, %v1999
      %v2094 = vsub.f32 %v1841, %v1999
      %v2095 = vsub.f32 %v1843, %v2002
      %v2096 = vsub.f32 %v1845, %v2002
      %v2097 = vsub.f32 %v1849, %v2005
      %v2098 = vsub.f32 %v1851, %v2005
      %v2099 = vsub.f32 %v1853, %v2008
      %v2100 = vsub.f32 %v1855, %v2008
      %v2101 = vsub.f32 %v1859, %v2011
      %v2102 = vsub.f32 %v1861, %v2011
      %v2103 = vsub.f32 %v1863, %v2014
      %v2104 = vsub.f32 %v1865, %v2014
      %v2105 = vsub.f32 %v1869, %v2017
      %v2106 = vsub.f32 %v1871, %v2017
      %v2107 = vsub.f32 %v1873, %v2020
      %v2108 = vsub.f32 %v1875, %v2020
      %v2109 = vsub.f32 %v1879, %v2023
      %v2110 = vsub.f32 %v1881, %v2023
      %v2111 = vsub.f32 %v1883, %v2026
      %v2112 = vsub.f32 %v1885, %v2026
      %v2113 = vsub.f32 %v1889, %v2029
      %v2114 = vsub.f32 %v1891, %v2029
      %v2115 = vsub.f32 %v1893, %v2032
      %v2116 = vsub.f32 %v1895, %v2032
      %v2117 = vsub.f32 %v1899, %v2035
      %v2118 = vsub.f32 %v1901, %v2035
      %v2119 = vsub.f32 %v1903, %v2038
      %v2120 = vsub.f32 %v1905, %v2038
      %v2121 = vsub.f32 %v1909, %v2041
      %v2122 = vsub.f32 %v1911, %v2041
      %v2123 = vsub.f32 %v1913, %v2044
      %v2124 = vsub.f32 %v1915, %v2044
      %v2125 = vsub.f32 %v1919, %v2047
      %v2126 = vsub.f32 %v1921, %v2047
      %v2127 = vsub.f32 %v1923, %v2050
      %v2128 = vsub.f32 %v1925, %v2050
      %v2129 = vsub.f32 %v1929, %v2053
      %v2130 = vsub.f32 %v1931, %v2053
      %v2131 = vsub.f32 %v1933, %v2056
      %v2132 = vsub.f32 %v1935, %v2056
      %v2133 = vsub.f32 %v1939, %v2059
      %v2134 = vsub.f32 %v1941, %v2059
      %v2135 = vsub.f32 %v1943, %v2062
      %v2136 = vsub.f32 %v1945, %v2062
      %v2137 = vsub.f32 %v1949, %v2065
      %v2138 = vsub.f32 %v1951, %v2065
      %v2139 = vsub.f32 %v1953, %v2068
      %v2140 = vsub.f32 %v1955, %v2068
      %v2141 = vsub.f32 %v1959, %v2071
      %v2142 = vsub.f32 %v1961, %v2071
      %v2143 = vsub.f32 %v1963, %v2074
      %v2144 = vsub.f32 %v1965, %v2074
      %v2145 = vsub.f32 %v1969, %v2077
      %v2146 = vsub.f32 %v1971, %v2077
      %v2147 = vsub.f32 %v1973, %v2080
      %v2148 = vsub.f32 %v1975, %v2080
      %v2149 = vsub.f32 %v1979, %v2083
      %v2150 = vsub.f32 %v1981, %v2083
      %v2151 = vsub.f32 %v1983, %v2086
      %v2152 = vsub.f32 %v1985, %v2086
      %v2153 = vsub.f32 %v1989, %v2089
      %v2154 = vsub.f32 %v1991, %v2089
      %v2155 = vsub.f32 %v1993, %v2092
      %v2156 = vsub.f32 %v1995, %v2092
      %v2157 = vmul.f32 %v2093, 1.442695
      %v2158 = vpow.pop %v2157
      %v2159 = vmul.f32 %v2094, 1.442695
      %v2160 = vpow.pop %v2159
      %v2161 = vmul.f32 %v2095, 1.442695
      %v2162 = vpow.pop %v2161
      %v2163 = vmul.f32 %v2096, 1.442695
      %v2164 = vpow.pop %v2163
      %v2165 = vmul.f32 %v2097, 1.442695
      %v2166 = vpow.pop %v2165
      %v2167 = vmul.f32 %v2098, 1.442695
      %v2168 = vpow.pop %v2167
      %v2169 = vmul.f32 %v2099, 1.442695
      %v2170 = vpow.pop %v2169
      %v2171 = vmul.f32 %v2100, 1.442695
      %v2172 = vpow.pop %v2171
      %v2173 = vmul.f32 %v2101, 1.442695
      %v2174 = vpow.pop %v2173
      %v2175 = vmul.f32 %v2102, 1.442695
      %v2176 = vpow.pop %v2175
      %v2177 = vmul.f32 %v2103, 1.442695
      %v2178 = vpow.pop %v2177
      %v2179 = vmul.f32 %v2104, 1.442695
      %v2180 = vpow.pop %v2179
      %v2181 = vmul.f32 %v2105, 1.442695
      %v2182 = vpow.pop %v2181
      %v2183 = vmul.f32 %v2106, 1.442695
      %v2184 = vpow.pop %v2183
      %v2185 = vmul.f32 %v2107, 1.442695
      %v2186 = vpow.pop %v2185
      %v2187 = vmul.f32 %v2108, 1.442695
      %v2188 = vpow.pop %v2187
      %v2189 = vmul.f32 %v2109, 1.442695
      %v2190 = vpow.pop %v2189
      %v2191 = vmul.f32 %v2110, 1.442695
      %v2192 = vpow.pop %v2191
      %v2193 = vmul.f32 %v2111, 1.442695
      %v2194 = vpow.pop %v2193
      %v2195 = vmul.f32 %v2112, 1.442695
      %v2196 = vpow.pop %v2195
      %v2197 = vmul.f32 %v2113, 1.442695
      %v2198 = vpow.pop %v2197
      %v2199 = vmul.f32 %v2114, 1.442695
      %v2200 = vpow.pop %v2199
      %v2201 = vmul.f32 %v2115, 1.442695
      %v2202 = vpow.pop %v2201
      %v2203 = vmul.f32 %v2116, 1.442695
      %v2204 = vpow.pop %v2203
      %v2205 = vmul.f32 %v2117, 1.442695
      %v2206 = vpow.pop %v2205
      %v2207 = vmul.f32 %v2118, 1.442695
      %v2208 = vpow.pop %v2207
      %v2209 = vmul.f32 %v2119, 1.442695
      %v2210 = vpow.pop %v2209
      %v2211 = vmul.f32 %v2120, 1.442695
      %v2212 = vpow.pop %v2211
      %v2213 = vmul.f32 %v2121, 1.442695
      %v2214 = vpow.pop %v2213
      %v2215 = vmul.f32 %v2122, 1.442695
      %v2216 = vpow.pop %v2215
      %v2217 = vmul.f32 %v2123, 1.442695
      %v2218 = vpow.pop %v2217
      %v2219 = vmul.f32 %v2124, 1.442695
      %v2220 = vpow.pop %v2219
      %v2221 = vmul.f32 %v2125, 1.442695
      %v2222 = vpow.pop %v2221
      %v2223 = vmul.f32 %v2126, 1.442695
      %v2224 = vpow.pop %v2223
      %v2225 = vmul.f32 %v2127, 1.442695
      %v2226 = vpow.pop %v2225
      %v2227 = vmul.f32 %v2128, 1.442695
      %v2228 = vpow.pop %v2227
      %v2229 = vmul.f32 %v2129, 1.442695
      %v2230 = vpow.pop %v2229
      %v2231 = vmul.f32 %v2130, 1.442695
      %v2232 = vpow.pop %v2231
      %v2233 = vmul.f32 %v2131, 1.442695
      %v2234 = vpow.pop %v2233
      %v2235 = vmul.f32 %v2132, 1.442695
      %v2236 = vpow.pop %v2235
      %v2237 = vmul.f32 %v2133, 1.442695
      %v2238 = vpow.pop %v2237
      %v2239 = vmul.f32 %v2134, 1.442695
      %v2240 = vpow.pop %v2239
      %v2241 = vmul.f32 %v2135, 1.442695
      %v2242 = vpow.pop %v2241
      %v2243 = vmul.f32 %v2136, 1.442695
      %v2244 = vpow.pop %v2243
      %v2245 = vmul.f32 %v2137, 1.442695
      %v2246 = vpow.pop %v2245
      %v2247 = vmul.f32 %v2138, 1.442695
      %v2248 = vpow.pop %v2247
      %v2249 = vmul.f32 %v2139, 1.442695
      %v2250 = vpow.pop %v2249
      %v2251 = vmul.f32 %v2140, 1.442695
      %v2252 = vpow.pop %v2251
      %v2253 = vmul.f32 %v2141, 1.442695
      %v2254 = vpow.pop %v2253
      %v2255 = vmul.f32 %v2142, 1.442695
      %v2256 = vpow.pop %v2255
      %v2257 = vmul.f32 %v2143, 1.442695
      %v2258 = vpow.pop %v2257
      %v2259 = vmul.f32 %v2144, 1.442695
      %v2260 = vpow.pop %v2259
      %v2261 = vmul.f32 %v2145, 1.442695
      %v2262 = vpow.pop %v2261
      %v2263 = vmul.f32 %v2146, 1.442695
      %v2264 = vpow.pop %v2263
      %v2265 = vmul.f32 %v2147, 1.442695
      %v2266 = vpow.pop %v2265
      %v2267 = vmul.f32 %v2148, 1.442695
      %v2268 = vpow.pop %v2267
      %v2269 = vmul.f32 %v2149, 1.442695
      %v2270 = vpow.pop %v2269
      %v2271 = vmul.f32 %v2150, 1.442695
      %v2272 = vpow.pop %v2271
      %v2273 = vmul.f32 %v2151, 1.442695
      %v2274 = vpow.pop %v2273
      %v2275 = vmul.f32 %v2152, 1.442695
      %v2276 = vpow.pop %v2275
      %v2277 = vmul.f32 %v2153, 1.442695
      %v2278 = vpow.pop %v2277
      %v2279 = vmul.f32 %v2154, 1.442695
      %v2280 = vpow.pop %v2279
      %v2281 = vmul.f32 %v2155, 1.442695
      %v2282 = vpow.pop %v2281
      %v2283 = vmul.f32 %v2156, 1.442695
      %v2284 = vpow.pop %v2283
      %v2285 = vadd.f32 %v2158, %v2160
      %2286 = vadd.xlane.f32.xlu0 %v2285
      %v2287 = vpop.xlane.xlu0 %2286
      %v2288 = vadd.f32 %v2162, %v2164
      %2289 = vadd.xlane.f32.xlu0 %v2288
      %v2290 = vpop.xlane.xlu0 %2289
      %v2291 = vadd.f32 %v2166, %v2168
      %2292 = vadd.xlane.f32.xlu0 %v2291
      %v2293 = vpop.xlane.xlu0 %2292
      %v2294 = vadd.f32 %v2170, %v2172
      %2295 = vadd.xlane.f32.xlu0 %v2294
      %v2296 = vpop.xlane.xlu0 %2295
      %v2297 = vadd.f32 %v2174, %v2176
      %2298 = vadd.xlane.f32.xlu0 %v2297
      %v2299 = vpop.xlane.xlu0 %2298
      %v2300 = vadd.f32 %v2178, %v2180
      %2301 = vadd.xlane.f32.xlu0 %v2300
      %v2302 = vpop.xlane.xlu0 %2301
      %v2303 = vadd.f32 %v2182, %v2184
      %2304 = vadd.xlane.f32.xlu0 %v2303
      %v2305 = vpop.xlane.xlu0 %2304
      %v2306 = vadd.f32 %v2186, %v2188
      %2307 = vadd.xlane.f32.xlu0 %v2306
      %v2308 = vpop.xlane.xlu0 %2307
      %v2309 = vadd.f32 %v2190, %v2192
      %2310 = vadd.xlane.f32.xlu0 %v2309
      %v2311 = vpop.xlane.xlu0 %2310
      %v2312 = vadd.f32 %v2194, %v2196
      %2313 = vadd.xlane.f32.xlu0 %v2312
      %v2314 = vpop.xlane.xlu0 %2313
      %v2315 = vadd.f32 %v2198, %v2200
      %2316 = vadd.xlane.f32.xlu0 %v2315
      %v2317 = vpop.xlane.xlu0 %2316
      %v2318 = vadd.f32 %v2202, %v2204
      %2319 = vadd.xlane.f32.xlu0 %v2318
      %v2320 = vpop.xlane.xlu0 %2319
      %v2321 = vadd.f32 %v2206, %v2208
      %2322 = vadd.xlane.f32.xlu0 %v2321
      %v2323 = vpop.xlane.xlu0 %2322
      %v2324 = vadd.f32 %v2210, %v2212
      %2325 = vadd.xlane.f32.xlu0 %v2324
      %v2326 = vpop.xlane.xlu0 %2325
      %v2327 = vadd.f32 %v2214, %v2216
      %2328 = vadd.xlane.f32.xlu0 %v2327
      %v2329 = vpop.xlane.xlu0 %2328
      %v2330 = vadd.f32 %v2218, %v2220
      %2331 = vadd.xlane.f32.xlu0 %v2330
      %v2332 = vpop.xlane.xlu0 %2331
      %v2333 = vadd.f32 %v2222, %v2224
      %2334 = vadd.xlane.f32.xlu0 %v2333
      %v2335 = vpop.xlane.xlu0 %2334
      %v2336 = vadd.f32 %v2226, %v2228
      %2337 = vadd.xlane.f32.xlu0 %v2336
      %v2338 = vpop.xlane.xlu0 %2337
      %v2339 = vadd.f32 %v2230, %v2232
      %2340 = vadd.xlane.f32.xlu0 %v2339
      %v2341 = vpop.xlane.xlu0 %2340
      %v2342 = vadd.f32 %v2234, %v2236
      %2343 = vadd.xlane.f32.xlu0 %v2342
      %v2344 = vpop.xlane.xlu0 %2343
      %v2345 = vadd.f32 %v2238, %v2240
      %2346 = vadd.xlane.f32.xlu0 %v2345
      %v2347 = vpop.xlane.xlu0 %2346
      %v2348 = vadd.f32 %v2242, %v2244
      %2349 = vadd.xlane.f32.xlu0 %v2348
      %v2350 = vpop.xlane.xlu0 %2349
      %v2351 = vadd.f32 %v2246, %v2248
      %2352 = vadd.xlane.f32.xlu0 %v2351
      %v2353 = vpop.xlane.xlu0 %2352
      %v2354 = vadd.f32 %v2250, %v2252
      %2355 = vadd.xlane.f32.xlu0 %v2354
      %v2356 = vpop.xlane.xlu0 %2355
      %v2357 = vadd.f32 %v2254, %v2256
      %2358 = vadd.xlane.f32.xlu0 %v2357
      %v2359 = vpop.xlane.xlu0 %2358
      %v2360 = vadd.f32 %v2258, %v2260
      %2361 = vadd.xlane.f32.xlu0 %v2360
      %v2362 = vpop.xlane.xlu0 %2361
      %v2363 = vadd.f32 %v2262, %v2264
      %2364 = vadd.xlane.f32.xlu0 %v2363
      %v2365 = vpop.xlane.xlu0 %2364
      %v2366 = vadd.f32 %v2266, %v2268
      %2367 = vadd.xlane.f32.xlu0 %v2366
      %v2368 = vpop.xlane.xlu0 %2367
      %v2369 = vadd.f32 %v2270, %v2272
      %2370 = vadd.xlane.f32.xlu0 %v2369
      %v2371 = vpop.xlane.xlu0 %2370
      %v2372 = vadd.f32 %v2274, %v2276
      %2373 = vadd.xlane.f32.xlu0 %v2372
      %v2374 = vpop.xlane.xlu0 %2373
      %v2375 = vadd.f32 %v2278, %v2280
      %2376 = vadd.xlane.f32.xlu0 %v2375
      %v2377 = vpop.xlane.xlu0 %2376
      %v2378 = vadd.f32 %v2282, %v2284
      %2379 = vadd.xlane.f32.xlu0 %v2378
      %v2380 = vpop.xlane.xlu0 %2379
      %v2381 = vpack.c.bf16 %v2162, %v2158
      %v2382 = vpack.c.bf16 %v2164, %v2160
      %v2383 = vpack.c.bf16 %v2170, %v2166
      %v2384 = vpack.c.bf16 %v2172, %v2168
      %v2385 = vpack.c.bf16 %v2178, %v2174
      %v2386 = vpack.c.bf16 %v2180, %v2176
      %v2387 = vpack.c.bf16 %v2186, %v2182
      %v2388 = vpack.c.bf16 %v2188, %v2184
      %v2389 = vpack.c.bf16 %v2194, %v2190
      %v2390 = vpack.c.bf16 %v2196, %v2192
      %v2391 = vpack.c.bf16 %v2202, %v2198
      %v2392 = vpack.c.bf16 %v2204, %v2200
      %v2393 = vpack.c.bf16 %v2210, %v2206
      %v2394 = vpack.c.bf16 %v2212, %v2208
      %v2395 = vpack.c.bf16 %v2218, %v2214
      %v2396 = vpack.c.bf16 %v2220, %v2216
      %v2397 = vpack.c.bf16 %v2226, %v2222
      %v2398 = vpack.c.bf16 %v2228, %v2224
      %v2399 = vpack.c.bf16 %v2234, %v2230
      %v2400 = vpack.c.bf16 %v2236, %v2232
      %v2401 = vpack.c.bf16 %v2242, %v2238
      %v2402 = vpack.c.bf16 %v2244, %v2240
      %v2403 = vpack.c.bf16 %v2250, %v2246
      %v2404 = vpack.c.bf16 %v2252, %v2248
      %v2405 = vpack.c.bf16 %v2258, %v2254
      %v2406 = vpack.c.bf16 %v2260, %v2256
      %v2407 = vpack.c.bf16 %v2266, %v2262
      %v2408 = vpack.c.bf16 %v2268, %v2264
      %v2409 = vpack.c.bf16 %v2274, %v2270
      %v2410 = vpack.c.bf16 %v2276, %v2272
      %v2411 = vpack.c.bf16 %v2282, %v2278
      %v2412 = vpack.c.bf16 %v2284, %v2280
      %2413 = vrot.lane.b32.xlu0 %v585, 60
      %v2414 = vpop.permute.xlu0 %2413
      %2415 = vrot.lane.b32.xlu0 %v586, 60
      %v2416 = vpop.permute.xlu0 %2415
      %2417 = vrot.lane.b32.xlu0 %v587, 60
      %v2418 = vpop.permute.xlu0 %2417
      %2419 = vrot.lane.b32.xlu0 %v588, 60
      %v2420 = vpop.permute.xlu0 %2419
      %2421 = vrot.lane.b32.xlu0 %v589, 60
      %v2422 = vpop.permute.xlu0 %2421
      %2423 = vrot.lane.b32.xlu0 %v590, 60
      %v2424 = vpop.permute.xlu0 %2423
      %2425 = vrot.lane.b32.xlu0 %v591, 60
      %v2426 = vpop.permute.xlu0 %2425
      %2427 = vrot.lane.b32.xlu0 %v592, 60
      %v2428 = vpop.permute.xlu0 %2427
      %2429 = vrot.lane.b32.xlu0 %v593, 60
      %v2430 = vpop.permute.xlu0 %2429
      %2431 = vrot.lane.b32.xlu0 %v594, 60
      %v2432 = vpop.permute.xlu0 %2431
      %2433 = vrot.lane.b32.xlu0 %v595, 60
      %v2434 = vpop.permute.xlu0 %2433
      %2435 = vrot.lane.b32.xlu0 %v596, 60
      %v2436 = vpop.permute.xlu0 %2435
      %2437 = vrot.lane.b32.xlu0 %v597, 60
      %v2438 = vpop.permute.xlu0 %2437
      %2439 = vrot.lane.b32.xlu0 %v598, 60
      %v2440 = vpop.permute.xlu0 %2439
      %2441 = vrot.lane.b32.xlu0 %v599, 60
      %v2442 = vpop.permute.xlu0 %2441
      %2443 = vrot.lane.b32.xlu0 %v600, 60
      %v2444 = vpop.permute.xlu0 %2443
      %2461 = vmatprep.subr.bf16.mxu0 0
      %2462 = vmatpush1.bf16.msra.mxu0 %v2414
      %2463 = vmatprep.subr.bf16.mxu0 0
      %2464 = vmatpush1.bf16.msra.mxu0 %v2416
      %2465 = vmatprep.subr.bf16.mxu0 0
      %2466 = vmatpush1.bf16.msra.mxu0 %v2418
      %2467 = vmatprep.subr.bf16.mxu0 0
      %2468 = vmatpush1.bf16.msra.mxu0 %v2420
      %2469 = vmatprep.subr.bf16.mxu0 0
      %2470 = vmatpush1.bf16.msra.mxu0 %v2422
      %2471 = vmatprep.subr.bf16.mxu0 0
      %2472 = vmatpush1.bf16.msra.mxu0 %v2424
      %2473 = vmatprep.subr.bf16.mxu0 0
      %2474 = vmatpush1.bf16.msra.mxu0 %v2426
      %2475 = vmatprep.subr.bf16.mxu0 0
      %2476 = vmatpush1.bf16.msra.mxu0 %v2428
      %2477 = vmatprep.subr.bf16.mxu0 0
      %2478 = vmatpush1.bf16.msra.mxu0 %v2430
      %2479 = vmatprep.subr.bf16.mxu0 0
      %2480 = vmatpush1.bf16.msra.mxu0 %v2432
      %2481 = vmatprep.subr.bf16.mxu0 0
      %2482 = vmatpush1.bf16.msra.mxu0 %v2434
      %2483 = vmatprep.subr.bf16.mxu0 0
      %2484 = vmatpush1.bf16.msra.mxu0 %v2436
      %2485 = vmatprep.subr.bf16.mxu0 0
      %2486 = vmatpush1.bf16.msra.mxu0 %v2438
      %2487 = vmatprep.subr.bf16.mxu0 0
      %2488 = vmatpush1.bf16.msra.mxu0 %v2440
      %2489 = vmatprep.subr.bf16.mxu0 0
      %2490 = vmatpush1.bf16.msra.mxu0 %v2442
      %2491 = vmatprep.subr.bf16.mxu0 0
      %2492 = vmatpush1.bf16.msra.mxu0 %v2444
      %2493 = vmatprep.mubr.bf16.mxu0 %v2382
      %2494 = vmatmul.mubr.bf16.gmra.mrb[0].mxu0 %v2381
      %v2495 = vpop.f32.mrb[0].mxu0
      %v2496 = vadd.f32 0.0, %v2495
      %v2497 = vpop.f32.mrb[0].mxu0
      %v2498 = vpop.f32.mrb[0].mxu0
      %v2499 = vadd.f32 0.0, %v2498
      %v2500 = vpop.f32.mrb[0].mxu0
      %2501 = vmatprep.mubr.bf16.mxu0 %v2384
      %2502 = vmatmul.mubr.bf16.gmra.mrb[0].mxu0 %v2383
      %v2503 = vpop.f32.mrb[0].mxu0
      %v2504 = vadd.f32 0.0, %v2503
      %v2505 = vpop.f32.mrb[0].mxu0
      %v2506 = vpop.f32.mrb[0].mxu0
      %v2507 = vadd.f32 0.0, %v2506
      %v2508 = vpop.f32.mrb[0].mxu0
      %2509 = vmatprep.mubr.bf16.mxu0 %v2386
      %2510 = vmatmul.mubr.bf16.gmra.mrb[0].mxu0 %v2385
      %v2511 = vpop.f32.mrb[0].mxu0
      %v2512 = vadd.f32 0.0, %v2511
      %v2513 = vpop.f32.mrb[0].mxu0
      %v2514 = vpop.f32.mrb[0].mxu0
      %v2515 = vadd.f32 0.0, %v2514
      %v2516 = vpop.f32.mrb[0].mxu0
      %2517 = vmatprep.mubr.bf16.mxu0 %v2388
      %2518 = vmatmul.mubr.bf16.gmra.mrb[0].mxu0 %v2387
      %v2519 = vpop.f32.mrb[0].mxu0
      %v2520 = vadd.f32 0.0, %v2519
      %v2521 = vpop.f32.mrb[0].mxu0
      %v2522 = vpop.f32.mrb[0].mxu0
      %v2523 = vadd.f32 0.0, %v2522
      %v2524 = vpop.f32.mrb[0].mxu0
      %2525 = vmatprep.mubr.bf16.mxu0 %v2390
      %2526 = vmatmul.mubr.bf16.gmra.mrb[0].mxu0 %v2389
      %v2527 = vpop.f32.mrb[0].mxu0
      %v2528 = vadd.f32 0.0, %v2527
      %v2529 = vpop.f32.mrb[0].mxu0
      %v2530 = vpop.f32.mrb[0].mxu0
      %v2531 = vadd.f32 0.0, %v2530
      %v2532 = vpop.f32.mrb[0].mxu0
      %2533 = vmatprep.mubr.bf16.mxu0 %v2392
      %2534 = vmatmul.mubr.bf16.gmra.mrb[0].mxu0 %v2391
      %v2535 = vpop.f32.mrb[0].mxu0
      %v2536 = vadd.f32 0.0, %v2535
      %v2537 = vpop.f32.mrb[0].mxu0
      %v2538 = vpop.f32.mrb[0].mxu0
      %v2539 = vadd.f32 0.0, %v2538
      %v2540 = vpop.f32.mrb[0].mxu0
      %2541 = vmatprep.mubr.bf16.mxu0 %v2394
      %2542 = vmatmul.mubr.bf16.gmra.mrb[0].mxu0 %v2393
      %v2543 = vpop.f32.mrb[0].mxu0
      %v2544 = vadd.f32 0.0, %v2543
      %v2545 = vpop.f32.mrb[0].mxu0
      %v2546 = vpop.f32.mrb[0].mxu0
      %v2547 = vadd.f32 0.0, %v2546
      %v2548 = vpop.f32.mrb[0].mxu0
      %2549 = vmatprep.mubr.bf16.mxu0 %v2396
      %2550 = vmatmul.mubr.bf16.gmra.mrb[0].mxu0 %v2395
      %v2551 = vpop.f32.mrb[0].mxu0
      %v2552 = vadd.f32 0.0, %v2551
      %v2553 = vpop.f32.mrb[0].mxu0
      %v2554 = vpop.f32.mrb[0].mxu0
      %v2555 = vadd.f32 0.0, %v2554
      %v2556 = vpop.f32.mrb[0].mxu0
      %2557 = vmatprep.mubr.bf16.mxu0 %v2398
      %2558 = vmatmul.mubr.bf16.gmra.mrb[0].mxu0 %v2397
      %v2559 = vpop.f32.mrb[0].mxu0
      %v2560 = vadd.f32 0.0, %v2559
      %v2561 = vpop.f32.mrb[0].mxu0
      %v2562 = vpop.f32.mrb[0].mxu0
      %v2563 = vadd.f32 0.0, %v2562
      %v2564 = vpop.f32.mrb[0].mxu0
      %2565 = vmatprep.mubr.bf16.mxu0 %v2400
      %2566 = vmatmul.mubr.bf16.gmra.mrb[0].mxu0 %v2399
      %v2567 = vpop.f32.mrb[0].mxu0
      %v2568 = vadd.f32 0.0, %v2567
      %v2569 = vpop.f32.mrb[0].mxu0
      %v2570 = vpop.f32.mrb[0].mxu0
      %v2571 = vadd.f32 0.0, %v2570
      %v2572 = vpop.f32.mrb[0].mxu0
      %2573 = vmatprep.mubr.bf16.mxu0 %v2402
      %2574 = vmatmul.mubr.bf16.gmra.mrb[0].mxu0 %v2401
      %v2575 = vpop.f32.mrb[0].mxu0
      %v2576 = vadd.f32 0.0, %v2575
      %v2577 = vpop.f32.mrb[0].mxu0
      %v2578 = vpop.f32.mrb[0].mxu0
      %v2579 = vadd.f32 0.0, %v2578
      %v2580 = vpop.f32.mrb[0].mxu0
      %2581 = vmatprep.mubr.bf16.mxu0 %v2404
      %2582 = vmatmul.mubr.bf16.gmra.mrb[0].mxu0 %v2403
      %v2583 = vpop.f32.mrb[0].mxu0
      %v2584 = vadd.f32 0.0, %v2583
      %v2585 = vpop.f32.mrb[0].mxu0
      %v2586 = vpop.f32.mrb[0].mxu0
      %v2587 = vadd.f32 0.0, %v2586
      %v2588 = vpop.f32.mrb[0].mxu0
      %2589 = vmatprep.mubr.bf16.mxu0 %v2406
      %2590 = vmatmul.mubr.bf16.gmra.mrb[0].mxu0 %v2405
      %v2591 = vpop.f32.mrb[0].mxu0
      %v2592 = vadd.f32 0.0, %v2591
      %v2593 = vpop.f32.mrb[0].mxu0
      %v2594 = vpop.f32.mrb[0].mxu0
      %v2595 = vadd.f32 0.0, %v2594
      %v2596 = vpop.f32.mrb[0].mxu0
      %2597 = vmatprep.mubr.bf16.mxu0 %v2408
      %2598 = vmatmul.mubr.bf16.gmra.mrb[0].mxu0 %v2407
      %v2599 = vpop.f32.mrb[0].mxu0
      %v2600 = vadd.f32 0.0, %v2599
      %v2601 = vpop.f32.mrb[0].mxu0
      %v2602 = vpop.f32.mrb[0].mxu0
      %v2603 = vadd.f32 0.0, %v2602
      %v2604 = vpop.f32.mrb[0].mxu0
      %2605 = vmatprep.mubr.bf16.mxu0 %v2410
      %2606 = vmatmul.mubr.bf16.gmra.mrb[0].mxu0 %v2409
      %v2607 = vpop.f32.mrb[0].mxu0
      %v2608 = vadd.f32 0.0, %v2607
      %v2609 = vpop.f32.mrb[0].mxu0
      %v2610 = vpop.f32.mrb[0].mxu0
      %v2611 = vadd.f32 0.0, %v2610
      %v2612 = vpop.f32.mrb[0].mxu0
      %2613 = vmatprep.mubr.bf16.mxu0 %v2412
      %2614 = vmatmul.mubr.bf16.gmra.mrb[0].mxu0 %v2411
      %v2615 = vpop.f32.mrb[0].mxu0
      %v2616 = vadd.f32 0.0, %v2615
      %v2617 = vpop.f32.mrb[0].mxu0
      %v2618 = vpop.f32.mrb[0].mxu0
      %v2619 = vadd.f32 0.0, %v2618
      %v2620 = vpop.f32.mrb[0].mxu0
      %2621 = vdwg.mxu0
      %v2622 = vrcp.pop %v2287
      %v2623 = vrcp.pop %v2290
      %v2624 = vrcp.pop %v2293
      %v2625 = vrcp.pop %v2296
      %v2626 = vrcp.pop %v2299
      %v2627 = vrcp.pop %v2302
      %v2628 = vrcp.pop %v2305
      %v2629 = vrcp.pop %v2308
      %v2630 = vrcp.pop %v2311
      %v2631 = vrcp.pop %v2314
      %v2632 = vrcp.pop %v2317
      %v2633 = vrcp.pop %v2320
      %v2634 = vrcp.pop %v2323
      %v2635 = vrcp.pop %v2326
      %v2636 = vrcp.pop %v2329
      %v2637 = vrcp.pop %v2332
      %v2638 = vrcp.pop %v2335
      %v2639 = vrcp.pop %v2338
      %v2640 = vrcp.pop %v2341
      %v2641 = vrcp.pop %v2344
      %v2642 = vrcp.pop %v2347
      %v2643 = vrcp.pop %v2350
      %v2644 = vrcp.pop %v2353
      %v2645 = vrcp.pop %v2356
      %v2646 = vrcp.pop %v2359
      %v2647 = vrcp.pop %v2362
      %v2648 = vrcp.pop %v2365
      %v2649 = vrcp.pop %v2368
      %v2650 = vrcp.pop %v2371
      %v2651 = vrcp.pop %v2374
      %v2652 = vrcp.pop %v2377
      %v2653 = vrcp.pop %v2380
      %v2654 = vmul.f32 %v2496, %v2622
      %v2655 = vmul.f32 %v2499, %v2623
      %v2656 = vmul.f32 %v2504, %v2624
      %v2657 = vmul.f32 %v2507, %v2625
      %v2658 = vmul.f32 %v2512, %v2626
      %v2659 = vmul.f32 %v2515, %v2627
      %v2660 = vmul.f32 %v2520, %v2628
      %v2661 = vmul.f32 %v2523, %v2629
      %v2662 = vmul.f32 %v2528, %v2630
      %v2663 = vmul.f32 %v2531, %v2631
      %v2664 = vmul.f32 %v2536, %v2632
      %v2665 = vmul.f32 %v2539, %v2633
      %v2666 = vmul.f32 %v2544, %v2634
      %v2667 = vmul.f32 %v2547, %v2635
      %v2668 = vmul.f32 %v2552, %v2636
      %v2669 = vmul.f32 %v2555, %v2637
      %v2670 = vmul.f32 %v2560, %v2638
      %v2671 = vmul.f32 %v2563, %v2639
      %v2672 = vmul.f32 %v2568, %v2640
      %v2673 = vmul.f32 %v2571, %v2641
      %v2674 = vmul.f32 %v2576, %v2642
      %v2675 = vmul.f32 %v2579, %v2643
      %v2676 = vmul.f32 %v2584, %v2644
      %v2677 = vmul.f32 %v2587, %v2645
      %v2678 = vmul.f32 %v2592, %v2646
      %v2679 = vmul.f32 %v2595, %v2647
      %v2680 = vmul.f32 %v2600, %v2648
      %v2681 = vmul.f32 %v2603, %v2649
      %v2682 = vmul.f32 %v2608, %v2650
      %v2683 = vmul.f32 %v2611, %v2651
      %v2684 = vmul.f32 %v2616, %v2652
      %v2685 = vmul.f32 %v2619, %v2653
      %2686 = vrot.lane.b32.xlu0 %v569, 120
      %v2687 = vpop.permute.xlu0 %2686
      %2688 = vrot.lane.b32.xlu0 %v570, 120
      %v2689 = vpop.permute.xlu0 %2688
      %2690 = vrot.lane.b32.xlu0 %v571, 120
      %v2691 = vpop.permute.xlu0 %2690
      %2692 = vrot.lane.b32.xlu0 %v572, 120
      %v2693 = vpop.permute.xlu0 %2692
      %2694 = vrot.lane.b32.xlu0 %v573, 120
      %v2695 = vpop.permute.xlu0 %2694
      %2696 = vrot.lane.b32.xlu0 %v574, 120
      %v2697 = vpop.permute.xlu0 %2696
      %2698 = vrot.lane.b32.xlu0 %v575, 120
      %v2699 = vpop.permute.xlu0 %2698
      %2700 = vrot.lane.b32.xlu0 %v576, 120
      %v2701 = vpop.permute.xlu0 %2700
      %2702 = vrot.lane.b32.xlu0 %v577, 120
      %v2703 = vpop.permute.xlu0 %2702
      %2704 = vrot.lane.b32.xlu0 %v578, 120
      %v2705 = vpop.permute.xlu0 %2704
      %2706 = vrot.lane.b32.xlu0 %v579, 120
      %v2707 = vpop.permute.xlu0 %2706
      %2708 = vrot.lane.b32.xlu0 %v580, 120
      %v2709 = vpop.permute.xlu0 %2708
      %2710 = vrot.lane.b32.xlu0 %v581, 120
      %v2711 = vpop.permute.xlu0 %2710
      %2712 = vrot.lane.b32.xlu0 %v582, 120
      %v2713 = vpop.permute.xlu0 %2712
      %2714 = vrot.lane.b32.xlu0 %v583, 120
      %v2715 = vpop.permute.xlu0 %2714
      %2716 = vrot.lane.b32.xlu0 %v584, 120
      %v2717 = vpop.permute.xlu0 %2716
      %2718 = vrot.lane.b32.xlu0 %v585, 88
      %v2719 = vpop.permute.xlu0 %2718
      %2720 = vrot.lane.b32.xlu0 %v586, 88
      %v2721 = vpop.permute.xlu0 %2720
      %2722 = vrot.lane.b32.xlu0 %v587, 88
      %v2723 = vpop.permute.xlu0 %2722
      %2724 = vrot.lane.b32.xlu0 %v588, 88
      %v2725 = vpop.permute.xlu0 %2724
      %2726 = vrot.lane.b32.xlu0 %v589, 88
      %v2727 = vpop.permute.xlu0 %2726
      %2728 = vrot.lane.b32.xlu0 %v590, 88
      %v2729 = vpop.permute.xlu0 %2728
      %2730 = vrot.lane.b32.xlu0 %v591, 88
      %v2731 = vpop.permute.xlu0 %2730
      %2732 = vrot.lane.b32.xlu0 %v592, 88
      %v2733 = vpop.permute.xlu0 %2732
      %2734 = vrot.lane.b32.xlu0 %v593, 88
      %v2735 = vpop.permute.xlu0 %2734
      %2736 = vrot.lane.b32.xlu0 %v594, 88
      %v2737 = vpop.permute.xlu0 %2736
      %2738 = vrot.lane.b32.xlu0 %v595, 88
      %v2739 = vpop.permute.xlu0 %2738
      %2740 = vrot.lane.b32.xlu0 %v596, 88
      %v2741 = vpop.permute.xlu0 %2740
      %2742 = vrot.lane.b32.xlu0 %v597, 88
      %v2743 = vpop.permute.xlu0 %2742
      %2744 = vrot.lane.b32.xlu0 %v598, 88
      %v2745 = vpop.permute.xlu0 %2744
      %2746 = vrot.lane.b32.xlu0 %v599, 88
      %v2747 = vpop.permute.xlu0 %2746
      %2748 = vrot.lane.b32.xlu0 %v600, 88
      %v2749 = vpop.permute.xlu0 %2748
      %v2751 = vsel %vm649, %v2687, 0
      %v2754 = vsel %vm649, %v2689, 0
      %v2757 = vsel %vm649, %v2691, 0
      %v2760 = vsel %vm649, %v2693, 0
      %v2763 = vsel %vm649, %v2695, 0
      %v2766 = vsel %vm649, %v2697, 0
      %v2769 = vsel %vm649, %v2699, 0
      %v2772 = vsel %vm649, %v2701, 0
      %v2775 = vsel %vm649, %v2703, 0
      %v2778 = vsel %vm649, %v2705, 0
      %v2781 = vsel %vm649, %v2707, 0
      %v2784 = vsel %vm649, %v2709, 0
      %v2787 = vsel %vm649, %v2711, 0
      %v2790 = vsel %vm649, %v2713, 0
      %v2793 = vsel %vm649, %v2715, 0
      %v2796 = vsel %vm649, %v2717, 0
      %v2799 = vsel %vm649, %v2719, 0
      %v2802 = vsel %vm649, %v2721, 0
      %v2805 = vsel %vm649, %v2723, 0
      %v2808 = vsel %vm649, %v2725, 0
      %v2811 = vsel %vm649, %v2727, 0
      %v2814 = vsel %vm649, %v2729, 0
      %v2817 = vsel %vm649, %v2731, 0
      %v2820 = vsel %vm649, %v2733, 0
      %v2823 = vsel %vm649, %v2735, 0
      %v2826 = vsel %vm649, %v2737, 0
      %v2829 = vsel %vm649, %v2739, 0
      %v2832 = vsel %vm649, %v2741, 0
      %v2835 = vsel %vm649, %v2743, 0
      %v2838 = vsel %vm649, %v2745, 0
      %v2841 = vsel %vm649, %v2747, 0
      %v2844 = vsel %vm649, %v2749, 0
      %2846 = vmatprep.subr.bf16.mxu0 0
      %2847 = vmatpush1.bf16.xpose.msra.mxu0 %v2799
      %2848 = vmatprep.subr.bf16.mxu0 0
      %2849 = vmatpush1.bf16.xpose.msra.mxu0 %v2802
      %2850 = vmatprep.subr.bf16.mxu0 0
      %2851 = vmatpush1.bf16.xpose.msra.mxu0 %v2805
      %2852 = vmatprep.subr.bf16.mxu0 0
      %2853 = vmatpush1.bf16.xpose.msra.mxu0 %v2808
      %2854 = vmatprep.subr.bf16.mxu0 0
      %2855 = vmatpush1.bf16.xpose.msra.mxu0 %v2811
      %2856 = vmatprep.subr.bf16.mxu0 0
      %2857 = vmatpush1.bf16.xpose.msra.mxu0 %v2814
      %2858 = vmatprep.subr.bf16.mxu0 0
      %2859 = vmatpush1.bf16.xpose.msra.mxu0 %v2817
      %2860 = vmatprep.subr.bf16.mxu0 0
      %2861 = vmatpush1.bf16.xpose.msra.mxu0 %v2820
      %2862 = vmatprep.subr.bf16.mxu0 0
      %2863 = vmatpush1.bf16.xpose.msra.mxu0 %v2823
      %2864 = vmatprep.subr.bf16.mxu0 0
      %2865 = vmatpush1.bf16.xpose.msra.mxu0 %v2826
      %2866 = vmatprep.subr.bf16.mxu0 0
      %2867 = vmatpush1.bf16.xpose.msra.mxu0 %v2829
      %2868 = vmatprep.subr.bf16.mxu0 0
      %2869 = vmatpush1.bf16.xpose.msra.mxu0 %v2832
      %2870 = vmatprep.subr.bf16.mxu0 0
      %2871 = vmatpush1.bf16.xpose.msra.mxu0 %v2835
      %2872 = vmatprep.subr.bf16.mxu0 0
      %2873 = vmatpush1.bf16.xpose.msra.mxu0 %v2838
      %2874 = vmatprep.subr.bf16.mxu0 0
      %2875 = vmatpush1.bf16.xpose.msra.mxu0 %v2841
      %2876 = vmatprep.subr.bf16.mxu0 0
      %2877 = vmatpush1.bf16.xpose.msra.mxu0 %v2844
      %2878 = vmatprep.mubr.bf16.mxu0 0
      %2879 = vmatmul.mubr.bf16.gmra.mrb[0].mxu0 %v2751
      %v2880 = vpop.f32.mrb[0].mxu0
      %v2881 = vadd.f32 0.0, %v2880
      %v2882 = vpop.f32.mrb[0].mxu0
      %v2883 = vadd.f32 0.0, %v2882
      %v2884 = vpop.f32.mrb[0].mxu0
      %v2885 = vadd.f32 0.0, %v2884
      %v2886 = vpop.f32.mrb[0].mxu0
      %v2887 = vadd.f32 0.0, %v2886
      %2888 = vmatprep.mubr.bf16.mxu0 0
      %2889 = vmatmul.mubr.bf16.gmra.mrb[0].mxu0 %v2754
      %v2890 = vpop.f32.mrb[0].mxu0
      %v2891 = vadd.f32 0.0, %v2890
      %v2892 = vpop.f32.mrb[0].mxu0
      %v2893 = vadd.f32 0.0, %v2892
      %v2894 = vpop.f32.mrb[0].mxu0
      %v2895 = vadd.f32 0.0, %v2894
      %v2896 = vpop.f32.mrb[0].mxu0
      %v2897 = vadd.f32 0.0, %v2896
      %2898 = vmatprep.mubr.bf16.mxu0 0
      %2899 = vmatmul.mubr.bf16.gmra.mrb[0].mxu0 %v2757
      %v2900 = vpop.f32.mrb[0].mxu0
      %v2901 = vadd.f32 0.0, %v2900
      %v2902 = vpop.f32.mrb[0].mxu0
      %v2903 = vadd.f32 0.0, %v2902
      %v2904 = vpop.f32.mrb[0].mxu0
      %v2905 = vadd.f32 0.0, %v2904
      %v2906 = vpop.f32.mrb[0].mxu0
      %v2907 = vadd.f32 0.0, %v2906
      %2908 = vmatprep.mubr.bf16.mxu0 0
      %2909 = vmatmul.mubr.bf16.gmra.mrb[0].mxu0 %v2760
      %v2910 = vpop.f32.mrb[0].mxu0
      %v2911 = vadd.f32 0.0, %v2910
      %v2912 = vpop.f32.mrb[0].mxu0
      %v2913 = vadd.f32 0.0, %v2912
      %v2914 = vpop.f32.mrb[0].mxu0
      %v2915 = vadd.f32 0.0, %v2914
      %v2916 = vpop.f32.mrb[0].mxu0
      %v2917 = vadd.f32 0.0, %v2916
      %2918 = vmatprep.mubr.bf16.mxu0 0
      %2919 = vmatmul.mubr.bf16.gmra.mrb[0].mxu0 %v2763
      %v2920 = vpop.f32.mrb[0].mxu0
      %v2921 = vadd.f32 0.0, %v2920
      %v2922 = vpop.f32.mrb[0].mxu0
      %v2923 = vadd.f32 0.0, %v2922
      %v2924 = vpop.f32.mrb[0].mxu0
      %v2925 = vadd.f32 0.0, %v2924
      %v2926 = vpop.f32.mrb[0].mxu0
      %v2927 = vadd.f32 0.0, %v2926
      %2928 = vmatprep.mubr.bf16.mxu0 0
      %2929 = vmatmul.mubr.bf16.gmra.mrb[0].mxu0 %v2766
      %v2930 = vpop.f32.mrb[0].mxu0
      %v2931 = vadd.f32 0.0, %v2930
      %v2932 = vpop.f32.mrb[0].mxu0
      %v2933 = vadd.f32 0.0, %v2932
      %v2934 = vpop.f32.mrb[0].mxu0
      %v2935 = vadd.f32 0.0, %v2934
      %v2936 = vpop.f32.mrb[0].mxu0
      %v2937 = vadd.f32 0.0, %v2936
      %2938 = vmatprep.mubr.bf16.mxu0 0
      %2939 = vmatmul.mubr.bf16.gmra.mrb[0].mxu0 %v2769
      %v2940 = vpop.f32.mrb[0].mxu0
      %v2941 = vadd.f32 0.0, %v2940
      %v2942 = vpop.f32.mrb[0].mxu0
      %v2943 = vadd.f32 0.0, %v2942
      %v2944 = vpop.f32.mrb[0].mxu0
      %v2945 = vadd.f32 0.0, %v2944
      %v2946 = vpop.f32.mrb[0].mxu0
      %v2947 = vadd.f32 0.0, %v2946
      %2948 = vmatprep.mubr.bf16.mxu0 0
      %2949 = vmatmul.mubr.bf16.gmra.mrb[0].mxu0 %v2772
      %v2950 = vpop.f32.mrb[0].mxu0
      %v2951 = vadd.f32 0.0, %v2950
      %v2952 = vpop.f32.mrb[0].mxu0
      %v2953 = vadd.f32 0.0, %v2952
      %v2954 = vpop.f32.mrb[0].mxu0
      %v2955 = vadd.f32 0.0, %v2954
      %v2956 = vpop.f32.mrb[0].mxu0
      %v2957 = vadd.f32 0.0, %v2956
      %2958 = vmatprep.mubr.bf16.mxu0 0
      %2959 = vmatmul.mubr.bf16.gmra.mrb[0].mxu0 %v2775
      %v2960 = vpop.f32.mrb[0].mxu0
      %v2961 = vadd.f32 0.0, %v2960
      %v2962 = vpop.f32.mrb[0].mxu0
      %v2963 = vadd.f32 0.0, %v2962
      %v2964 = vpop.f32.mrb[0].mxu0
      %v2965 = vadd.f32 0.0, %v2964
      %v2966 = vpop.f32.mrb[0].mxu0
      %v2967 = vadd.f32 0.0, %v2966
      %2968 = vmatprep.mubr.bf16.mxu0 0
      %2969 = vmatmul.mubr.bf16.gmra.mrb[0].mxu0 %v2778
      %v2970 = vpop.f32.mrb[0].mxu0
      %v2971 = vadd.f32 0.0, %v2970
      %v2972 = vpop.f32.mrb[0].mxu0
      %v2973 = vadd.f32 0.0, %v2972
      %v2974 = vpop.f32.mrb[0].mxu0
      %v2975 = vadd.f32 0.0, %v2974
      %v2976 = vpop.f32.mrb[0].mxu0
      %v2977 = vadd.f32 0.0, %v2976
      %2978 = vmatprep.mubr.bf16.mxu0 0
      %2979 = vmatmul.mubr.bf16.gmra.mrb[0].mxu0 %v2781
      %v2980 = vpop.f32.mrb[0].mxu0
      %v2981 = vadd.f32 0.0, %v2980
      %v2982 = vpop.f32.mrb[0].mxu0
      %v2983 = vadd.f32 0.0, %v2982
      %v2984 = vpop.f32.mrb[0].mxu0
      %v2985 = vadd.f32 0.0, %v2984
      %v2986 = vpop.f32.mrb[0].mxu0
      %v2987 = vadd.f32 0.0, %v2986
      %2988 = vmatprep.mubr.bf16.mxu0 0
      %2989 = vmatmul.mubr.bf16.gmra.mrb[0].mxu0 %v2784
      %v2990 = vpop.f32.mrb[0].mxu0
      %v2991 = vadd.f32 0.0, %v2990
      %v2992 = vpop.f32.mrb[0].mxu0
      %v2993 = vadd.f32 0.0, %v2992
      %v2994 = vpop.f32.mrb[0].mxu0
      %v2995 = vadd.f32 0.0, %v2994
      %v2996 = vpop.f32.mrb[0].mxu0
      %v2997 = vadd.f32 0.0, %v2996
      %2998 = vmatprep.mubr.bf16.mxu0 0
      %2999 = vmatmul.mubr.bf16.gmra.mrb[0].mxu0 %v2787
      %v3000 = vpop.f32.mrb[0].mxu0
      %v3001 = vadd.f32 0.0, %v3000
      %v3002 = vpop.f32.mrb[0].mxu0
      %v3003 = vadd.f32 0.0, %v3002
      %v3004 = vpop.f32.mrb[0].mxu0
      %v3005 = vadd.f32 0.0, %v3004
      %v3006 = vpop.f32.mrb[0].mxu0
      %v3007 = vadd.f32 0.0, %v3006
      %3008 = vmatprep.mubr.bf16.mxu0 0
      %3009 = vmatmul.mubr.bf16.gmra.mrb[0].mxu0 %v2790
      %v3010 = vpop.f32.mrb[0].mxu0
      %v3011 = vadd.f32 0.0, %v3010
      %v3012 = vpop.f32.mrb[0].mxu0
      %v3013 = vadd.f32 0.0, %v3012
      %v3014 = vpop.f32.mrb[0].mxu0
      %v3015 = vadd.f32 0.0, %v3014
      %v3016 = vpop.f32.mrb[0].mxu0
      %v3017 = vadd.f32 0.0, %v3016
      %3018 = vmatprep.mubr.bf16.mxu0 0
      %3019 = vmatmul.mubr.bf16.gmra.mrb[0].mxu0 %v2793
      %v3020 = vpop.f32.mrb[0].mxu0
      %v3021 = vadd.f32 0.0, %v3020
      %v3022 = vpop.f32.mrb[0].mxu0
      %v3023 = vadd.f32 0.0, %v3022
      %v3024 = vpop.f32.mrb[0].mxu0
      %v3025 = vadd.f32 0.0, %v3024
      %v3026 = vpop.f32.mrb[0].mxu0
      %v3027 = vadd.f32 0.0, %v3026
      %3028 = vmatprep.mubr.bf16.mxu0 0
      %3029 = vmatmul.mubr.bf16.gmra.mrb[0].mxu0 %v2796
      %v3030 = vpop.f32.mrb[0].mxu0
      %v3031 = vadd.f32 0.0, %v3030
      %v3032 = vpop.f32.mrb[0].mxu0
      %v3033 = vadd.f32 0.0, %v3032
      %v3034 = vpop.f32.mrb[0].mxu0
      %v3035 = vadd.f32 0.0, %v3034
      %v3036 = vpop.f32.mrb[0].mxu0
      %v3037 = vadd.f32 0.0, %v3036
      %3038 = vdwg.mxu0
      %v3039 = vmax.f32 %v2881, %v2883
      %3040 = vmax.xlane.f32.xlu0 %v3039
      %v3041 = vpop.xlane.xlu0 %3040
      %v3042 = vmax.f32 %v2885, %v2887
      %3043 = vmax.xlane.f32.xlu0 %v3042
      %v3044 = vpop.xlane.xlu0 %3043
      %v3045 = vmax.f32 %v2891, %v2893
      %3046 = vmax.xlane.f32.xlu0 %v3045
      %v3047 = vpop.xlane.xlu0 %3046
      %v3048 = vmax.f32 %v2895, %v2897
      %3049 = vmax.xlane.f32.xlu0 %v3048
      %v3050 = vpop.xlane.xlu0 %3049
      %v3051 = vmax.f32 %v2901, %v2903
      %3052 = vmax.xlane.f32.xlu0 %v3051
      %v3053 = vpop.xlane.xlu0 %3052
      %v3054 = vmax.f32 %v2905, %v2907
      %3055 = vmax.xlane.f32.xlu0 %v3054
      %v3056 = vpop.xlane.xlu0 %3055
      %v3057 = vmax.f32 %v2911, %v2913
      %3058 = vmax.xlane.f32.xlu0 %v3057
      %v3059 = vpop.xlane.xlu0 %3058
      %v3060 = vmax.f32 %v2915, %v2917
      %3061 = vmax.xlane.f32.xlu0 %v3060
      %v3062 = vpop.xlane.xlu0 %3061
      %v3063 = vmax.f32 %v2921, %v2923
      %3064 = vmax.xlane.f32.xlu0 %v3063
      %v3065 = vpop.xlane.xlu0 %3064
      %v3066 = vmax.f32 %v2925, %v2927
      %3067 = vmax.xlane.f32.xlu0 %v3066
      %v3068 = vpop.xlane.xlu0 %3067
      %v3069 = vmax.f32 %v2931, %v2933
      %3070 = vmax.xlane.f32.xlu0 %v3069
      %v3071 = vpop.xlane.xlu0 %3070
      %v3072 = vmax.f32 %v2935, %v2937
      %3073 = vmax.xlane.f32.xlu0 %v3072
      %v3074 = vpop.xlane.xlu0 %3073
      %v3075 = vmax.f32 %v2941, %v2943
      %3076 = vmax.xlane.f32.xlu0 %v3075
      %v3077 = vpop.xlane.xlu0 %3076
      %v3078 = vmax.f32 %v2945, %v2947
      %3079 = vmax.xlane.f32.xlu0 %v3078
      %v3080 = vpop.xlane.xlu0 %3079
      %v3081 = vmax.f32 %v2951, %v2953
      %3082 = vmax.xlane.f32.xlu0 %v3081
      %v3083 = vpop.xlane.xlu0 %3082
      %v3084 = vmax.f32 %v2955, %v2957
      %3085 = vmax.xlane.f32.xlu0 %v3084
      %v3086 = vpop.xlane.xlu0 %3085
      %v3087 = vmax.f32 %v2961, %v2963
      %3088 = vmax.xlane.f32.xlu0 %v3087
      %v3089 = vpop.xlane.xlu0 %3088
      %v3090 = vmax.f32 %v2965, %v2967
      %3091 = vmax.xlane.f32.xlu0 %v3090
      %v3092 = vpop.xlane.xlu0 %3091
      %v3093 = vmax.f32 %v2971, %v2973
      %3094 = vmax.xlane.f32.xlu0 %v3093
      %v3095 = vpop.xlane.xlu0 %3094
      %v3096 = vmax.f32 %v2975, %v2977
      %3097 = vmax.xlane.f32.xlu0 %v3096
      %v3098 = vpop.xlane.xlu0 %3097
      %v3099 = vmax.f32 %v2981, %v2983
      %3100 = vmax.xlane.f32.xlu0 %v3099
      %v3101 = vpop.xlane.xlu0 %3100
      %v3102 = vmax.f32 %v2985, %v2987
      %3103 = vmax.xlane.f32.xlu0 %v3102
      %v3104 = vpop.xlane.xlu0 %3103
      %v3105 = vmax.f32 %v2991, %v2993
      %3106 = vmax.xlane.f32.xlu0 %v3105
      %v3107 = vpop.xlane.xlu0 %3106
      %v3108 = vmax.f32 %v2995, %v2997
      %3109 = vmax.xlane.f32.xlu0 %v3108
      %v3110 = vpop.xlane.xlu0 %3109
      %v3111 = vmax.f32 %v3001, %v3003
      %3112 = vmax.xlane.f32.xlu0 %v3111
      %v3113 = vpop.xlane.xlu0 %3112
      %v3114 = vmax.f32 %v3005, %v3007
      %3115 = vmax.xlane.f32.xlu0 %v3114
      %v3116 = vpop.xlane.xlu0 %3115
      %v3117 = vmax.f32 %v3011, %v3013
      %3118 = vmax.xlane.f32.xlu0 %v3117
      %v3119 = vpop.xlane.xlu0 %3118
      %v3120 = vmax.f32 %v3015, %v3017
      %3121 = vmax.xlane.f32.xlu0 %v3120
      %v3122 = vpop.xlane.xlu0 %3121
      %v3123 = vmax.f32 %v3021, %v3023
      %3124 = vmax.xlane.f32.xlu0 %v3123
      %v3125 = vpop.xlane.xlu0 %3124
      %v3126 = vmax.f32 %v3025, %v3027
      %3127 = vmax.xlane.f32.xlu0 %v3126
      %v3128 = vpop.xlane.xlu0 %3127
      %v3129 = vmax.f32 %v3031, %v3033
      %3130 = vmax.xlane.f32.xlu0 %v3129
      %v3131 = vpop.xlane.xlu0 %3130
      %v3132 = vmax.f32 %v3035, %v3037
      %3133 = vmax.xlane.f32.xlu0 %v3132
      %v3134 = vpop.xlane.xlu0 %3133
      %v3135 = vsub.f32 %v2881, %v3041
      %v3136 = vsub.f32 %v2883, %v3041
      %v3137 = vsub.f32 %v2885, %v3044
      %v3138 = vsub.f32 %v2887, %v3044
      %v3139 = vsub.f32 %v2891, %v3047
      %v3140 = vsub.f32 %v2893, %v3047
      %v3141 = vsub.f32 %v2895, %v3050
      %v3142 = vsub.f32 %v2897, %v3050
      %v3143 = vsub.f32 %v2901, %v3053
      %v3144 = vsub.f32 %v2903, %v3053
      %v3145 = vsub.f32 %v2905, %v3056
      %v3146 = vsub.f32 %v2907, %v3056
      %v3147 = vsub.f32 %v2911, %v3059
      %v3148 = vsub.f32 %v2913, %v3059
      %v3149 = vsub.f32 %v2915, %v3062
      %v3150 = vsub.f32 %v2917, %v3062
      %v3151 = vsub.f32 %v2921, %v3065
      %v3152 = vsub.f32 %v2923, %v3065
      %v3153 = vsub.f32 %v2925, %v3068
      %v3154 = vsub.f32 %v2927, %v3068
      %v3155 = vsub.f32 %v2931, %v3071
      %v3156 = vsub.f32 %v2933, %v3071
      %v3157 = vsub.f32 %v2935, %v3074
      %v3158 = vsub.f32 %v2937, %v3074
      %v3159 = vsub.f32 %v2941, %v3077
      %v3160 = vsub.f32 %v2943, %v3077
      %v3161 = vsub.f32 %v2945, %v3080
      %v3162 = vsub.f32 %v2947, %v3080
      %v3163 = vsub.f32 %v2951, %v3083
      %v3164 = vsub.f32 %v2953, %v3083
      %v3165 = vsub.f32 %v2955, %v3086
      %v3166 = vsub.f32 %v2957, %v3086
      %v3167 = vsub.f32 %v2961, %v3089
      %v3168 = vsub.f32 %v2963, %v3089
      %v3169 = vsub.f32 %v2965, %v3092
      %v3170 = vsub.f32 %v2967, %v3092
      %v3171 = vsub.f32 %v2971, %v3095
      %v3172 = vsub.f32 %v2973, %v3095
      %v3173 = vsub.f32 %v2975, %v3098
      %v3174 = vsub.f32 %v2977, %v3098
      %v3175 = vsub.f32 %v2981, %v3101
      %v3176 = vsub.f32 %v2983, %v3101
      %v3177 = vsub.f32 %v2985, %v3104
      %v3178 = vsub.f32 %v2987, %v3104
      %v3179 = vsub.f32 %v2991, %v3107
      %v3180 = vsub.f32 %v2993, %v3107
      %v3181 = vsub.f32 %v2995, %v3110
      %v3182 = vsub.f32 %v2997, %v3110
      %v3183 = vsub.f32 %v3001, %v3113
      %v3184 = vsub.f32 %v3003, %v3113
      %v3185 = vsub.f32 %v3005, %v3116
      %v3186 = vsub.f32 %v3007, %v3116
      %v3187 = vsub.f32 %v3011, %v3119
      %v3188 = vsub.f32 %v3013, %v3119
      %v3189 = vsub.f32 %v3015, %v3122
      %v3190 = vsub.f32 %v3017, %v3122
      %v3191 = vsub.f32 %v3021, %v3125
      %v3192 = vsub.f32 %v3023, %v3125
      %v3193 = vsub.f32 %v3025, %v3128
      %v3194 = vsub.f32 %v3027, %v3128
      %v3195 = vsub.f32 %v3031, %v3131
      %v3196 = vsub.f32 %v3033, %v3131
      %v3197 = vsub.f32 %v3035, %v3134
      %v3198 = vsub.f32 %v3037, %v3134
      %v3199 = vmul.f32 %v3135, 1.442695
      %v3200 = vpow.pop %v3199
      %v3201 = vmul.f32 %v3136, 1.442695
      %v3202 = vpow.pop %v3201
      %v3203 = vmul.f32 %v3137, 1.442695
      %v3204 = vpow.pop %v3203
      %v3205 = vmul.f32 %v3138, 1.442695
      %v3206 = vpow.pop %v3205
      %v3207 = vmul.f32 %v3139, 1.442695
      %v3208 = vpow.pop %v3207
      %v3209 = vmul.f32 %v3140, 1.442695
      %v3210 = vpow.pop %v3209
      %v3211 = vmul.f32 %v3141, 1.442695
      %v3212 = vpow.pop %v3211
      %v3213 = vmul.f32 %v3142, 1.442695
      %v3214 = vpow.pop %v3213
      %v3215 = vmul.f32 %v3143, 1.442695
      %v3216 = vpow.pop %v3215
      %v3217 = vmul.f32 %v3144, 1.442695
      %v3218 = vpow.pop %v3217
      %v3219 = vmul.f32 %v3145, 1.442695
      %v3220 = vpow.pop %v3219
      %v3221 = vmul.f32 %v3146, 1.442695
      %v3222 = vpow.pop %v3221
      %v3223 = vmul.f32 %v3147, 1.442695
      %v3224 = vpow.pop %v3223
      %v3225 = vmul.f32 %v3148, 1.442695
      %v3226 = vpow.pop %v3225
      %v3227 = vmul.f32 %v3149, 1.442695
      %v3228 = vpow.pop %v3227
      %v3229 = vmul.f32 %v3150, 1.442695
      %v3230 = vpow.pop %v3229
      %v3231 = vmul.f32 %v3151, 1.442695
      %v3232 = vpow.pop %v3231
      %v3233 = vmul.f32 %v3152, 1.442695
      %v3234 = vpow.pop %v3233
      %v3235 = vmul.f32 %v3153, 1.442695
      %v3236 = vpow.pop %v3235
      %v3237 = vmul.f32 %v3154, 1.442695
      %v3238 = vpow.pop %v3237
      %v3239 = vmul.f32 %v3155, 1.442695
      %v3240 = vpow.pop %v3239
      %v3241 = vmul.f32 %v3156, 1.442695
      %v3242 = vpow.pop %v3241
      %v3243 = vmul.f32 %v3157, 1.442695
      %v3244 = vpow.pop %v3243
      %v3245 = vmul.f32 %v3158, 1.442695
      %v3246 = vpow.pop %v3245
      %v3247 = vmul.f32 %v3159, 1.442695
      %v3248 = vpow.pop %v3247
      %v3249 = vmul.f32 %v3160, 1.442695
      %v3250 = vpow.pop %v3249
      %v3251 = vmul.f32 %v3161, 1.442695
      %v3252 = vpow.pop %v3251
      %v3253 = vmul.f32 %v3162, 1.442695
      %v3254 = vpow.pop %v3253
      %v3255 = vmul.f32 %v3163, 1.442695
      %v3256 = vpow.pop %v3255
      %v3257 = vmul.f32 %v3164, 1.442695
      %v3258 = vpow.pop %v3257
      %v3259 = vmul.f32 %v3165, 1.442695
      %v3260 = vpow.pop %v3259
      %v3261 = vmul.f32 %v3166, 1.442695
      %v3262 = vpow.pop %v3261
      %v3263 = vmul.f32 %v3167, 1.442695
      %v3264 = vpow.pop %v3263
      %v3265 = vmul.f32 %v3168, 1.442695
      %v3266 = vpow.pop %v3265
      %v3267 = vmul.f32 %v3169, 1.442695
      %v3268 = vpow.pop %v3267
      %v3269 = vmul.f32 %v3170, 1.442695
      %v3270 = vpow.pop %v3269
      %v3271 = vmul.f32 %v3171, 1.442695
      %v3272 = vpow.pop %v3271
      %v3273 = vmul.f32 %v3172, 1.442695
      %v3274 = vpow.pop %v3273
      %v3275 = vmul.f32 %v3173, 1.442695
      %v3276 = vpow.pop %v3275
      %v3277 = vmul.f32 %v3174, 1.442695
      %v3278 = vpow.pop %v3277
      %v3279 = vmul.f32 %v3175, 1.442695
      %v3280 = vpow.pop %v3279
      %v3281 = vmul.f32 %v3176, 1.442695
      %v3282 = vpow.pop %v3281
      %v3283 = vmul.f32 %v3177, 1.442695
      %v3284 = vpow.pop %v3283
      %v3285 = vmul.f32 %v3178, 1.442695
      %v3286 = vpow.pop %v3285
      %v3287 = vmul.f32 %v3179, 1.442695
      %v3288 = vpow.pop %v3287
      %v3289 = vmul.f32 %v3180, 1.442695
      %v3290 = vpow.pop %v3289
      %v3291 = vmul.f32 %v3181, 1.442695
      %v3292 = vpow.pop %v3291
      %v3293 = vmul.f32 %v3182, 1.442695
      %v3294 = vpow.pop %v3293
      %v3295 = vmul.f32 %v3183, 1.442695
      %v3296 = vpow.pop %v3295
      %v3297 = vmul.f32 %v3184, 1.442695
      %v3298 = vpow.pop %v3297
      %v3299 = vmul.f32 %v3185, 1.442695
      %v3300 = vpow.pop %v3299
      %v3301 = vmul.f32 %v3186, 1.442695
      %v3302 = vpow.pop %v3301
      %v3303 = vmul.f32 %v3187, 1.442695
      %v3304 = vpow.pop %v3303
      %v3305 = vmul.f32 %v3188, 1.442695
      %v3306 = vpow.pop %v3305
      %v3307 = vmul.f32 %v3189, 1.442695
      %v3308 = vpow.pop %v3307
      %v3309 = vmul.f32 %v3190, 1.442695
      %v3310 = vpow.pop %v3309
      %v3311 = vmul.f32 %v3191, 1.442695
      %v3312 = vpow.pop %v3311
      %v3313 = vmul.f32 %v3192, 1.442695
      %v3314 = vpow.pop %v3313
      %v3315 = vmul.f32 %v3193, 1.442695
      %v3316 = vpow.pop %v3315
      %v3317 = vmul.f32 %v3194, 1.442695
      %v3318 = vpow.pop %v3317
      %v3319 = vmul.f32 %v3195, 1.442695
      %v3320 = vpow.pop %v3319
      %v3321 = vmul.f32 %v3196, 1.442695
      %v3322 = vpow.pop %v3321
      %v3323 = vmul.f32 %v3197, 1.442695
      %v3324 = vpow.pop %v3323
      %v3325 = vmul.f32 %v3198, 1.442695
      %v3326 = vpow.pop %v3325
      %v3327 = vadd.f32 %v3200, %v3202
      %3328 = vadd.xlane.f32.xlu0 %v3327
      %v3329 = vpop.xlane.xlu0 %3328
      %v3330 = vadd.f32 %v3204, %v3206
      %3331 = vadd.xlane.f32.xlu0 %v3330
      %v3332 = vpop.xlane.xlu0 %3331
      %v3333 = vadd.f32 %v3208, %v3210
      %3334 = vadd.xlane.f32.xlu0 %v3333
      %v3335 = vpop.xlane.xlu0 %3334
      %v3336 = vadd.f32 %v3212, %v3214
      %3337 = vadd.xlane.f32.xlu0 %v3336
      %v3338 = vpop.xlane.xlu0 %3337
      %v3339 = vadd.f32 %v3216, %v3218
      %3340 = vadd.xlane.f32.xlu0 %v3339
      %v3341 = vpop.xlane.xlu0 %3340
      %v3342 = vadd.f32 %v3220, %v3222
      %3343 = vadd.xlane.f32.xlu0 %v3342
      %v3344 = vpop.xlane.xlu0 %3343
      %v3345 = vadd.f32 %v3224, %v3226
      %3346 = vadd.xlane.f32.xlu0 %v3345
      %v3347 = vpop.xlane.xlu0 %3346
      %v3348 = vadd.f32 %v3228, %v3230
      %3349 = vadd.xlane.f32.xlu0 %v3348
      %v3350 = vpop.xlane.xlu0 %3349
      %v3351 = vadd.f32 %v3232, %v3234
      %3352 = vadd.xlane.f32.xlu0 %v3351
      %v3353 = vpop.xlane.xlu0 %3352
      %v3354 = vadd.f32 %v3236, %v3238
      %3355 = vadd.xlane.f32.xlu0 %v3354
      %v3356 = vpop.xlane.xlu0 %3355
      %v3357 = vadd.f32 %v3240, %v3242
      %3358 = vadd.xlane.f32.xlu0 %v3357
      %v3359 = vpop.xlane.xlu0 %3358
      %v3360 = vadd.f32 %v3244, %v3246
      %3361 = vadd.xlane.f32.xlu0 %v3360
      %v3362 = vpop.xlane.xlu0 %3361
      %v3363 = vadd.f32 %v3248, %v3250
      %3364 = vadd.xlane.f32.xlu0 %v3363
      %v3365 = vpop.xlane.xlu0 %3364
      %v3366 = vadd.f32 %v3252, %v3254
      %3367 = vadd.xlane.f32.xlu0 %v3366
      %v3368 = vpop.xlane.xlu0 %3367
      %v3369 = vadd.f32 %v3256, %v3258
      %3370 = vadd.xlane.f32.xlu0 %v3369
      %v3371 = vpop.xlane.xlu0 %3370
      %v3372 = vadd.f32 %v3260, %v3262
      %3373 = vadd.xlane.f32.xlu0 %v3372
      %v3374 = vpop.xlane.xlu0 %3373
      %v3375 = vadd.f32 %v3264, %v3266
      %3376 = vadd.xlane.f32.xlu0 %v3375
      %v3377 = vpop.xlane.xlu0 %3376
      %v3378 = vadd.f32 %v3268, %v3270
      %3379 = vadd.xlane.f32.xlu0 %v3378
      %v3380 = vpop.xlane.xlu0 %3379
      %v3381 = vadd.f32 %v3272, %v3274
      %3382 = vadd.xlane.f32.xlu0 %v3381
      %v3383 = vpop.xlane.xlu0 %3382
      %v3384 = vadd.f32 %v3276, %v3278
      %3385 = vadd.xlane.f32.xlu0 %v3384
      %v3386 = vpop.xlane.xlu0 %3385
      %v3387 = vadd.f32 %v3280, %v3282
      %3388 = vadd.xlane.f32.xlu0 %v3387
      %v3389 = vpop.xlane.xlu0 %3388
      %v3390 = vadd.f32 %v3284, %v3286
      %3391 = vadd.xlane.f32.xlu0 %v3390
      %v3392 = vpop.xlane.xlu0 %3391
      %v3393 = vadd.f32 %v3288, %v3290
      %3394 = vadd.xlane.f32.xlu0 %v3393
      %v3395 = vpop.xlane.xlu0 %3394
      %v3396 = vadd.f32 %v3292, %v3294
      %3397 = vadd.xlane.f32.xlu0 %v3396
      %v3398 = vpop.xlane.xlu0 %3397
      %v3399 = vadd.f32 %v3296, %v3298
      %3400 = vadd.xlane.f32.xlu0 %v3399
      %v3401 = vpop.xlane.xlu0 %3400
      %v3402 = vadd.f32 %v3300, %v3302
      %3403 = vadd.xlane.f32.xlu0 %v3402
      %v3404 = vpop.xlane.xlu0 %3403
      %v3405 = vadd.f32 %v3304, %v3306
      %3406 = vadd.xlane.f32.xlu0 %v3405
      %v3407 = vpop.xlane.xlu0 %3406
      %v3408 = vadd.f32 %v3308, %v3310
      %3409 = vadd.xlane.f32.xlu0 %v3408
      %v3410 = vpop.xlane.xlu0 %3409
      %v3411 = vadd.f32 %v3312, %v3314
      %3412 = vadd.xlane.f32.xlu0 %v3411
      %v3413 = vpop.xlane.xlu0 %3412
      %v3414 = vadd.f32 %v3316, %v3318
      %3415 = vadd.xlane.f32.xlu0 %v3414
      %v3416 = vpop.xlane.xlu0 %3415
      %v3417 = vadd.f32 %v3320, %v3322
      %3418 = vadd.xlane.f32.xlu0 %v3417
      %v3419 = vpop.xlane.xlu0 %3418
      %v3420 = vadd.f32 %v3324, %v3326
      %3421 = vadd.xlane.f32.xlu0 %v3420
      %v3422 = vpop.xlane.xlu0 %3421
      %v3423 = vpack.c.bf16 %v3204, %v3200
      %v3424 = vpack.c.bf16 %v3206, %v3202
      %v3425 = vpack.c.bf16 %v3212, %v3208
      %v3426 = vpack.c.bf16 %v3214, %v3210
      %v3427 = vpack.c.bf16 %v3220, %v3216
      %v3428 = vpack.c.bf16 %v3222, %v3218
      %v3429 = vpack.c.bf16 %v3228, %v3224
      %v3430 = vpack.c.bf16 %v3230, %v3226
      %v3431 = vpack.c.bf16 %v3236, %v3232
      %v3432 = vpack.c.bf16 %v3238, %v3234
      %v3433 = vpack.c.bf16 %v3244, %v3240
      %v3434 = vpack.c.bf16 %v3246, %v3242
      %v3435 = vpack.c.bf16 %v3252, %v3248
      %v3436 = vpack.c.bf16 %v3254, %v3250
      %v3437 = vpack.c.bf16 %v3260, %v3256
      %v3438 = vpack.c.bf16 %v3262, %v3258
      %v3439 = vpack.c.bf16 %v3268, %v3264
      %v3440 = vpack.c.bf16 %v3270, %v3266
      %v3441 = vpack.c.bf16 %v3276, %v3272
      %v3442 = vpack.c.bf16 %v3278, %v3274
      %v3443 = vpack.c.bf16 %v3284, %v3280
      %v3444 = vpack.c.bf16 %v3286, %v3282
      %v3445 = vpack.c.bf16 %v3292, %v3288
      %v3446 = vpack.c.bf16 %v3294, %v3290
      %v3447 = vpack.c.bf16 %v3300, %v3296
      %v3448 = vpack.c.bf16 %v3302, %v3298
      %v3449 = vpack.c.bf16 %v3308, %v3304
      %v3450 = vpack.c.bf16 %v3310, %v3306
      %v3451 = vpack.c.bf16 %v3316, %v3312
      %v3452 = vpack.c.bf16 %v3318, %v3314
      %v3453 = vpack.c.bf16 %v3324, %v3320
      %v3454 = vpack.c.bf16 %v3326, %v3322
      %3455 = vrot.lane.b32.xlu0 %v585, 56
      %v3456 = vpop.permute.xlu0 %3455
      %3457 = vrot.lane.b32.xlu0 %v586, 56
      %v3458 = vpop.permute.xlu0 %3457
      %3459 = vrot.lane.b32.xlu0 %v587, 56
      %v3460 = vpop.permute.xlu0 %3459
      %3461 = vrot.lane.b32.xlu0 %v588, 56
      %v3462 = vpop.permute.xlu0 %3461
      %3463 = vrot.lane.b32.xlu0 %v589, 56
      %v3464 = vpop.permute.xlu0 %3463
      %3465 = vrot.lane.b32.xlu0 %v590, 56
      %v3466 = vpop.permute.xlu0 %3465
      %3467 = vrot.lane.b32.xlu0 %v591, 56
      %v3468 = vpop.permute.xlu0 %3467
      %3469 = vrot.lane.b32.xlu0 %v592, 56
      %v3470 = vpop.permute.xlu0 %3469
      %3471 = vrot.lane.b32.xlu0 %v593, 56
      %v3472 = vpop.permute.xlu0 %3471
      %3473 = vrot.lane.b32.xlu0 %v594, 56
      %v3474 = vpop.permute.xlu0 %3473
      %3475 = vrot.lane.b32.xlu0 %v595, 56
      %v3476 = vpop.permute.xlu0 %3475
      %3477 = vrot.lane.b32.xlu0 %v596, 56
      %v3478 = vpop.permute.xlu0 %3477
      %3479 = vrot.lane.b32.xlu0 %v597, 56
      %v3480 = vpop.permute.xlu0 %3479
      %3481 = vrot.lane.b32.xlu0 %v598, 56
      %v3482 = vpop.permute.xlu0 %3481
      %3483 = vrot.lane.b32.xlu0 %v599, 56
      %v3484 = vpop.permute.xlu0 %3483
      %3485 = vrot.lane.b32.xlu0 %v600, 56
      %v3486 = vpop.permute.xlu0 %3485
      %3503 = vmatprep.subr.bf16.mxu0 0
      %3504 = vmatpush1.bf16.msra.mxu0 %v3456
      %3505 = vmatprep.subr.bf16.mxu0 0
      %3506 = vmatpush1.bf16.msra.mxu0 %v3458
      %3507 = vmatprep.subr.bf16.mxu0 0
      %3508 = vmatpush1.bf16.msra.mxu0 %v3460
      %3509 = vmatprep.subr.bf16.mxu0 0
      %3510 = vmatpush1.bf16.msra.mxu0 %v3462
      %3511 = vmatprep.subr.bf16.mxu0 0
      %3512 = vmatpush1.bf16.msra.mxu0 %v3464
      %3513 = vmatprep.subr.bf16.mxu0 0
      %3514 = vmatpush1.bf16.msra.mxu0 %v3466
      %3515 = vmatprep.subr.bf16.mxu0 0
      %3516 = vmatpush1.bf16.msra.mxu0 %v3468
      %3517 = vmatprep.subr.bf16.mxu0 0
      %3518 = vmatpush1.bf16.msra.mxu0 %v3470
      %3519 = vmatprep.subr.bf16.mxu0 0
      %3520 = vmatpush1.bf16.msra.mxu0 %v3472
      %3521 = vmatprep.subr.bf16.mxu0 0
      %3522 = vmatpush1.bf16.msra.mxu0 %v3474
      %3523 = vmatprep.subr.bf16.mxu0 0
      %3524 = vmatpush1.bf16.msra.mxu0 %v3476
      %3525 = vmatprep.subr.bf16.mxu0 0
      %3526 = vmatpush1.bf16.msra.mxu0 %v3478
      %3527 = vmatprep.subr.bf16.mxu0 0
      %3528 = vmatpush1.bf16.msra.mxu0 %v3480
      %3529 = vmatprep.subr.bf16.mxu0 0
      %3530 = vmatpush1.bf16.msra.mxu0 %v3482
      %3531 = vmatprep.subr.bf16.mxu0 0
      %3532 = vmatpush1.bf16.msra.mxu0 %v3484
      %3533 = vmatprep.subr.bf16.mxu0 0
      %3534 = vmatpush1.bf16.msra.mxu0 %v3486
      %3535 = vmatprep.mubr.bf16.mxu0 %v3424
      %3536 = vmatmul.mubr.bf16.gmra.mrb[0].mxu0 %v3423
      %v3537 = vpop.f32.mrb[0].mxu0
      %v3538 = vadd.f32 0.0, %v3537
      %v3539 = vpop.f32.mrb[0].mxu0
      %v3540 = vpop.f32.mrb[0].mxu0
      %v3541 = vadd.f32 0.0, %v3540
      %v3542 = vpop.f32.mrb[0].mxu0
      %3543 = vmatprep.mubr.bf16.mxu0 %v3426
      %3544 = vmatmul.mubr.bf16.gmra.mrb[0].mxu0 %v3425
      %v3545 = vpop.f32.mrb[0].mxu0
      %v3546 = vadd.f32 0.0, %v3545
      %v3547 = vpop.f32.mrb[0].mxu0
      %v3548 = vpop.f32.mrb[0].mxu0
      %v3549 = vadd.f32 0.0, %v3548
      %v3550 = vpop.f32.mrb[0].mxu0
      %3551 = vmatprep.mubr.bf16.mxu0 %v3428
      %3552 = vmatmul.mubr.bf16.gmra.mrb[0].mxu0 %v3427
      %v3553 = vpop.f32.mrb[0].mxu0
      %v3554 = vadd.f32 0.0, %v3553
      %v3555 = vpop.f32.mrb[0].mxu0
      %v3556 = vpop.f32.mrb[0].mxu0
      %v3557 = vadd.f32 0.0, %v3556
      %v3558 = vpop.f32.mrb[0].mxu0
      %3559 = vmatprep.mubr.bf16.mxu0 %v3430
      %3560 = vmatmul.mubr.bf16.gmra.mrb[0].mxu0 %v3429
      %v3561 = vpop.f32.mrb[0].mxu0
      %v3562 = vadd.f32 0.0, %v3561
      %v3563 = vpop.f32.mrb[0].mxu0
      %v3564 = vpop.f32.mrb[0].mxu0
      %v3565 = vadd.f32 0.0, %v3564
      %v3566 = vpop.f32.mrb[0].mxu0
      %3567 = vmatprep.mubr.bf16.mxu0 %v3432
      %3568 = vmatmul.mubr.bf16.gmra.mrb[0].mxu0 %v3431
      %v3569 = vpop.f32.mrb[0].mxu0
      %v3570 = vadd.f32 0.0, %v3569
      %v3571 = vpop.f32.mrb[0].mxu0
      %v3572 = vpop.f32.mrb[0].mxu0
      %v3573 = vadd.f32 0.0, %v3572
      %v3574 = vpop.f32.mrb[0].mxu0
      %3575 = vmatprep.mubr.bf16.mxu0 %v3434
      %3576 = vmatmul.mubr.bf16.gmra.mrb[0].mxu0 %v3433
      %v3577 = vpop.f32.mrb[0].mxu0
      %v3578 = vadd.f32 0.0, %v3577
      %v3579 = vpop.f32.mrb[0].mxu0
      %v3580 = vpop.f32.mrb[0].mxu0
      %v3581 = vadd.f32 0.0, %v3580
      %v3582 = vpop.f32.mrb[0].mxu0
      %3583 = vmatprep.mubr.bf16.mxu0 %v3436
      %3584 = vmatmul.mubr.bf16.gmra.mrb[0].mxu0 %v3435
      %v3585 = vpop.f32.mrb[0].mxu0
      %v3586 = vadd.f32 0.0, %v3585
      %v3587 = vpop.f32.mrb[0].mxu0
      %v3588 = vpop.f32.mrb[0].mxu0
      %v3589 = vadd.f32 0.0, %v3588
      %v3590 = vpop.f32.mrb[0].mxu0
      %3591 = vmatprep.mubr.bf16.mxu0 %v3438
      %3592 = vmatmul.mubr.bf16.gmra.mrb[0].mxu0 %v3437
      %v3593 = vpop.f32.mrb[0].mxu0
      %v3594 = vadd.f32 0.0, %v3593
      %v3595 = vpop.f32.mrb[0].mxu0
      %v3596 = vpop.f32.mrb[0].mxu0
      %v3597 = vadd.f32 0.0, %v3596
      %v3598 = vpop.f32.mrb[0].mxu0
      %3599 = vmatprep.mubr.bf16.mxu0 %v3440
      %3600 = vmatmul.mubr.bf16.gmra.mrb[0].mxu0 %v3439
      %v3601 = vpop.f32.mrb[0].mxu0
      %v3602 = vadd.f32 0.0, %v3601
      %v3603 = vpop.f32.mrb[0].mxu0
      %v3604 = vpop.f32.mrb[0].mxu0
      %v3605 = vadd.f32 0.0, %v3604
      %v3606 = vpop.f32.mrb[0].mxu0
      %3607 = vmatprep.mubr.bf16.mxu0 %v3442
      %3608 = vmatmul.mubr.bf16.gmra.mrb[0].mxu0 %v3441
      %v3609 = vpop.f32.mrb[0].mxu0
      %v3610 = vadd.f32 0.0, %v3609
      %v3611 = vpop.f32.mrb[0].mxu0
      %v3612 = vpop.f32.mrb[0].mxu0
      %v3613 = vadd.f32 0.0, %v3612
      %v3614 = vpop.f32.mrb[0].mxu0
      %3615 = vmatprep.mubr.bf16.mxu0 %v3444
      %3616 = vmatmul.mubr.bf16.gmra.mrb[0].mxu0 %v3443
      %v3617 = vpop.f32.mrb[0].mxu0
      %v3618 = vadd.f32 0.0, %v3617
      %v3619 = vpop.f32.mrb[0].mxu0
      %v3620 = vpop.f32.mrb[0].mxu0
      %v3621 = vadd.f32 0.0, %v3620
      %v3622 = vpop.f32.mrb[0].mxu0
      %3623 = vmatprep.mubr.bf16.mxu0 %v3446
      %3624 = vmatmul.mubr.bf16.gmra.mrb[0].mxu0 %v3445
      %v3625 = vpop.f32.mrb[0].mxu0
      %v3626 = vadd.f32 0.0, %v3625
      %v3627 = vpop.f32.mrb[0].mxu0
      %v3628 = vpop.f32.mrb[0].mxu0
      %v3629 = vadd.f32 0.0, %v3628
      %v3630 = vpop.f32.mrb[0].mxu0
      %3631 = vmatprep.mubr.bf16.mxu0 %v3448
      %3632 = vmatmul.mubr.bf16.gmra.mrb[0].mxu0 %v3447
      %v3633 = vpop.f32.mrb[0].mxu0
      %v3634 = vadd.f32 0.0, %v3633
      %v3635 = vpop.f32.mrb[0].mxu0
      %v3636 = vpop.f32.mrb[0].mxu0
      %v3637 = vadd.f32 0.0, %v3636
      %v3638 = vpop.f32.mrb[0].mxu0
      %3639 = vmatprep.mubr.bf16.mxu0 %v3450
      %3640 = vmatmul.mubr.bf16.gmra.mrb[0].mxu0 %v3449
      %v3641 = vpop.f32.mrb[0].mxu0
      %v3642 = vadd.f32 0.0, %v3641
      %v3643 = vpop.f32.mrb[0].mxu0
      %v3644 = vpop.f32.mrb[0].mxu0
      %v3645 = vadd.f32 0.0, %v3644
      %v3646 = vpop.f32.mrb[0].mxu0
      %3647 = vmatprep.mubr.bf16.mxu0 %v3452
      %3648 = vmatmul.mubr.bf16.gmra.mrb[0].mxu0 %v3451
      %v3649 = vpop.f32.mrb[0].mxu0
      %v3650 = vadd.f32 0.0, %v3649
      %v3651 = vpop.f32.mrb[0].mxu0
      %v3652 = vpop.f32.mrb[0].mxu0
      %v3653 = vadd.f32 0.0, %v3652
      %v3654 = vpop.f32.mrb[0].mxu0
      %3655 = vmatprep.mubr.bf16.mxu0 %v3454
      %3656 = vmatmul.mubr.bf16.gmra.mrb[0].mxu0 %v3453
      %v3657 = vpop.f32.mrb[0].mxu0
      %v3658 = vadd.f32 0.0, %v3657
      %v3659 = vpop.f32.mrb[0].mxu0
      %v3660 = vpop.f32.mrb[0].mxu0
      %v3661 = vadd.f32 0.0, %v3660
      %v3662 = vpop.f32.mrb[0].mxu0
      %3663 = vdwg.mxu0
      %v3664 = vrcp.pop %v3329
      %v3665 = vrcp.pop %v3332
      %v3666 = vrcp.pop %v3335
      %v3667 = vrcp.pop %v3338
      %v3668 = vrcp.pop %v3341
      %v3669 = vrcp.pop %v3344
      %v3670 = vrcp.pop %v3347
      %v3671 = vrcp.pop %v3350
      %v3672 = vrcp.pop %v3353
      %v3673 = vrcp.pop %v3356
      %v3674 = vrcp.pop %v3359
      %v3675 = vrcp.pop %v3362
      %v3676 = vrcp.pop %v3365
      %v3677 = vrcp.pop %v3368
      %v3678 = vrcp.pop %v3371
      %v3679 = vrcp.pop %v3374
      %v3680 = vrcp.pop %v3377
      %v3681 = vrcp.pop %v3380
      %v3682 = vrcp.pop %v3383
      %v3683 = vrcp.pop %v3386
      %v3684 = vrcp.pop %v3389
      %v3685 = vrcp.pop %v3392
      %v3686 = vrcp.pop %v3395
      %v3687 = vrcp.pop %v3398
      %v3688 = vrcp.pop %v3401
      %v3689 = vrcp.pop %v3404
      %v3690 = vrcp.pop %v3407
      %v3691 = vrcp.pop %v3410
      %v3692 = vrcp.pop %v3413
      %v3693 = vrcp.pop %v3416
      %v3694 = vrcp.pop %v3419
      %v3695 = vrcp.pop %v3422
      %v3696 = vmul.f32 %v3538, %v3664
      %v3697 = vmul.f32 %v3541, %v3665
      %v3698 = vmul.f32 %v3546, %v3666
      %v3699 = vmul.f32 %v3549, %v3667
      %v3700 = vmul.f32 %v3554, %v3668
      %v3701 = vmul.f32 %v3557, %v3669
      %v3702 = vmul.f32 %v3562, %v3670
      %v3703 = vmul.f32 %v3565, %v3671
      %v3704 = vmul.f32 %v3570, %v3672
      %v3705 = vmul.f32 %v3573, %v3673
      %v3706 = vmul.f32 %v3578, %v3674
      %v3707 = vmul.f32 %v3581, %v3675
      %v3708 = vmul.f32 %v3586, %v3676
      %v3709 = vmul.f32 %v3589, %v3677
      %v3710 = vmul.f32 %v3594, %v3678
      %v3711 = vmul.f32 %v3597, %v3679
      %v3712 = vmul.f32 %v3602, %v3680
      %v3713 = vmul.f32 %v3605, %v3681
      %v3714 = vmul.f32 %v3610, %v3682
      %v3715 = vmul.f32 %v3613, %v3683
      %v3716 = vmul.f32 %v3618, %v3684
      %v3717 = vmul.f32 %v3621, %v3685
      %v3718 = vmul.f32 %v3626, %v3686
      %v3719 = vmul.f32 %v3629, %v3687
      %v3720 = vmul.f32 %v3634, %v3688
      %v3721 = vmul.f32 %v3637, %v3689
      %v3722 = vmul.f32 %v3642, %v3690
      %v3723 = vmul.f32 %v3645, %v3691
      %v3724 = vmul.f32 %v3650, %v3692
      %v3725 = vmul.f32 %v3653, %v3693
      %v3726 = vmul.f32 %v3658, %v3694
      %v3727 = vmul.f32 %v3661, %v3695
      %3728 = vrot.lane.b32.xlu0 %v569, 116
      %v3729 = vpop.permute.xlu0 %3728
      %3730 = vrot.lane.b32.xlu0 %v570, 116
      %v3731 = vpop.permute.xlu0 %3730
      %3732 = vrot.lane.b32.xlu0 %v571, 116
      %v3733 = vpop.permute.xlu0 %3732
      %3734 = vrot.lane.b32.xlu0 %v572, 116
      %v3735 = vpop.permute.xlu0 %3734
      %3736 = vrot.lane.b32.xlu0 %v573, 116
      %v3737 = vpop.permute.xlu0 %3736
      %3738 = vrot.lane.b32.xlu0 %v574, 116
      %v3739 = vpop.permute.xlu0 %3738
      %3740 = vrot.lane.b32.xlu0 %v575, 116
      %v3741 = vpop.permute.xlu0 %3740
      %3742 = vrot.lane.b32.xlu0 %v576, 116
      %v3743 = vpop.permute.xlu0 %3742
      %3744 = vrot.lane.b32.xlu0 %v577, 116
      %v3745 = vpop.permute.xlu0 %3744
      %3746 = vrot.lane.b32.xlu0 %v578, 116
      %v3747 = vpop.permute.xlu0 %3746
      %3748 = vrot.lane.b32.xlu0 %v579, 116
      %v3749 = vpop.permute.xlu0 %3748
      %3750 = vrot.lane.b32.xlu0 %v580, 116
      %v3751 = vpop.permute.xlu0 %3750
      %3752 = vrot.lane.b32.xlu0 %v581, 116
      %v3753 = vpop.permute.xlu0 %3752
      %3754 = vrot.lane.b32.xlu0 %v582, 116
      %v3755 = vpop.permute.xlu0 %3754
      %3756 = vrot.lane.b32.xlu0 %v583, 116
      %v3757 = vpop.permute.xlu0 %3756
      %3758 = vrot.lane.b32.xlu0 %v584, 116
      %v3759 = vpop.permute.xlu0 %3758
      %3760 = vrot.lane.b32.xlu0 %v585, 84
      %v3761 = vpop.permute.xlu0 %3760
      %3762 = vrot.lane.b32.xlu0 %v586, 84
      %v3763 = vpop.permute.xlu0 %3762
      %3764 = vrot.lane.b32.xlu0 %v587, 84
      %v3765 = vpop.permute.xlu0 %3764
      %3766 = vrot.lane.b32.xlu0 %v588, 84
      %v3767 = vpop.permute.xlu0 %3766
      %3768 = vrot.lane.b32.xlu0 %v589, 84
      %v3769 = vpop.permute.xlu0 %3768
      %3770 = vrot.lane.b32.xlu0 %v590, 84
      %v3771 = vpop.permute.xlu0 %3770
      %3772 = vrot.lane.b32.xlu0 %v591, 84
      %v3773 = vpop.permute.xlu0 %3772
      %3774 = vrot.lane.b32.xlu0 %v592, 84
      %v3775 = vpop.permute.xlu0 %3774
      %3776 = vrot.lane.b32.xlu0 %v593, 84
      %v3777 = vpop.permute.xlu0 %3776
      %3778 = vrot.lane.b32.xlu0 %v594, 84
      %v3779 = vpop.permute.xlu0 %3778
      %3780 = vrot.lane.b32.xlu0 %v595, 84
      %v3781 = vpop.permute.xlu0 %3780
      %3782 = vrot.lane.b32.xlu0 %v596, 84
      %v3783 = vpop.permute.xlu0 %3782
      %3784 = vrot.lane.b32.xlu0 %v597, 84
      %v3785 = vpop.permute.xlu0 %3784
      %3786 = vrot.lane.b32.xlu0 %v598, 84
      %v3787 = vpop.permute.xlu0 %3786
      %3788 = vrot.lane.b32.xlu0 %v599, 84
      %v3789 = vpop.permute.xlu0 %3788
      %3790 = vrot.lane.b32.xlu0 %v600, 84
      %v3791 = vpop.permute.xlu0 %3790
      %v3793 = vsel %vm649, %v3729, 0
      %v3796 = vsel %vm649, %v3731, 0
      %v3799 = vsel %vm649, %v3733, 0
      %v3802 = vsel %vm649, %v3735, 0
      %v3805 = vsel %vm649, %v3737, 0
      %v3808 = vsel %vm649, %v3739, 0
      %v3811 = vsel %vm649, %v3741, 0
      %v3814 = vsel %vm649, %v3743, 0
      %v3817 = vsel %vm649, %v3745, 0
      %v3820 = vsel %vm649, %v3747, 0
      %v3823 = vsel %vm649, %v3749, 0
      %v3826 = vsel %vm649, %v3751, 0
      %v3829 = vsel %vm649, %v3753, 0
      %v3832 = vsel %vm649, %v3755, 0
      %v3835 = vsel %vm649, %v3757, 0
      %v3838 = vsel %vm649, %v3759, 0
      %v3841 = vsel %vm649, %v3761, 0
      %v3844 = vsel %vm649, %v3763, 0
      %v3847 = vsel %vm649, %v3765, 0
      %v3850 = vsel %vm649, %v3767, 0
      %v3853 = vsel %vm649, %v3769, 0
      %v3856 = vsel %vm649, %v3771, 0
      %v3859 = vsel %vm649, %v3773, 0
      %v3862 = vsel %vm649, %v3775, 0
      %v3865 = vsel %vm649, %v3777, 0
      %v3868 = vsel %vm649, %v3779, 0
      %v3871 = vsel %vm649, %v3781, 0
      %v3874 = vsel %vm649, %v3783, 0
      %v3877 = vsel %vm649, %v3785, 0
      %v3880 = vsel %vm649, %v3787, 0
      %v3883 = vsel %vm649, %v3789, 0
      %v3886 = vsel %vm649, %v3791, 0
      %3888 = vmatprep.subr.bf16.mxu0 0
      %3889 = vmatpush1.bf16.xpose.msra.mxu0 %v3841
      %3890 = vmatprep.subr.bf16.mxu0 0
      %3891 = vmatpush1.bf16.xpose.msra.mxu0 %v3844
      %3892 = vmatprep.subr.bf16.mxu0 0
      %3893 = vmatpush1.bf16.xpose.msra.mxu0 %v3847
      %3894 = vmatprep.subr.bf16.mxu0 0
      %3895 = vmatpush1.bf16.xpose.msra.mxu0 %v3850
      %3896 = vmatprep.subr.bf16.mxu0 0
      %3897 = vmatpush1.bf16.xpose.msra.mxu0 %v3853
      %3898 = vmatprep.subr.bf16.mxu0 0
      %3899 = vmatpush1.bf16.xpose.msra.mxu0 %v3856
      %3900 = vmatprep.subr.bf16.mxu0 0
      %3901 = vmatpush1.bf16.xpose.msra.mxu0 %v3859
      %3902 = vmatprep.subr.bf16.mxu0 0
      %3903 = vmatpush1.bf16.xpose.msra.mxu0 %v3862
      %3904 = vmatprep.subr.bf16.mxu0 0
      %3905 = vmatpush1.bf16.xpose.msra.mxu0 %v3865
      %3906 = vmatprep.subr.bf16.mxu0 0
      %3907 = vmatpush1.bf16.xpose.msra.mxu0 %v3868
      %3908 = vmatprep.subr.bf16.mxu0 0
      %3909 = vmatpush1.bf16.xpose.msra.mxu0 %v3871
      %3910 = vmatprep.subr.bf16.mxu0 0
      %3911 = vmatpush1.bf16.xpose.msra.mxu0 %v3874
      %3912 = vmatprep.subr.bf16.mxu0 0
      %3913 = vmatpush1.bf16.xpose.msra.mxu0 %v3877
      %3914 = vmatprep.subr.bf16.mxu0 0
      %3915 = vmatpush1.bf16.xpose.msra.mxu0 %v3880
      %3916 = vmatprep.subr.bf16.mxu0 0
      %3917 = vmatpush1.bf16.xpose.msra.mxu0 %v3883
      %3918 = vmatprep.subr.bf16.mxu0 0
      %3919 = vmatpush1.bf16.xpose.msra.mxu0 %v3886
      %3920 = vmatprep.mubr.bf16.mxu0 0
      %3921 = vmatmul.mubr.bf16.gmra.mrb[0].mxu0 %v3793
      %v3922 = vpop.f32.mrb[0].mxu0
      %v3923 = vadd.f32 0.0, %v3922
      %v3924 = vpop.f32.mrb[0].mxu0
      %v3925 = vadd.f32 0.0, %v3924
      %v3926 = vpop.f32.mrb[0].mxu0
      %v3927 = vadd.f32 0.0, %v3926
      %v3928 = vpop.f32.mrb[0].mxu0
      %v3929 = vadd.f32 0.0, %v3928
      %3930 = vmatprep.mubr.bf16.mxu0 0
      %3931 = vmatmul.mubr.bf16.gmra.mrb[0].mxu0 %v3796
      %v3932 = vpop.f32.mrb[0].mxu0
      %v3933 = vadd.f32 0.0, %v3932
      %v3934 = vpop.f32.mrb[0].mxu0
      %v3935 = vadd.f32 0.0, %v3934
      %v3936 = vpop.f32.mrb[0].mxu0
      %v3937 = vadd.f32 0.0, %v3936
      %v3938 = vpop.f32.mrb[0].mxu0
      %v3939 = vadd.f32 0.0, %v3938
      %3940 = vmatprep.mubr.bf16.mxu0 0
      %3941 = vmatmul.mubr.bf16.gmra.mrb[0].mxu0 %v3799
      %v3942 = vpop.f32.mrb[0].mxu0
      %v3943 = vadd.f32 0.0, %v3942
      %v3944 = vpop.f32.mrb[0].mxu0
      %v3945 = vadd.f32 0.0, %v3944
      %v3946 = vpop.f32.mrb[0].mxu0
      %v3947 = vadd.f32 0.0, %v3946
      %v3948 = vpop.f32.mrb[0].mxu0
      %v3949 = vadd.f32 0.0, %v3948
      %3950 = vmatprep.mubr.bf16.mxu0 0
      %3951 = vmatmul.mubr.bf16.gmra.mrb[0].mxu0 %v3802
      %v3952 = vpop.f32.mrb[0].mxu0
      %v3953 = vadd.f32 0.0, %v3952
      %v3954 = vpop.f32.mrb[0].mxu0
      %v3955 = vadd.f32 0.0, %v3954
      %v3956 = vpop.f32.mrb[0].mxu0
      %v3957 = vadd.f32 0.0, %v3956
      %v3958 = vpop.f32.mrb[0].mxu0
      %v3959 = vadd.f32 0.0, %v3958
      %3960 = vmatprep.mubr.bf16.mxu0 0
      %3961 = vmatmul.mubr.bf16.gmra.mrb[0].mxu0 %v3805
      %v3962 = vpop.f32.mrb[0].mxu0
      %v3963 = vadd.f32 0.0, %v3962
      %v3964 = vpop.f32.mrb[0].mxu0
      %v3965 = vadd.f32 0.0, %v3964
      %v3966 = vpop.f32.mrb[0].mxu0
      %v3967 = vadd.f32 0.0, %v3966
      %v3968 = vpop.f32.mrb[0].mxu0
      %v3969 = vadd.f32 0.0, %v3968
      %3970 = vmatprep.mubr.bf16.mxu0 0
      %3971 = vmatmul.mubr.bf16.gmra.mrb[0].mxu0 %v3808
      %v3972 = vpop.f32.mrb[0].mxu0
      %v3973 = vadd.f32 0.0, %v3972
      %v3974 = vpop.f32.mrb[0].mxu0
      %v3975 = vadd.f32 0.0, %v3974
      %v3976 = vpop.f32.mrb[0].mxu0
      %v3977 = vadd.f32 0.0, %v3976
      %v3978 = vpop.f32.mrb[0].mxu0
      %v3979 = vadd.f32 0.0, %v3978
      %3980 = vmatprep.mubr.bf16.mxu0 0
      %3981 = vmatmul.mubr.bf16.gmra.mrb[0].mxu0 %v3811
      %v3982 = vpop.f32.mrb[0].mxu0
      %v3983 = vadd.f32 0.0, %v3982
      %v3984 = vpop.f32.mrb[0].mxu0
      %v3985 = vadd.f32 0.0, %v3984
      %v3986 = vpop.f32.mrb[0].mxu0
      %v3987 = vadd.f32 0.0, %v3986
      %v3988 = vpop.f32.mrb[0].mxu0
      %v3989 = vadd.f32 0.0, %v3988
      %3990 = vmatprep.mubr.bf16.mxu0 0
      %3991 = vmatmul.mubr.bf16.gmra.mrb[0].mxu0 %v3814
      %v3992 = vpop.f32.mrb[0].mxu0
      %v3993 = vadd.f32 0.0, %v3992
      %v3994 = vpop.f32.mrb[0].mxu0
      %v3995 = vadd.f32 0.0, %v3994
      %v3996 = vpop.f32.mrb[0].mxu0
      %v3997 = vadd.f32 0.0, %v3996
      %v3998 = vpop.f32.mrb[0].mxu0
      %v3999 = vadd.f32 0.0, %v3998
      %4000 = vmatprep.mubr.bf16.mxu0 0
      %4001 = vmatmul.mubr.bf16.gmra.mrb[0].mxu0 %v3817
      %v4002 = vpop.f32.mrb[0].mxu0
      %v4003 = vadd.f32 0.0, %v4002
      %v4004 = vpop.f32.mrb[0].mxu0
      %v4005 = vadd.f32 0.0, %v4004
      %v4006 = vpop.f32.mrb[0].mxu0
      %v4007 = vadd.f32 0.0, %v4006
      %v4008 = vpop.f32.mrb[0].mxu0
      %v4009 = vadd.f32 0.0, %v4008
      %4010 = vmatprep.mubr.bf16.mxu0 0
      %4011 = vmatmul.mubr.bf16.gmra.mrb[0].mxu0 %v3820
      %v4012 = vpop.f32.mrb[0].mxu0
      %v4013 = vadd.f32 0.0, %v4012
      %v4014 = vpop.f32.mrb[0].mxu0
      %v4015 = vadd.f32 0.0, %v4014
      %v4016 = vpop.f32.mrb[0].mxu0
      %v4017 = vadd.f32 0.0, %v4016
      %v4018 = vpop.f32.mrb[0].mxu0
      %v4019 = vadd.f32 0.0, %v4018
      %4020 = vmatprep.mubr.bf16.mxu0 0
      %4021 = vmatmul.mubr.bf16.gmra.mrb[0].mxu0 %v3823
      %v4022 = vpop.f32.mrb[0].mxu0
      %v4023 = vadd.f32 0.0, %v4022
      %v4024 = vpop.f32.mrb[0].mxu0
      %v4025 = vadd.f32 0.0, %v4024
      %v4026 = vpop.f32.mrb[0].mxu0
      %v4027 = vadd.f32 0.0, %v4026
      %v4028 = vpop.f32.mrb[0].mxu0
      %v4029 = vadd.f32 0.0, %v4028
      %4030 = vmatprep.mubr.bf16.mxu0 0
      %4031 = vmatmul.mubr.bf16.gmra.mrb[0].mxu0 %v3826
      %v4032 = vpop.f32.mrb[0].mxu0
      %v4033 = vadd.f32 0.0, %v4032
      %v4034 = vpop.f32.mrb[0].mxu0
      %v4035 = vadd.f32 0.0, %v4034
      %v4036 = vpop.f32.mrb[0].mxu0
      %v4037 = vadd.f32 0.0, %v4036
      %v4038 = vpop.f32.mrb[0].mxu0
      %v4039 = vadd.f32 0.0, %v4038
      %4040 = vmatprep.mubr.bf16.mxu0 0
      %4041 = vmatmul.mubr.bf16.gmra.mrb[0].mxu0 %v3829
      %v4042 = vpop.f32.mrb[0].mxu0
      %v4043 = vadd.f32 0.0, %v4042
      %v4044 = vpop.f32.mrb[0].mxu0
      %v4045 = vadd.f32 0.0, %v4044
      %v4046 = vpop.f32.mrb[0].mxu0
      %v4047 = vadd.f32 0.0, %v4046
      %v4048 = vpop.f32.mrb[0].mxu0
      %v4049 = vadd.f32 0.0, %v4048
      %4050 = vmatprep.mubr.bf16.mxu0 0
      %4051 = vmatmul.mubr.bf16.gmra.mrb[0].mxu0 %v3832
      %v4052 = vpop.f32.mrb[0].mxu0
      %v4053 = vadd.f32 0.0, %v4052
      %v4054 = vpop.f32.mrb[0].mxu0
      %v4055 = vadd.f32 0.0, %v4054
      %v4056 = vpop.f32.mrb[0].mxu0
      %v4057 = vadd.f32 0.0, %v4056
      %v4058 = vpop.f32.mrb[0].mxu0
      %v4059 = vadd.f32 0.0, %v4058
      %4060 = vmatprep.mubr.bf16.mxu0 0
      %4061 = vmatmul.mubr.bf16.gmra.mrb[0].mxu0 %v3835
      %v4062 = vpop.f32.mrb[0].mxu0
      %v4063 = vadd.f32 0.0, %v4062
      %v4064 = vpop.f32.mrb[0].mxu0
      %v4065 = vadd.f32 0.0, %v4064
      %v4066 = vpop.f32.mrb[0].mxu0
      %v4067 = vadd.f32 0.0, %v4066
      %v4068 = vpop.f32.mrb[0].mxu0
      %v4069 = vadd.f32 0.0, %v4068
      %4070 = vmatprep.mubr.bf16.mxu0 0
      %4071 = vmatmul.mubr.bf16.gmra.mrb[0].mxu0 %v3838
      %v4072 = vpop.f32.mrb[0].mxu0
      %v4073 = vadd.f32 0.0, %v4072
      %v4074 = vpop.f32.mrb[0].mxu0
      %v4075 = vadd.f32 0.0, %v4074
      %v4076 = vpop.f32.mrb[0].mxu0
      %v4077 = vadd.f32 0.0, %v4076
      %v4078 = vpop.f32.mrb[0].mxu0
      %v4079 = vadd.f32 0.0, %v4078
      %4080 = vdwg.mxu0
      %v4081 = vmax.f32 %v3923, %v3925
      %4082 = vmax.xlane.f32.xlu0 %v4081
      %v4083 = vpop.xlane.xlu0 %4082
      %v4084 = vmax.f32 %v3927, %v3929
      %4085 = vmax.xlane.f32.xlu0 %v4084
      %v4086 = vpop.xlane.xlu0 %4085
      %v4087 = vmax.f32 %v3933, %v3935
      %4088 = vmax.xlane.f32.xlu0 %v4087
      %v4089 = vpop.xlane.xlu0 %4088
      %v4090 = vmax.f32 %v3937, %v3939
      %4091 = vmax.xlane.f32.xlu0 %v4090
      %v4092 = vpop.xlane.xlu0 %4091
      %v4093 = vmax.f32 %v3943, %v3945
      %4094 = vmax.xlane.f32.xlu0 %v4093
      %v4095 = vpop.xlane.xlu0 %4094
      %v4096 = vmax.f32 %v3947, %v3949
      %4097 = vmax.xlane.f32.xlu0 %v4096
      %v4098 = vpop.xlane.xlu0 %4097
      %v4099 = vmax.f32 %v3953, %v3955
      %4100 = vmax.xlane.f32.xlu0 %v4099
      %v4101 = vpop.xlane.xlu0 %4100
      %v4102 = vmax.f32 %v3957, %v3959
      %4103 = vmax.xlane.f32.xlu0 %v4102
      %v4104 = vpop.xlane.xlu0 %4103
      %v4105 = vmax.f32 %v3963, %v3965
      %4106 = vmax.xlane.f32.xlu0 %v4105
      %v4107 = vpop.xlane.xlu0 %4106
      %v4108 = vmax.f32 %v3967, %v3969
      %4109 = vmax.xlane.f32.xlu0 %v4108
      %v4110 = vpop.xlane.xlu0 %4109
      %v4111 = vmax.f32 %v3973, %v3975
      %4112 = vmax.xlane.f32.xlu0 %v4111
      %v4113 = vpop.xlane.xlu0 %4112
      %v4114 = vmax.f32 %v3977, %v3979
      %4115 = vmax.xlane.f32.xlu0 %v4114
      %v4116 = vpop.xlane.xlu0 %4115
      %v4117 = vmax.f32 %v3983, %v3985
      %4118 = vmax.xlane.f32.xlu0 %v4117
      %v4119 = vpop.xlane.xlu0 %4118
      %v4120 = vmax.f32 %v3987, %v3989
      %4121 = vmax.xlane.f32.xlu0 %v4120
      %v4122 = vpop.xlane.xlu0 %4121
      %v4123 = vmax.f32 %v3993, %v3995
      %4124 = vmax.xlane.f32.xlu0 %v4123
      %v4125 = vpop.xlane.xlu0 %4124
      %v4126 = vmax.f32 %v3997, %v3999
      %4127 = vmax.xlane.f32.xlu0 %v4126
      %v4128 = vpop.xlane.xlu0 %4127
      %v4129 = vmax.f32 %v4003, %v4005
      %4130 = vmax.xlane.f32.xlu0 %v4129
      %v4131 = vpop.xlane.xlu0 %4130
      %v4132 = vmax.f32 %v4007, %v4009
      %4133 = vmax.xlane.f32.xlu0 %v4132
      %v4134 = vpop.xlane.xlu0 %4133
      %v4135 = vmax.f32 %v4013, %v4015
      %4136 = vmax.xlane.f32.xlu0 %v4135
      %v4137 = vpop.xlane.xlu0 %4136
      %v4138 = vmax.f32 %v4017, %v4019
      %4139 = vmax.xlane.f32.xlu0 %v4138
      %v4140 = vpop.xlane.xlu0 %4139
      %v4141 = vmax.f32 %v4023, %v4025
      %4142 = vmax.xlane.f32.xlu0 %v4141
      %v4143 = vpop.xlane.xlu0 %4142
      %v4144 = vmax.f32 %v4027, %v4029
      %4145 = vmax.xlane.f32.xlu0 %v4144
      %v4146 = vpop.xlane.xlu0 %4145
      %v4147 = vmax.f32 %v4033, %v4035
      %4148 = vmax.xlane.f32.xlu0 %v4147
      %v4149 = vpop.xlane.xlu0 %4148
      %v4150 = vmax.f32 %v4037, %v4039
      %4151 = vmax.xlane.f32.xlu0 %v4150
      %v4152 = vpop.xlane.xlu0 %4151
      %v4153 = vmax.f32 %v4043, %v4045
      %4154 = vmax.xlane.f32.xlu0 %v4153
      %v4155 = vpop.xlane.xlu0 %4154
      %v4156 = vmax.f32 %v4047, %v4049
      %4157 = vmax.xlane.f32.xlu0 %v4156
      %v4158 = vpop.xlane.xlu0 %4157
      %v4159 = vmax.f32 %v4053, %v4055
      %4160 = vmax.xlane.f32.xlu0 %v4159
      %v4161 = vpop.xlane.xlu0 %4160
      %v4162 = vmax.f32 %v4057, %v4059
      %4163 = vmax.xlane.f32.xlu0 %v4162
      %v4164 = vpop.xlane.xlu0 %4163
      %v4165 = vmax.f32 %v4063, %v4065
      %4166 = vmax.xlane.f32.xlu0 %v4165
      %v4167 = vpop.xlane.xlu0 %4166
      %v4168 = vmax.f32 %v4067, %v4069
      %4169 = vmax.xlane.f32.xlu0 %v4168
      %v4170 = vpop.xlane.xlu0 %4169
      %v4171 = vmax.f32 %v4073, %v4075
      %4172 = vmax.xlane.f32.xlu0 %v4171
      %v4173 = vpop.xlane.xlu0 %4172
      %v4174 = vmax.f32 %v4077, %v4079
      %4175 = vmax.xlane.f32.xlu0 %v4174
      %v4176 = vpop.xlane.xlu0 %4175
      %v4177 = vsub.f32 %v3923, %v4083
      %v4178 = vsub.f32 %v3925, %v4083
      %v4179 = vsub.f32 %v3927, %v4086
      %v4180 = vsub.f32 %v3929, %v4086
      %v4181 = vsub.f32 %v3933, %v4089
      %v4182 = vsub.f32 %v3935, %v4089
      %v4183 = vsub.f32 %v3937, %v4092
      %v4184 = vsub.f32 %v3939, %v4092
      %v4185 = vsub.f32 %v3943, %v4095
      %v4186 = vsub.f32 %v3945, %v4095
      %v4187 = vsub.f32 %v3947, %v4098
      %v4188 = vsub.f32 %v3949, %v4098
      %v4189 = vsub.f32 %v3953, %v4101
      %v4190 = vsub.f32 %v3955, %v4101
      %v4191 = vsub.f32 %v3957, %v4104
      %v4192 = vsub.f32 %v3959, %v4104
      %v4193 = vsub.f32 %v3963, %v4107
      %v4194 = vsub.f32 %v3965, %v4107
      %v4195 = vsub.f32 %v3967, %v4110
      %v4196 = vsub.f32 %v3969, %v4110
      %v4197 = vsub.f32 %v3973, %v4113
      %v4198 = vsub.f32 %v3975, %v4113
      %v4199 = vsub.f32 %v3977, %v4116
      %v4200 = vsub.f32 %v3979, %v4116
      %v4201 = vsub.f32 %v3983, %v4119
      %v4202 = vsub.f32 %v3985, %v4119
      %v4203 = vsub.f32 %v3987, %v4122
      %v4204 = vsub.f32 %v3989, %v4122
      %v4205 = vsub.f32 %v3993, %v4125
      %v4206 = vsub.f32 %v3995, %v4125
      %v4207 = vsub.f32 %v3997, %v4128
      %v4208 = vsub.f32 %v3999, %v4128
      %v4209 = vsub.f32 %v4003, %v4131
      %v4210 = vsub.f32 %v4005, %v4131
      %v4211 = vsub.f32 %v4007, %v4134
      %v4212 = vsub.f32 %v4009, %v4134
      %v4213 = vsub.f32 %v4013, %v4137
      %v4214 = vsub.f32 %v4015, %v4137
      %v4215 = vsub.f32 %v4017, %v4140
      %v4216 = vsub.f32 %v4019, %v4140
      %v4217 = vsub.f32 %v4023, %v4143
      %v4218 = vsub.f32 %v4025, %v4143
      %v4219 = vsub.f32 %v4027, %v4146
      %v4220 = vsub.f32 %v4029, %v4146
      %v4221 = vsub.f32 %v4033, %v4149
      %v4222 = vsub.f32 %v4035, %v4149
      %v4223 = vsub.f32 %v4037, %v4152
      %v4224 = vsub.f32 %v4039, %v4152
      %v4225 = vsub.f32 %v4043, %v4155
      %v4226 = vsub.f32 %v4045, %v4155
      %v4227 = vsub.f32 %v4047, %v4158
      %v4228 = vsub.f32 %v4049, %v4158
      %v4229 = vsub.f32 %v4053, %v4161
      %v4230 = vsub.f32 %v4055, %v4161
      %v4231 = vsub.f32 %v4057, %v4164
      %v4232 = vsub.f32 %v4059, %v4164
      %v4233 = vsub.f32 %v4063, %v4167
      %v4234 = vsub.f32 %v4065, %v4167
      %v4235 = vsub.f32 %v4067, %v4170
      %v4236 = vsub.f32 %v4069, %v4170
      %v4237 = vsub.f32 %v4073, %v4173
      %v4238 = vsub.f32 %v4075, %v4173
      %v4239 = vsub.f32 %v4077, %v4176
      %v4240 = vsub.f32 %v4079, %v4176
      %v4241 = vmul.f32 %v4177, 1.442695
      %v4242 = vpow.pop %v4241
      %v4243 = vmul.f32 %v4178, 1.442695
      %v4244 = vpow.pop %v4243
      %v4245 = vmul.f32 %v4179, 1.442695
      %v4246 = vpow.pop %v4245
      %v4247 = vmul.f32 %v4180, 1.442695
      %v4248 = vpow.pop %v4247
      %v4249 = vmul.f32 %v4181, 1.442695
      %v4250 = vpow.pop %v4249
      %v4251 = vmul.f32 %v4182, 1.442695
      %v4252 = vpow.pop %v4251
      %v4253 = vmul.f32 %v4183, 1.442695
      %v4254 = vpow.pop %v4253
      %v4255 = vmul.f32 %v4184, 1.442695
      %v4256 = vpow.pop %v4255
      %v4257 = vmul.f32 %v4185, 1.442695
      %v4258 = vpow.pop %v4257
      %v4259 = vmul.f32 %v4186, 1.442695
      %v4260 = vpow.pop %v4259
      %v4261 = vmul.f32 %v4187, 1.442695
      %v4262 = vpow.pop %v4261
      %v4263 = vmul.f32 %v4188, 1.442695
      %v4264 = vpow.pop %v4263
      %v4265 = vmul.f32 %v4189, 1.442695
      %v4266 = vpow.pop %v4265
      %v4267 = vmul.f32 %v4190, 1.442695
      %v4268 = vpow.pop %v4267
      %v4269 = vmul.f32 %v4191, 1.442695
      %v4270 = vpow.pop %v4269
      %v4271 = vmul.f32 %v4192, 1.442695
      %v4272 = vpow.pop %v4271
      %v4273 = vmul.f32 %v4193, 1.442695
      %v4274 = vpow.pop %v4273
      %v4275 = vmul.f32 %v4194, 1.442695
      %v4276 = vpow.pop %v4275
      %v4277 = vmul.f32 %v4195, 1.442695
      %v4278 = vpow.pop %v4277
      %v4279 = vmul.f32 %v4196, 1.442695
      %v4280 = vpow.pop %v4279
      %v4281 = vmul.f32 %v4197, 1.442695
      %v4282 = vpow.pop %v4281
      %v4283 = vmul.f32 %v4198, 1.442695
      %v4284 = vpow.pop %v4283
      %v4285 = vmul.f32 %v4199, 1.442695
      %v4286 = vpow.pop %v4285
      %v4287 = vmul.f32 %v4200, 1.442695
      %v4288 = vpow.pop %v4287
      %v4289 = vmul.f32 %v4201, 1.442695
      %v4290 = vpow.pop %v4289
      %v4291 = vmul.f32 %v4202, 1.442695
      %v4292 = vpow.pop %v4291
      %v4293 = vmul.f32 %v4203, 1.442695
      %v4294 = vpow.pop %v4293
      %v4295 = vmul.f32 %v4204, 1.442695
      %v4296 = vpow.pop %v4295
      %v4297 = vmul.f32 %v4205, 1.442695
      %v4298 = vpow.pop %v4297
      %v4299 = vmul.f32 %v4206, 1.442695
      %v4300 = vpow.pop %v4299
      %v4301 = vmul.f32 %v4207, 1.442695
      %v4302 = vpow.pop %v4301
      %v4303 = vmul.f32 %v4208, 1.442695
      %v4304 = vpow.pop %v4303
      %v4305 = vmul.f32 %v4209, 1.442695
      %v4306 = vpow.pop %v4305
      %v4307 = vmul.f32 %v4210, 1.442695
      %v4308 = vpow.pop %v4307
      %v4309 = vmul.f32 %v4211, 1.442695
      %v4310 = vpow.pop %v4309
      %v4311 = vmul.f32 %v4212, 1.442695
      %v4312 = vpow.pop %v4311
      %v4313 = vmul.f32 %v4213, 1.442695
      %v4314 = vpow.pop %v4313
      %v4315 = vmul.f32 %v4214, 1.442695
      %v4316 = vpow.pop %v4315
      %v4317 = vmul.f32 %v4215, 1.442695
      %v4318 = vpow.pop %v4317
      %v4319 = vmul.f32 %v4216, 1.442695
      %v4320 = vpow.pop %v4319
      %v4321 = vmul.f32 %v4217, 1.442695
      %v4322 = vpow.pop %v4321
      %v4323 = vmul.f32 %v4218, 1.442695
      %v4324 = vpow.pop %v4323
      %v4325 = vmul.f32 %v4219, 1.442695
      %v4326 = vpow.pop %v4325
      %v4327 = vmul.f32 %v4220, 1.442695
      %v4328 = vpow.pop %v4327
      %v4329 = vmul.f32 %v4221, 1.442695
      %v4330 = vpow.pop %v4329
      %v4331 = vmul.f32 %v4222, 1.442695
      %v4332 = vpow.pop %v4331
      %v4333 = vmul.f32 %v4223, 1.442695
      %v4334 = vpow.pop %v4333
      %v4335 = vmul.f32 %v4224, 1.442695
      %v4336 = vpow.pop %v4335
      %v4337 = vmul.f32 %v4225, 1.442695
      %v4338 = vpow.pop %v4337
      %v4339 = vmul.f32 %v4226, 1.442695
      %v4340 = vpow.pop %v4339
      %v4341 = vmul.f32 %v4227, 1.442695
      %v4342 = vpow.pop %v4341
      %v4343 = vmul.f32 %v4228, 1.442695
      %v4344 = vpow.pop %v4343
      %v4345 = vmul.f32 %v4229, 1.442695
      %v4346 = vpow.pop %v4345
      %v4347 = vmul.f32 %v4230, 1.442695
      %v4348 = vpow.pop %v4347
      %v4349 = vmul.f32 %v4231, 1.442695
      %v4350 = vpow.pop %v4349
      %v4351 = vmul.f32 %v4232, 1.442695
      %v4352 = vpow.pop %v4351
      %v4353 = vmul.f32 %v4233, 1.442695
      %v4354 = vpow.pop %v4353
      %v4355 = vmul.f32 %v4234, 1.442695
      %v4356 = vpow.pop %v4355
      %v4357 = vmul.f32 %v4235, 1.442695
      %v4358 = vpow.pop %v4357
      %v4359 = vmul.f32 %v4236, 1.442695
      %v4360 = vpow.pop %v4359
      %v4361 = vmul.f32 %v4237, 1.442695
      %v4362 = vpow.pop %v4361
      %v4363 = vmul.f32 %v4238, 1.442695
      %v4364 = vpow.pop %v4363
      %v4365 = vmul.f32 %v4239, 1.442695
      %v4366 = vpow.pop %v4365
      %v4367 = vmul.f32 %v4240, 1.442695
      %v4368 = vpow.pop %v4367
      %v4369 = vadd.f32 %v4242, %v4244
      %4370 = vadd.xlane.f32.xlu0 %v4369
      %v4371 = vpop.xlane.xlu0 %4370
      %v4372 = vadd.f32 %v4246, %v4248
      %4373 = vadd.xlane.f32.xlu0 %v4372
      %v4374 = vpop.xlane.xlu0 %4373
      %v4375 = vadd.f32 %v4250, %v4252
      %4376 = vadd.xlane.f32.xlu0 %v4375
      %v4377 = vpop.xlane.xlu0 %4376
      %v4378 = vadd.f32 %v4254, %v4256
      %4379 = vadd.xlane.f32.xlu0 %v4378
      %v4380 = vpop.xlane.xlu0 %4379
      %v4381 = vadd.f32 %v4258, %v4260
      %4382 = vadd.xlane.f32.xlu0 %v4381
      %v4383 = vpop.xlane.xlu0 %4382
      %v4384 = vadd.f32 %v4262, %v4264
      %4385 = vadd.xlane.f32.xlu0 %v4384
      %v4386 = vpop.xlane.xlu0 %4385
      %v4387 = vadd.f32 %v4266, %v4268
      %4388 = vadd.xlane.f32.xlu0 %v4387
      %v4389 = vpop.xlane.xlu0 %4388
      %v4390 = vadd.f32 %v4270, %v4272
      %4391 = vadd.xlane.f32.xlu0 %v4390
      %v4392 = vpop.xlane.xlu0 %4391
      %v4393 = vadd.f32 %v4274, %v4276
      %4394 = vadd.xlane.f32.xlu0 %v4393
      %v4395 = vpop.xlane.xlu0 %4394
      %v4396 = vadd.f32 %v4278, %v4280
      %4397 = vadd.xlane.f32.xlu0 %v4396
      %v4398 = vpop.xlane.xlu0 %4397
      %v4399 = vadd.f32 %v4282, %v4284
      %4400 = vadd.xlane.f32.xlu0 %v4399
      %v4401 = vpop.xlane.xlu0 %4400
      %v4402 = vadd.f32 %v4286, %v4288
      %4403 = vadd.xlane.f32.xlu0 %v4402
      %v4404 = vpop.xlane.xlu0 %4403
      %v4405 = vadd.f32 %v4290, %v4292
      %4406 = vadd.xlane.f32.xlu0 %v4405
      %v4407 = vpop.xlane.xlu0 %4406
      %v4408 = vadd.f32 %v4294, %v4296
      %4409 = vadd.xlane.f32.xlu0 %v4408
      %v4410 = vpop.xlane.xlu0 %4409
      %v4411 = vadd.f32 %v4298, %v4300
      %4412 = vadd.xlane.f32.xlu0 %v4411
      %v4413 = vpop.xlane.xlu0 %4412
      %v4414 = vadd.f32 %v4302, %v4304
      %4415 = vadd.xlane.f32.xlu0 %v4414
      %v4416 = vpop.xlane.xlu0 %4415
      %v4417 = vadd.f32 %v4306, %v4308
      %4418 = vadd.xlane.f32.xlu0 %v4417
      %v4419 = vpop.xlane.xlu0 %4418
      %v4420 = vadd.f32 %v4310, %v4312
      %4421 = vadd.xlane.f32.xlu0 %v4420
      %v4422 = vpop.xlane.xlu0 %4421
      %v4423 = vadd.f32 %v4314, %v4316
      %4424 = vadd.xlane.f32.xlu0 %v4423
      %v4425 = vpop.xlane.xlu0 %4424
      %v4426 = vadd.f32 %v4318, %v4320
      %4427 = vadd.xlane.f32.xlu0 %v4426
      %v4428 = vpop.xlane.xlu0 %4427
      %v4429 = vadd.f32 %v4322, %v4324
      %4430 = vadd.xlane.f32.xlu0 %v4429
      %v4431 = vpop.xlane.xlu0 %4430
      %v4432 = vadd.f32 %v4326, %v4328
      %4433 = vadd.xlane.f32.xlu0 %v4432
      %v4434 = vpop.xlane.xlu0 %4433
      %v4435 = vadd.f32 %v4330, %v4332
      %4436 = vadd.xlane.f32.xlu0 %v4435
      %v4437 = vpop.xlane.xlu0 %4436
      %v4438 = vadd.f32 %v4334, %v4336
      %4439 = vadd.xlane.f32.xlu0 %v4438
      %v4440 = vpop.xlane.xlu0 %4439
      %v4441 = vadd.f32 %v4338, %v4340
      %4442 = vadd.xlane.f32.xlu0 %v4441
      %v4443 = vpop.xlane.xlu0 %4442
      %v4444 = vadd.f32 %v4342, %v4344
      %4445 = vadd.xlane.f32.xlu0 %v4444
      %v4446 = vpop.xlane.xlu0 %4445
      %v4447 = vadd.f32 %v4346, %v4348
      %4448 = vadd.xlane.f32.xlu0 %v4447
      %v4449 = vpop.xlane.xlu0 %4448
      %v4450 = vadd.f32 %v4350, %v4352
      %4451 = vadd.xlane.f32.xlu0 %v4450
      %v4452 = vpop.xlane.xlu0 %4451
      %v4453 = vadd.f32 %v4354, %v4356
      %4454 = vadd.xlane.f32.xlu0 %v4453
      %v4455 = vpop.xlane.xlu0 %4454
      %v4456 = vadd.f32 %v4358, %v4360
      %4457 = vadd.xlane.f32.xlu0 %v4456
      %v4458 = vpop.xlane.xlu0 %4457
      %v4459 = vadd.f32 %v4362, %v4364
      %4460 = vadd.xlane.f32.xlu0 %v4459
      %v4461 = vpop.xlane.xlu0 %4460
      %v4462 = vadd.f32 %v4366, %v4368
      %4463 = vadd.xlane.f32.xlu0 %v4462
      %v4464 = vpop.xlane.xlu0 %4463
      %v4465 = vpack.c.bf16 %v4246, %v4242
      %v4466 = vpack.c.bf16 %v4248, %v4244
      %v4467 = vpack.c.bf16 %v4254, %v4250
      %v4468 = vpack.c.bf16 %v4256, %v4252
      %v4469 = vpack.c.bf16 %v4262, %v4258
      %v4470 = vpack.c.bf16 %v4264, %v4260
      %v4471 = vpack.c.bf16 %v4270, %v4266
      %v4472 = vpack.c.bf16 %v4272, %v4268
      %v4473 = vpack.c.bf16 %v4278, %v4274
      %v4474 = vpack.c.bf16 %v4280, %v4276
      %v4475 = vpack.c.bf16 %v4286, %v4282
      %v4476 = vpack.c.bf16 %v4288, %v4284
      %v4477 = vpack.c.bf16 %v4294, %v4290
      %v4478 = vpack.c.bf16 %v4296, %v4292
      %v4479 = vpack.c.bf16 %v4302, %v4298
      %v4480 = vpack.c.bf16 %v4304, %v4300
      %v4481 = vpack.c.bf16 %v4310, %v4306
      %v4482 = vpack.c.bf16 %v4312, %v4308
      %v4483 = vpack.c.bf16 %v4318, %v4314
      %v4484 = vpack.c.bf16 %v4320, %v4316
      %v4485 = vpack.c.bf16 %v4326, %v4322
      %v4486 = vpack.c.bf16 %v4328, %v4324
      %v4487 = vpack.c.bf16 %v4334, %v4330
      %v4488 = vpack.c.bf16 %v4336, %v4332
      %v4489 = vpack.c.bf16 %v4342, %v4338
      %v4490 = vpack.c.bf16 %v4344, %v4340
      %v4491 = vpack.c.bf16 %v4350, %v4346
      %v4492 = vpack.c.bf16 %v4352, %v4348
      %v4493 = vpack.c.bf16 %v4358, %v4354
      %v4494 = vpack.c.bf16 %v4360, %v4356
      %v4495 = vpack.c.bf16 %v4366, %v4362
      %v4496 = vpack.c.bf16 %v4368, %v4364
      %4497 = vrot.lane.b32.xlu0 %v585, 52
      %v4498 = vpop.permute.xlu0 %4497
      %4499 = vrot.lane.b32.xlu0 %v586, 52
      %v4500 = vpop.permute.xlu0 %4499
      %4501 = vrot.lane.b32.xlu0 %v587, 52
      %v4502 = vpop.permute.xlu0 %4501
      %4503 = vrot.lane.b32.xlu0 %v588, 52
      %v4504 = vpop.permute.xlu0 %4503
      %4505 = vrot.lane.b32.xlu0 %v589, 52
      %v4506 = vpop.permute.xlu0 %4505
      %4507 = vrot.lane.b32.xlu0 %v590, 52
      %v4508 = vpop.permute.xlu0 %4507
      %4509 = vrot.lane.b32.xlu0 %v591, 52
      %v4510 = vpop.permute.xlu0 %4509
      %4511 = vrot.lane.b32.xlu0 %v592, 52
      %v4512 = vpop.permute.xlu0 %4511
      %4513 = vrot.lane.b32.xlu0 %v593, 52
      %v4514 = vpop.permute.xlu0 %4513
      %4515 = vrot.lane.b32.xlu0 %v594, 52
      %v4516 = vpop.permute.xlu0 %4515
      %4517 = vrot.lane.b32.xlu0 %v595, 52
      %v4518 = vpop.permute.xlu0 %4517
      %4519 = vrot.lane.b32.xlu0 %v596, 52
      %v4520 = vpop.permute.xlu0 %4519
      %4521 = vrot.lane.b32.xlu0 %v597, 52
      %v4522 = vpop.permute.xlu0 %4521
      %4523 = vrot.lane.b32.xlu0 %v598, 52
      %v4524 = vpop.permute.xlu0 %4523
      %4525 = vrot.lane.b32.xlu0 %v599, 52
      %v4526 = vpop.permute.xlu0 %4525
      %4527 = vrot.lane.b32.xlu0 %v600, 52
      %v4528 = vpop.permute.xlu0 %4527
      %4545 = vmatprep.subr.bf16.mxu0 0
      %4546 = vmatpush1.bf16.msra.mxu0 %v4498
      %4547 = vmatprep.subr.bf16.mxu0 0
      %4548 = vmatpush1.bf16.msra.mxu0 %v4500
      %4549 = vmatprep.subr.bf16.mxu0 0
      %4550 = vmatpush1.bf16.msra.mxu0 %v4502
      %4551 = vmatprep.subr.bf16.mxu0 0
      %4552 = vmatpush1.bf16.msra.mxu0 %v4504
      %4553 = vmatprep.subr.bf16.mxu0 0
      %4554 = vmatpush1.bf16.msra.mxu0 %v4506
      %4555 = vmatprep.subr.bf16.mxu0 0
      %4556 = vmatpush1.bf16.msra.mxu0 %v4508
      %4557 = vmatprep.subr.bf16.mxu0 0
      %4558 = vmatpush1.bf16.msra.mxu0 %v4510
      %4559 = vmatprep.subr.bf16.mxu0 0
      %4560 = vmatpush1.bf16.msra.mxu0 %v4512
      %4561 = vmatprep.subr.bf16.mxu0 0
      %4562 = vmatpush1.bf16.msra.mxu0 %v4514
      %4563 = vmatprep.subr.bf16.mxu0 0
      %4564 = vmatpush1.bf16.msra.mxu0 %v4516
      %4565 = vmatprep.subr.bf16.mxu0 0
      %4566 = vmatpush1.bf16.msra.mxu0 %v4518
      %4567 = vmatprep.subr.bf16.mxu0 0
      %4568 = vmatpush1.bf16.msra.mxu0 %v4520
      %4569 = vmatprep.subr.bf16.mxu0 0
      %4570 = vmatpush1.bf16.msra.mxu0 %v4522
      %4571 = vmatprep.subr.bf16.mxu0 0
      %4572 = vmatpush1.bf16.msra.mxu0 %v4524
      %4573 = vmatprep.subr.bf16.mxu0 0
      %4574 = vmatpush1.bf16.msra.mxu0 %v4526
      %4575 = vmatprep.subr.bf16.mxu0 0
      %4576 = vmatpush1.bf16.msra.mxu0 %v4528
      %4577 = vmatprep.mubr.bf16.mxu0 %v4466
      %4578 = vmatmul.mubr.bf16.gmra.mrb[0].mxu0 %v4465
      %v4579 = vpop.f32.mrb[0].mxu0
      %v4580 = vadd.f32 0.0, %v4579
      %v4581 = vpop.f32.mrb[0].mxu0
      %v4582 = vpop.f32.mrb[0].mxu0
      %v4583 = vadd.f32 0.0, %v4582
      %v4584 = vpop.f32.mrb[0].mxu0
      %4585 = vmatprep.mubr.bf16.mxu0 %v4468
      %4586 = vmatmul.mubr.bf16.gmra.mrb[0].mxu0 %v4467
      %v4587 = vpop.f32.mrb[0].mxu0
      %v4588 = vadd.f32 0.0, %v4587
      %v4589 = vpop.f32.mrb[0].mxu0
      %v4590 = vpop.f32.mrb[0].mxu0
      %v4591 = vadd.f32 0.0, %v4590
      %v4592 = vpop.f32.mrb[0].mxu0
      %4593 = vmatprep.mubr.bf16.mxu0 %v4470
      %4594 = vmatmul.mubr.bf16.gmra.mrb[0].mxu0 %v4469
      %v4595 = vpop.f32.mrb[0].mxu0
      %v4596 = vadd.f32 0.0, %v4595
      %v4597 = vpop.f32.mrb[0].mxu0
      %v4598 = vpop.f32.mrb[0].mxu0
      %v4599 = vadd.f32 0.0, %v4598
      %v4600 = vpop.f32.mrb[0].mxu0
      %4601 = vmatprep.mubr.bf16.mxu0 %v4472
      %4602 = vmatmul.mubr.bf16.gmra.mrb[0].mxu0 %v4471
      %v4603 = vpop.f32.mrb[0].mxu0
      %v4604 = vadd.f32 0.0, %v4603
      %v4605 = vpop.f32.mrb[0].mxu0
      %v4606 = vpop.f32.mrb[0].mxu0
      %v4607 = vadd.f32 0.0, %v4606
      %v4608 = vpop.f32.mrb[0].mxu0
      %4609 = vmatprep.mubr.bf16.mxu0 %v4474
      %4610 = vmatmul.mubr.bf16.gmra.mrb[0].mxu0 %v4473
      %v4611 = vpop.f32.mrb[0].mxu0
      %v4612 = vadd.f32 0.0, %v4611
      %v4613 = vpop.f32.mrb[0].mxu0
      %v4614 = vpop.f32.mrb[0].mxu0
      %v4615 = vadd.f32 0.0, %v4614
      %v4616 = vpop.f32.mrb[0].mxu0
      %4617 = vmatprep.mubr.bf16.mxu0 %v4476
      %4618 = vmatmul.mubr.bf16.gmra.mrb[0].mxu0 %v4475
      %v4619 = vpop.f32.mrb[0].mxu0
      %v4620 = vadd.f32 0.0, %v4619
      %v4621 = vpop.f32.mrb[0].mxu0
      %v4622 = vpop.f32.mrb[0].mxu0
      %v4623 = vadd.f32 0.0, %v4622
      %v4624 = vpop.f32.mrb[0].mxu0
      %4625 = vmatprep.mubr.bf16.mxu0 %v4478
      %4626 = vmatmul.mubr.bf16.gmra.mrb[0].mxu0 %v4477
      %v4627 = vpop.f32.mrb[0].mxu0
      %v4628 = vadd.f32 0.0, %v4627
      %v4629 = vpop.f32.mrb[0].mxu0
      %v4630 = vpop.f32.mrb[0].mxu0
      %v4631 = vadd.f32 0.0, %v4630
      %v4632 = vpop.f32.mrb[0].mxu0
      %4633 = vmatprep.mubr.bf16.mxu0 %v4480
      %4634 = vmatmul.mubr.bf16.gmra.mrb[0].mxu0 %v4479
      %v4635 = vpop.f32.mrb[0].mxu0
      %v4636 = vadd.f32 0.0, %v4635
      %v4637 = vpop.f32.mrb[0].mxu0
      %v4638 = vpop.f32.mrb[0].mxu0
      %v4639 = vadd.f32 0.0, %v4638
      %v4640 = vpop.f32.mrb[0].mxu0
      %4641 = vmatprep.mubr.bf16.mxu0 %v4482
      %4642 = vmatmul.mubr.bf16.gmra.mrb[0].mxu0 %v4481
      %v4643 = vpop.f32.mrb[0].mxu0
      %v4644 = vadd.f32 0.0, %v4643
      %v4645 = vpop.f32.mrb[0].mxu0
      %v4646 = vpop.f32.mrb[0].mxu0
      %v4647 = vadd.f32 0.0, %v4646
      %v4648 = vpop.f32.mrb[0].mxu0
      %4649 = vmatprep.mubr.bf16.mxu0 %v4484
      %4650 = vmatmul.mubr.bf16.gmra.mrb[0].mxu0 %v4483
      %v4651 = vpop.f32.mrb[0].mxu0
      %v4652 = vadd.f32 0.0, %v4651
      %v4653 = vpop.f32.mrb[0].mxu0
      %v4654 = vpop.f32.mrb[0].mxu0
      %v4655 = vadd.f32 0.0, %v4654
      %v4656 = vpop.f32.mrb[0].mxu0
      %4657 = vmatprep.mubr.bf16.mxu0 %v4486
      %4658 = vmatmul.mubr.bf16.gmra.mrb[0].mxu0 %v4485
      %v4659 = vpop.f32.mrb[0].mxu0
      %v4660 = vadd.f32 0.0, %v4659
      %v4661 = vpop.f32.mrb[0].mxu0
      %v4662 = vpop.f32.mrb[0].mxu0
      %v4663 = vadd.f32 0.0, %v4662
      %v4664 = vpop.f32.mrb[0].mxu0
      %4665 = vmatprep.mubr.bf16.mxu0 %v4488
      %4666 = vmatmul.mubr.bf16.gmra.mrb[0].mxu0 %v4487
      %v4667 = vpop.f32.mrb[0].mxu0
      %v4668 = vadd.f32 0.0, %v4667
      %v4669 = vpop.f32.mrb[0].mxu0
      %v4670 = vpop.f32.mrb[0].mxu0
      %v4671 = vadd.f32 0.0, %v4670
      %v4672 = vpop.f32.mrb[0].mxu0
      %4673 = vmatprep.mubr.bf16.mxu0 %v4490
      %4674 = vmatmul.mubr.bf16.gmra.mrb[0].mxu0 %v4489
      %v4675 = vpop.f32.mrb[0].mxu0
      %v4676 = vadd.f32 0.0, %v4675
      %v4677 = vpop.f32.mrb[0].mxu0
      %v4678 = vpop.f32.mrb[0].mxu0
      %v4679 = vadd.f32 0.0, %v4678
      %v4680 = vpop.f32.mrb[0].mxu0
      %4681 = vmatprep.mubr.bf16.mxu0 %v4492
      %4682 = vmatmul.mubr.bf16.gmra.mrb[0].mxu0 %v4491
      %v4683 = vpop.f32.mrb[0].mxu0
      %v4684 = vadd.f32 0.0, %v4683
      %v4685 = vpop.f32.mrb[0].mxu0
      %v4686 = vpop.f32.mrb[0].mxu0
      %v4687 = vadd.f32 0.0, %v4686
      %v4688 = vpop.f32.mrb[0].mxu0
      %4689 = vmatprep.mubr.bf16.mxu0 %v4494
      %4690 = vmatmul.mubr.bf16.gmra.mrb[0].mxu0 %v4493
      %v4691 = vpop.f32.mrb[0].mxu0
      %v4692 = vadd.f32 0.0, %v4691
      %v4693 = vpop.f32.mrb[0].mxu0
      %v4694 = vpop.f32.mrb[0].mxu0
      %v4695 = vadd.f32 0.0, %v4694
      %v4696 = vpop.f32.mrb[0].mxu0
      %4697 = vmatprep.mubr.bf16.mxu0 %v4496
      %4698 = vmatmul.mubr.bf16.gmra.mrb[0].mxu0 %v4495
      %v4699 = vpop.f32.mrb[0].mxu0
      %v4700 = vadd.f32 0.0, %v4699
      %v4701 = vpop.f32.mrb[0].mxu0
      %v4702 = vpop.f32.mrb[0].mxu0
      %v4703 = vadd.f32 0.0, %v4702
      %v4704 = vpop.f32.mrb[0].mxu0
      %4705 = vdwg.mxu0
      %v4706 = vrcp.pop %v4371
      %v4707 = vrcp.pop %v4374
      %v4708 = vrcp.pop %v4377
      %v4709 = vrcp.pop %v4380
      %v4710 = vrcp.pop %v4383
      %v4711 = vrcp.pop %v4386
      %v4712 = vrcp.pop %v4389
      %v4713 = vrcp.pop %v4392
      %v4714 = vrcp.pop %v4395
      %v4715 = vrcp.pop %v4398
      %v4716 = vrcp.pop %v4401
      %v4717 = vrcp.pop %v4404
      %v4718 = vrcp.pop %v4407
      %v4719 = vrcp.pop %v4410
      %v4720 = vrcp.pop %v4413
      %v4721 = vrcp.pop %v4416
      %v4722 = vrcp.pop %v4419
      %v4723 = vrcp.pop %v4422
      %v4724 = vrcp.pop %v4425
      %v4725 = vrcp.pop %v4428
      %v4726 = vrcp.pop %v4431
      %v4727 = vrcp.pop %v4434
      %v4728 = vrcp.pop %v4437
      %v4729 = vrcp.pop %v4440
      %v4730 = vrcp.pop %v4443
      %v4731 = vrcp.pop %v4446
      %v4732 = vrcp.pop %v4449
      %v4733 = vrcp.pop %v4452
      %v4734 = vrcp.pop %v4455
      %v4735 = vrcp.pop %v4458
      %v4736 = vrcp.pop %v4461
      %v4737 = vrcp.pop %v4464
      %v4738 = vmul.f32 %v4580, %v4706
      %v4739 = vmul.f32 %v4583, %v4707
      %v4740 = vmul.f32 %v4588, %v4708
      %v4741 = vmul.f32 %v4591, %v4709
      %v4742 = vmul.f32 %v4596, %v4710
      %v4743 = vmul.f32 %v4599, %v4711
      %v4744 = vmul.f32 %v4604, %v4712
      %v4745 = vmul.f32 %v4607, %v4713
      %v4746 = vmul.f32 %v4612, %v4714
      %v4747 = vmul.f32 %v4615, %v4715
      %v4748 = vmul.f32 %v4620, %v4716
      %v4749 = vmul.f32 %v4623, %v4717
      %v4750 = vmul.f32 %v4628, %v4718
      %v4751 = vmul.f32 %v4631, %v4719
      %v4752 = vmul.f32 %v4636, %v4720
      %v4753 = vmul.f32 %v4639, %v4721
      %v4754 = vmul.f32 %v4644, %v4722
      %v4755 = vmul.f32 %v4647, %v4723
      %v4756 = vmul.f32 %v4652, %v4724
      %v4757 = vmul.f32 %v4655, %v4725
      %v4758 = vmul.f32 %v4660, %v4726
      %v4759 = vmul.f32 %v4663, %v4727
      %v4760 = vmul.f32 %v4668, %v4728
      %v4761 = vmul.f32 %v4671, %v4729
      %v4762 = vmul.f32 %v4676, %v4730
      %v4763 = vmul.f32 %v4679, %v4731
      %v4764 = vmul.f32 %v4684, %v4732
      %v4765 = vmul.f32 %v4687, %v4733
      %v4766 = vmul.f32 %v4692, %v4734
      %v4767 = vmul.f32 %v4695, %v4735
      %v4768 = vmul.f32 %v4700, %v4736
      %v4769 = vmul.f32 %v4703, %v4737
      %4770 = vrot.lane.b32.xlu0 %v569, 112
      %v4771 = vpop.permute.xlu0 %4770
      %4772 = vrot.lane.b32.xlu0 %v570, 112
      %v4773 = vpop.permute.xlu0 %4772
      %4774 = vrot.lane.b32.xlu0 %v571, 112
      %v4775 = vpop.permute.xlu0 %4774
      %4776 = vrot.lane.b32.xlu0 %v572, 112
      %v4777 = vpop.permute.xlu0 %4776
      %4778 = vrot.lane.b32.xlu0 %v573, 112
      %v4779 = vpop.permute.xlu0 %4778
      %4780 = vrot.lane.b32.xlu0 %v574, 112
      %v4781 = vpop.permute.xlu0 %4780
      %4782 = vrot.lane.b32.xlu0 %v575, 112
      %v4783 = vpop.permute.xlu0 %4782
      %4784 = vrot.lane.b32.xlu0 %v576, 112
      %v4785 = vpop.permute.xlu0 %4784
      %4786 = vrot.lane.b32.xlu0 %v577, 112
      %v4787 = vpop.permute.xlu0 %4786
      %4788 = vrot.lane.b32.xlu0 %v578, 112
      %v4789 = vpop.permute.xlu0 %4788
      %4790 = vrot.lane.b32.xlu0 %v579, 112
      %v4791 = vpop.permute.xlu0 %4790
      %4792 = vrot.lane.b32.xlu0 %v580, 112
      %v4793 = vpop.permute.xlu0 %4792
      %4794 = vrot.lane.b32.xlu0 %v581, 112
      %v4795 = vpop.permute.xlu0 %4794
      %4796 = vrot.lane.b32.xlu0 %v582, 112
      %v4797 = vpop.permute.xlu0 %4796
      %4798 = vrot.lane.b32.xlu0 %v583, 112
      %v4799 = vpop.permute.xlu0 %4798
      %4800 = vrot.lane.b32.xlu0 %v584, 112
      %v4801 = vpop.permute.xlu0 %4800
      %4802 = vrot.lane.b32.xlu0 %v585, 80
      %v4803 = vpop.permute.xlu0 %4802
      %4804 = vrot.lane.b32.xlu0 %v586, 80
      %v4805 = vpop.permute.xlu0 %4804
      %4806 = vrot.lane.b32.xlu0 %v587, 80
      %v4807 = vpop.permute.xlu0 %4806
      %4808 = vrot.lane.b32.xlu0 %v588, 80
      %v4809 = vpop.permute.xlu0 %4808
      %4810 = vrot.lane.b32.xlu0 %v589, 80
      %v4811 = vpop.permute.xlu0 %4810
      %4812 = vrot.lane.b32.xlu0 %v590, 80
      %v4813 = vpop.permute.xlu0 %4812
      %4814 = vrot.lane.b32.xlu0 %v591, 80
      %v4815 = vpop.permute.xlu0 %4814
      %4816 = vrot.lane.b32.xlu0 %v592, 80
      %v4817 = vpop.permute.xlu0 %4816
      %4818 = vrot.lane.b32.xlu0 %v593, 80
      %v4819 = vpop.permute.xlu0 %4818
      %4820 = vrot.lane.b32.xlu0 %v594, 80
      %v4821 = vpop.permute.xlu0 %4820
      %4822 = vrot.lane.b32.xlu0 %v595, 80
      %v4823 = vpop.permute.xlu0 %4822
      %4824 = vrot.lane.b32.xlu0 %v596, 80
      %v4825 = vpop.permute.xlu0 %4824
      %4826 = vrot.lane.b32.xlu0 %v597, 80
      %v4827 = vpop.permute.xlu0 %4826
      %4828 = vrot.lane.b32.xlu0 %v598, 80
      %v4829 = vpop.permute.xlu0 %4828
      %4830 = vrot.lane.b32.xlu0 %v599, 80
      %v4831 = vpop.permute.xlu0 %4830
      %4832 = vrot.lane.b32.xlu0 %v600, 80
      %v4833 = vpop.permute.xlu0 %4832
      %v4835 = vsel %vm649, %v4771, 0
      %v4838 = vsel %vm649, %v4773, 0
      %v4841 = vsel %vm649, %v4775, 0
      %v4844 = vsel %vm649, %v4777, 0
      %v4847 = vsel %vm649, %v4779, 0
      %v4850 = vsel %vm649, %v4781, 0
      %v4853 = vsel %vm649, %v4783, 0
      %v4856 = vsel %vm649, %v4785, 0
      %v4859 = vsel %vm649, %v4787, 0
      %v4862 = vsel %vm649, %v4789, 0
      %v4865 = vsel %vm649, %v4791, 0
      %v4868 = vsel %vm649, %v4793, 0
      %v4871 = vsel %vm649, %v4795, 0
      %v4874 = vsel %vm649, %v4797, 0
      %v4877 = vsel %vm649, %v4799, 0
      %v4880 = vsel %vm649, %v4801, 0
      %v4883 = vsel %vm649, %v4803, 0
      %v4886 = vsel %vm649, %v4805, 0
      %v4889 = vsel %vm649, %v4807, 0
      %v4892 = vsel %vm649, %v4809, 0
      %v4895 = vsel %vm649, %v4811, 0
      %v4898 = vsel %vm649, %v4813, 0
      %v4901 = vsel %vm649, %v4815, 0
      %v4904 = vsel %vm649, %v4817, 0
      %v4907 = vsel %vm649, %v4819, 0
      %v4910 = vsel %vm649, %v4821, 0
      %v4913 = vsel %vm649, %v4823, 0
      %v4916 = vsel %vm649, %v4825, 0
      %v4919 = vsel %vm649, %v4827, 0
      %v4922 = vsel %vm649, %v4829, 0
      %v4925 = vsel %vm649, %v4831, 0
      %v4928 = vsel %vm649, %v4833, 0
      %4930 = vmatprep.subr.bf16.mxu0 0
      %4931 = vmatpush1.bf16.xpose.msra.mxu0 %v4883
      %4932 = vmatprep.subr.bf16.mxu0 0
      %4933 = vmatpush1.bf16.xpose.msra.mxu0 %v4886
      %4934 = vmatprep.subr.bf16.mxu0 0
      %4935 = vmatpush1.bf16.xpose.msra.mxu0 %v4889
      %4936 = vmatprep.subr.bf16.mxu0 0
      %4937 = vmatpush1.bf16.xpose.msra.mxu0 %v4892
      %4938 = vmatprep.subr.bf16.mxu0 0
      %4939 = vmatpush1.bf16.xpose.msra.mxu0 %v4895
      %4940 = vmatprep.subr.bf16.mxu0 0
      %4941 = vmatpush1.bf16.xpose.msra.mxu0 %v4898
      %4942 = vmatprep.subr.bf16.mxu0 0
      %4943 = vmatpush1.bf16.xpose.msra.mxu0 %v4901
      %4944 = vmatprep.subr.bf16.mxu0 0
      %4945 = vmatpush1.bf16.xpose.msra.mxu0 %v4904
      %4946 = vmatprep.subr.bf16.mxu0 0
      %4947 = vmatpush1.bf16.xpose.msra.mxu0 %v4907
      %4948 = vmatprep.subr.bf16.mxu0 0
      %4949 = vmatpush1.bf16.xpose.msra.mxu0 %v4910
      %4950 = vmatprep.subr.bf16.mxu0 0
      %4951 = vmatpush1.bf16.xpose.msra.mxu0 %v4913
      %4952 = vmatprep.subr.bf16.mxu0 0
      %4953 = vmatpush1.bf16.xpose.msra.mxu0 %v4916
      %4954 = vmatprep.subr.bf16.mxu0 0
      %4955 = vmatpush1.bf16.xpose.msra.mxu0 %v4919
      %4956 = vmatprep.subr.bf16.mxu0 0
      %4957 = vmatpush1.bf16.xpose.msra.mxu0 %v4922
      %4958 = vmatprep.subr.bf16.mxu0 0
      %4959 = vmatpush1.bf16.xpose.msra.mxu0 %v4925
      %4960 = vmatprep.subr.bf16.mxu0 0
      %4961 = vmatpush1.bf16.xpose.msra.mxu0 %v4928
      %4962 = vmatprep.mubr.bf16.mxu0 0
      %4963 = vmatmul.mubr.bf16.gmra.mrb[0].mxu0 %v4835
      %v4964 = vpop.f32.mrb[0].mxu0
      %v4965 = vadd.f32 0.0, %v4964
      %v4966 = vpop.f32.mrb[0].mxu0
      %v4967 = vadd.f32 0.0, %v4966
      %v4968 = vpop.f32.mrb[0].mxu0
      %v4969 = vadd.f32 0.0, %v4968
      %v4970 = vpop.f32.mrb[0].mxu0
      %v4971 = vadd.f32 0.0, %v4970
      %4972 = vmatprep.mubr.bf16.mxu0 0
      %4973 = vmatmul.mubr.bf16.gmra.mrb[0].mxu0 %v4838
      %v4974 = vpop.f32.mrb[0].mxu0
      %v4975 = vadd.f32 0.0, %v4974
      %v4976 = vpop.f32.mrb[0].mxu0
      %v4977 = vadd.f32 0.0, %v4976
      %v4978 = vpop.f32.mrb[0].mxu0
      %v4979 = vadd.f32 0.0, %v4978
      %v4980 = vpop.f32.mrb[0].mxu0
      %v4981 = vadd.f32 0.0, %v4980
      %4982 = vmatprep.mubr.bf16.mxu0 0
      %4983 = vmatmul.mubr.bf16.gmra.mrb[0].mxu0 %v4841
      %v4984 = vpop.f32.mrb[0].mxu0
      %v4985 = vadd.f32 0.0, %v4984
      %v4986 = vpop.f32.mrb[0].mxu0
      %v4987 = vadd.f32 0.0, %v4986
      %v4988 = vpop.f32.mrb[0].mxu0
      %v4989 = vadd.f32 0.0, %v4988
      %v4990 = vpop.f32.mrb[0].mxu0
      %v4991 = vadd.f32 0.0, %v4990
      %4992 = vmatprep.mubr.bf16.mxu0 0
      %4993 = vmatmul.mubr.bf16.gmra.mrb[0].mxu0 %v4844
      %v4994 = vpop.f32.mrb[0].mxu0
      %v4995 = vadd.f32 0.0, %v4994
      %v4996 = vpop.f32.mrb[0].mxu0
      %v4997 = vadd.f32 0.0, %v4996
      %v4998 = vpop.f32.mrb[0].mxu0
      %v4999 = vadd.f32 0.0, %v4998
      %v5000 = vpop.f32.mrb[0].mxu0
      %v5001 = vadd.f32 0.0, %v5000
      %5002 = vmatprep.mubr.bf16.mxu0 0
      %5003 = vmatmul.mubr.bf16.gmra.mrb[0].mxu0 %v4847
      %v5004 = vpop.f32.mrb[0].mxu0
      %v5005 = vadd.f32 0.0, %v5004
      %v5006 = vpop.f32.mrb[0].mxu0
      %v5007 = vadd.f32 0.0, %v5006
      %v5008 = vpop.f32.mrb[0].mxu0
      %v5009 = vadd.f32 0.0, %v5008
      %v5010 = vpop.f32.mrb[0].mxu0
      %v5011 = vadd.f32 0.0, %v5010
      %5012 = vmatprep.mubr.bf16.mxu0 0
      %5013 = vmatmul.mubr.bf16.gmra.mrb[0].mxu0 %v4850
      %v5014 = vpop.f32.mrb[0].mxu0
      %v5015 = vadd.f32 0.0, %v5014
      %v5016 = vpop.f32.mrb[0].mxu0
      %v5017 = vadd.f32 0.0, %v5016
      %v5018 = vpop.f32.mrb[0].mxu0
      %v5019 = vadd.f32 0.0, %v5018
      %v5020 = vpop.f32.mrb[0].mxu0
      %v5021 = vadd.f32 0.0, %v5020
      %5022 = vmatprep.mubr.bf16.mxu0 0
      %5023 = vmatmul.mubr.bf16.gmra.mrb[0].mxu0 %v4853
      %v5024 = vpop.f32.mrb[0].mxu0
      %v5025 = vadd.f32 0.0, %v5024
      %v5026 = vpop.f32.mrb[0].mxu0
      %v5027 = vadd.f32 0.0, %v5026
      %v5028 = vpop.f32.mrb[0].mxu0
      %v5029 = vadd.f32 0.0, %v5028
      %v5030 = vpop.f32.mrb[0].mxu0
      %v5031 = vadd.f32 0.0, %v5030
      %5032 = vmatprep.mubr.bf16.mxu0 0
      %5033 = vmatmul.mubr.bf16.gmra.mrb[0].mxu0 %v4856
      %v5034 = vpop.f32.mrb[0].mxu0
      %v5035 = vadd.f32 0.0, %v5034
      %v5036 = vpop.f32.mrb[0].mxu0
      %v5037 = vadd.f32 0.0, %v5036
      %v5038 = vpop.f32.mrb[0].mxu0
      %v5039 = vadd.f32 0.0, %v5038
      %v5040 = vpop.f32.mrb[0].mxu0
      %v5041 = vadd.f32 0.0, %v5040
      %5042 = vmatprep.mubr.bf16.mxu0 0
      %5043 = vmatmul.mubr.bf16.gmra.mrb[0].mxu0 %v4859
      %v5044 = vpop.f32.mrb[0].mxu0
      %v5045 = vadd.f32 0.0, %v5044
      %v5046 = vpop.f32.mrb[0].mxu0
      %v5047 = vadd.f32 0.0, %v5046
      %v5048 = vpop.f32.mrb[0].mxu0
      %v5049 = vadd.f32 0.0, %v5048
      %v5050 = vpop.f32.mrb[0].mxu0
      %v5051 = vadd.f32 0.0, %v5050
      %5052 = vmatprep.mubr.bf16.mxu0 0
      %5053 = vmatmul.mubr.bf16.gmra.mrb[0].mxu0 %v4862
      %v5054 = vpop.f32.mrb[0].mxu0
      %v5055 = vadd.f32 0.0, %v5054
      %v5056 = vpop.f32.mrb[0].mxu0
      %v5057 = vadd.f32 0.0, %v5056
      %v5058 = vpop.f32.mrb[0].mxu0
      %v5059 = vadd.f32 0.0, %v5058
      %v5060 = vpop.f32.mrb[0].mxu0
      %v5061 = vadd.f32 0.0, %v5060
      %5062 = vmatprep.mubr.bf16.mxu0 0
      %5063 = vmatmul.mubr.bf16.gmra.mrb[0].mxu0 %v4865
      %v5064 = vpop.f32.mrb[0].mxu0
      %v5065 = vadd.f32 0.0, %v5064
      %v5066 = vpop.f32.mrb[0].mxu0
      %v5067 = vadd.f32 0.0, %v5066
      %v5068 = vpop.f32.mrb[0].mxu0
      %v5069 = vadd.f32 0.0, %v5068
      %v5070 = vpop.f32.mrb[0].mxu0
      %v5071 = vadd.f32 0.0, %v5070
      %5072 = vmatprep.mubr.bf16.mxu0 0
      %5073 = vmatmul.mubr.bf16.gmra.mrb[0].mxu0 %v4868
      %v5074 = vpop.f32.mrb[0].mxu0
      %v5075 = vadd.f32 0.0, %v5074
      %v5076 = vpop.f32.mrb[0].mxu0
      %v5077 = vadd.f32 0.0, %v5076
      %v5078 = vpop.f32.mrb[0].mxu0
      %v5079 = vadd.f32 0.0, %v5078
      %v5080 = vpop.f32.mrb[0].mxu0
      %v5081 = vadd.f32 0.0, %v5080
      %5082 = vmatprep.mubr.bf16.mxu0 0
      %5083 = vmatmul.mubr.bf16.gmra.mrb[0].mxu0 %v4871
      %v5084 = vpop.f32.mrb[0].mxu0
      %v5085 = vadd.f32 0.0, %v5084
      %v5086 = vpop.f32.mrb[0].mxu0
      %v5087 = vadd.f32 0.0, %v5086
      %v5088 = vpop.f32.mrb[0].mxu0
      %v5089 = vadd.f32 0.0, %v5088
      %v5090 = vpop.f32.mrb[0].mxu0
      %v5091 = vadd.f32 0.0, %v5090
      %5092 = vmatprep.mubr.bf16.mxu0 0
      %5093 = vmatmul.mubr.bf16.gmra.mrb[0].mxu0 %v4874
      %v5094 = vpop.f32.mrb[0].mxu0
      %v5095 = vadd.f32 0.0, %v5094
      %v5096 = vpop.f32.mrb[0].mxu0
      %v5097 = vadd.f32 0.0, %v5096
      %v5098 = vpop.f32.mrb[0].mxu0
      %v5099 = vadd.f32 0.0, %v5098
      %v5100 = vpop.f32.mrb[0].mxu0
      %v5101 = vadd.f32 0.0, %v5100
      %5102 = vmatprep.mubr.bf16.mxu0 0
      %5103 = vmatmul.mubr.bf16.gmra.mrb[0].mxu0 %v4877
      %v5104 = vpop.f32.mrb[0].mxu0
      %v5105 = vadd.f32 0.0, %v5104
      %v5106 = vpop.f32.mrb[0].mxu0
      %v5107 = vadd.f32 0.0, %v5106
      %v5108 = vpop.f32.mrb[0].mxu0
      %v5109 = vadd.f32 0.0, %v5108
      %v5110 = vpop.f32.mrb[0].mxu0
      %v5111 = vadd.f32 0.0, %v5110
      %5112 = vmatprep.mubr.bf16.mxu0 0
      %5113 = vmatmul.mubr.bf16.gmra.mrb[0].mxu0 %v4880
      %v5114 = vpop.f32.mrb[0].mxu0
      %v5115 = vadd.f32 0.0, %v5114
      %v5116 = vpop.f32.mrb[0].mxu0
      %v5117 = vadd.f32 0.0, %v5116
      %v5118 = vpop.f32.mrb[0].mxu0
      %v5119 = vadd.f32 0.0, %v5118
      %v5120 = vpop.f32.mrb[0].mxu0
      %v5121 = vadd.f32 0.0, %v5120
      %5122 = vdwg.mxu0
      %v5123 = vmax.f32 %v4965, %v4967
      %5124 = vmax.xlane.f32.xlu0 %v5123
      %v5125 = vpop.xlane.xlu0 %5124
      %v5126 = vmax.f32 %v4969, %v4971
      %5127 = vmax.xlane.f32.xlu0 %v5126
      %v5128 = vpop.xlane.xlu0 %5127
      %v5129 = vmax.f32 %v4975, %v4977
      %5130 = vmax.xlane.f32.xlu0 %v5129
      %v5131 = vpop.xlane.xlu0 %5130
      %v5132 = vmax.f32 %v4979, %v4981
      %5133 = vmax.xlane.f32.xlu0 %v5132
      %v5134 = vpop.xlane.xlu0 %5133
      %v5135 = vmax.f32 %v4985, %v4987
      %5136 = vmax.xlane.f32.xlu0 %v5135
      %v5137 = vpop.xlane.xlu0 %5136
      %v5138 = vmax.f32 %v4989, %v4991
      %5139 = vmax.xlane.f32.xlu0 %v5138
      %v5140 = vpop.xlane.xlu0 %5139
      %v5141 = vmax.f32 %v4995, %v4997
      %5142 = vmax.xlane.f32.xlu0 %v5141
      %v5143 = vpop.xlane.xlu0 %5142
      %v5144 = vmax.f32 %v4999, %v5001
      %5145 = vmax.xlane.f32.xlu0 %v5144
      %v5146 = vpop.xlane.xlu0 %5145
      %v5147 = vmax.f32 %v5005, %v5007
      %5148 = vmax.xlane.f32.xlu0 %v5147
      %v5149 = vpop.xlane.xlu0 %5148
      %v5150 = vmax.f32 %v5009, %v5011
      %5151 = vmax.xlane.f32.xlu0 %v5150
      %v5152 = vpop.xlane.xlu0 %5151
      %v5153 = vmax.f32 %v5015, %v5017
      %5154 = vmax.xlane.f32.xlu0 %v5153
      %v5155 = vpop.xlane.xlu0 %5154
      %v5156 = vmax.f32 %v5019, %v5021
      %5157 = vmax.xlane.f32.xlu0 %v5156
      %v5158 = vpop.xlane.xlu0 %5157
      %v5159 = vmax.f32 %v5025, %v5027
      %5160 = vmax.xlane.f32.xlu0 %v5159
      %v5161 = vpop.xlane.xlu0 %5160
      %v5162 = vmax.f32 %v5029, %v5031
      %5163 = vmax.xlane.f32.xlu0 %v5162
      %v5164 = vpop.xlane.xlu0 %5163
      %v5165 = vmax.f32 %v5035, %v5037
      %5166 = vmax.xlane.f32.xlu0 %v5165
      %v5167 = vpop.xlane.xlu0 %5166
      %v5168 = vmax.f32 %v5039, %v5041
      %5169 = vmax.xlane.f32.xlu0 %v5168
      %v5170 = vpop.xlane.xlu0 %5169
      %v5171 = vmax.f32 %v5045, %v5047
      %5172 = vmax.xlane.f32.xlu0 %v5171
      %v5173 = vpop.xlane.xlu0 %5172
      %v5174 = vmax.f32 %v5049, %v5051
      %5175 = vmax.xlane.f32.xlu0 %v5174
      %v5176 = vpop.xlane.xlu0 %5175
      %v5177 = vmax.f32 %v5055, %v5057
      %5178 = vmax.xlane.f32.xlu0 %v5177
      %v5179 = vpop.xlane.xlu0 %5178
      %v5180 = vmax.f32 %v5059, %v5061
      %5181 = vmax.xlane.f32.xlu0 %v5180
      %v5182 = vpop.xlane.xlu0 %5181
      %v5183 = vmax.f32 %v5065, %v5067
      %5184 = vmax.xlane.f32.xlu0 %v5183
      %v5185 = vpop.xlane.xlu0 %5184
      %v5186 = vmax.f32 %v5069, %v5071
      %5187 = vmax.xlane.f32.xlu0 %v5186
      %v5188 = vpop.xlane.xlu0 %5187
      %v5189 = vmax.f32 %v5075, %v5077
      %5190 = vmax.xlane.f32.xlu0 %v5189
      %v5191 = vpop.xlane.xlu0 %5190
      %v5192 = vmax.f32 %v5079, %v5081
      %5193 = vmax.xlane.f32.xlu0 %v5192
      %v5194 = vpop.xlane.xlu0 %5193
      %v5195 = vmax.f32 %v5085, %v5087
      %5196 = vmax.xlane.f32.xlu0 %v5195
      %v5197 = vpop.xlane.xlu0 %5196
      %v5198 = vmax.f32 %v5089, %v5091
      %5199 = vmax.xlane.f32.xlu0 %v5198
      %v5200 = vpop.xlane.xlu0 %5199
      %v5201 = vmax.f32 %v5095, %v5097
      %5202 = vmax.xlane.f32.xlu0 %v5201
      %v5203 = vpop.xlane.xlu0 %5202
      %v5204 = vmax.f32 %v5099, %v5101
      %5205 = vmax.xlane.f32.xlu0 %v5204
      %v5206 = vpop.xlane.xlu0 %5205
      %v5207 = vmax.f32 %v5105, %v5107
      %5208 = vmax.xlane.f32.xlu0 %v5207
      %v5209 = vpop.xlane.xlu0 %5208
      %v5210 = vmax.f32 %v5109, %v5111
      %5211 = vmax.xlane.f32.xlu0 %v5210
      %v5212 = vpop.xlane.xlu0 %5211
      %v5213 = vmax.f32 %v5115, %v5117
      %5214 = vmax.xlane.f32.xlu0 %v5213
      %v5215 = vpop.xlane.xlu0 %5214
      %v5216 = vmax.f32 %v5119, %v5121
      %5217 = vmax.xlane.f32.xlu0 %v5216
      %v5218 = vpop.xlane.xlu0 %5217
      %v5219 = vsub.f32 %v4965, %v5125
      %v5220 = vsub.f32 %v4967, %v5125
      %v5221 = vsub.f32 %v4969, %v5128
      %v5222 = vsub.f32 %v4971, %v5128
      %v5223 = vsub.f32 %v4975, %v5131
      %v5224 = vsub.f32 %v4977, %v5131
      %v5225 = vsub.f32 %v4979, %v5134
      %v5226 = vsub.f32 %v4981, %v5134
      %v5227 = vsub.f32 %v4985, %v5137
      %v5228 = vsub.f32 %v4987, %v5137
      %v5229 = vsub.f32 %v4989, %v5140
      %v5230 = vsub.f32 %v4991, %v5140
      %v5231 = vsub.f32 %v4995, %v5143
      %v5232 = vsub.f32 %v4997, %v5143
      %v5233 = vsub.f32 %v4999, %v5146
      %v5234 = vsub.f32 %v5001, %v5146
      %v5235 = vsub.f32 %v5005, %v5149
      %v5236 = vsub.f32 %v5007, %v5149
      %v5237 = vsub.f32 %v5009, %v5152
      %v5238 = vsub.f32 %v5011, %v5152
      %v5239 = vsub.f32 %v5015, %v5155
      %v5240 = vsub.f32 %v5017, %v5155
      %v5241 = vsub.f32 %v5019, %v5158
      %v5242 = vsub.f32 %v5021, %v5158
      %v5243 = vsub.f32 %v5025, %v5161
      %v5244 = vsub.f32 %v5027, %v5161
      %v5245 = vsub.f32 %v5029, %v5164
      %v5246 = vsub.f32 %v5031, %v5164
      %v5247 = vsub.f32 %v5035, %v5167
      %v5248 = vsub.f32 %v5037, %v5167
      %v5249 = vsub.f32 %v5039, %v5170
      %v5250 = vsub.f32 %v5041, %v5170
      %v5251 = vsub.f32 %v5045, %v5173
      %v5252 = vsub.f32 %v5047, %v5173
      %v5253 = vsub.f32 %v5049, %v5176
      %v5254 = vsub.f32 %v5051, %v5176
      %v5255 = vsub.f32 %v5055, %v5179
      %v5256 = vsub.f32 %v5057, %v5179
      %v5257 = vsub.f32 %v5059, %v5182
      %v5258 = vsub.f32 %v5061, %v5182
      %v5259 = vsub.f32 %v5065, %v5185
      %v5260 = vsub.f32 %v5067, %v5185
      %v5261 = vsub.f32 %v5069, %v5188
      %v5262 = vsub.f32 %v5071, %v5188
      %v5263 = vsub.f32 %v5075, %v5191
      %v5264 = vsub.f32 %v5077, %v5191
      %v5265 = vsub.f32 %v5079, %v5194
      %v5266 = vsub.f32 %v5081, %v5194
      %v5267 = vsub.f32 %v5085, %v5197
      %v5268 = vsub.f32 %v5087, %v5197
      %v5269 = vsub.f32 %v5089, %v5200
      %v5270 = vsub.f32 %v5091, %v5200
      %v5271 = vsub.f32 %v5095, %v5203
      %v5272 = vsub.f32 %v5097, %v5203
      %v5273 = vsub.f32 %v5099, %v5206
      %v5274 = vsub.f32 %v5101, %v5206
      %v5275 = vsub.f32 %v5105, %v5209
      %v5276 = vsub.f32 %v5107, %v5209
      %v5277 = vsub.f32 %v5109, %v5212
      %v5278 = vsub.f32 %v5111, %v5212
      %v5279 = vsub.f32 %v5115, %v5215
      %v5280 = vsub.f32 %v5117, %v5215
      %v5281 = vsub.f32 %v5119, %v5218
      %v5282 = vsub.f32 %v5121, %v5218
      %v5283 = vmul.f32 %v5219, 1.442695
      %v5284 = vpow.pop %v5283
      %v5285 = vmul.f32 %v5220, 1.442695
      %v5286 = vpow.pop %v5285
      %v5287 = vmul.f32 %v5221, 1.442695
      %v5288 = vpow.pop %v5287
      %v5289 = vmul.f32 %v5222, 1.442695
      %v5290 = vpow.pop %v5289
      %v5291 = vmul.f32 %v5223, 1.442695
      %v5292 = vpow.pop %v5291
      %v5293 = vmul.f32 %v5224, 1.442695
      %v5294 = vpow.pop %v5293
      %v5295 = vmul.f32 %v5225, 1.442695
      %v5296 = vpow.pop %v5295
      %v5297 = vmul.f32 %v5226, 1.442695
      %v5298 = vpow.pop %v5297
      %v5299 = vmul.f32 %v5227, 1.442695
      %v5300 = vpow.pop %v5299
      %v5301 = vmul.f32 %v5228, 1.442695
      %v5302 = vpow.pop %v5301
      %v5303 = vmul.f32 %v5229, 1.442695
      %v5304 = vpow.pop %v5303
      %v5305 = vmul.f32 %v5230, 1.442695
      %v5306 = vpow.pop %v5305
      %v5307 = vmul.f32 %v5231, 1.442695
      %v5308 = vpow.pop %v5307
      %v5309 = vmul.f32 %v5232, 1.442695
      %v5310 = vpow.pop %v5309
      %v5311 = vmul.f32 %v5233, 1.442695
      %v5312 = vpow.pop %v5311
      %v5313 = vmul.f32 %v5234, 1.442695
      %v5314 = vpow.pop %v5313
      %v5315 = vmul.f32 %v5235, 1.442695
      %v5316 = vpow.pop %v5315
      %v5317 = vmul.f32 %v5236, 1.442695
      %v5318 = vpow.pop %v5317
      %v5319 = vmul.f32 %v5237, 1.442695
      %v5320 = vpow.pop %v5319
      %v5321 = vmul.f32 %v5238, 1.442695
      %v5322 = vpow.pop %v5321
      %v5323 = vmul.f32 %v5239, 1.442695
      %v5324 = vpow.pop %v5323
      %v5325 = vmul.f32 %v5240, 1.442695
      %v5326 = vpow.pop %v5325
      %v5327 = vmul.f32 %v5241, 1.442695
      %v5328 = vpow.pop %v5327
      %v5329 = vmul.f32 %v5242, 1.442695
      %v5330 = vpow.pop %v5329
      %v5331 = vmul.f32 %v5243, 1.442695
      %v5332 = vpow.pop %v5331
      %v5333 = vmul.f32 %v5244, 1.442695
      %v5334 = vpow.pop %v5333
      %v5335 = vmul.f32 %v5245, 1.442695
      %v5336 = vpow.pop %v5335
      %v5337 = vmul.f32 %v5246, 1.442695
      %v5338 = vpow.pop %v5337
      %v5339 = vmul.f32 %v5247, 1.442695
      %v5340 = vpow.pop %v5339
      %v5341 = vmul.f32 %v5248, 1.442695
      %v5342 = vpow.pop %v5341
      %v5343 = vmul.f32 %v5249, 1.442695
      %v5344 = vpow.pop %v5343
      %v5345 = vmul.f32 %v5250, 1.442695
      %v5346 = vpow.pop %v5345
      %v5347 = vmul.f32 %v5251, 1.442695
      %v5348 = vpow.pop %v5347
      %v5349 = vmul.f32 %v5252, 1.442695
      %v5350 = vpow.pop %v5349
      %v5351 = vmul.f32 %v5253, 1.442695
      %v5352 = vpow.pop %v5351
      %v5353 = vmul.f32 %v5254, 1.442695
      %v5354 = vpow.pop %v5353
      %v5355 = vmul.f32 %v5255, 1.442695
      %v5356 = vpow.pop %v5355
      %v5357 = vmul.f32 %v5256, 1.442695
      %v5358 = vpow.pop %v5357
      %v5359 = vmul.f32 %v5257, 1.442695
      %v5360 = vpow.pop %v5359
      %v5361 = vmul.f32 %v5258, 1.442695
      %v5362 = vpow.pop %v5361
      %v5363 = vmul.f32 %v5259, 1.442695
      %v5364 = vpow.pop %v5363
      %v5365 = vmul.f32 %v5260, 1.442695
      %v5366 = vpow.pop %v5365
      %v5367 = vmul.f32 %v5261, 1.442695
      %v5368 = vpow.pop %v5367
      %v5369 = vmul.f32 %v5262, 1.442695
      %v5370 = vpow.pop %v5369
      %v5371 = vmul.f32 %v5263, 1.442695
      %v5372 = vpow.pop %v5371
      %v5373 = vmul.f32 %v5264, 1.442695
      %v5374 = vpow.pop %v5373
      %v5375 = vmul.f32 %v5265, 1.442695
      %v5376 = vpow.pop %v5375
      %v5377 = vmul.f32 %v5266, 1.442695
      %v5378 = vpow.pop %v5377
      %v5379 = vmul.f32 %v5267, 1.442695
      %v5380 = vpow.pop %v5379
      %v5381 = vmul.f32 %v5268, 1.442695
      %v5382 = vpow.pop %v5381
      %v5383 = vmul.f32 %v5269, 1.442695
      %v5384 = vpow.pop %v5383
      %v5385 = vmul.f32 %v5270, 1.442695
      %v5386 = vpow.pop %v5385
      %v5387 = vmul.f32 %v5271, 1.442695
      %v5388 = vpow.pop %v5387
      %v5389 = vmul.f32 %v5272, 1.442695
      %v5390 = vpow.pop %v5389
      %v5391 = vmul.f32 %v5273, 1.442695
      %v5392 = vpow.pop %v5391
      %v5393 = vmul.f32 %v5274, 1.442695
      %v5394 = vpow.pop %v5393
      %v5395 = vmul.f32 %v5275, 1.442695
      %v5396 = vpow.pop %v5395
      %v5397 = vmul.f32 %v5276, 1.442695
      %v5398 = vpow.pop %v5397
      %v5399 = vmul.f32 %v5277, 1.442695
      %v5400 = vpow.pop %v5399
      %v5401 = vmul.f32 %v5278, 1.442695
      %v5402 = vpow.pop %v5401
      %v5403 = vmul.f32 %v5279, 1.442695
      %v5404 = vpow.pop %v5403
      %v5405 = vmul.f32 %v5280, 1.442695
      %v5406 = vpow.pop %v5405
      %v5407 = vmul.f32 %v5281, 1.442695
      %v5408 = vpow.pop %v5407
      %v5409 = vmul.f32 %v5282, 1.442695
      %v5410 = vpow.pop %v5409
      %v5411 = vadd.f32 %v5284, %v5286
      %5412 = vadd.xlane.f32.xlu0 %v5411
      %v5413 = vpop.xlane.xlu0 %5412
      %v5414 = vadd.f32 %v5288, %v5290
      %5415 = vadd.xlane.f32.xlu0 %v5414
      %v5416 = vpop.xlane.xlu0 %5415
      %v5417 = vadd.f32 %v5292, %v5294
      %5418 = vadd.xlane.f32.xlu0 %v5417
      %v5419 = vpop.xlane.xlu0 %5418
      %v5420 = vadd.f32 %v5296, %v5298
      %5421 = vadd.xlane.f32.xlu0 %v5420
      %v5422 = vpop.xlane.xlu0 %5421
      %v5423 = vadd.f32 %v5300, %v5302
      %5424 = vadd.xlane.f32.xlu0 %v5423
      %v5425 = vpop.xlane.xlu0 %5424
      %v5426 = vadd.f32 %v5304, %v5306
      %5427 = vadd.xlane.f32.xlu0 %v5426
      %v5428 = vpop.xlane.xlu0 %5427
      %v5429 = vadd.f32 %v5308, %v5310
      %5430 = vadd.xlane.f32.xlu0 %v5429
      %v5431 = vpop.xlane.xlu0 %5430
      %v5432 = vadd.f32 %v5312, %v5314
      %5433 = vadd.xlane.f32.xlu0 %v5432
      %v5434 = vpop.xlane.xlu0 %5433
      %v5435 = vadd.f32 %v5316, %v5318
      %5436 = vadd.xlane.f32.xlu0 %v5435
      %v5437 = vpop.xlane.xlu0 %5436
      %v5438 = vadd.f32 %v5320, %v5322
      %5439 = vadd.xlane.f32.xlu0 %v5438
      %v5440 = vpop.xlane.xlu0 %5439
      %v5441 = vadd.f32 %v5324, %v5326
      %5442 = vadd.xlane.f32.xlu0 %v5441
      %v5443 = vpop.xlane.xlu0 %5442
      %v5444 = vadd.f32 %v5328, %v5330
      %5445 = vadd.xlane.f32.xlu0 %v5444
      %v5446 = vpop.xlane.xlu0 %5445
      %v5447 = vadd.f32 %v5332, %v5334
      %5448 = vadd.xlane.f32.xlu0 %v5447
      %v5449 = vpop.xlane.xlu0 %5448
      %v5450 = vadd.f32 %v5336, %v5338
      %5451 = vadd.xlane.f32.xlu0 %v5450
      %v5452 = vpop.xlane.xlu0 %5451
      %v5453 = vadd.f32 %v5340, %v5342
      %5454 = vadd.xlane.f32.xlu0 %v5453
      %v5455 = vpop.xlane.xlu0 %5454
      %v5456 = vadd.f32 %v5344, %v5346
      %5457 = vadd.xlane.f32.xlu0 %v5456
      %v5458 = vpop.xlane.xlu0 %5457
      %v5459 = vadd.f32 %v5348, %v5350
      %5460 = vadd.xlane.f32.xlu0 %v5459
      %v5461 = vpop.xlane.xlu0 %5460
      %v5462 = vadd.f32 %v5352, %v5354
      %5463 = vadd.xlane.f32.xlu0 %v5462
      %v5464 = vpop.xlane.xlu0 %5463
      %v5465 = vadd.f32 %v5356, %v5358
      %5466 = vadd.xlane.f32.xlu0 %v5465
      %v5467 = vpop.xlane.xlu0 %5466
      %v5468 = vadd.f32 %v5360, %v5362
      %5469 = vadd.xlane.f32.xlu0 %v5468
      %v5470 = vpop.xlane.xlu0 %5469
      %v5471 = vadd.f32 %v5364, %v5366
      %5472 = vadd.xlane.f32.xlu0 %v5471
      %v5473 = vpop.xlane.xlu0 %5472
      %v5474 = vadd.f32 %v5368, %v5370
      %5475 = vadd.xlane.f32.xlu0 %v5474
      %v5476 = vpop.xlane.xlu0 %5475
      %v5477 = vadd.f32 %v5372, %v5374
      %5478 = vadd.xlane.f32.xlu0 %v5477
      %v5479 = vpop.xlane.xlu0 %5478
      %v5480 = vadd.f32 %v5376, %v5378
      %5481 = vadd.xlane.f32.xlu0 %v5480
      %v5482 = vpop.xlane.xlu0 %5481
      %v5483 = vadd.f32 %v5380, %v5382
      %5484 = vadd.xlane.f32.xlu0 %v5483
      %v5485 = vpop.xlane.xlu0 %5484
      %v5486 = vadd.f32 %v5384, %v5386
      %5487 = vadd.xlane.f32.xlu0 %v5486
      %v5488 = vpop.xlane.xlu0 %5487
      %v5489 = vadd.f32 %v5388, %v5390
      %5490 = vadd.xlane.f32.xlu0 %v5489
      %v5491 = vpop.xlane.xlu0 %5490
      %v5492 = vadd.f32 %v5392, %v5394
      %5493 = vadd.xlane.f32.xlu0 %v5492
      %v5494 = vpop.xlane.xlu0 %5493
      %v5495 = vadd.f32 %v5396, %v5398
      %5496 = vadd.xlane.f32.xlu0 %v5495
      %v5497 = vpop.xlane.xlu0 %5496
      %v5498 = vadd.f32 %v5400, %v5402
      %5499 = vadd.xlane.f32.xlu0 %v5498
      %v5500 = vpop.xlane.xlu0 %5499
      %v5501 = vadd.f32 %v5404, %v5406
      %5502 = vadd.xlane.f32.xlu0 %v5501
      %v5503 = vpop.xlane.xlu0 %5502
      %v5504 = vadd.f32 %v5408, %v5410
      %5505 = vadd.xlane.f32.xlu0 %v5504
      %v5506 = vpop.xlane.xlu0 %5505
      %v5507 = vpack.c.bf16 %v5288, %v5284
      %v5508 = vpack.c.bf16 %v5290, %v5286
      %v5509 = vpack.c.bf16 %v5296, %v5292
      %v5510 = vpack.c.bf16 %v5298, %v5294
      %v5511 = vpack.c.bf16 %v5304, %v5300
      %v5512 = vpack.c.bf16 %v5306, %v5302
      %v5513 = vpack.c.bf16 %v5312, %v5308
      %v5514 = vpack.c.bf16 %v5314, %v5310
      %v5515 = vpack.c.bf16 %v5320, %v5316
      %v5516 = vpack.c.bf16 %v5322, %v5318
      %v5517 = vpack.c.bf16 %v5328, %v5324
      %v5518 = vpack.c.bf16 %v5330, %v5326
      %v5519 = vpack.c.bf16 %v5336, %v5332
      %v5520 = vpack.c.bf16 %v5338, %v5334
      %v5521 = vpack.c.bf16 %v5344, %v5340
      %v5522 = vpack.c.bf16 %v5346, %v5342
      %v5523 = vpack.c.bf16 %v5352, %v5348
      %v5524 = vpack.c.bf16 %v5354, %v5350
      %v5525 = vpack.c.bf16 %v5360, %v5356
      %v5526 = vpack.c.bf16 %v5362, %v5358
      %v5527 = vpack.c.bf16 %v5368, %v5364
      %v5528 = vpack.c.bf16 %v5370, %v5366
      %v5529 = vpack.c.bf16 %v5376, %v5372
      %v5530 = vpack.c.bf16 %v5378, %v5374
      %v5531 = vpack.c.bf16 %v5384, %v5380
      %v5532 = vpack.c.bf16 %v5386, %v5382
      %v5533 = vpack.c.bf16 %v5392, %v5388
      %v5534 = vpack.c.bf16 %v5394, %v5390
      %v5535 = vpack.c.bf16 %v5400, %v5396
      %v5536 = vpack.c.bf16 %v5402, %v5398
      %v5537 = vpack.c.bf16 %v5408, %v5404
      %v5538 = vpack.c.bf16 %v5410, %v5406
      %5539 = vrot.lane.b32.xlu0 %v585, 48
      %v5540 = vpop.permute.xlu0 %5539
      %5541 = vrot.lane.b32.xlu0 %v586, 48
      %v5542 = vpop.permute.xlu0 %5541
      %5543 = vrot.lane.b32.xlu0 %v587, 48
      %v5544 = vpop.permute.xlu0 %5543
      %5545 = vrot.lane.b32.xlu0 %v588, 48
      %v5546 = vpop.permute.xlu0 %5545
      %5547 = vrot.lane.b32.xlu0 %v589, 48
      %v5548 = vpop.permute.xlu0 %5547
      %5549 = vrot.lane.b32.xlu0 %v590, 48
      %v5550 = vpop.permute.xlu0 %5549
      %5551 = vrot.lane.b32.xlu0 %v591, 48
      %v5552 = vpop.permute.xlu0 %5551
      %5553 = vrot.lane.b32.xlu0 %v592, 48
      %v5554 = vpop.permute.xlu0 %5553
      %5555 = vrot.lane.b32.xlu0 %v593, 48
      %v5556 = vpop.permute.xlu0 %5555
      %5557 = vrot.lane.b32.xlu0 %v594, 48
      %v5558 = vpop.permute.xlu0 %5557
      %5559 = vrot.lane.b32.xlu0 %v595, 48
      %v5560 = vpop.permute.xlu0 %5559
      %5561 = vrot.lane.b32.xlu0 %v596, 48
      %v5562 = vpop.permute.xlu0 %5561
      %5563 = vrot.lane.b32.xlu0 %v597, 48
      %v5564 = vpop.permute.xlu0 %5563
      %5565 = vrot.lane.b32.xlu0 %v598, 48
      %v5566 = vpop.permute.xlu0 %5565
      %5567 = vrot.lane.b32.xlu0 %v599, 48
      %v5568 = vpop.permute.xlu0 %5567
      %5569 = vrot.lane.b32.xlu0 %v600, 48
      %v5570 = vpop.permute.xlu0 %5569
      %5587 = vmatprep.subr.bf16.mxu0 0
      %5588 = vmatpush1.bf16.msra.mxu0 %v5540
      %5589 = vmatprep.subr.bf16.mxu0 0
      %5590 = vmatpush1.bf16.msra.mxu0 %v5542
      %5591 = vmatprep.subr.bf16.mxu0 0
      %5592 = vmatpush1.bf16.msra.mxu0 %v5544
      %5593 = vmatprep.subr.bf16.mxu0 0
      %5594 = vmatpush1.bf16.msra.mxu0 %v5546
      %5595 = vmatprep.subr.bf16.mxu0 0
      %5596 = vmatpush1.bf16.msra.mxu0 %v5548
      %5597 = vmatprep.subr.bf16.mxu0 0
      %5598 = vmatpush1.bf16.msra.mxu0 %v5550
      %5599 = vmatprep.subr.bf16.mxu0 0
      %5600 = vmatpush1.bf16.msra.mxu0 %v5552
      %5601 = vmatprep.subr.bf16.mxu0 0
      %5602 = vmatpush1.bf16.msra.mxu0 %v5554
      %5603 = vmatprep.subr.bf16.mxu0 0
      %5604 = vmatpush1.bf16.msra.mxu0 %v5556
      %5605 = vmatprep.subr.bf16.mxu0 0
      %5606 = vmatpush1.bf16.msra.mxu0 %v5558
      %5607 = vmatprep.subr.bf16.mxu0 0
      %5608 = vmatpush1.bf16.msra.mxu0 %v5560
      %5609 = vmatprep.subr.bf16.mxu0 0
      %5610 = vmatpush1.bf16.msra.mxu0 %v5562
      %5611 = vmatprep.subr.bf16.mxu0 0
      %5612 = vmatpush1.bf16.msra.mxu0 %v5564
      %5613 = vmatprep.subr.bf16.mxu0 0
      %5614 = vmatpush1.bf16.msra.mxu0 %v5566
      %5615 = vmatprep.subr.bf16.mxu0 0
      %5616 = vmatpush1.bf16.msra.mxu0 %v5568
      %5617 = vmatprep.subr.bf16.mxu0 0
      %5618 = vmatpush1.bf16.msra.mxu0 %v5570
      %5619 = vmatprep.mubr.bf16.mxu0 %v5508
      %5620 = vmatmul.mubr.bf16.gmra.mrb[0].mxu0 %v5507
      %v5621 = vpop.f32.mrb[0].mxu0
      %v5622 = vadd.f32 0.0, %v5621
      %v5623 = vpop.f32.mrb[0].mxu0
      %v5624 = vpop.f32.mrb[0].mxu0
      %v5625 = vadd.f32 0.0, %v5624
      %v5626 = vpop.f32.mrb[0].mxu0
      %5627 = vmatprep.mubr.bf16.mxu0 %v5510
      %5628 = vmatmul.mubr.bf16.gmra.mrb[0].mxu0 %v5509
      %v5629 = vpop.f32.mrb[0].mxu0
      %v5630 = vadd.f32 0.0, %v5629
      %v5631 = vpop.f32.mrb[0].mxu0
      %v5632 = vpop.f32.mrb[0].mxu0
      %v5633 = vadd.f32 0.0, %v5632
      %v5634 = vpop.f32.mrb[0].mxu0
      %5635 = vmatprep.mubr.bf16.mxu0 %v5512
      %5636 = vmatmul.mubr.bf16.gmra.mrb[0].mxu0 %v5511
      %v5637 = vpop.f32.mrb[0].mxu0
      %v5638 = vadd.f32 0.0, %v5637
      %v5639 = vpop.f32.mrb[0].mxu0
      %v5640 = vpop.f32.mrb[0].mxu0
      %v5641 = vadd.f32 0.0, %v5640
      %v5642 = vpop.f32.mrb[0].mxu0
      %5643 = vmatprep.mubr.bf16.mxu0 %v5514
      %5644 = vmatmul.mubr.bf16.gmra.mrb[0].mxu0 %v5513
      %v5645 = vpop.f32.mrb[0].mxu0
      %v5646 = vadd.f32 0.0, %v5645
      %v5647 = vpop.f32.mrb[0].mxu0
      %v5648 = vpop.f32.mrb[0].mxu0
      %v5649 = vadd.f32 0.0, %v5648
      %v5650 = vpop.f32.mrb[0].mxu0
      %5651 = vmatprep.mubr.bf16.mxu0 %v5516
      %5652 = vmatmul.mubr.bf16.gmra.mrb[0].mxu0 %v5515
      %v5653 = vpop.f32.mrb[0].mxu0
      %v5654 = vadd.f32 0.0, %v5653
      %v5655 = vpop.f32.mrb[0].mxu0
      %v5656 = vpop.f32.mrb[0].mxu0
      %v5657 = vadd.f32 0.0, %v5656
      %v5658 = vpop.f32.mrb[0].mxu0
      %5659 = vmatprep.mubr.bf16.mxu0 %v5518
      %5660 = vmatmul.mubr.bf16.gmra.mrb[0].mxu0 %v5517
      %v5661 = vpop.f32.mrb[0].mxu0
      %v5662 = vadd.f32 0.0, %v5661
      %v5663 = vpop.f32.mrb[0].mxu0
      %v5664 = vpop.f32.mrb[0].mxu0
      %v5665 = vadd.f32 0.0, %v5664
      %v5666 = vpop.f32.mrb[0].mxu0
      %5667 = vmatprep.mubr.bf16.mxu0 %v5520
      %5668 = vmatmul.mubr.bf16.gmra.mrb[0].mxu0 %v5519
      %v5669 = vpop.f32.mrb[0].mxu0
      %v5670 = vadd.f32 0.0, %v5669
      %v5671 = vpop.f32.mrb[0].mxu0
      %v5672 = vpop.f32.mrb[0].mxu0
      %v5673 = vadd.f32 0.0, %v5672
      %v5674 = vpop.f32.mrb[0].mxu0
      %5675 = vmatprep.mubr.bf16.mxu0 %v5522
      %5676 = vmatmul.mubr.bf16.gmra.mrb[0].mxu0 %v5521
      %v5677 = vpop.f32.mrb[0].mxu0
      %v5678 = vadd.f32 0.0, %v5677
      %v5679 = vpop.f32.mrb[0].mxu0
      %v5680 = vpop.f32.mrb[0].mxu0
      %v5681 = vadd.f32 0.0, %v5680
      %v5682 = vpop.f32.mrb[0].mxu0
      %5683 = vmatprep.mubr.bf16.mxu0 %v5524
      %5684 = vmatmul.mubr.bf16.gmra.mrb[0].mxu0 %v5523
      %v5685 = vpop.f32.mrb[0].mxu0
      %v5686 = vadd.f32 0.0, %v5685
      %v5687 = vpop.f32.mrb[0].mxu0
      %v5688 = vpop.f32.mrb[0].mxu0
      %v5689 = vadd.f32 0.0, %v5688
      %v5690 = vpop.f32.mrb[0].mxu0
      %5691 = vmatprep.mubr.bf16.mxu0 %v5526
      %5692 = vmatmul.mubr.bf16.gmra.mrb[0].mxu0 %v5525
      %v5693 = vpop.f32.mrb[0].mxu0
      %v5694 = vadd.f32 0.0, %v5693
      %v5695 = vpop.f32.mrb[0].mxu0
      %v5696 = vpop.f32.mrb[0].mxu0
      %v5697 = vadd.f32 0.0, %v5696
      %v5698 = vpop.f32.mrb[0].mxu0
      %5699 = vmatprep.mubr.bf16.mxu0 %v5528
      %5700 = vmatmul.mubr.bf16.gmra.mrb[0].mxu0 %v5527
      %v5701 = vpop.f32.mrb[0].mxu0
      %v5702 = vadd.f32 0.0, %v5701
      %v5703 = vpop.f32.mrb[0].mxu0
      %v5704 = vpop.f32.mrb[0].mxu0
      %v5705 = vadd.f32 0.0, %v5704
      %v5706 = vpop.f32.mrb[0].mxu0
      %5707 = vmatprep.mubr.bf16.mxu0 %v5530
      %5708 = vmatmul.mubr.bf16.gmra.mrb[0].mxu0 %v5529
      %v5709 = vpop.f32.mrb[0].mxu0
      %v5710 = vadd.f32 0.0, %v5709
      %v5711 = vpop.f32.mrb[0].mxu0
      %v5712 = vpop.f32.mrb[0].mxu0
      %v5713 = vadd.f32 0.0, %v5712
      %v5714 = vpop.f32.mrb[0].mxu0
      %5715 = vmatprep.mubr.bf16.mxu0 %v5532
      %5716 = vmatmul.mubr.bf16.gmra.mrb[0].mxu0 %v5531
      %v5717 = vpop.f32.mrb[0].mxu0
      %v5718 = vadd.f32 0.0, %v5717
      %v5719 = vpop.f32.mrb[0].mxu0
      %v5720 = vpop.f32.mrb[0].mxu0
      %v5721 = vadd.f32 0.0, %v5720
      %v5722 = vpop.f32.mrb[0].mxu0
      %5723 = vmatprep.mubr.bf16.mxu0 %v5534
      %5724 = vmatmul.mubr.bf16.gmra.mrb[0].mxu0 %v5533
      %v5725 = vpop.f32.mrb[0].mxu0
      %v5726 = vadd.f32 0.0, %v5725
      %v5727 = vpop.f32.mrb[0].mxu0
      %v5728 = vpop.f32.mrb[0].mxu0
      %v5729 = vadd.f32 0.0, %v5728
      %v5730 = vpop.f32.mrb[0].mxu0
      %5731 = vmatprep.mubr.bf16.mxu0 %v5536
      %5732 = vmatmul.mubr.bf16.gmra.mrb[0].mxu0 %v5535
      %v5733 = vpop.f32.mrb[0].mxu0
      %v5734 = vadd.f32 0.0, %v5733
      %v5735 = vpop.f32.mrb[0].mxu0
      %v5736 = vpop.f32.mrb[0].mxu0
      %v5737 = vadd.f32 0.0, %v5736
      %v5738 = vpop.f32.mrb[0].mxu0
      %5739 = vmatprep.mubr.bf16.mxu0 %v5538
      %5740 = vmatmul.mubr.bf16.gmra.mrb[0].mxu0 %v5537
      %v5741 = vpop.f32.mrb[0].mxu0
      %v5742 = vadd.f32 0.0, %v5741
      %v5743 = vpop.f32.mrb[0].mxu0
      %v5744 = vpop.f32.mrb[0].mxu0
      %v5745 = vadd.f32 0.0, %v5744
      %v5746 = vpop.f32.mrb[0].mxu0
      %5747 = vdwg.mxu0
      %v5748 = vrcp.pop %v5413
      %v5749 = vrcp.pop %v5416
      %v5750 = vrcp.pop %v5419
      %v5751 = vrcp.pop %v5422
      %v5752 = vrcp.pop %v5425
      %v5753 = vrcp.pop %v5428
      %v5754 = vrcp.pop %v5431
      %v5755 = vrcp.pop %v5434
      %v5756 = vrcp.pop %v5437
      %v5757 = vrcp.pop %v5440
      %v5758 = vrcp.pop %v5443
      %v5759 = vrcp.pop %v5446
      %v5760 = vrcp.pop %v5449
      %v5761 = vrcp.pop %v5452
      %v5762 = vrcp.pop %v5455
      %v5763 = vrcp.pop %v5458
      %v5764 = vrcp.pop %v5461
      %v5765 = vrcp.pop %v5464
      %v5766 = vrcp.pop %v5467
      %v5767 = vrcp.pop %v5470
      %v5768 = vrcp.pop %v5473
      %v5769 = vrcp.pop %v5476
      %v5770 = vrcp.pop %v5479
      %v5771 = vrcp.pop %v5482
      %v5772 = vrcp.pop %v5485
      %v5773 = vrcp.pop %v5488
      %v5774 = vrcp.pop %v5491
      %v5775 = vrcp.pop %v5494
      %v5776 = vrcp.pop %v5497
      %v5777 = vrcp.pop %v5500
      %v5778 = vrcp.pop %v5503
      %v5779 = vrcp.pop %v5506
      %v5780 = vmul.f32 %v5622, %v5748
      %v5781 = vmul.f32 %v5625, %v5749
      %v5782 = vmul.f32 %v5630, %v5750
      %v5783 = vmul.f32 %v5633, %v5751
      %v5784 = vmul.f32 %v5638, %v5752
      %v5785 = vmul.f32 %v5641, %v5753
      %v5786 = vmul.f32 %v5646, %v5754
      %v5787 = vmul.f32 %v5649, %v5755
      %v5788 = vmul.f32 %v5654, %v5756
      %v5789 = vmul.f32 %v5657, %v5757
      %v5790 = vmul.f32 %v5662, %v5758
      %v5791 = vmul.f32 %v5665, %v5759
      %v5792 = vmul.f32 %v5670, %v5760
      %v5793 = vmul.f32 %v5673, %v5761
      %v5794 = vmul.f32 %v5678, %v5762
      %v5795 = vmul.f32 %v5681, %v5763
      %v5796 = vmul.f32 %v5686, %v5764
      %v5797 = vmul.f32 %v5689, %v5765
      %v5798 = vmul.f32 %v5694, %v5766
      %v5799 = vmul.f32 %v5697, %v5767
      %v5800 = vmul.f32 %v5702, %v5768
      %v5801 = vmul.f32 %v5705, %v5769
      %v5802 = vmul.f32 %v5710, %v5770
      %v5803 = vmul.f32 %v5713, %v5771
      %v5804 = vmul.f32 %v5718, %v5772
      %v5805 = vmul.f32 %v5721, %v5773
      %v5806 = vmul.f32 %v5726, %v5774
      %v5807 = vmul.f32 %v5729, %v5775
      %v5808 = vmul.f32 %v5734, %v5776
      %v5809 = vmul.f32 %v5737, %v5777
      %v5810 = vmul.f32 %v5742, %v5778
      %v5811 = vmul.f32 %v5745, %v5779
      %5812 = vrot.lane.b32.xlu0 %v569, 108
      %v5813 = vpop.permute.xlu0 %5812
      %5814 = vrot.lane.b32.xlu0 %v570, 108
      %v5815 = vpop.permute.xlu0 %5814
      %5816 = vrot.lane.b32.xlu0 %v571, 108
      %v5817 = vpop.permute.xlu0 %5816
      %5818 = vrot.lane.b32.xlu0 %v572, 108
      %v5819 = vpop.permute.xlu0 %5818
      %5820 = vrot.lane.b32.xlu0 %v573, 108
      %v5821 = vpop.permute.xlu0 %5820
      %5822 = vrot.lane.b32.xlu0 %v574, 108
      %v5823 = vpop.permute.xlu0 %5822
      %5824 = vrot.lane.b32.xlu0 %v575, 108
      %v5825 = vpop.permute.xlu0 %5824
      %5826 = vrot.lane.b32.xlu0 %v576, 108
      %v5827 = vpop.permute.xlu0 %5826
      %5828 = vrot.lane.b32.xlu0 %v577, 108
      %v5829 = vpop.permute.xlu0 %5828
      %5830 = vrot.lane.b32.xlu0 %v578, 108
      %v5831 = vpop.permute.xlu0 %5830
      %5832 = vrot.lane.b32.xlu0 %v579, 108
      %v5833 = vpop.permute.xlu0 %5832
      %5834 = vrot.lane.b32.xlu0 %v580, 108
      %v5835 = vpop.permute.xlu0 %5834
      %5836 = vrot.lane.b32.xlu0 %v581, 108
      %v5837 = vpop.permute.xlu0 %5836
      %5838 = vrot.lane.b32.xlu0 %v582, 108
      %v5839 = vpop.permute.xlu0 %5838
      %5840 = vrot.lane.b32.xlu0 %v583, 108
      %v5841 = vpop.permute.xlu0 %5840
      %5842 = vrot.lane.b32.xlu0 %v584, 108
      %v5843 = vpop.permute.xlu0 %5842
      %5844 = vrot.lane.b32.xlu0 %v585, 76
      %v5845 = vpop.permute.xlu0 %5844
      %5846 = vrot.lane.b32.xlu0 %v586, 76
      %v5847 = vpop.permute.xlu0 %5846
      %5848 = vrot.lane.b32.xlu0 %v587, 76
      %v5849 = vpop.permute.xlu0 %5848
      %5850 = vrot.lane.b32.xlu0 %v588, 76
      %v5851 = vpop.permute.xlu0 %5850
      %5852 = vrot.lane.b32.xlu0 %v589, 76
      %v5853 = vpop.permute.xlu0 %5852
      %5854 = vrot.lane.b32.xlu0 %v590, 76
      %v5855 = vpop.permute.xlu0 %5854
      %5856 = vrot.lane.b32.xlu0 %v591, 76
      %v5857 = vpop.permute.xlu0 %5856
      %5858 = vrot.lane.b32.xlu0 %v592, 76
      %v5859 = vpop.permute.xlu0 %5858
      %5860 = vrot.lane.b32.xlu0 %v593, 76
      %v5861 = vpop.permute.xlu0 %5860
      %5862 = vrot.lane.b32.xlu0 %v594, 76
      %v5863 = vpop.permute.xlu0 %5862
      %5864 = vrot.lane.b32.xlu0 %v595, 76
      %v5865 = vpop.permute.xlu0 %5864
      %5866 = vrot.lane.b32.xlu0 %v596, 76
      %v5867 = vpop.permute.xlu0 %5866
      %5868 = vrot.lane.b32.xlu0 %v597, 76
      %v5869 = vpop.permute.xlu0 %5868
      %5870 = vrot.lane.b32.xlu0 %v598, 76
      %v5871 = vpop.permute.xlu0 %5870
      %5872 = vrot.lane.b32.xlu0 %v599, 76
      %v5873 = vpop.permute.xlu0 %5872
      %5874 = vrot.lane.b32.xlu0 %v600, 76
      %v5875 = vpop.permute.xlu0 %5874
      %v5877 = vsel %vm649, %v5813, 0
      %v5880 = vsel %vm649, %v5815, 0
      %v5883 = vsel %vm649, %v5817, 0
      %v5886 = vsel %vm649, %v5819, 0
      %v5889 = vsel %vm649, %v5821, 0
      %v5892 = vsel %vm649, %v5823, 0
      %v5895 = vsel %vm649, %v5825, 0
      %v5898 = vsel %vm649, %v5827, 0
      %v5901 = vsel %vm649, %v5829, 0
      %v5904 = vsel %vm649, %v5831, 0
      %v5907 = vsel %vm649, %v5833, 0
      %v5910 = vsel %vm649, %v5835, 0
      %v5913 = vsel %vm649, %v5837, 0
      %v5916 = vsel %vm649, %v5839, 0
      %v5919 = vsel %vm649, %v5841, 0
      %v5922 = vsel %vm649, %v5843, 0
      %v5925 = vsel %vm649, %v5845, 0
      %v5928 = vsel %vm649, %v5847, 0
      %v5931 = vsel %vm649, %v5849, 0
      %v5934 = vsel %vm649, %v5851, 0
      %v5937 = vsel %vm649, %v5853, 0
      %v5940 = vsel %vm649, %v5855, 0
      %v5943 = vsel %vm649, %v5857, 0
      %v5946 = vsel %vm649, %v5859, 0
      %v5949 = vsel %vm649, %v5861, 0
      %v5952 = vsel %vm649, %v5863, 0
      %v5955 = vsel %vm649, %v5865, 0
      %v5958 = vsel %vm649, %v5867, 0
      %v5961 = vsel %vm649, %v5869, 0
      %v5964 = vsel %vm649, %v5871, 0
      %v5967 = vsel %vm649, %v5873, 0
      %v5970 = vsel %vm649, %v5875, 0
      %5972 = vmatprep.subr.bf16.mxu0 0
      %5973 = vmatpush1.bf16.xpose.msra.mxu0 %v5925
      %5974 = vmatprep.subr.bf16.mxu0 0
      %5975 = vmatpush1.bf16.xpose.msra.mxu0 %v5928
      %5976 = vmatprep.subr.bf16.mxu0 0
      %5977 = vmatpush1.bf16.xpose.msra.mxu0 %v5931
      %5978 = vmatprep.subr.bf16.mxu0 0
      %5979 = vmatpush1.bf16.xpose.msra.mxu0 %v5934
      %5980 = vmatprep.subr.bf16.mxu0 0
      %5981 = vmatpush1.bf16.xpose.msra.mxu0 %v5937
      %5982 = vmatprep.subr.bf16.mxu0 0
      %5983 = vmatpush1.bf16.xpose.msra.mxu0 %v5940
      %5984 = vmatprep.subr.bf16.mxu0 0
      %5985 = vmatpush1.bf16.xpose.msra.mxu0 %v5943
      %5986 = vmatprep.subr.bf16.mxu0 0
      %5987 = vmatpush1.bf16.xpose.msra.mxu0 %v5946
      %5988 = vmatprep.subr.bf16.mxu0 0
      %5989 = vmatpush1.bf16.xpose.msra.mxu0 %v5949
      %5990 = vmatprep.subr.bf16.mxu0 0
      %5991 = vmatpush1.bf16.xpose.msra.mxu0 %v5952
      %5992 = vmatprep.subr.bf16.mxu0 0
      %5993 = vmatpush1.bf16.xpose.msra.mxu0 %v5955
      %5994 = vmatprep.subr.bf16.mxu0 0
      %5995 = vmatpush1.bf16.xpose.msra.mxu0 %v5958
      %5996 = vmatprep.subr.bf16.mxu0 0
      %5997 = vmatpush1.bf16.xpose.msra.mxu0 %v5961
      %5998 = vmatprep.subr.bf16.mxu0 0
      %5999 = vmatpush1.bf16.xpose.msra.mxu0 %v5964
      %6000 = vmatprep.subr.bf16.mxu0 0
      %6001 = vmatpush1.bf16.xpose.msra.mxu0 %v5967
      %6002 = vmatprep.subr.bf16.mxu0 0
      %6003 = vmatpush1.bf16.xpose.msra.mxu0 %v5970
      %6004 = vmatprep.mubr.bf16.mxu0 0
      %6005 = vmatmul.mubr.bf16.gmra.mrb[0].mxu0 %v5877
      %v6006 = vpop.f32.mrb[0].mxu0
      %v6007 = vadd.f32 0.0, %v6006
      %v6008 = vpop.f32.mrb[0].mxu0
      %v6009 = vadd.f32 0.0, %v6008
      %v6010 = vpop.f32.mrb[0].mxu0
      %v6011 = vadd.f32 0.0, %v6010
      %v6012 = vpop.f32.mrb[0].mxu0
      %v6013 = vadd.f32 0.0, %v6012
      %6014 = vmatprep.mubr.bf16.mxu0 0
      %6015 = vmatmul.mubr.bf16.gmra.mrb[0].mxu0 %v5880
      %v6016 = vpop.f32.mrb[0].mxu0
      %v6017 = vadd.f32 0.0, %v6016
      %v6018 = vpop.f32.mrb[0].mxu0
      %v6019 = vadd.f32 0.0, %v6018
      %v6020 = vpop.f32.mrb[0].mxu0
      %v6021 = vadd.f32 0.0, %v6020
      %v6022 = vpop.f32.mrb[0].mxu0
      %v6023 = vadd.f32 0.0, %v6022
      %6024 = vmatprep.mubr.bf16.mxu0 0
      %6025 = vmatmul.mubr.bf16.gmra.mrb[0].mxu0 %v5883
      %v6026 = vpop.f32.mrb[0].mxu0
      %v6027 = vadd.f32 0.0, %v6026
      %v6028 = vpop.f32.mrb[0].mxu0
      %v6029 = vadd.f32 0.0, %v6028
      %v6030 = vpop.f32.mrb[0].mxu0
      %v6031 = vadd.f32 0.0, %v6030
      %v6032 = vpop.f32.mrb[0].mxu0
      %v6033 = vadd.f32 0.0, %v6032
      %6034 = vmatprep.mubr.bf16.mxu0 0
      %6035 = vmatmul.mubr.bf16.gmra.mrb[0].mxu0 %v5886
      %v6036 = vpop.f32.mrb[0].mxu0
      %v6037 = vadd.f32 0.0, %v6036
      %v6038 = vpop.f32.mrb[0].mxu0
      %v6039 = vadd.f32 0.0, %v6038
      %v6040 = vpop.f32.mrb[0].mxu0
      %v6041 = vadd.f32 0.0, %v6040
      %v6042 = vpop.f32.mrb[0].mxu0
      %v6043 = vadd.f32 0.0, %v6042
      %6044 = vmatprep.mubr.bf16.mxu0 0
      %6045 = vmatmul.mubr.bf16.gmra.mrb[0].mxu0 %v5889
      %v6046 = vpop.f32.mrb[0].mxu0
      %v6047 = vadd.f32 0.0, %v6046
      %v6048 = vpop.f32.mrb[0].mxu0
      %v6049 = vadd.f32 0.0, %v6048
      %v6050 = vpop.f32.mrb[0].mxu0
      %v6051 = vadd.f32 0.0, %v6050
      %v6052 = vpop.f32.mrb[0].mxu0
      %v6053 = vadd.f32 0.0, %v6052
      %6054 = vmatprep.mubr.bf16.mxu0 0
      %6055 = vmatmul.mubr.bf16.gmra.mrb[0].mxu0 %v5892
      %v6056 = vpop.f32.mrb[0].mxu0
      %v6057 = vadd.f32 0.0, %v6056
      %v6058 = vpop.f32.mrb[0].mxu0
      %v6059 = vadd.f32 0.0, %v6058
      %v6060 = vpop.f32.mrb[0].mxu0
      %v6061 = vadd.f32 0.0, %v6060
      %v6062 = vpop.f32.mrb[0].mxu0
      %v6063 = vadd.f32 0.0, %v6062
      %6064 = vmatprep.mubr.bf16.mxu0 0
      %6065 = vmatmul.mubr.bf16.gmra.mrb[0].mxu0 %v5895
      %v6066 = vpop.f32.mrb[0].mxu0
      %v6067 = vadd.f32 0.0, %v6066
      %v6068 = vpop.f32.mrb[0].mxu0
      %v6069 = vadd.f32 0.0, %v6068
      %v6070 = vpop.f32.mrb[0].mxu0
      %v6071 = vadd.f32 0.0, %v6070
      %v6072 = vpop.f32.mrb[0].mxu0
      %v6073 = vadd.f32 0.0, %v6072
      %6074 = vmatprep.mubr.bf16.mxu0 0
      %6075 = vmatmul.mubr.bf16.gmra.mrb[0].mxu0 %v5898
      %v6076 = vpop.f32.mrb[0].mxu0
      %v6077 = vadd.f32 0.0, %v6076
      %v6078 = vpop.f32.mrb[0].mxu0
      %v6079 = vadd.f32 0.0, %v6078
      %v6080 = vpop.f32.mrb[0].mxu0
      %v6081 = vadd.f32 0.0, %v6080
      %v6082 = vpop.f32.mrb[0].mxu0
      %v6083 = vadd.f32 0.0, %v6082
      %6084 = vmatprep.mubr.bf16.mxu0 0
      %6085 = vmatmul.mubr.bf16.gmra.mrb[0].mxu0 %v5901
      %v6086 = vpop.f32.mrb[0].mxu0
      %v6087 = vadd.f32 0.0, %v6086
      %v6088 = vpop.f32.mrb[0].mxu0
      %v6089 = vadd.f32 0.0, %v6088
      %v6090 = vpop.f32.mrb[0].mxu0
      %v6091 = vadd.f32 0.0, %v6090
      %v6092 = vpop.f32.mrb[0].mxu0
      %v6093 = vadd.f32 0.0, %v6092
      %6094 = vmatprep.mubr.bf16.mxu0 0
      %6095 = vmatmul.mubr.bf16.gmra.mrb[0].mxu0 %v5904
      %v6096 = vpop.f32.mrb[0].mxu0
      %v6097 = vadd.f32 0.0, %v6096
      %v6098 = vpop.f32.mrb[0].mxu0
      %v6099 = vadd.f32 0.0, %v6098
      %v6100 = vpop.f32.mrb[0].mxu0
      %v6101 = vadd.f32 0.0, %v6100
      %v6102 = vpop.f32.mrb[0].mxu0
      %v6103 = vadd.f32 0.0, %v6102
      %6104 = vmatprep.mubr.bf16.mxu0 0
      %6105 = vmatmul.mubr.bf16.gmra.mrb[0].mxu0 %v5907
      %v6106 = vpop.f32.mrb[0].mxu0
      %v6107 = vadd.f32 0.0, %v6106
      %v6108 = vpop.f32.mrb[0].mxu0
      %v6109 = vadd.f32 0.0, %v6108
      %v6110 = vpop.f32.mrb[0].mxu0
      %v6111 = vadd.f32 0.0, %v6110
      %v6112 = vpop.f32.mrb[0].mxu0
      %v6113 = vadd.f32 0.0, %v6112
      %6114 = vmatprep.mubr.bf16.mxu0 0
      %6115 = vmatmul.mubr.bf16.gmra.mrb[0].mxu0 %v5910
      %v6116 = vpop.f32.mrb[0].mxu0
      %v6117 = vadd.f32 0.0, %v6116
      %v6118 = vpop.f32.mrb[0].mxu0
      %v6119 = vadd.f32 0.0, %v6118
      %v6120 = vpop.f32.mrb[0].mxu0
      %v6121 = vadd.f32 0.0, %v6120
      %v6122 = vpop.f32.mrb[0].mxu0
      %v6123 = vadd.f32 0.0, %v6122
      %6124 = vmatprep.mubr.bf16.mxu0 0
      %6125 = vmatmul.mubr.bf16.gmra.mrb[0].mxu0 %v5913
      %v6126 = vpop.f32.mrb[0].mxu0
      %v6127 = vadd.f32 0.0, %v6126
      %v6128 = vpop.f32.mrb[0].mxu0
      %v6129 = vadd.f32 0.0, %v6128
      %v6130 = vpop.f32.mrb[0].mxu0
      %v6131 = vadd.f32 0.0, %v6130
      %v6132 = vpop.f32.mrb[0].mxu0
      %v6133 = vadd.f32 0.0, %v6132
      %6134 = vmatprep.mubr.bf16.mxu0 0
      %6135 = vmatmul.mubr.bf16.gmra.mrb[0].mxu0 %v5916
      %v6136 = vpop.f32.mrb[0].mxu0
      %v6137 = vadd.f32 0.0, %v6136
      %v6138 = vpop.f32.mrb[0].mxu0
      %v6139 = vadd.f32 0.0, %v6138
      %v6140 = vpop.f32.mrb[0].mxu0
      %v6141 = vadd.f32 0.0, %v6140
      %v6142 = vpop.f32.mrb[0].mxu0
      %v6143 = vadd.f32 0.0, %v6142
      %6144 = vmatprep.mubr.bf16.mxu0 0
      %6145 = vmatmul.mubr.bf16.gmra.mrb[0].mxu0 %v5919
      %v6146 = vpop.f32.mrb[0].mxu0
      %v6147 = vadd.f32 0.0, %v6146
      %v6148 = vpop.f32.mrb[0].mxu0
      %v6149 = vadd.f32 0.0, %v6148
      %v6150 = vpop.f32.mrb[0].mxu0
      %v6151 = vadd.f32 0.0, %v6150
      %v6152 = vpop.f32.mrb[0].mxu0
      %v6153 = vadd.f32 0.0, %v6152
      %6154 = vmatprep.mubr.bf16.mxu0 0
      %6155 = vmatmul.mubr.bf16.gmra.mrb[0].mxu0 %v5922
      %v6156 = vpop.f32.mrb[0].mxu0
      %v6157 = vadd.f32 0.0, %v6156
      %v6158 = vpop.f32.mrb[0].mxu0
      %v6159 = vadd.f32 0.0, %v6158
      %v6160 = vpop.f32.mrb[0].mxu0
      %v6161 = vadd.f32 0.0, %v6160
      %v6162 = vpop.f32.mrb[0].mxu0
      %v6163 = vadd.f32 0.0, %v6162
      %6164 = vdwg.mxu0
      %v6165 = vmax.f32 %v6007, %v6009
      %6166 = vmax.xlane.f32.xlu0 %v6165
      %v6167 = vpop.xlane.xlu0 %6166
      %v6168 = vmax.f32 %v6011, %v6013
      %6169 = vmax.xlane.f32.xlu0 %v6168
      %v6170 = vpop.xlane.xlu0 %6169
      %v6171 = vmax.f32 %v6017, %v6019
      %6172 = vmax.xlane.f32.xlu0 %v6171
      %v6173 = vpop.xlane.xlu0 %6172
      %v6174 = vmax.f32 %v6021, %v6023
      %6175 = vmax.xlane.f32.xlu0 %v6174
      %v6176 = vpop.xlane.xlu0 %6175
      %v6177 = vmax.f32 %v6027, %v6029
      %6178 = vmax.xlane.f32.xlu0 %v6177
      %v6179 = vpop.xlane.xlu0 %6178
      %v6180 = vmax.f32 %v6031, %v6033
      %6181 = vmax.xlane.f32.xlu0 %v6180
      %v6182 = vpop.xlane.xlu0 %6181
      %v6183 = vmax.f32 %v6037, %v6039
      %6184 = vmax.xlane.f32.xlu0 %v6183
      %v6185 = vpop.xlane.xlu0 %6184
      %v6186 = vmax.f32 %v6041, %v6043
      %6187 = vmax.xlane.f32.xlu0 %v6186
      %v6188 = vpop.xlane.xlu0 %6187
      %v6189 = vmax.f32 %v6047, %v6049
      %6190 = vmax.xlane.f32.xlu0 %v6189
      %v6191 = vpop.xlane.xlu0 %6190
      %v6192 = vmax.f32 %v6051, %v6053
      %6193 = vmax.xlane.f32.xlu0 %v6192
      %v6194 = vpop.xlane.xlu0 %6193
      %v6195 = vmax.f32 %v6057, %v6059
      %6196 = vmax.xlane.f32.xlu0 %v6195
      %v6197 = vpop.xlane.xlu0 %6196
      %v6198 = vmax.f32 %v6061, %v6063
      %6199 = vmax.xlane.f32.xlu0 %v6198
      %v6200 = vpop.xlane.xlu0 %6199
      %v6201 = vmax.f32 %v6067, %v6069
      %6202 = vmax.xlane.f32.xlu0 %v6201
      %v6203 = vpop.xlane.xlu0 %6202
      %v6204 = vmax.f32 %v6071, %v6073
      %6205 = vmax.xlane.f32.xlu0 %v6204
      %v6206 = vpop.xlane.xlu0 %6205
      %v6207 = vmax.f32 %v6077, %v6079
      %6208 = vmax.xlane.f32.xlu0 %v6207
      %v6209 = vpop.xlane.xlu0 %6208
      %v6210 = vmax.f32 %v6081, %v6083
      %6211 = vmax.xlane.f32.xlu0 %v6210
      %v6212 = vpop.xlane.xlu0 %6211
      %v6213 = vmax.f32 %v6087, %v6089
      %6214 = vmax.xlane.f32.xlu0 %v6213
      %v6215 = vpop.xlane.xlu0 %6214
      %v6216 = vmax.f32 %v6091, %v6093
      %6217 = vmax.xlane.f32.xlu0 %v6216
      %v6218 = vpop.xlane.xlu0 %6217
      %v6219 = vmax.f32 %v6097, %v6099
      %6220 = vmax.xlane.f32.xlu0 %v6219
      %v6221 = vpop.xlane.xlu0 %6220
      %v6222 = vmax.f32 %v6101, %v6103
      %6223 = vmax.xlane.f32.xlu0 %v6222
      %v6224 = vpop.xlane.xlu0 %6223
      %v6225 = vmax.f32 %v6107, %v6109
      %6226 = vmax.xlane.f32.xlu0 %v6225
      %v6227 = vpop.xlane.xlu0 %6226
      %v6228 = vmax.f32 %v6111, %v6113
      %6229 = vmax.xlane.f32.xlu0 %v6228
      %v6230 = vpop.xlane.xlu0 %6229
      %v6231 = vmax.f32 %v6117, %v6119
      %6232 = vmax.xlane.f32.xlu0 %v6231
      %v6233 = vpop.xlane.xlu0 %6232
      %v6234 = vmax.f32 %v6121, %v6123
      %6235 = vmax.xlane.f32.xlu0 %v6234
      %v6236 = vpop.xlane.xlu0 %6235
      %v6237 = vmax.f32 %v6127, %v6129
      %6238 = vmax.xlane.f32.xlu0 %v6237
      %v6239 = vpop.xlane.xlu0 %6238
      %v6240 = vmax.f32 %v6131, %v6133
      %6241 = vmax.xlane.f32.xlu0 %v6240
      %v6242 = vpop.xlane.xlu0 %6241
      %v6243 = vmax.f32 %v6137, %v6139
      %6244 = vmax.xlane.f32.xlu0 %v6243
      %v6245 = vpop.xlane.xlu0 %6244
      %v6246 = vmax.f32 %v6141, %v6143
      %6247 = vmax.xlane.f32.xlu0 %v6246
      %v6248 = vpop.xlane.xlu0 %6247
      %v6249 = vmax.f32 %v6147, %v6149
      %6250 = vmax.xlane.f32.xlu0 %v6249
      %v6251 = vpop.xlane.xlu0 %6250
      %v6252 = vmax.f32 %v6151, %v6153
      %6253 = vmax.xlane.f32.xlu0 %v6252
      %v6254 = vpop.xlane.xlu0 %6253
      %v6255 = vmax.f32 %v6157, %v6159
      %6256 = vmax.xlane.f32.xlu0 %v6255
      %v6257 = vpop.xlane.xlu0 %6256
      %v6258 = vmax.f32 %v6161, %v6163
      %6259 = vmax.xlane.f32.xlu0 %v6258
      %v6260 = vpop.xlane.xlu0 %6259
      %v6261 = vsub.f32 %v6007, %v6167
      %v6262 = vsub.f32 %v6009, %v6167
      %v6263 = vsub.f32 %v6011, %v6170
      %v6264 = vsub.f32 %v6013, %v6170
      %v6265 = vsub.f32 %v6017, %v6173
      %v6266 = vsub.f32 %v6019, %v6173
      %v6267 = vsub.f32 %v6021, %v6176
      %v6268 = vsub.f32 %v6023, %v6176
      %v6269 = vsub.f32 %v6027, %v6179
      %v6270 = vsub.f32 %v6029, %v6179
      %v6271 = vsub.f32 %v6031, %v6182
      %v6272 = vsub.f32 %v6033, %v6182
      %v6273 = vsub.f32 %v6037, %v6185
      %v6274 = vsub.f32 %v6039, %v6185
      %v6275 = vsub.f32 %v6041, %v6188
      %v6276 = vsub.f32 %v6043, %v6188
      %v6277 = vsub.f32 %v6047, %v6191
      %v6278 = vsub.f32 %v6049, %v6191
      %v6279 = vsub.f32 %v6051, %v6194
      %v6280 = vsub.f32 %v6053, %v6194
      %v6281 = vsub.f32 %v6057, %v6197
      %v6282 = vsub.f32 %v6059, %v6197
      %v6283 = vsub.f32 %v6061, %v6200
      %v6284 = vsub.f32 %v6063, %v6200
      %v6285 = vsub.f32 %v6067, %v6203
      %v6286 = vsub.f32 %v6069, %v6203
      %v6287 = vsub.f32 %v6071, %v6206
      %v6288 = vsub.f32 %v6073, %v6206
      %v6289 = vsub.f32 %v6077, %v6209
      %v6290 = vsub.f32 %v6079, %v6209
      %v6291 = vsub.f32 %v6081, %v6212
      %v6292 = vsub.f32 %v6083, %v6212
      %v6293 = vsub.f32 %v6087, %v6215
      %v6294 = vsub.f32 %v6089, %v6215
      %v6295 = vsub.f32 %v6091, %v6218
      %v6296 = vsub.f32 %v6093, %v6218
      %v6297 = vsub.f32 %v6097, %v6221
      %v6298 = vsub.f32 %v6099, %v6221
      %v6299 = vsub.f32 %v6101, %v6224
      %v6300 = vsub.f32 %v6103, %v6224
      %v6301 = vsub.f32 %v6107, %v6227
      %v6302 = vsub.f32 %v6109, %v6227
      %v6303 = vsub.f32 %v6111, %v6230
      %v6304 = vsub.f32 %v6113, %v6230
      %v6305 = vsub.f32 %v6117, %v6233
      %v6306 = vsub.f32 %v6119, %v6233
      %v6307 = vsub.f32 %v6121, %v6236
      %v6308 = vsub.f32 %v6123, %v6236
      %v6309 = vsub.f32 %v6127, %v6239
      %v6310 = vsub.f32 %v6129, %v6239
      %v6311 = vsub.f32 %v6131, %v6242
      %v6312 = vsub.f32 %v6133, %v6242
      %v6313 = vsub.f32 %v6137, %v6245
      %v6314 = vsub.f32 %v6139, %v6245
      %v6315 = vsub.f32 %v6141, %v6248
      %v6316 = vsub.f32 %v6143, %v6248
      %v6317 = vsub.f32 %v6147, %v6251
      %v6318 = vsub.f32 %v6149, %v6251
      %v6319 = vsub.f32 %v6151, %v6254
      %v6320 = vsub.f32 %v6153, %v6254
      %v6321 = vsub.f32 %v6157, %v6257
      %v6322 = vsub.f32 %v6159, %v6257
      %v6323 = vsub.f32 %v6161, %v6260
      %v6324 = vsub.f32 %v6163, %v6260
      %v6325 = vmul.f32 %v6261, 1.442695
      %v6326 = vpow.pop %v6325
      %v6327 = vmul.f32 %v6262, 1.442695
      %v6328 = vpow.pop %v6327
      %v6329 = vmul.f32 %v6263, 1.442695
      %v6330 = vpow.pop %v6329
      %v6331 = vmul.f32 %v6264, 1.442695
      %v6332 = vpow.pop %v6331
      %v6333 = vmul.f32 %v6265, 1.442695
      %v6334 = vpow.pop %v6333
      %v6335 = vmul.f32 %v6266, 1.442695
      %v6336 = vpow.pop %v6335
      %v6337 = vmul.f32 %v6267, 1.442695
      %v6338 = vpow.pop %v6337
      %v6339 = vmul.f32 %v6268, 1.442695
      %v6340 = vpow.pop %v6339
      %v6341 = vmul.f32 %v6269, 1.442695
      %v6342 = vpow.pop %v6341
      %v6343 = vmul.f32 %v6270, 1.442695
      %v6344 = vpow.pop %v6343
      %v6345 = vmul.f32 %v6271, 1.442695
      %v6346 = vpow.pop %v6345
      %v6347 = vmul.f32 %v6272, 1.442695
      %v6348 = vpow.pop %v6347
      %v6349 = vmul.f32 %v6273, 1.442695
      %v6350 = vpow.pop %v6349
      %v6351 = vmul.f32 %v6274, 1.442695
      %v6352 = vpow.pop %v6351
      %v6353 = vmul.f32 %v6275, 1.442695
      %v6354 = vpow.pop %v6353
      %v6355 = vmul.f32 %v6276, 1.442695
      %v6356 = vpow.pop %v6355
      %v6357 = vmul.f32 %v6277, 1.442695
      %v6358 = vpow.pop %v6357
      %v6359 = vmul.f32 %v6278, 1.442695
      %v6360 = vpow.pop %v6359
      %v6361 = vmul.f32 %v6279, 1.442695
      %v6362 = vpow.pop %v6361
      %v6363 = vmul.f32 %v6280, 1.442695
      %v6364 = vpow.pop %v6363
      %v6365 = vmul.f32 %v6281, 1.442695
      %v6366 = vpow.pop %v6365
      %v6367 = vmul.f32 %v6282, 1.442695
      %v6368 = vpow.pop %v6367
      %v6369 = vmul.f32 %v6283, 1.442695
      %v6370 = vpow.pop %v6369
      %v6371 = vmul.f32 %v6284, 1.442695
      %v6372 = vpow.pop %v6371
      %v6373 = vmul.f32 %v6285, 1.442695
      %v6374 = vpow.pop %v6373
      %v6375 = vmul.f32 %v6286, 1.442695
      %v6376 = vpow.pop %v6375
      %v6377 = vmul.f32 %v6287, 1.442695
      %v6378 = vpow.pop %v6377
      %v6379 = vmul.f32 %v6288, 1.442695
      %v6380 = vpow.pop %v6379
      %v6381 = vmul.f32 %v6289, 1.442695
      %v6382 = vpow.pop %v6381
      %v6383 = vmul.f32 %v6290, 1.442695
      %v6384 = vpow.pop %v6383
      %v6385 = vmul.f32 %v6291, 1.442695
      %v6386 = vpow.pop %v6385
      %v6387 = vmul.f32 %v6292, 1.442695
      %v6388 = vpow.pop %v6387
      %v6389 = vmul.f32 %v6293, 1.442695
      %v6390 = vpow.pop %v6389
      %v6391 = vmul.f32 %v6294, 1.442695
      %v6392 = vpow.pop %v6391
      %v6393 = vmul.f32 %v6295, 1.442695
      %v6394 = vpow.pop %v6393
      %v6395 = vmul.f32 %v6296, 1.442695
      %v6396 = vpow.pop %v6395
      %v6397 = vmul.f32 %v6297, 1.442695
      %v6398 = vpow.pop %v6397
      %v6399 = vmul.f32 %v6298, 1.442695
      %v6400 = vpow.pop %v6399
      %v6401 = vmul.f32 %v6299, 1.442695
      %v6402 = vpow.pop %v6401
      %v6403 = vmul.f32 %v6300, 1.442695
      %v6404 = vpow.pop %v6403
      %v6405 = vmul.f32 %v6301, 1.442695
      %v6406 = vpow.pop %v6405
      %v6407 = vmul.f32 %v6302, 1.442695
      %v6408 = vpow.pop %v6407
      %v6409 = vmul.f32 %v6303, 1.442695
      %v6410 = vpow.pop %v6409
      %v6411 = vmul.f32 %v6304, 1.442695
      %v6412 = vpow.pop %v6411
      %v6413 = vmul.f32 %v6305, 1.442695
      %v6414 = vpow.pop %v6413
      %v6415 = vmul.f32 %v6306, 1.442695
      %v6416 = vpow.pop %v6415
      %v6417 = vmul.f32 %v6307, 1.442695
      %v6418 = vpow.pop %v6417
      %v6419 = vmul.f32 %v6308, 1.442695
      %v6420 = vpow.pop %v6419
      %v6421 = vmul.f32 %v6309, 1.442695
      %v6422 = vpow.pop %v6421
      %v6423 = vmul.f32 %v6310, 1.442695
      %v6424 = vpow.pop %v6423
      %v6425 = vmul.f32 %v6311, 1.442695
      %v6426 = vpow.pop %v6425
      %v6427 = vmul.f32 %v6312, 1.442695
      %v6428 = vpow.pop %v6427
      %v6429 = vmul.f32 %v6313, 1.442695
      %v6430 = vpow.pop %v6429
      %v6431 = vmul.f32 %v6314, 1.442695
      %v6432 = vpow.pop %v6431
      %v6433 = vmul.f32 %v6315, 1.442695
      %v6434 = vpow.pop %v6433
      %v6435 = vmul.f32 %v6316, 1.442695
      %v6436 = vpow.pop %v6435
      %v6437 = vmul.f32 %v6317, 1.442695
      %v6438 = vpow.pop %v6437
      %v6439 = vmul.f32 %v6318, 1.442695
      %v6440 = vpow.pop %v6439
      %v6441 = vmul.f32 %v6319, 1.442695
      %v6442 = vpow.pop %v6441
      %v6443 = vmul.f32 %v6320, 1.442695
      %v6444 = vpow.pop %v6443
      %v6445 = vmul.f32 %v6321, 1.442695
      %v6446 = vpow.pop %v6445
      %v6447 = vmul.f32 %v6322, 1.442695
      %v6448 = vpow.pop %v6447
      %v6449 = vmul.f32 %v6323, 1.442695
      %v6450 = vpow.pop %v6449
      %v6451 = vmul.f32 %v6324, 1.442695
      %v6452 = vpow.pop %v6451
      %v6453 = vadd.f32 %v6326, %v6328
      %6454 = vadd.xlane.f32.xlu0 %v6453
      %v6455 = vpop.xlane.xlu0 %6454
      %v6456 = vadd.f32 %v6330, %v6332
      %6457 = vadd.xlane.f32.xlu0 %v6456
      %v6458 = vpop.xlane.xlu0 %6457
      %v6459 = vadd.f32 %v6334, %v6336
      %6460 = vadd.xlane.f32.xlu0 %v6459
      %v6461 = vpop.xlane.xlu0 %6460
      %v6462 = vadd.f32 %v6338, %v6340
      %6463 = vadd.xlane.f32.xlu0 %v6462
      %v6464 = vpop.xlane.xlu0 %6463
      %v6465 = vadd.f32 %v6342, %v6344
      %6466 = vadd.xlane.f32.xlu0 %v6465
      %v6467 = vpop.xlane.xlu0 %6466
      %v6468 = vadd.f32 %v6346, %v6348
      %6469 = vadd.xlane.f32.xlu0 %v6468
      %v6470 = vpop.xlane.xlu0 %6469
      %v6471 = vadd.f32 %v6350, %v6352
      %6472 = vadd.xlane.f32.xlu0 %v6471
      %v6473 = vpop.xlane.xlu0 %6472
      %v6474 = vadd.f32 %v6354, %v6356
      %6475 = vadd.xlane.f32.xlu0 %v6474
      %v6476 = vpop.xlane.xlu0 %6475
      %v6477 = vadd.f32 %v6358, %v6360
      %6478 = vadd.xlane.f32.xlu0 %v6477
      %v6479 = vpop.xlane.xlu0 %6478
      %v6480 = vadd.f32 %v6362, %v6364
      %6481 = vadd.xlane.f32.xlu0 %v6480
      %v6482 = vpop.xlane.xlu0 %6481
      %v6483 = vadd.f32 %v6366, %v6368
      %6484 = vadd.xlane.f32.xlu0 %v6483
      %v6485 = vpop.xlane.xlu0 %6484
      %v6486 = vadd.f32 %v6370, %v6372
      %6487 = vadd.xlane.f32.xlu0 %v6486
      %v6488 = vpop.xlane.xlu0 %6487
      %v6489 = vadd.f32 %v6374, %v6376
      %6490 = vadd.xlane.f32.xlu0 %v6489
      %v6491 = vpop.xlane.xlu0 %6490
      %v6492 = vadd.f32 %v6378, %v6380
      %6493 = vadd.xlane.f32.xlu0 %v6492
      %v6494 = vpop.xlane.xlu0 %6493
      %v6495 = vadd.f32 %v6382, %v6384
      %6496 = vadd.xlane.f32.xlu0 %v6495
      %v6497 = vpop.xlane.xlu0 %6496
      %v6498 = vadd.f32 %v6386, %v6388
      %6499 = vadd.xlane.f32.xlu0 %v6498
      %v6500 = vpop.xlane.xlu0 %6499
      %v6501 = vadd.f32 %v6390, %v6392
      %6502 = vadd.xlane.f32.xlu0 %v6501
      %v6503 = vpop.xlane.xlu0 %6502
      %v6504 = vadd.f32 %v6394, %v6396
      %6505 = vadd.xlane.f32.xlu0 %v6504
      %v6506 = vpop.xlane.xlu0 %6505
      %v6507 = vadd.f32 %v6398, %v6400
      %6508 = vadd.xlane.f32.xlu0 %v6507
      %v6509 = vpop.xlane.xlu0 %6508
      %v6510 = vadd.f32 %v6402, %v6404
      %6511 = vadd.xlane.f32.xlu0 %v6510
      %v6512 = vpop.xlane.xlu0 %6511
      %v6513 = vadd.f32 %v6406, %v6408
      %6514 = vadd.xlane.f32.xlu0 %v6513
      %v6515 = vpop.xlane.xlu0 %6514
      %v6516 = vadd.f32 %v6410, %v6412
      %6517 = vadd.xlane.f32.xlu0 %v6516
      %v6518 = vpop.xlane.xlu0 %6517
      %v6519 = vadd.f32 %v6414, %v6416
      %6520 = vadd.xlane.f32.xlu0 %v6519
      %v6521 = vpop.xlane.xlu0 %6520
      %v6522 = vadd.f32 %v6418, %v6420
      %6523 = vadd.xlane.f32.xlu0 %v6522
      %v6524 = vpop.xlane.xlu0 %6523
      %v6525 = vadd.f32 %v6422, %v6424
      %6526 = vadd.xlane.f32.xlu0 %v6525
      %v6527 = vpop.xlane.xlu0 %6526
      %v6528 = vadd.f32 %v6426, %v6428
      %6529 = vadd.xlane.f32.xlu0 %v6528
      %v6530 = vpop.xlane.xlu0 %6529
      %v6531 = vadd.f32 %v6430, %v6432
      %6532 = vadd.xlane.f32.xlu0 %v6531
      %v6533 = vpop.xlane.xlu0 %6532
      %v6534 = vadd.f32 %v6434, %v6436
      %6535 = vadd.xlane.f32.xlu0 %v6534
      %v6536 = vpop.xlane.xlu0 %6535
      %v6537 = vadd.f32 %v6438, %v6440
      %6538 = vadd.xlane.f32.xlu0 %v6537
      %v6539 = vpop.xlane.xlu0 %6538
      %v6540 = vadd.f32 %v6442, %v6444
      %6541 = vadd.xlane.f32.xlu0 %v6540
      %v6542 = vpop.xlane.xlu0 %6541
      %v6543 = vadd.f32 %v6446, %v6448
      %6544 = vadd.xlane.f32.xlu0 %v6543
      %v6545 = vpop.xlane.xlu0 %6544
      %v6546 = vadd.f32 %v6450, %v6452
      %6547 = vadd.xlane.f32.xlu0 %v6546
      %v6548 = vpop.xlane.xlu0 %6547
      %v6549 = vpack.c.bf16 %v6330, %v6326
      %v6550 = vpack.c.bf16 %v6332, %v6328
      %v6551 = vpack.c.bf16 %v6338, %v6334
      %v6552 = vpack.c.bf16 %v6340, %v6336
      %v6553 = vpack.c.bf16 %v6346, %v6342
      %v6554 = vpack.c.bf16 %v6348, %v6344
      %v6555 = vpack.c.bf16 %v6354, %v6350
      %v6556 = vpack.c.bf16 %v6356, %v6352
      %v6557 = vpack.c.bf16 %v6362, %v6358
      %v6558 = vpack.c.bf16 %v6364, %v6360
      %v6559 = vpack.c.bf16 %v6370, %v6366
      %v6560 = vpack.c.bf16 %v6372, %v6368
      %v6561 = vpack.c.bf16 %v6378, %v6374
      %v6562 = vpack.c.bf16 %v6380, %v6376
      %v6563 = vpack.c.bf16 %v6386, %v6382
      %v6564 = vpack.c.bf16 %v6388, %v6384
      %v6565 = vpack.c.bf16 %v6394, %v6390
      %v6566 = vpack.c.bf16 %v6396, %v6392
      %v6567 = vpack.c.bf16 %v6402, %v6398
      %v6568 = vpack.c.bf16 %v6404, %v6400
      %v6569 = vpack.c.bf16 %v6410, %v6406
      %v6570 = vpack.c.bf16 %v6412, %v6408
      %v6571 = vpack.c.bf16 %v6418, %v6414
      %v6572 = vpack.c.bf16 %v6420, %v6416
      %v6573 = vpack.c.bf16 %v6426, %v6422
      %v6574 = vpack.c.bf16 %v6428, %v6424
      %v6575 = vpack.c.bf16 %v6434, %v6430
      %v6576 = vpack.c.bf16 %v6436, %v6432
      %v6577 = vpack.c.bf16 %v6442, %v6438
      %v6578 = vpack.c.bf16 %v6444, %v6440
      %v6579 = vpack.c.bf16 %v6450, %v6446
      %v6580 = vpack.c.bf16 %v6452, %v6448
      %6581 = vrot.lane.b32.xlu0 %v585, 44
      %v6582 = vpop.permute.xlu0 %6581
      %6583 = vrot.lane.b32.xlu0 %v586, 44
      %v6584 = vpop.permute.xlu0 %6583
      %6585 = vrot.lane.b32.xlu0 %v587, 44
      %v6586 = vpop.permute.xlu0 %6585
      %6587 = vrot.lane.b32.xlu0 %v588, 44
      %v6588 = vpop.permute.xlu0 %6587
      %6589 = vrot.lane.b32.xlu0 %v589, 44
      %v6590 = vpop.permute.xlu0 %6589
      %6591 = vrot.lane.b32.xlu0 %v590, 44
      %v6592 = vpop.permute.xlu0 %6591
      %6593 = vrot.lane.b32.xlu0 %v591, 44
      %v6594 = vpop.permute.xlu0 %6593
      %6595 = vrot.lane.b32.xlu0 %v592, 44
      %v6596 = vpop.permute.xlu0 %6595
      %6597 = vrot.lane.b32.xlu0 %v593, 44
      %v6598 = vpop.permute.xlu0 %6597
      %6599 = vrot.lane.b32.xlu0 %v594, 44
      %v6600 = vpop.permute.xlu0 %6599
      %6601 = vrot.lane.b32.xlu0 %v595, 44
      %v6602 = vpop.permute.xlu0 %6601
      %6603 = vrot.lane.b32.xlu0 %v596, 44
      %v6604 = vpop.permute.xlu0 %6603
      %6605 = vrot.lane.b32.xlu0 %v597, 44
      %v6606 = vpop.permute.xlu0 %6605
      %6607 = vrot.lane.b32.xlu0 %v598, 44
      %v6608 = vpop.permute.xlu0 %6607
      %6609 = vrot.lane.b32.xlu0 %v599, 44
      %v6610 = vpop.permute.xlu0 %6609
      %6611 = vrot.lane.b32.xlu0 %v600, 44
      %v6612 = vpop.permute.xlu0 %6611
      %6629 = vmatprep.subr.bf16.mxu0 0
      %6630 = vmatpush1.bf16.msra.mxu0 %v6582
      %6631 = vmatprep.subr.bf16.mxu0 0
      %6632 = vmatpush1.bf16.msra.mxu0 %v6584
      %6633 = vmatprep.subr.bf16.mxu0 0
      %6634 = vmatpush1.bf16.msra.mxu0 %v6586
      %6635 = vmatprep.subr.bf16.mxu0 0
      %6636 = vmatpush1.bf16.msra.mxu0 %v6588
      %6637 = vmatprep.subr.bf16.mxu0 0
      %6638 = vmatpush1.bf16.msra.mxu0 %v6590
      %6639 = vmatprep.subr.bf16.mxu0 0
      %6640 = vmatpush1.bf16.msra.mxu0 %v6592
      %6641 = vmatprep.subr.bf16.mxu0 0
      %6642 = vmatpush1.bf16.msra.mxu0 %v6594
      %6643 = vmatprep.subr.bf16.mxu0 0
      %6644 = vmatpush1.bf16.msra.mxu0 %v6596
      %6645 = vmatprep.subr.bf16.mxu0 0
      %6646 = vmatpush1.bf16.msra.mxu0 %v6598
      %6647 = vmatprep.subr.bf16.mxu0 0
      %6648 = vmatpush1.bf16.msra.mxu0 %v6600
      %6649 = vmatprep.subr.bf16.mxu0 0
      %6650 = vmatpush1.bf16.msra.mxu0 %v6602
      %6651 = vmatprep.subr.bf16.mxu0 0
      %6652 = vmatpush1.bf16.msra.mxu0 %v6604
      %6653 = vmatprep.subr.bf16.mxu0 0
      %6654 = vmatpush1.bf16.msra.mxu0 %v6606
      %6655 = vmatprep.subr.bf16.mxu0 0
      %6656 = vmatpush1.bf16.msra.mxu0 %v6608
      %6657 = vmatprep.subr.bf16.mxu0 0
      %6658 = vmatpush1.bf16.msra.mxu0 %v6610
      %6659 = vmatprep.subr.bf16.mxu0 0
      %6660 = vmatpush1.bf16.msra.mxu0 %v6612
      %6661 = vmatprep.mubr.bf16.mxu0 %v6550
      %6662 = vmatmul.mubr.bf16.gmra.mrb[0].mxu0 %v6549
      %v6663 = vpop.f32.mrb[0].mxu0
      %v6664 = vadd.f32 0.0, %v6663
      %v6665 = vpop.f32.mrb[0].mxu0
      %v6666 = vpop.f32.mrb[0].mxu0
      %v6667 = vadd.f32 0.0, %v6666
      %v6668 = vpop.f32.mrb[0].mxu0
      %6669 = vmatprep.mubr.bf16.mxu0 %v6552
      %6670 = vmatmul.mubr.bf16.gmra.mrb[0].mxu0 %v6551
      %v6671 = vpop.f32.mrb[0].mxu0
      %v6672 = vadd.f32 0.0, %v6671
      %v6673 = vpop.f32.mrb[0].mxu0
      %v6674 = vpop.f32.mrb[0].mxu0
      %v6675 = vadd.f32 0.0, %v6674
      %v6676 = vpop.f32.mrb[0].mxu0
      %6677 = vmatprep.mubr.bf16.mxu0 %v6554
      %6678 = vmatmul.mubr.bf16.gmra.mrb[0].mxu0 %v6553
      %v6679 = vpop.f32.mrb[0].mxu0
      %v6680 = vadd.f32 0.0, %v6679
      %v6681 = vpop.f32.mrb[0].mxu0
      %v6682 = vpop.f32.mrb[0].mxu0
      %v6683 = vadd.f32 0.0, %v6682
      %v6684 = vpop.f32.mrb[0].mxu0
      %6685 = vmatprep.mubr.bf16.mxu0 %v6556
      %6686 = vmatmul.mubr.bf16.gmra.mrb[0].mxu0 %v6555
      %v6687 = vpop.f32.mrb[0].mxu0
      %v6688 = vadd.f32 0.0, %v6687
      %v6689 = vpop.f32.mrb[0].mxu0
      %v6690 = vpop.f32.mrb[0].mxu0
      %v6691 = vadd.f32 0.0, %v6690
      %v6692 = vpop.f32.mrb[0].mxu0
      %6693 = vmatprep.mubr.bf16.mxu0 %v6558
      %6694 = vmatmul.mubr.bf16.gmra.mrb[0].mxu0 %v6557
      %v6695 = vpop.f32.mrb[0].mxu0
      %v6696 = vadd.f32 0.0, %v6695
      %v6697 = vpop.f32.mrb[0].mxu0
      %v6698 = vpop.f32.mrb[0].mxu0
      %v6699 = vadd.f32 0.0, %v6698
      %v6700 = vpop.f32.mrb[0].mxu0
      %6701 = vmatprep.mubr.bf16.mxu0 %v6560
      %6702 = vmatmul.mubr.bf16.gmra.mrb[0].mxu0 %v6559
      %v6703 = vpop.f32.mrb[0].mxu0
      %v6704 = vadd.f32 0.0, %v6703
      %v6705 = vpop.f32.mrb[0].mxu0
      %v6706 = vpop.f32.mrb[0].mxu0
      %v6707 = vadd.f32 0.0, %v6706
      %v6708 = vpop.f32.mrb[0].mxu0
      %6709 = vmatprep.mubr.bf16.mxu0 %v6562
      %6710 = vmatmul.mubr.bf16.gmra.mrb[0].mxu0 %v6561
      %v6711 = vpop.f32.mrb[0].mxu0
      %v6712 = vadd.f32 0.0, %v6711
      %v6713 = vpop.f32.mrb[0].mxu0
      %v6714 = vpop.f32.mrb[0].mxu0
      %v6715 = vadd.f32 0.0, %v6714
      %v6716 = vpop.f32.mrb[0].mxu0
      %6717 = vmatprep.mubr.bf16.mxu0 %v6564
      %6718 = vmatmul.mubr.bf16.gmra.mrb[0].mxu0 %v6563
      %v6719 = vpop.f32.mrb[0].mxu0
      %v6720 = vadd.f32 0.0, %v6719
      %v6721 = vpop.f32.mrb[0].mxu0
      %v6722 = vpop.f32.mrb[0].mxu0
      %v6723 = vadd.f32 0.0, %v6722
      %v6724 = vpop.f32.mrb[0].mxu0
      %6725 = vmatprep.mubr.bf16.mxu0 %v6566
      %6726 = vmatmul.mubr.bf16.gmra.mrb[0].mxu0 %v6565
      %v6727 = vpop.f32.mrb[0].mxu0
      %v6728 = vadd.f32 0.0, %v6727
      %v6729 = vpop.f32.mrb[0].mxu0
      %v6730 = vpop.f32.mrb[0].mxu0
      %v6731 = vadd.f32 0.0, %v6730
      %v6732 = vpop.f32.mrb[0].mxu0
      %6733 = vmatprep.mubr.bf16.mxu0 %v6568
      %6734 = vmatmul.mubr.bf16.gmra.mrb[0].mxu0 %v6567
      %v6735 = vpop.f32.mrb[0].mxu0
      %v6736 = vadd.f32 0.0, %v6735
      %v6737 = vpop.f32.mrb[0].mxu0
      %v6738 = vpop.f32.mrb[0].mxu0
      %v6739 = vadd.f32 0.0, %v6738
      %v6740 = vpop.f32.mrb[0].mxu0
      %6741 = vmatprep.mubr.bf16.mxu0 %v6570
      %6742 = vmatmul.mubr.bf16.gmra.mrb[0].mxu0 %v6569
      %v6743 = vpop.f32.mrb[0].mxu0
      %v6744 = vadd.f32 0.0, %v6743
      %v6745 = vpop.f32.mrb[0].mxu0
      %v6746 = vpop.f32.mrb[0].mxu0
      %v6747 = vadd.f32 0.0, %v6746
      %v6748 = vpop.f32.mrb[0].mxu0
      %6749 = vmatprep.mubr.bf16.mxu0 %v6572
      %6750 = vmatmul.mubr.bf16.gmra.mrb[0].mxu0 %v6571
      %v6751 = vpop.f32.mrb[0].mxu0
      %v6752 = vadd.f32 0.0, %v6751
      %v6753 = vpop.f32.mrb[0].mxu0
      %v6754 = vpop.f32.mrb[0].mxu0
      %v6755 = vadd.f32 0.0, %v6754
      %v6756 = vpop.f32.mrb[0].mxu0
      %6757 = vmatprep.mubr.bf16.mxu0 %v6574
      %6758 = vmatmul.mubr.bf16.gmra.mrb[0].mxu0 %v6573
      %v6759 = vpop.f32.mrb[0].mxu0
      %v6760 = vadd.f32 0.0, %v6759
      %v6761 = vpop.f32.mrb[0].mxu0
      %v6762 = vpop.f32.mrb[0].mxu0
      %v6763 = vadd.f32 0.0, %v6762
      %v6764 = vpop.f32.mrb[0].mxu0
      %6765 = vmatprep.mubr.bf16.mxu0 %v6576
      %6766 = vmatmul.mubr.bf16.gmra.mrb[0].mxu0 %v6575
      %v6767 = vpop.f32.mrb[0].mxu0
      %v6768 = vadd.f32 0.0, %v6767
      %v6769 = vpop.f32.mrb[0].mxu0
      %v6770 = vpop.f32.mrb[0].mxu0
      %v6771 = vadd.f32 0.0, %v6770
      %v6772 = vpop.f32.mrb[0].mxu0
      %6773 = vmatprep.mubr.bf16.mxu0 %v6578
      %6774 = vmatmul.mubr.bf16.gmra.mrb[0].mxu0 %v6577
      %v6775 = vpop.f32.mrb[0].mxu0
      %v6776 = vadd.f32 0.0, %v6775
      %v6777 = vpop.f32.mrb[0].mxu0
      %v6778 = vpop.f32.mrb[0].mxu0
      %v6779 = vadd.f32 0.0, %v6778
      %v6780 = vpop.f32.mrb[0].mxu0
      %6781 = vmatprep.mubr.bf16.mxu0 %v6580
      %6782 = vmatmul.mubr.bf16.gmra.mrb[0].mxu0 %v6579
      %v6783 = vpop.f32.mrb[0].mxu0
      %v6784 = vadd.f32 0.0, %v6783
      %v6785 = vpop.f32.mrb[0].mxu0
      %v6786 = vpop.f32.mrb[0].mxu0
      %v6787 = vadd.f32 0.0, %v6786
      %v6788 = vpop.f32.mrb[0].mxu0
      %6789 = vdwg.mxu0
      %v6790 = vrcp.pop %v6455
      %v6791 = vrcp.pop %v6458
      %v6792 = vrcp.pop %v6461
      %v6793 = vrcp.pop %v6464
      %v6794 = vrcp.pop %v6467
      %v6795 = vrcp.pop %v6470
      %v6796 = vrcp.pop %v6473
      %v6797 = vrcp.pop %v6476
      %v6798 = vrcp.pop %v6479
      %v6799 = vrcp.pop %v6482
      %v6800 = vrcp.pop %v6485
      %v6801 = vrcp.pop %v6488
      %v6802 = vrcp.pop %v6491
      %v6803 = vrcp.pop %v6494
      %v6804 = vrcp.pop %v6497
      %v6805 = vrcp.pop %v6500
      %v6806 = vrcp.pop %v6503
      %v6807 = vrcp.pop %v6506
      %v6808 = vrcp.pop %v6509
      %v6809 = vrcp.pop %v6512
      %v6810 = vrcp.pop %v6515
      %v6811 = vrcp.pop %v6518
      %v6812 = vrcp.pop %v6521
      %v6813 = vrcp.pop %v6524
      %v6814 = vrcp.pop %v6527
      %v6815 = vrcp.pop %v6530
      %v6816 = vrcp.pop %v6533
      %v6817 = vrcp.pop %v6536
      %v6818 = vrcp.pop %v6539
      %v6819 = vrcp.pop %v6542
      %v6820 = vrcp.pop %v6545
      %v6821 = vrcp.pop %v6548
      %v6822 = vmul.f32 %v6664, %v6790
      %v6823 = vmul.f32 %v6667, %v6791
      %v6824 = vmul.f32 %v6672, %v6792
      %v6825 = vmul.f32 %v6675, %v6793
      %v6826 = vmul.f32 %v6680, %v6794
      %v6827 = vmul.f32 %v6683, %v6795
      %v6828 = vmul.f32 %v6688, %v6796
      %v6829 = vmul.f32 %v6691, %v6797
      %v6830 = vmul.f32 %v6696, %v6798
      %v6831 = vmul.f32 %v6699, %v6799
      %v6832 = vmul.f32 %v6704, %v6800
      %v6833 = vmul.f32 %v6707, %v6801
      %v6834 = vmul.f32 %v6712, %v6802
      %v6835 = vmul.f32 %v6715, %v6803
      %v6836 = vmul.f32 %v6720, %v6804
      %v6837 = vmul.f32 %v6723, %v6805
      %v6838 = vmul.f32 %v6728, %v6806
      %v6839 = vmul.f32 %v6731, %v6807
      %v6840 = vmul.f32 %v6736, %v6808
      %v6841 = vmul.f32 %v6739, %v6809
      %v6842 = vmul.f32 %v6744, %v6810
      %v6843 = vmul.f32 %v6747, %v6811
      %v6844 = vmul.f32 %v6752, %v6812
      %v6845 = vmul.f32 %v6755, %v6813
      %v6846 = vmul.f32 %v6760, %v6814
      %v6847 = vmul.f32 %v6763, %v6815
      %v6848 = vmul.f32 %v6768, %v6816
      %v6849 = vmul.f32 %v6771, %v6817
      %v6850 = vmul.f32 %v6776, %v6818
      %v6851 = vmul.f32 %v6779, %v6819
      %v6852 = vmul.f32 %v6784, %v6820
      %v6853 = vmul.f32 %v6787, %v6821
      %6854 = vrot.lane.b32.xlu0 %v569, 104
      %v6855 = vpop.permute.xlu0 %6854
      %6856 = vrot.lane.b32.xlu0 %v570, 104
      %v6857 = vpop.permute.xlu0 %6856
      %6858 = vrot.lane.b32.xlu0 %v571, 104
      %v6859 = vpop.permute.xlu0 %6858
      %6860 = vrot.lane.b32.xlu0 %v572, 104
      %v6861 = vpop.permute.xlu0 %6860
      %6862 = vrot.lane.b32.xlu0 %v573, 104
      %v6863 = vpop.permute.xlu0 %6862
      %6864 = vrot.lane.b32.xlu0 %v574, 104
      %v6865 = vpop.permute.xlu0 %6864
      %6866 = vrot.lane.b32.xlu0 %v575, 104
      %v6867 = vpop.permute.xlu0 %6866
      %6868 = vrot.lane.b32.xlu0 %v576, 104
      %v6869 = vpop.permute.xlu0 %6868
      %6870 = vrot.lane.b32.xlu0 %v577, 104
      %v6871 = vpop.permute.xlu0 %6870
      %6872 = vrot.lane.b32.xlu0 %v578, 104
      %v6873 = vpop.permute.xlu0 %6872
      %6874 = vrot.lane.b32.xlu0 %v579, 104
      %v6875 = vpop.permute.xlu0 %6874
      %6876 = vrot.lane.b32.xlu0 %v580, 104
      %v6877 = vpop.permute.xlu0 %6876
      %6878 = vrot.lane.b32.xlu0 %v581, 104
      %v6879 = vpop.permute.xlu0 %6878
      %6880 = vrot.lane.b32.xlu0 %v582, 104
      %v6881 = vpop.permute.xlu0 %6880
      %6882 = vrot.lane.b32.xlu0 %v583, 104
      %v6883 = vpop.permute.xlu0 %6882
      %6884 = vrot.lane.b32.xlu0 %v584, 104
      %v6885 = vpop.permute.xlu0 %6884
      %6886 = vrot.lane.b32.xlu0 %v585, 72
      %v6887 = vpop.permute.xlu0 %6886
      %6888 = vrot.lane.b32.xlu0 %v586, 72
      %v6889 = vpop.permute.xlu0 %6888
      %6890 = vrot.lane.b32.xlu0 %v587, 72
      %v6891 = vpop.permute.xlu0 %6890
      %6892 = vrot.lane.b32.xlu0 %v588, 72
      %v6893 = vpop.permute.xlu0 %6892
      %6894 = vrot.lane.b32.xlu0 %v589, 72
      %v6895 = vpop.permute.xlu0 %6894
      %6896 = vrot.lane.b32.xlu0 %v590, 72
      %v6897 = vpop.permute.xlu0 %6896
      %6898 = vrot.lane.b32.xlu0 %v591, 72
      %v6899 = vpop.permute.xlu0 %6898
      %6900 = vrot.lane.b32.xlu0 %v592, 72
      %v6901 = vpop.permute.xlu0 %6900
      %6902 = vrot.lane.b32.xlu0 %v593, 72
      %v6903 = vpop.permute.xlu0 %6902
      %6904 = vrot.lane.b32.xlu0 %v594, 72
      %v6905 = vpop.permute.xlu0 %6904
      %6906 = vrot.lane.b32.xlu0 %v595, 72
      %v6907 = vpop.permute.xlu0 %6906
      %6908 = vrot.lane.b32.xlu0 %v596, 72
      %v6909 = vpop.permute.xlu0 %6908
      %6910 = vrot.lane.b32.xlu0 %v597, 72
      %v6911 = vpop.permute.xlu0 %6910
      %6912 = vrot.lane.b32.xlu0 %v598, 72
      %v6913 = vpop.permute.xlu0 %6912
      %6914 = vrot.lane.b32.xlu0 %v599, 72
      %v6915 = vpop.permute.xlu0 %6914
      %6916 = vrot.lane.b32.xlu0 %v600, 72
      %v6917 = vpop.permute.xlu0 %6916
      %v6919 = vsel %vm649, %v6855, 0
      %v6922 = vsel %vm649, %v6857, 0
      %v6925 = vsel %vm649, %v6859, 0
      %v6928 = vsel %vm649, %v6861, 0
      %v6931 = vsel %vm649, %v6863, 0
      %v6934 = vsel %vm649, %v6865, 0
      %v6937 = vsel %vm649, %v6867, 0
      %v6940 = vsel %vm649, %v6869, 0
      %v6943 = vsel %vm649, %v6871, 0
      %v6946 = vsel %vm649, %v6873, 0
      %v6949 = vsel %vm649, %v6875, 0
      %v6952 = vsel %vm649, %v6877, 0
      %v6955 = vsel %vm649, %v6879, 0
      %v6958 = vsel %vm649, %v6881, 0
      %v6961 = vsel %vm649, %v6883, 0
      %v6964 = vsel %vm649, %v6885, 0
      %v6967 = vsel %vm649, %v6887, 0
      %v6970 = vsel %vm649, %v6889, 0
      %v6973 = vsel %vm649, %v6891, 0
      %v6976 = vsel %vm649, %v6893, 0
      %v6979 = vsel %vm649, %v6895, 0
      %v6982 = vsel %vm649, %v6897, 0
      %v6985 = vsel %vm649, %v6899, 0
      %v6988 = vsel %vm649, %v6901, 0
      %v6991 = vsel %vm649, %v6903, 0
      %v6994 = vsel %vm649, %v6905, 0
      %v6997 = vsel %vm649, %v6907, 0
      %v7000 = vsel %vm649, %v6909, 0
      %v7003 = vsel %vm649, %v6911, 0
      %v7006 = vsel %vm649, %v6913, 0
      %v7009 = vsel %vm649, %v6915, 0
      %v7012 = vsel %vm649, %v6917, 0
      %7014 = vmatprep.subr.bf16.mxu0 0
      %7015 = vmatpush1.bf16.xpose.msra.mxu0 %v6967
      %7016 = vmatprep.subr.bf16.mxu0 0
      %7017 = vmatpush1.bf16.xpose.msra.mxu0 %v6970
      %7018 = vmatprep.subr.bf16.mxu0 0
      %7019 = vmatpush1.bf16.xpose.msra.mxu0 %v6973
      %7020 = vmatprep.subr.bf16.mxu0 0
      %7021 = vmatpush1.bf16.xpose.msra.mxu0 %v6976
      %7022 = vmatprep.subr.bf16.mxu0 0
      %7023 = vmatpush1.bf16.xpose.msra.mxu0 %v6979
      %7024 = vmatprep.subr.bf16.mxu0 0
      %7025 = vmatpush1.bf16.xpose.msra.mxu0 %v6982
      %7026 = vmatprep.subr.bf16.mxu0 0
      %7027 = vmatpush1.bf16.xpose.msra.mxu0 %v6985
      %7028 = vmatprep.subr.bf16.mxu0 0
      %7029 = vmatpush1.bf16.xpose.msra.mxu0 %v6988
      %7030 = vmatprep.subr.bf16.mxu0 0
      %7031 = vmatpush1.bf16.xpose.msra.mxu0 %v6991
      %7032 = vmatprep.subr.bf16.mxu0 0
      %7033 = vmatpush1.bf16.xpose.msra.mxu0 %v6994
      %7034 = vmatprep.subr.bf16.mxu0 0
      %7035 = vmatpush1.bf16.xpose.msra.mxu0 %v6997
      %7036 = vmatprep.subr.bf16.mxu0 0
      %7037 = vmatpush1.bf16.xpose.msra.mxu0 %v7000
      %7038 = vmatprep.subr.bf16.mxu0 0
      %7039 = vmatpush1.bf16.xpose.msra.mxu0 %v7003
      %7040 = vmatprep.subr.bf16.mxu0 0
      %7041 = vmatpush1.bf16.xpose.msra.mxu0 %v7006
      %7042 = vmatprep.subr.bf16.mxu0 0
      %7043 = vmatpush1.bf16.xpose.msra.mxu0 %v7009
      %7044 = vmatprep.subr.bf16.mxu0 0
      %7045 = vmatpush1.bf16.xpose.msra.mxu0 %v7012
      %7046 = vmatprep.mubr.bf16.mxu0 0
      %7047 = vmatmul.mubr.bf16.gmra.mrb[0].mxu0 %v6919
      %v7048 = vpop.f32.mrb[0].mxu0
      %v7049 = vadd.f32 0.0, %v7048
      %v7050 = vpop.f32.mrb[0].mxu0
      %v7051 = vadd.f32 0.0, %v7050
      %v7052 = vpop.f32.mrb[0].mxu0
      %v7053 = vadd.f32 0.0, %v7052
      %v7054 = vpop.f32.mrb[0].mxu0
      %v7055 = vadd.f32 0.0, %v7054
      %7056 = vmatprep.mubr.bf16.mxu0 0
      %7057 = vmatmul.mubr.bf16.gmra.mrb[0].mxu0 %v6922
      %v7058 = vpop.f32.mrb[0].mxu0
      %v7059 = vadd.f32 0.0, %v7058
      %v7060 = vpop.f32.mrb[0].mxu0
      %v7061 = vadd.f32 0.0, %v7060
      %v7062 = vpop.f32.mrb[0].mxu0
      %v7063 = vadd.f32 0.0, %v7062
      %v7064 = vpop.f32.mrb[0].mxu0
      %v7065 = vadd.f32 0.0, %v7064
      %7066 = vmatprep.mubr.bf16.mxu0 0
      %7067 = vmatmul.mubr.bf16.gmra.mrb[0].mxu0 %v6925
      %v7068 = vpop.f32.mrb[0].mxu0
      %v7069 = vadd.f32 0.0, %v7068
      %v7070 = vpop.f32.mrb[0].mxu0
      %v7071 = vadd.f32 0.0, %v7070
      %v7072 = vpop.f32.mrb[0].mxu0
      %v7073 = vadd.f32 0.0, %v7072
      %v7074 = vpop.f32.mrb[0].mxu0
      %v7075 = vadd.f32 0.0, %v7074
      %7076 = vmatprep.mubr.bf16.mxu0 0
      %7077 = vmatmul.mubr.bf16.gmra.mrb[0].mxu0 %v6928
      %v7078 = vpop.f32.mrb[0].mxu0
      %v7079 = vadd.f32 0.0, %v7078
      %v7080 = vpop.f32.mrb[0].mxu0
      %v7081 = vadd.f32 0.0, %v7080
      %v7082 = vpop.f32.mrb[0].mxu0
      %v7083 = vadd.f32 0.0, %v7082
      %v7084 = vpop.f32.mrb[0].mxu0
      %v7085 = vadd.f32 0.0, %v7084
      %7086 = vmatprep.mubr.bf16.mxu0 0
      %7087 = vmatmul.mubr.bf16.gmra.mrb[0].mxu0 %v6931
      %v7088 = vpop.f32.mrb[0].mxu0
      %v7089 = vadd.f32 0.0, %v7088
      %v7090 = vpop.f32.mrb[0].mxu0
      %v7091 = vadd.f32 0.0, %v7090
      %v7092 = vpop.f32.mrb[0].mxu0
      %v7093 = vadd.f32 0.0, %v7092
      %v7094 = vpop.f32.mrb[0].mxu0
      %v7095 = vadd.f32 0.0, %v7094
      %7096 = vmatprep.mubr.bf16.mxu0 0
      %7097 = vmatmul.mubr.bf16.gmra.mrb[0].mxu0 %v6934
      %v7098 = vpop.f32.mrb[0].mxu0
      %v7099 = vadd.f32 0.0, %v7098
      %v7100 = vpop.f32.mrb[0].mxu0
      %v7101 = vadd.f32 0.0, %v7100
      %v7102 = vpop.f32.mrb[0].mxu0
      %v7103 = vadd.f32 0.0, %v7102
      %v7104 = vpop.f32.mrb[0].mxu0
      %v7105 = vadd.f32 0.0, %v7104
      %7106 = vmatprep.mubr.bf16.mxu0 0
      %7107 = vmatmul.mubr.bf16.gmra.mrb[0].mxu0 %v6937
      %v7108 = vpop.f32.mrb[0].mxu0
      %v7109 = vadd.f32 0.0, %v7108
      %v7110 = vpop.f32.mrb[0].mxu0
      %v7111 = vadd.f32 0.0, %v7110
      %v7112 = vpop.f32.mrb[0].mxu0
      %v7113 = vadd.f32 0.0, %v7112
      %v7114 = vpop.f32.mrb[0].mxu0
      %v7115 = vadd.f32 0.0, %v7114
      %7116 = vmatprep.mubr.bf16.mxu0 0
      %7117 = vmatmul.mubr.bf16.gmra.mrb[0].mxu0 %v6940
      %v7118 = vpop.f32.mrb[0].mxu0
      %v7119 = vadd.f32 0.0, %v7118
      %v7120 = vpop.f32.mrb[0].mxu0
      %v7121 = vadd.f32 0.0, %v7120
      %v7122 = vpop.f32.mrb[0].mxu0
      %v7123 = vadd.f32 0.0, %v7122
      %v7124 = vpop.f32.mrb[0].mxu0
      %v7125 = vadd.f32 0.0, %v7124
      %7126 = vmatprep.mubr.bf16.mxu0 0
      %7127 = vmatmul.mubr.bf16.gmra.mrb[0].mxu0 %v6943
      %v7128 = vpop.f32.mrb[0].mxu0
      %v7129 = vadd.f32 0.0, %v7128
      %v7130 = vpop.f32.mrb[0].mxu0
      %v7131 = vadd.f32 0.0, %v7130
      %v7132 = vpop.f32.mrb[0].mxu0
      %v7133 = vadd.f32 0.0, %v7132
      %v7134 = vpop.f32.mrb[0].mxu0
      %v7135 = vadd.f32 0.0, %v7134
      %7136 = vmatprep.mubr.bf16.mxu0 0
      %7137 = vmatmul.mubr.bf16.gmra.mrb[0].mxu0 %v6946
      %v7138 = vpop.f32.mrb[0].mxu0
      %v7139 = vadd.f32 0.0, %v7138
      %v7140 = vpop.f32.mrb[0].mxu0
      %v7141 = vadd.f32 0.0, %v7140
      %v7142 = vpop.f32.mrb[0].mxu0
      %v7143 = vadd.f32 0.0, %v7142
      %v7144 = vpop.f32.mrb[0].mxu0
      %v7145 = vadd.f32 0.0, %v7144
      %7146 = vmatprep.mubr.bf16.mxu0 0
      %7147 = vmatmul.mubr.bf16.gmra.mrb[0].mxu0 %v6949
      %v7148 = vpop.f32.mrb[0].mxu0
      %v7149 = vadd.f32 0.0, %v7148
      %v7150 = vpop.f32.mrb[0].mxu0
      %v7151 = vadd.f32 0.0, %v7150
      %v7152 = vpop.f32.mrb[0].mxu0
      %v7153 = vadd.f32 0.0, %v7152
      %v7154 = vpop.f32.mrb[0].mxu0
      %v7155 = vadd.f32 0.0, %v7154
      %7156 = vmatprep.mubr.bf16.mxu0 0
      %7157 = vmatmul.mubr.bf16.gmra.mrb[0].mxu0 %v6952
      %v7158 = vpop.f32.mrb[0].mxu0
      %v7159 = vadd.f32 0.0, %v7158
      %v7160 = vpop.f32.mrb[0].mxu0
      %v7161 = vadd.f32 0.0, %v7160
      %v7162 = vpop.f32.mrb[0].mxu0
      %v7163 = vadd.f32 0.0, %v7162
      %v7164 = vpop.f32.mrb[0].mxu0
      %v7165 = vadd.f32 0.0, %v7164
      %7166 = vmatprep.mubr.bf16.mxu0 0
      %7167 = vmatmul.mubr.bf16.gmra.mrb[0].mxu0 %v6955
      %v7168 = vpop.f32.mrb[0].mxu0
      %v7169 = vadd.f32 0.0, %v7168
      %v7170 = vpop.f32.mrb[0].mxu0
      %v7171 = vadd.f32 0.0, %v7170
      %v7172 = vpop.f32.mrb[0].mxu0
      %v7173 = vadd.f32 0.0, %v7172
      %v7174 = vpop.f32.mrb[0].mxu0
      %v7175 = vadd.f32 0.0, %v7174
      %7176 = vmatprep.mubr.bf16.mxu0 0
      %7177 = vmatmul.mubr.bf16.gmra.mrb[0].mxu0 %v6958
      %v7178 = vpop.f32.mrb[0].mxu0
      %v7179 = vadd.f32 0.0, %v7178
      %v7180 = vpop.f32.mrb[0].mxu0
      %v7181 = vadd.f32 0.0, %v7180
      %v7182 = vpop.f32.mrb[0].mxu0
      %v7183 = vadd.f32 0.0, %v7182
      %v7184 = vpop.f32.mrb[0].mxu0
      %v7185 = vadd.f32 0.0, %v7184
      %7186 = vmatprep.mubr.bf16.mxu0 0
      %7187 = vmatmul.mubr.bf16.gmra.mrb[0].mxu0 %v6961
      %v7188 = vpop.f32.mrb[0].mxu0
      %v7189 = vadd.f32 0.0, %v7188
      %v7190 = vpop.f32.mrb[0].mxu0
      %v7191 = vadd.f32 0.0, %v7190
      %v7192 = vpop.f32.mrb[0].mxu0
      %v7193 = vadd.f32 0.0, %v7192
      %v7194 = vpop.f32.mrb[0].mxu0
      %v7195 = vadd.f32 0.0, %v7194
      %7196 = vmatprep.mubr.bf16.mxu0 0
      %7197 = vmatmul.mubr.bf16.gmra.mrb[0].mxu0 %v6964
      %v7198 = vpop.f32.mrb[0].mxu0
      %v7199 = vadd.f32 0.0, %v7198
      %v7200 = vpop.f32.mrb[0].mxu0
      %v7201 = vadd.f32 0.0, %v7200
      %v7202 = vpop.f32.mrb[0].mxu0
      %v7203 = vadd.f32 0.0, %v7202
      %v7204 = vpop.f32.mrb[0].mxu0
      %v7205 = vadd.f32 0.0, %v7204
      %7206 = vdwg.mxu0
      %v7207 = vmax.f32 %v7049, %v7051
      %7208 = vmax.xlane.f32.xlu0 %v7207
      %v7209 = vpop.xlane.xlu0 %7208
      %v7210 = vmax.f32 %v7053, %v7055
      %7211 = vmax.xlane.f32.xlu0 %v7210
      %v7212 = vpop.xlane.xlu0 %7211
      %v7213 = vmax.f32 %v7059, %v7061
      %7214 = vmax.xlane.f32.xlu0 %v7213
      %v7215 = vpop.xlane.xlu0 %7214
      %v7216 = vmax.f32 %v7063, %v7065
      %7217 = vmax.xlane.f32.xlu0 %v7216
      %v7218 = vpop.xlane.xlu0 %7217
      %v7219 = vmax.f32 %v7069, %v7071
      %7220 = vmax.xlane.f32.xlu0 %v7219
      %v7221 = vpop.xlane.xlu0 %7220
      %v7222 = vmax.f32 %v7073, %v7075
      %7223 = vmax.xlane.f32.xlu0 %v7222
      %v7224 = vpop.xlane.xlu0 %7223
      %v7225 = vmax.f32 %v7079, %v7081
      %7226 = vmax.xlane.f32.xlu0 %v7225
      %v7227 = vpop.xlane.xlu0 %7226
      %v7228 = vmax.f32 %v7083, %v7085
      %7229 = vmax.xlane.f32.xlu0 %v7228
      %v7230 = vpop.xlane.xlu0 %7229
      %v7231 = vmax.f32 %v7089, %v7091
      %7232 = vmax.xlane.f32.xlu0 %v7231
      %v7233 = vpop.xlane.xlu0 %7232
      %v7234 = vmax.f32 %v7093, %v7095
      %7235 = vmax.xlane.f32.xlu0 %v7234
      %v7236 = vpop.xlane.xlu0 %7235
      %v7237 = vmax.f32 %v7099, %v7101
      %7238 = vmax.xlane.f32.xlu0 %v7237
      %v7239 = vpop.xlane.xlu0 %7238
      %v7240 = vmax.f32 %v7103, %v7105
      %7241 = vmax.xlane.f32.xlu0 %v7240
      %v7242 = vpop.xlane.xlu0 %7241
      %v7243 = vmax.f32 %v7109, %v7111
      %7244 = vmax.xlane.f32.xlu0 %v7243
      %v7245 = vpop.xlane.xlu0 %7244
      %v7246 = vmax.f32 %v7113, %v7115
      %7247 = vmax.xlane.f32.xlu0 %v7246
      %v7248 = vpop.xlane.xlu0 %7247
      %v7249 = vmax.f32 %v7119, %v7121
      %7250 = vmax.xlane.f32.xlu0 %v7249
      %v7251 = vpop.xlane.xlu0 %7250
      %v7252 = vmax.f32 %v7123, %v7125
      %7253 = vmax.xlane.f32.xlu0 %v7252
      %v7254 = vpop.xlane.xlu0 %7253
      %v7255 = vmax.f32 %v7129, %v7131
      %7256 = vmax.xlane.f32.xlu0 %v7255
      %v7257 = vpop.xlane.xlu0 %7256
      %v7258 = vmax.f32 %v7133, %v7135
      %7259 = vmax.xlane.f32.xlu0 %v7258
      %v7260 = vpop.xlane.xlu0 %7259
      %v7261 = vmax.f32 %v7139, %v7141
      %7262 = vmax.xlane.f32.xlu0 %v7261
      %v7263 = vpop.xlane.xlu0 %7262
      %v7264 = vmax.f32 %v7143, %v7145
      %7265 = vmax.xlane.f32.xlu0 %v7264
      %v7266 = vpop.xlane.xlu0 %7265
      %v7267 = vmax.f32 %v7149, %v7151
      %7268 = vmax.xlane.f32.xlu0 %v7267
      %v7269 = vpop.xlane.xlu0 %7268
      %v7270 = vmax.f32 %v7153, %v7155
      %7271 = vmax.xlane.f32.xlu0 %v7270
      %v7272 = vpop.xlane.xlu0 %7271
      %v7273 = vmax.f32 %v7159, %v7161
      %7274 = vmax.xlane.f32.xlu0 %v7273
      %v7275 = vpop.xlane.xlu0 %7274
      %v7276 = vmax.f32 %v7163, %v7165
      %7277 = vmax.xlane.f32.xlu0 %v7276
      %v7278 = vpop.xlane.xlu0 %7277
      %v7279 = vmax.f32 %v7169, %v7171
      %7280 = vmax.xlane.f32.xlu0 %v7279
      %v7281 = vpop.xlane.xlu0 %7280
      %v7282 = vmax.f32 %v7173, %v7175
      %7283 = vmax.xlane.f32.xlu0 %v7282
      %v7284 = vpop.xlane.xlu0 %7283
      %v7285 = vmax.f32 %v7179, %v7181
      %7286 = vmax.xlane.f32.xlu0 %v7285
      %v7287 = vpop.xlane.xlu0 %7286
      %v7288 = vmax.f32 %v7183, %v7185
      %7289 = vmax.xlane.f32.xlu0 %v7288
      %v7290 = vpop.xlane.xlu0 %7289
      %v7291 = vmax.f32 %v7189, %v7191
      %7292 = vmax.xlane.f32.xlu0 %v7291
      %v7293 = vpop.xlane.xlu0 %7292
      %v7294 = vmax.f32 %v7193, %v7195
      %7295 = vmax.xlane.f32.xlu0 %v7294
      %v7296 = vpop.xlane.xlu0 %7295
      %v7297 = vmax.f32 %v7199, %v7201
      %7298 = vmax.xlane.f32.xlu0 %v7297
      %v7299 = vpop.xlane.xlu0 %7298
      %v7300 = vmax.f32 %v7203, %v7205
      %7301 = vmax.xlane.f32.xlu0 %v7300
      %v7302 = vpop.xlane.xlu0 %7301
      %v7303 = vsub.f32 %v7049, %v7209
      %v7304 = vsub.f32 %v7051, %v7209
      %v7305 = vsub.f32 %v7053, %v7212
      %v7306 = vsub.f32 %v7055, %v7212
      %v7307 = vsub.f32 %v7059, %v7215
      %v7308 = vsub.f32 %v7061, %v7215
      %v7309 = vsub.f32 %v7063, %v7218
      %v7310 = vsub.f32 %v7065, %v7218
      %v7311 = vsub.f32 %v7069, %v7221
      %v7312 = vsub.f32 %v7071, %v7221
      %v7313 = vsub.f32 %v7073, %v7224
      %v7314 = vsub.f32 %v7075, %v7224
      %v7315 = vsub.f32 %v7079, %v7227
      %v7316 = vsub.f32 %v7081, %v7227
      %v7317 = vsub.f32 %v7083, %v7230
      %v7318 = vsub.f32 %v7085, %v7230
      %v7319 = vsub.f32 %v7089, %v7233
      %v7320 = vsub.f32 %v7091, %v7233
      %v7321 = vsub.f32 %v7093, %v7236
      %v7322 = vsub.f32 %v7095, %v7236
      %v7323 = vsub.f32 %v7099, %v7239
      %v7324 = vsub.f32 %v7101, %v7239
      %v7325 = vsub.f32 %v7103, %v7242
      %v7326 = vsub.f32 %v7105, %v7242
      %v7327 = vsub.f32 %v7109, %v7245
      %v7328 = vsub.f32 %v7111, %v7245
      %v7329 = vsub.f32 %v7113, %v7248
      %v7330 = vsub.f32 %v7115, %v7248
      %v7331 = vsub.f32 %v7119, %v7251
      %v7332 = vsub.f32 %v7121, %v7251
      %v7333 = vsub.f32 %v7123, %v7254
      %v7334 = vsub.f32 %v7125, %v7254
      %v7335 = vsub.f32 %v7129, %v7257
      %v7336 = vsub.f32 %v7131, %v7257
      %v7337 = vsub.f32 %v7133, %v7260
      %v7338 = vsub.f32 %v7135, %v7260
      %v7339 = vsub.f32 %v7139, %v7263
      %v7340 = vsub.f32 %v7141, %v7263
      %v7341 = vsub.f32 %v7143, %v7266
      %v7342 = vsub.f32 %v7145, %v7266
      %v7343 = vsub.f32 %v7149, %v7269
      %v7344 = vsub.f32 %v7151, %v7269
      %v7345 = vsub.f32 %v7153, %v7272
      %v7346 = vsub.f32 %v7155, %v7272
      %v7347 = vsub.f32 %v7159, %v7275
      %v7348 = vsub.f32 %v7161, %v7275
      %v7349 = vsub.f32 %v7163, %v7278
      %v7350 = vsub.f32 %v7165, %v7278
      %v7351 = vsub.f32 %v7169, %v7281
      %v7352 = vsub.f32 %v7171, %v7281
      %v7353 = vsub.f32 %v7173, %v7284
      %v7354 = vsub.f32 %v7175, %v7284
      %v7355 = vsub.f32 %v7179, %v7287
      %v7356 = vsub.f32 %v7181, %v7287
      %v7357 = vsub.f32 %v7183, %v7290
      %v7358 = vsub.f32 %v7185, %v7290
      %v7359 = vsub.f32 %v7189, %v7293
      %v7360 = vsub.f32 %v7191, %v7293
      %v7361 = vsub.f32 %v7193, %v7296
      %v7362 = vsub.f32 %v7195, %v7296
      %v7363 = vsub.f32 %v7199, %v7299
      %v7364 = vsub.f32 %v7201, %v7299
      %v7365 = vsub.f32 %v7203, %v7302
      %v7366 = vsub.f32 %v7205, %v7302
      %v7367 = vmul.f32 %v7303, 1.442695
      %v7368 = vpow.pop %v7367
      %v7369 = vmul.f32 %v7304, 1.442695
      %v7370 = vpow.pop %v7369
      %v7371 = vmul.f32 %v7305, 1.442695
      %v7372 = vpow.pop %v7371
      %v7373 = vmul.f32 %v7306, 1.442695
      %v7374 = vpow.pop %v7373
      %v7375 = vmul.f32 %v7307, 1.442695
      %v7376 = vpow.pop %v7375
      %v7377 = vmul.f32 %v7308, 1.442695
      %v7378 = vpow.pop %v7377
      %v7379 = vmul.f32 %v7309, 1.442695
      %v7380 = vpow.pop %v7379
      %v7381 = vmul.f32 %v7310, 1.442695
      %v7382 = vpow.pop %v7381
      %v7383 = vmul.f32 %v7311, 1.442695
      %v7384 = vpow.pop %v7383
      %v7385 = vmul.f32 %v7312, 1.442695
      %v7386 = vpow.pop %v7385
      %v7387 = vmul.f32 %v7313, 1.442695
      %v7388 = vpow.pop %v7387
      %v7389 = vmul.f32 %v7314, 1.442695
      %v7390 = vpow.pop %v7389
      %v7391 = vmul.f32 %v7315, 1.442695
      %v7392 = vpow.pop %v7391
      %v7393 = vmul.f32 %v7316, 1.442695
      %v7394 = vpow.pop %v7393
      %v7395 = vmul.f32 %v7317, 1.442695
      %v7396 = vpow.pop %v7395
      %v7397 = vmul.f32 %v7318, 1.442695
      %v7398 = vpow.pop %v7397
      %v7399 = vmul.f32 %v7319, 1.442695
      %v7400 = vpow.pop %v7399
      %v7401 = vmul.f32 %v7320, 1.442695
      %v7402 = vpow.pop %v7401
      %v7403 = vmul.f32 %v7321, 1.442695
      %v7404 = vpow.pop %v7403
      %v7405 = vmul.f32 %v7322, 1.442695
      %v7406 = vpow.pop %v7405
      %v7407 = vmul.f32 %v7323, 1.442695
      %v7408 = vpow.pop %v7407
      %v7409 = vmul.f32 %v7324, 1.442695
      %v7410 = vpow.pop %v7409
      %v7411 = vmul.f32 %v7325, 1.442695
      %v7412 = vpow.pop %v7411
      %v7413 = vmul.f32 %v7326, 1.442695
      %v7414 = vpow.pop %v7413
      %v7415 = vmul.f32 %v7327, 1.442695
      %v7416 = vpow.pop %v7415
      %v7417 = vmul.f32 %v7328, 1.442695
      %v7418 = vpow.pop %v7417
      %v7419 = vmul.f32 %v7329, 1.442695
      %v7420 = vpow.pop %v7419
      %v7421 = vmul.f32 %v7330, 1.442695
      %v7422 = vpow.pop %v7421
      %v7423 = vmul.f32 %v7331, 1.442695
      %v7424 = vpow.pop %v7423
      %v7425 = vmul.f32 %v7332, 1.442695
      %v7426 = vpow.pop %v7425
      %v7427 = vmul.f32 %v7333, 1.442695
      %v7428 = vpow.pop %v7427
      %v7429 = vmul.f32 %v7334, 1.442695
      %v7430 = vpow.pop %v7429
      %v7431 = vmul.f32 %v7335, 1.442695
      %v7432 = vpow.pop %v7431
      %v7433 = vmul.f32 %v7336, 1.442695
      %v7434 = vpow.pop %v7433
      %v7435 = vmul.f32 %v7337, 1.442695
      %v7436 = vpow.pop %v7435
      %v7437 = vmul.f32 %v7338, 1.442695
      %v7438 = vpow.pop %v7437
      %v7439 = vmul.f32 %v7339, 1.442695
      %v7440 = vpow.pop %v7439
      %v7441 = vmul.f32 %v7340, 1.442695
      %v7442 = vpow.pop %v7441
      %v7443 = vmul.f32 %v7341, 1.442695
      %v7444 = vpow.pop %v7443
      %v7445 = vmul.f32 %v7342, 1.442695
      %v7446 = vpow.pop %v7445
      %v7447 = vmul.f32 %v7343, 1.442695
      %v7448 = vpow.pop %v7447
      %v7449 = vmul.f32 %v7344, 1.442695
      %v7450 = vpow.pop %v7449
      %v7451 = vmul.f32 %v7345, 1.442695
      %v7452 = vpow.pop %v7451
      %v7453 = vmul.f32 %v7346, 1.442695
      %v7454 = vpow.pop %v7453
      %v7455 = vmul.f32 %v7347, 1.442695
      %v7456 = vpow.pop %v7455
      %v7457 = vmul.f32 %v7348, 1.442695
      %v7458 = vpow.pop %v7457
      %v7459 = vmul.f32 %v7349, 1.442695
      %v7460 = vpow.pop %v7459
      %v7461 = vmul.f32 %v7350, 1.442695
      %v7462 = vpow.pop %v7461
      %v7463 = vmul.f32 %v7351, 1.442695
      %v7464 = vpow.pop %v7463
      %v7465 = vmul.f32 %v7352, 1.442695
      %v7466 = vpow.pop %v7465
      %v7467 = vmul.f32 %v7353, 1.442695
      %v7468 = vpow.pop %v7467
      %v7469 = vmul.f32 %v7354, 1.442695
      %v7470 = vpow.pop %v7469
      %v7471 = vmul.f32 %v7355, 1.442695
      %v7472 = vpow.pop %v7471
      %v7473 = vmul.f32 %v7356, 1.442695
      %v7474 = vpow.pop %v7473
      %v7475 = vmul.f32 %v7357, 1.442695
      %v7476 = vpow.pop %v7475
      %v7477 = vmul.f32 %v7358, 1.442695
      %v7478 = vpow.pop %v7477
      %v7479 = vmul.f32 %v7359, 1.442695
      %v7480 = vpow.pop %v7479
      %v7481 = vmul.f32 %v7360, 1.442695
      %v7482 = vpow.pop %v7481
      %v7483 = vmul.f32 %v7361, 1.442695
      %v7484 = vpow.pop %v7483
      %v7485 = vmul.f32 %v7362, 1.442695
      %v7486 = vpow.pop %v7485
      %v7487 = vmul.f32 %v7363, 1.442695
      %v7488 = vpow.pop %v7487
      %v7489 = vmul.f32 %v7364, 1.442695
      %v7490 = vpow.pop %v7489
      %v7491 = vmul.f32 %v7365, 1.442695
      %v7492 = vpow.pop %v7491
      %v7493 = vmul.f32 %v7366, 1.442695
      %v7494 = vpow.pop %v7493
      %v7495 = vadd.f32 %v7368, %v7370
      %7496 = vadd.xlane.f32.xlu0 %v7495
      %v7497 = vpop.xlane.xlu0 %7496
      %v7498 = vadd.f32 %v7372, %v7374
      %7499 = vadd.xlane.f32.xlu0 %v7498
      %v7500 = vpop.xlane.xlu0 %7499
      %v7501 = vadd.f32 %v7376, %v7378
      %7502 = vadd.xlane.f32.xlu0 %v7501
      %v7503 = vpop.xlane.xlu0 %7502
      %v7504 = vadd.f32 %v7380, %v7382
      %7505 = vadd.xlane.f32.xlu0 %v7504
      %v7506 = vpop.xlane.xlu0 %7505
      %v7507 = vadd.f32 %v7384, %v7386
      %7508 = vadd.xlane.f32.xlu0 %v7507
      %v7509 = vpop.xlane.xlu0 %7508
      %v7510 = vadd.f32 %v7388, %v7390
      %7511 = vadd.xlane.f32.xlu0 %v7510
      %v7512 = vpop.xlane.xlu0 %7511
      %v7513 = vadd.f32 %v7392, %v7394
      %7514 = vadd.xlane.f32.xlu0 %v7513
      %v7515 = vpop.xlane.xlu0 %7514
      %v7516 = vadd.f32 %v7396, %v7398
      %7517 = vadd.xlane.f32.xlu0 %v7516
      %v7518 = vpop.xlane.xlu0 %7517
      %v7519 = vadd.f32 %v7400, %v7402
      %7520 = vadd.xlane.f32.xlu0 %v7519
      %v7521 = vpop.xlane.xlu0 %7520
      %v7522 = vadd.f32 %v7404, %v7406
      %7523 = vadd.xlane.f32.xlu0 %v7522
      %v7524 = vpop.xlane.xlu0 %7523
      %v7525 = vadd.f32 %v7408, %v7410
      %7526 = vadd.xlane.f32.xlu0 %v7525
      %v7527 = vpop.xlane.xlu0 %7526
      %v7528 = vadd.f32 %v7412, %v7414
      %7529 = vadd.xlane.f32.xlu0 %v7528
      %v7530 = vpop.xlane.xlu0 %7529
      %v7531 = vadd.f32 %v7416, %v7418
      %7532 = vadd.xlane.f32.xlu0 %v7531
      %v7533 = vpop.xlane.xlu0 %7532
      %v7534 = vadd.f32 %v7420, %v7422
      %7535 = vadd.xlane.f32.xlu0 %v7534
      %v7536 = vpop.xlane.xlu0 %7535
      %v7537 = vadd.f32 %v7424, %v7426
      %7538 = vadd.xlane.f32.xlu0 %v7537
      %v7539 = vpop.xlane.xlu0 %7538
      %v7540 = vadd.f32 %v7428, %v7430
      %7541 = vadd.xlane.f32.xlu0 %v7540
      %v7542 = vpop.xlane.xlu0 %7541
      %v7543 = vadd.f32 %v7432, %v7434
      %7544 = vadd.xlane.f32.xlu0 %v7543
      %v7545 = vpop.xlane.xlu0 %7544
      %v7546 = vadd.f32 %v7436, %v7438
      %7547 = vadd.xlane.f32.xlu0 %v7546
      %v7548 = vpop.xlane.xlu0 %7547
      %v7549 = vadd.f32 %v7440, %v7442
      %7550 = vadd.xlane.f32.xlu0 %v7549
      %v7551 = vpop.xlane.xlu0 %7550
      %v7552 = vadd.f32 %v7444, %v7446
      %7553 = vadd.xlane.f32.xlu0 %v7552
      %v7554 = vpop.xlane.xlu0 %7553
      %v7555 = vadd.f32 %v7448, %v7450
      %7556 = vadd.xlane.f32.xlu0 %v7555
      %v7557 = vpop.xlane.xlu0 %7556
      %v7558 = vadd.f32 %v7452, %v7454
      %7559 = vadd.xlane.f32.xlu0 %v7558
      %v7560 = vpop.xlane.xlu0 %7559
      %v7561 = vadd.f32 %v7456, %v7458
      %7562 = vadd.xlane.f32.xlu0 %v7561
      %v7563 = vpop.xlane.xlu0 %7562
      %v7564 = vadd.f32 %v7460, %v7462
      %7565 = vadd.xlane.f32.xlu0 %v7564
      %v7566 = vpop.xlane.xlu0 %7565
      %v7567 = vadd.f32 %v7464, %v7466
      %7568 = vadd.xlane.f32.xlu0 %v7567
      %v7569 = vpop.xlane.xlu0 %7568
      %v7570 = vadd.f32 %v7468, %v7470
      %7571 = vadd.xlane.f32.xlu0 %v7570
      %v7572 = vpop.xlane.xlu0 %7571
      %v7573 = vadd.f32 %v7472, %v7474
      %7574 = vadd.xlane.f32.xlu0 %v7573
      %v7575 = vpop.xlane.xlu0 %7574
      %v7576 = vadd.f32 %v7476, %v7478
      %7577 = vadd.xlane.f32.xlu0 %v7576
      %v7578 = vpop.xlane.xlu0 %7577
      %v7579 = vadd.f32 %v7480, %v7482
      %7580 = vadd.xlane.f32.xlu0 %v7579
      %v7581 = vpop.xlane.xlu0 %7580
      %v7582 = vadd.f32 %v7484, %v7486
      %7583 = vadd.xlane.f32.xlu0 %v7582
      %v7584 = vpop.xlane.xlu0 %7583
      %v7585 = vadd.f32 %v7488, %v7490
      %7586 = vadd.xlane.f32.xlu0 %v7585
      %v7587 = vpop.xlane.xlu0 %7586
      %v7588 = vadd.f32 %v7492, %v7494
      %7589 = vadd.xlane.f32.xlu0 %v7588
      %v7590 = vpop.xlane.xlu0 %7589
      %v7591 = vpack.c.bf16 %v7372, %v7368
      %v7592 = vpack.c.bf16 %v7374, %v7370
      %v7593 = vpack.c.bf16 %v7380, %v7376
      %v7594 = vpack.c.bf16 %v7382, %v7378
      %v7595 = vpack.c.bf16 %v7388, %v7384
      %v7596 = vpack.c.bf16 %v7390, %v7386
      %v7597 = vpack.c.bf16 %v7396, %v7392
      %v7598 = vpack.c.bf16 %v7398, %v7394
      %v7599 = vpack.c.bf16 %v7404, %v7400
      %v7600 = vpack.c.bf16 %v7406, %v7402
      %v7601 = vpack.c.bf16 %v7412, %v7408
      %v7602 = vpack.c.bf16 %v7414, %v7410
      %v7603 = vpack.c.bf16 %v7420, %v7416
      %v7604 = vpack.c.bf16 %v7422, %v7418
      %v7605 = vpack.c.bf16 %v7428, %v7424
      %v7606 = vpack.c.bf16 %v7430, %v7426
      %v7607 = vpack.c.bf16 %v7436, %v7432
      %v7608 = vpack.c.bf16 %v7438, %v7434
      %v7609 = vpack.c.bf16 %v7444, %v7440
      %v7610 = vpack.c.bf16 %v7446, %v7442
      %v7611 = vpack.c.bf16 %v7452, %v7448
      %v7612 = vpack.c.bf16 %v7454, %v7450
      %v7613 = vpack.c.bf16 %v7460, %v7456
      %v7614 = vpack.c.bf16 %v7462, %v7458
      %v7615 = vpack.c.bf16 %v7468, %v7464
      %v7616 = vpack.c.bf16 %v7470, %v7466
      %v7617 = vpack.c.bf16 %v7476, %v7472
      %v7618 = vpack.c.bf16 %v7478, %v7474
      %v7619 = vpack.c.bf16 %v7484, %v7480
      %v7620 = vpack.c.bf16 %v7486, %v7482
      %v7621 = vpack.c.bf16 %v7492, %v7488
      %v7622 = vpack.c.bf16 %v7494, %v7490
      %7623 = vrot.lane.b32.xlu0 %v585, 40
      %v7624 = vpop.permute.xlu0 %7623
      %7625 = vrot.lane.b32.xlu0 %v586, 40
      %v7626 = vpop.permute.xlu0 %7625
      %7627 = vrot.lane.b32.xlu0 %v587, 40
      %v7628 = vpop.permute.xlu0 %7627
      %7629 = vrot.lane.b32.xlu0 %v588, 40
      %v7630 = vpop.permute.xlu0 %7629
      %7631 = vrot.lane.b32.xlu0 %v589, 40
      %v7632 = vpop.permute.xlu0 %7631
      %7633 = vrot.lane.b32.xlu0 %v590, 40
      %v7634 = vpop.permute.xlu0 %7633
      %7635 = vrot.lane.b32.xlu0 %v591, 40
      %v7636 = vpop.permute.xlu0 %7635
      %7637 = vrot.lane.b32.xlu0 %v592, 40
      %v7638 = vpop.permute.xlu0 %7637
      %7639 = vrot.lane.b32.xlu0 %v593, 40
      %v7640 = vpop.permute.xlu0 %7639
      %7641 = vrot.lane.b32.xlu0 %v594, 40
      %v7642 = vpop.permute.xlu0 %7641
      %7643 = vrot.lane.b32.xlu0 %v595, 40
      %v7644 = vpop.permute.xlu0 %7643
      %7645 = vrot.lane.b32.xlu0 %v596, 40
      %v7646 = vpop.permute.xlu0 %7645
      %7647 = vrot.lane.b32.xlu0 %v597, 40
      %v7648 = vpop.permute.xlu0 %7647
      %7649 = vrot.lane.b32.xlu0 %v598, 40
      %v7650 = vpop.permute.xlu0 %7649
      %7651 = vrot.lane.b32.xlu0 %v599, 40
      %v7652 = vpop.permute.xlu0 %7651
      %7653 = vrot.lane.b32.xlu0 %v600, 40
      %v7654 = vpop.permute.xlu0 %7653
      %7671 = vmatprep.subr.bf16.mxu0 0
      %7672 = vmatpush1.bf16.msra.mxu0 %v7624
      %7673 = vmatprep.subr.bf16.mxu0 0
      %7674 = vmatpush1.bf16.msra.mxu0 %v7626
      %7675 = vmatprep.subr.bf16.mxu0 0
      %7676 = vmatpush1.bf16.msra.mxu0 %v7628
      %7677 = vmatprep.subr.bf16.mxu0 0
      %7678 = vmatpush1.bf16.msra.mxu0 %v7630
      %7679 = vmatprep.subr.bf16.mxu0 0
      %7680 = vmatpush1.bf16.msra.mxu0 %v7632
      %7681 = vmatprep.subr.bf16.mxu0 0
      %7682 = vmatpush1.bf16.msra.mxu0 %v7634
      %7683 = vmatprep.subr.bf16.mxu0 0
      %7684 = vmatpush1.bf16.msra.mxu0 %v7636
      %7685 = vmatprep.subr.bf16.mxu0 0
      %7686 = vmatpush1.bf16.msra.mxu0 %v7638
      %7687 = vmatprep.subr.bf16.mxu0 0
      %7688 = vmatpush1.bf16.msra.mxu0 %v7640
      %7689 = vmatprep.subr.bf16.mxu0 0
      %7690 = vmatpush1.bf16.msra.mxu0 %v7642
      %7691 = vmatprep.subr.bf16.mxu0 0
      %7692 = vmatpush1.bf16.msra.mxu0 %v7644
      %7693 = vmatprep.subr.bf16.mxu0 0
      %7694 = vmatpush1.bf16.msra.mxu0 %v7646
      %7695 = vmatprep.subr.bf16.mxu0 0
      %7696 = vmatpush1.bf16.msra.mxu0 %v7648
      %7697 = vmatprep.subr.bf16.mxu0 0
      %7698 = vmatpush1.bf16.msra.mxu0 %v7650
      %7699 = vmatprep.subr.bf16.mxu0 0
      %7700 = vmatpush1.bf16.msra.mxu0 %v7652
      %7701 = vmatprep.subr.bf16.mxu0 0
      %7702 = vmatpush1.bf16.msra.mxu0 %v7654
      %7703 = vmatprep.mubr.bf16.mxu0 %v7592
      %7704 = vmatmul.mubr.bf16.gmra.mrb[0].mxu0 %v7591
      %v7705 = vpop.f32.mrb[0].mxu0
      %v7706 = vadd.f32 0.0, %v7705
      %v7707 = vpop.f32.mrb[0].mxu0
      %v7708 = vpop.f32.mrb[0].mxu0
      %v7709 = vadd.f32 0.0, %v7708
      %v7710 = vpop.f32.mrb[0].mxu0
      %7711 = vmatprep.mubr.bf16.mxu0 %v7594
      %7712 = vmatmul.mubr.bf16.gmra.mrb[0].mxu0 %v7593
      %v7713 = vpop.f32.mrb[0].mxu0
      %v7714 = vadd.f32 0.0, %v7713
      %v7715 = vpop.f32.mrb[0].mxu0
      %v7716 = vpop.f32.mrb[0].mxu0
      %v7717 = vadd.f32 0.0, %v7716
      %v7718 = vpop.f32.mrb[0].mxu0
      %7719 = vmatprep.mubr.bf16.mxu0 %v7596
      %7720 = vmatmul.mubr.bf16.gmra.mrb[0].mxu0 %v7595
      %v7721 = vpop.f32.mrb[0].mxu0
      %v7722 = vadd.f32 0.0, %v7721
      %v7723 = vpop.f32.mrb[0].mxu0
      %v7724 = vpop.f32.mrb[0].mxu0
      %v7725 = vadd.f32 0.0, %v7724
      %v7726 = vpop.f32.mrb[0].mxu0
      %7727 = vmatprep.mubr.bf16.mxu0 %v7598
      %7728 = vmatmul.mubr.bf16.gmra.mrb[0].mxu0 %v7597
      %v7729 = vpop.f32.mrb[0].mxu0
      %v7730 = vadd.f32 0.0, %v7729
      %v7731 = vpop.f32.mrb[0].mxu0
      %v7732 = vpop.f32.mrb[0].mxu0
      %v7733 = vadd.f32 0.0, %v7732
      %v7734 = vpop.f32.mrb[0].mxu0
      %7735 = vmatprep.mubr.bf16.mxu0 %v7600
      %7736 = vmatmul.mubr.bf16.gmra.mrb[0].mxu0 %v7599
      %v7737 = vpop.f32.mrb[0].mxu0
      %v7738 = vadd.f32 0.0, %v7737
      %v7739 = vpop.f32.mrb[0].mxu0
      %v7740 = vpop.f32.mrb[0].mxu0
      %v7741 = vadd.f32 0.0, %v7740
      %v7742 = vpop.f32.mrb[0].mxu0
      %7743 = vmatprep.mubr.bf16.mxu0 %v7602
      %7744 = vmatmul.mubr.bf16.gmra.mrb[0].mxu0 %v7601
      %v7745 = vpop.f32.mrb[0].mxu0
      %v7746 = vadd.f32 0.0, %v7745
      %v7747 = vpop.f32.mrb[0].mxu0
      %v7748 = vpop.f32.mrb[0].mxu0
      %v7749 = vadd.f32 0.0, %v7748
      %v7750 = vpop.f32.mrb[0].mxu0
      %7751 = vmatprep.mubr.bf16.mxu0 %v7604
      %7752 = vmatmul.mubr.bf16.gmra.mrb[0].mxu0 %v7603
      %v7753 = vpop.f32.mrb[0].mxu0
      %v7754 = vadd.f32 0.0, %v7753
      %v7755 = vpop.f32.mrb[0].mxu0
      %v7756 = vpop.f32.mrb[0].mxu0
      %v7757 = vadd.f32 0.0, %v7756
      %v7758 = vpop.f32.mrb[0].mxu0
      %7759 = vmatprep.mubr.bf16.mxu0 %v7606
      %7760 = vmatmul.mubr.bf16.gmra.mrb[0].mxu0 %v7605
      %v7761 = vpop.f32.mrb[0].mxu0
      %v7762 = vadd.f32 0.0, %v7761
      %v7763 = vpop.f32.mrb[0].mxu0
      %v7764 = vpop.f32.mrb[0].mxu0
      %v7765 = vadd.f32 0.0, %v7764
      %v7766 = vpop.f32.mrb[0].mxu0
      %7767 = vmatprep.mubr.bf16.mxu0 %v7608
      %7768 = vmatmul.mubr.bf16.gmra.mrb[0].mxu0 %v7607
      %v7769 = vpop.f32.mrb[0].mxu0
      %v7770 = vadd.f32 0.0, %v7769
      %v7771 = vpop.f32.mrb[0].mxu0
      %v7772 = vpop.f32.mrb[0].mxu0
      %v7773 = vadd.f32 0.0, %v7772
      %v7774 = vpop.f32.mrb[0].mxu0
      %7775 = vmatprep.mubr.bf16.mxu0 %v7610
      %7776 = vmatmul.mubr.bf16.gmra.mrb[0].mxu0 %v7609
      %v7777 = vpop.f32.mrb[0].mxu0
      %v7778 = vadd.f32 0.0, %v7777
      %v7779 = vpop.f32.mrb[0].mxu0
      %v7780 = vpop.f32.mrb[0].mxu0
      %v7781 = vadd.f32 0.0, %v7780
      %v7782 = vpop.f32.mrb[0].mxu0
      %7783 = vmatprep.mubr.bf16.mxu0 %v7612
      %7784 = vmatmul.mubr.bf16.gmra.mrb[0].mxu0 %v7611
      %v7785 = vpop.f32.mrb[0].mxu0
      %v7786 = vadd.f32 0.0, %v7785
      %v7787 = vpop.f32.mrb[0].mxu0
      %v7788 = vpop.f32.mrb[0].mxu0
      %v7789 = vadd.f32 0.0, %v7788
      %v7790 = vpop.f32.mrb[0].mxu0
      %7791 = vmatprep.mubr.bf16.mxu0 %v7614
      %7792 = vmatmul.mubr.bf16.gmra.mrb[0].mxu0 %v7613
      %v7793 = vpop.f32.mrb[0].mxu0
      %v7794 = vadd.f32 0.0, %v7793
      %v7795 = vpop.f32.mrb[0].mxu0
      %v7796 = vpop.f32.mrb[0].mxu0
      %v7797 = vadd.f32 0.0, %v7796
      %v7798 = vpop.f32.mrb[0].mxu0
      %7799 = vmatprep.mubr.bf16.mxu0 %v7616
      %7800 = vmatmul.mubr.bf16.gmra.mrb[0].mxu0 %v7615
      %v7801 = vpop.f32.mrb[0].mxu0
      %v7802 = vadd.f32 0.0, %v7801
      %v7803 = vpop.f32.mrb[0].mxu0
      %v7804 = vpop.f32.mrb[0].mxu0
      %v7805 = vadd.f32 0.0, %v7804
      %v7806 = vpop.f32.mrb[0].mxu0
      %7807 = vmatprep.mubr.bf16.mxu0 %v7618
      %7808 = vmatmul.mubr.bf16.gmra.mrb[0].mxu0 %v7617
      %v7809 = vpop.f32.mrb[0].mxu0
      %v7810 = vadd.f32 0.0, %v7809
      %v7811 = vpop.f32.mrb[0].mxu0
      %v7812 = vpop.f32.mrb[0].mxu0
      %v7813 = vadd.f32 0.0, %v7812
      %v7814 = vpop.f32.mrb[0].mxu0
      %7815 = vmatprep.mubr.bf16.mxu0 %v7620
      %7816 = vmatmul.mubr.bf16.gmra.mrb[0].mxu0 %v7619
      %v7817 = vpop.f32.mrb[0].mxu0
      %v7818 = vadd.f32 0.0, %v7817
      %v7819 = vpop.f32.mrb[0].mxu0
      %v7820 = vpop.f32.mrb[0].mxu0
      %v7821 = vadd.f32 0.0, %v7820
      %v7822 = vpop.f32.mrb[0].mxu0
      %7823 = vmatprep.mubr.bf16.mxu0 %v7622
      %7824 = vmatmul.mubr.bf16.gmra.mrb[0].mxu0 %v7621
      %v7825 = vpop.f32.mrb[0].mxu0
      %v7826 = vadd.f32 0.0, %v7825
      %v7827 = vpop.f32.mrb[0].mxu0
      %v7828 = vpop.f32.mrb[0].mxu0
      %v7829 = vadd.f32 0.0, %v7828
      %v7830 = vpop.f32.mrb[0].mxu0
      %7831 = vdwg.mxu0
      %v7832 = vrcp.pop %v7497
      %v7833 = vrcp.pop %v7500
      %v7834 = vrcp.pop %v7503
      %v7835 = vrcp.pop %v7506
      %v7836 = vrcp.pop %v7509
      %v7837 = vrcp.pop %v7512
      %v7838 = vrcp.pop %v7515
      %v7839 = vrcp.pop %v7518
      %v7840 = vrcp.pop %v7521
      %v7841 = vrcp.pop %v7524
      %v7842 = vrcp.pop %v7527
      %v7843 = vrcp.pop %v7530
      %v7844 = vrcp.pop %v7533
      %v7845 = vrcp.pop %v7536
      %v7846 = vrcp.pop %v7539
      %v7847 = vrcp.pop %v7542
      %v7848 = vrcp.pop %v7545
      %v7849 = vrcp.pop %v7548
      %v7850 = vrcp.pop %v7551
      %v7851 = vrcp.pop %v7554
      %v7852 = vrcp.pop %v7557
      %v7853 = vrcp.pop %v7560
      %v7854 = vrcp.pop %v7563
      %v7855 = vrcp.pop %v7566
      %v7856 = vrcp.pop %v7569
      %v7857 = vrcp.pop %v7572
      %v7858 = vrcp.pop %v7575
      %v7859 = vrcp.pop %v7578
      %v7860 = vrcp.pop %v7581
      %v7861 = vrcp.pop %v7584
      %v7862 = vrcp.pop %v7587
      %v7863 = vrcp.pop %v7590
      %v7864 = vmul.f32 %v7706, %v7832
      %v7865 = vmul.f32 %v7709, %v7833
      %v7866 = vmul.f32 %v7714, %v7834
      %v7867 = vmul.f32 %v7717, %v7835
      %v7868 = vmul.f32 %v7722, %v7836
      %v7869 = vmul.f32 %v7725, %v7837
      %v7870 = vmul.f32 %v7730, %v7838
      %v7871 = vmul.f32 %v7733, %v7839
      %v7872 = vmul.f32 %v7738, %v7840
      %v7873 = vmul.f32 %v7741, %v7841
      %v7874 = vmul.f32 %v7746, %v7842
      %v7875 = vmul.f32 %v7749, %v7843
      %v7876 = vmul.f32 %v7754, %v7844
      %v7877 = vmul.f32 %v7757, %v7845
      %v7878 = vmul.f32 %v7762, %v7846
      %v7879 = vmul.f32 %v7765, %v7847
      %v7880 = vmul.f32 %v7770, %v7848
      %v7881 = vmul.f32 %v7773, %v7849
      %v7882 = vmul.f32 %v7778, %v7850
      %v7883 = vmul.f32 %v7781, %v7851
      %v7884 = vmul.f32 %v7786, %v7852
      %v7885 = vmul.f32 %v7789, %v7853
      %v7886 = vmul.f32 %v7794, %v7854
      %v7887 = vmul.f32 %v7797, %v7855
      %v7888 = vmul.f32 %v7802, %v7856
      %v7889 = vmul.f32 %v7805, %v7857
      %v7890 = vmul.f32 %v7810, %v7858
      %v7891 = vmul.f32 %v7813, %v7859
      %v7892 = vmul.f32 %v7818, %v7860
      %v7893 = vmul.f32 %v7821, %v7861
      %v7894 = vmul.f32 %v7826, %v7862
      %v7895 = vmul.f32 %v7829, %v7863
      %7896 = vrot.lane.b32.xlu0 %v569, 100
      %v7897 = vpop.permute.xlu0 %7896
      %7898 = vrot.lane.b32.xlu0 %v570, 100
      %v7899 = vpop.permute.xlu0 %7898
      %7900 = vrot.lane.b32.xlu0 %v571, 100
      %v7901 = vpop.permute.xlu0 %7900
      %7902 = vrot.lane.b32.xlu0 %v572, 100
      %v7903 = vpop.permute.xlu0 %7902
      %7904 = vrot.lane.b32.xlu0 %v573, 100
      %v7905 = vpop.permute.xlu0 %7904
      %7906 = vrot.lane.b32.xlu0 %v574, 100
      %v7907 = vpop.permute.xlu0 %7906
      %7908 = vrot.lane.b32.xlu0 %v575, 100
      %v7909 = vpop.permute.xlu0 %7908
      %7910 = vrot.lane.b32.xlu0 %v576, 100
      %v7911 = vpop.permute.xlu0 %7910
      %7912 = vrot.lane.b32.xlu0 %v577, 100
      %v7913 = vpop.permute.xlu0 %7912
      %7914 = vrot.lane.b32.xlu0 %v578, 100
      %v7915 = vpop.permute.xlu0 %7914
      %7916 = vrot.lane.b32.xlu0 %v579, 100
      %v7917 = vpop.permute.xlu0 %7916
      %7918 = vrot.lane.b32.xlu0 %v580, 100
      %v7919 = vpop.permute.xlu0 %7918
      %7920 = vrot.lane.b32.xlu0 %v581, 100
      %v7921 = vpop.permute.xlu0 %7920
      %7922 = vrot.lane.b32.xlu0 %v582, 100
      %v7923 = vpop.permute.xlu0 %7922
      %7924 = vrot.lane.b32.xlu0 %v583, 100
      %v7925 = vpop.permute.xlu0 %7924
      %7926 = vrot.lane.b32.xlu0 %v584, 100
      %v7927 = vpop.permute.xlu0 %7926
      %7928 = vrot.lane.b32.xlu0 %v585, 68
      %v7929 = vpop.permute.xlu0 %7928
      %7930 = vrot.lane.b32.xlu0 %v586, 68
      %v7931 = vpop.permute.xlu0 %7930
      %7932 = vrot.lane.b32.xlu0 %v587, 68
      %v7933 = vpop.permute.xlu0 %7932
      %7934 = vrot.lane.b32.xlu0 %v588, 68
      %v7935 = vpop.permute.xlu0 %7934
      %7936 = vrot.lane.b32.xlu0 %v589, 68
      %v7937 = vpop.permute.xlu0 %7936
      %7938 = vrot.lane.b32.xlu0 %v590, 68
      %v7939 = vpop.permute.xlu0 %7938
      %7940 = vrot.lane.b32.xlu0 %v591, 68
      %v7941 = vpop.permute.xlu0 %7940
      %7942 = vrot.lane.b32.xlu0 %v592, 68
      %v7943 = vpop.permute.xlu0 %7942
      %7944 = vrot.lane.b32.xlu0 %v593, 68
      %v7945 = vpop.permute.xlu0 %7944
      %7946 = vrot.lane.b32.xlu0 %v594, 68
      %v7947 = vpop.permute.xlu0 %7946
      %7948 = vrot.lane.b32.xlu0 %v595, 68
      %v7949 = vpop.permute.xlu0 %7948
      %7950 = vrot.lane.b32.xlu0 %v596, 68
      %v7951 = vpop.permute.xlu0 %7950
      %7952 = vrot.lane.b32.xlu0 %v597, 68
      %v7953 = vpop.permute.xlu0 %7952
      %7954 = vrot.lane.b32.xlu0 %v598, 68
      %v7955 = vpop.permute.xlu0 %7954
      %7956 = vrot.lane.b32.xlu0 %v599, 68
      %v7957 = vpop.permute.xlu0 %7956
      %7958 = vrot.lane.b32.xlu0 %v600, 68
      %v7959 = vpop.permute.xlu0 %7958
      %v7961 = vsel %vm649, %v7897, 0
      %v7964 = vsel %vm649, %v7899, 0
      %v7967 = vsel %vm649, %v7901, 0
      %v7970 = vsel %vm649, %v7903, 0
      %v7973 = vsel %vm649, %v7905, 0
      %v7976 = vsel %vm649, %v7907, 0
      %v7979 = vsel %vm649, %v7909, 0
      %v7982 = vsel %vm649, %v7911, 0
      %v7985 = vsel %vm649, %v7913, 0
      %v7988 = vsel %vm649, %v7915, 0
      %v7991 = vsel %vm649, %v7917, 0
      %v7994 = vsel %vm649, %v7919, 0
      %v7997 = vsel %vm649, %v7921, 0
      %v8000 = vsel %vm649, %v7923, 0
      %v8003 = vsel %vm649, %v7925, 0
      %v8006 = vsel %vm649, %v7927, 0
      %v8009 = vsel %vm649, %v7929, 0
      %v8012 = vsel %vm649, %v7931, 0
      %v8015 = vsel %vm649, %v7933, 0
      %v8018 = vsel %vm649, %v7935, 0
      %v8021 = vsel %vm649, %v7937, 0
      %v8024 = vsel %vm649, %v7939, 0
      %v8027 = vsel %vm649, %v7941, 0
      %v8030 = vsel %vm649, %v7943, 0
      %v8033 = vsel %vm649, %v7945, 0
      %v8036 = vsel %vm649, %v7947, 0
      %v8039 = vsel %vm649, %v7949, 0
      %v8042 = vsel %vm649, %v7951, 0
      %v8045 = vsel %vm649, %v7953, 0
      %v8048 = vsel %vm649, %v7955, 0
      %v8051 = vsel %vm649, %v7957, 0
      %v8054 = vsel %vm649, %v7959, 0
      %8056 = vmatprep.subr.bf16.mxu0 0
      %8057 = vmatpush1.bf16.xpose.msra.mxu0 %v8009
      %8058 = vmatprep.subr.bf16.mxu0 0
      %8059 = vmatpush1.bf16.xpose.msra.mxu0 %v8012
      %8060 = vmatprep.subr.bf16.mxu0 0
      %8061 = vmatpush1.bf16.xpose.msra.mxu0 %v8015
      %8062 = vmatprep.subr.bf16.mxu0 0
      %8063 = vmatpush1.bf16.xpose.msra.mxu0 %v8018
      %8064 = vmatprep.subr.bf16.mxu0 0
      %8065 = vmatpush1.bf16.xpose.msra.mxu0 %v8021
      %8066 = vmatprep.subr.bf16.mxu0 0
      %8067 = vmatpush1.bf16.xpose.msra.mxu0 %v8024
      %8068 = vmatprep.subr.bf16.mxu0 0
      %8069 = vmatpush1.bf16.xpose.msra.mxu0 %v8027
      %8070 = vmatprep.subr.bf16.mxu0 0
      %8071 = vmatpush1.bf16.xpose.msra.mxu0 %v8030
      %8072 = vmatprep.subr.bf16.mxu0 0
      %8073 = vmatpush1.bf16.xpose.msra.mxu0 %v8033
      %8074 = vmatprep.subr.bf16.mxu0 0
      %8075 = vmatpush1.bf16.xpose.msra.mxu0 %v8036
      %8076 = vmatprep.subr.bf16.mxu0 0
      %8077 = vmatpush1.bf16.xpose.msra.mxu0 %v8039
      %8078 = vmatprep.subr.bf16.mxu0 0
      %8079 = vmatpush1.bf16.xpose.msra.mxu0 %v8042
      %8080 = vmatprep.subr.bf16.mxu0 0
      %8081 = vmatpush1.bf16.xpose.msra.mxu0 %v8045
      %8082 = vmatprep.subr.bf16.mxu0 0
      %8083 = vmatpush1.bf16.xpose.msra.mxu0 %v8048
      %8084 = vmatprep.subr.bf16.mxu0 0
      %8085 = vmatpush1.bf16.xpose.msra.mxu0 %v8051
      %8086 = vmatprep.subr.bf16.mxu0 0
      %8087 = vmatpush1.bf16.xpose.msra.mxu0 %v8054
      %8088 = vmatprep.mubr.bf16.mxu0 0
      %8089 = vmatmul.mubr.bf16.gmra.mrb[0].mxu0 %v7961
      %v8090 = vpop.f32.mrb[0].mxu0
      %v8091 = vadd.f32 0.0, %v8090
      %v8092 = vpop.f32.mrb[0].mxu0
      %v8093 = vadd.f32 0.0, %v8092
      %v8094 = vpop.f32.mrb[0].mxu0
      %v8095 = vadd.f32 0.0, %v8094
      %v8096 = vpop.f32.mrb[0].mxu0
      %v8097 = vadd.f32 0.0, %v8096
      %8098 = vmatprep.mubr.bf16.mxu0 0
      %8099 = vmatmul.mubr.bf16.gmra.mrb[0].mxu0 %v7964
      %v8100 = vpop.f32.mrb[0].mxu0
      %v8101 = vadd.f32 0.0, %v8100
      %v8102 = vpop.f32.mrb[0].mxu0
      %v8103 = vadd.f32 0.0, %v8102
      %v8104 = vpop.f32.mrb[0].mxu0
      %v8105 = vadd.f32 0.0, %v8104
      %v8106 = vpop.f32.mrb[0].mxu0
      %v8107 = vadd.f32 0.0, %v8106
      %8108 = vmatprep.mubr.bf16.mxu0 0
      %8109 = vmatmul.mubr.bf16.gmra.mrb[0].mxu0 %v7967
      %v8110 = vpop.f32.mrb[0].mxu0
      %v8111 = vadd.f32 0.0, %v8110
      %v8112 = vpop.f32.mrb[0].mxu0
      %v8113 = vadd.f32 0.0, %v8112
      %v8114 = vpop.f32.mrb[0].mxu0
      %v8115 = vadd.f32 0.0, %v8114
      %v8116 = vpop.f32.mrb[0].mxu0
      %v8117 = vadd.f32 0.0, %v8116
      %8118 = vmatprep.mubr.bf16.mxu0 0
      %8119 = vmatmul.mubr.bf16.gmra.mrb[0].mxu0 %v7970
      %v8120 = vpop.f32.mrb[0].mxu0
      %v8121 = vadd.f32 0.0, %v8120
      %v8122 = vpop.f32.mrb[0].mxu0
      %v8123 = vadd.f32 0.0, %v8122
      %v8124 = vpop.f32.mrb[0].mxu0
      %v8125 = vadd.f32 0.0, %v8124
      %v8126 = vpop.f32.mrb[0].mxu0
      %v8127 = vadd.f32 0.0, %v8126
      %8128 = vmatprep.mubr.bf16.mxu0 0
      %8129 = vmatmul.mubr.bf16.gmra.mrb[0].mxu0 %v7973
      %v8130 = vpop.f32.mrb[0].mxu0
      %v8131 = vadd.f32 0.0, %v8130
      %v8132 = vpop.f32.mrb[0].mxu0
      %v8133 = vadd.f32 0.0, %v8132
      %v8134 = vpop.f32.mrb[0].mxu0
      %v8135 = vadd.f32 0.0, %v8134
      %v8136 = vpop.f32.mrb[0].mxu0
      %v8137 = vadd.f32 0.0, %v8136
      %8138 = vmatprep.mubr.bf16.mxu0 0
      %8139 = vmatmul.mubr.bf16.gmra.mrb[0].mxu0 %v7976
      %v8140 = vpop.f32.mrb[0].mxu0
      %v8141 = vadd.f32 0.0, %v8140
      %v8142 = vpop.f32.mrb[0].mxu0
      %v8143 = vadd.f32 0.0, %v8142
      %v8144 = vpop.f32.mrb[0].mxu0
      %v8145 = vadd.f32 0.0, %v8144
      %v8146 = vpop.f32.mrb[0].mxu0
      %v8147 = vadd.f32 0.0, %v8146
      %8148 = vmatprep.mubr.bf16.mxu0 0
      %8149 = vmatmul.mubr.bf16.gmra.mrb[0].mxu0 %v7979
      %v8150 = vpop.f32.mrb[0].mxu0
      %v8151 = vadd.f32 0.0, %v8150
      %v8152 = vpop.f32.mrb[0].mxu0
      %v8153 = vadd.f32 0.0, %v8152
      %v8154 = vpop.f32.mrb[0].mxu0
      %v8155 = vadd.f32 0.0, %v8154
      %v8156 = vpop.f32.mrb[0].mxu0
      %v8157 = vadd.f32 0.0, %v8156
      %8158 = vmatprep.mubr.bf16.mxu0 0
      %8159 = vmatmul.mubr.bf16.gmra.mrb[0].mxu0 %v7982
      %v8160 = vpop.f32.mrb[0].mxu0
      %v8161 = vadd.f32 0.0, %v8160
      %v8162 = vpop.f32.mrb[0].mxu0
      %v8163 = vadd.f32 0.0, %v8162
      %v8164 = vpop.f32.mrb[0].mxu0
      %v8165 = vadd.f32 0.0, %v8164
      %v8166 = vpop.f32.mrb[0].mxu0
      %v8167 = vadd.f32 0.0, %v8166
      %8168 = vmatprep.mubr.bf16.mxu0 0
      %8169 = vmatmul.mubr.bf16.gmra.mrb[0].mxu0 %v7985
      %v8170 = vpop.f32.mrb[0].mxu0
      %v8171 = vadd.f32 0.0, %v8170
      %v8172 = vpop.f32.mrb[0].mxu0
      %v8173 = vadd.f32 0.0, %v8172
      %v8174 = vpop.f32.mrb[0].mxu0
      %v8175 = vadd.f32 0.0, %v8174
      %v8176 = vpop.f32.mrb[0].mxu0
      %v8177 = vadd.f32 0.0, %v8176
      %8178 = vmatprep.mubr.bf16.mxu0 0
      %8179 = vmatmul.mubr.bf16.gmra.mrb[0].mxu0 %v7988
      %v8180 = vpop.f32.mrb[0].mxu0
      %v8181 = vadd.f32 0.0, %v8180
      %v8182 = vpop.f32.mrb[0].mxu0
      %v8183 = vadd.f32 0.0, %v8182
      %v8184 = vpop.f32.mrb[0].mxu0
      %v8185 = vadd.f32 0.0, %v8184
      %v8186 = vpop.f32.mrb[0].mxu0
      %v8187 = vadd.f32 0.0, %v8186
      %8188 = vmatprep.mubr.bf16.mxu0 0
      %8189 = vmatmul.mubr.bf16.gmra.mrb[0].mxu0 %v7991
      %v8190 = vpop.f32.mrb[0].mxu0
      %v8191 = vadd.f32 0.0, %v8190
      %v8192 = vpop.f32.mrb[0].mxu0
      %v8193 = vadd.f32 0.0, %v8192
      %v8194 = vpop.f32.mrb[0].mxu0
      %v8195 = vadd.f32 0.0, %v8194
      %v8196 = vpop.f32.mrb[0].mxu0
      %v8197 = vadd.f32 0.0, %v8196
      %8198 = vmatprep.mubr.bf16.mxu0 0
      %8199 = vmatmul.mubr.bf16.gmra.mrb[0].mxu0 %v7994
      %v8200 = vpop.f32.mrb[0].mxu0
      %v8201 = vadd.f32 0.0, %v8200
      %v8202 = vpop.f32.mrb[0].mxu0
      %v8203 = vadd.f32 0.0, %v8202
      %v8204 = vpop.f32.mrb[0].mxu0
      %v8205 = vadd.f32 0.0, %v8204
      %v8206 = vpop.f32.mrb[0].mxu0
      %v8207 = vadd.f32 0.0, %v8206
      %8208 = vmatprep.mubr.bf16.mxu0 0
      %8209 = vmatmul.mubr.bf16.gmra.mrb[0].mxu0 %v7997
      %v8210 = vpop.f32.mrb[0].mxu0
      %v8211 = vadd.f32 0.0, %v8210
      %v8212 = vpop.f32.mrb[0].mxu0
      %v8213 = vadd.f32 0.0, %v8212
      %v8214 = vpop.f32.mrb[0].mxu0
      %v8215 = vadd.f32 0.0, %v8214
      %v8216 = vpop.f32.mrb[0].mxu0
      %v8217 = vadd.f32 0.0, %v8216
      %8218 = vmatprep.mubr.bf16.mxu0 0
      %8219 = vmatmul.mubr.bf16.gmra.mrb[0].mxu0 %v8000
      %v8220 = vpop.f32.mrb[0].mxu0
      %v8221 = vadd.f32 0.0, %v8220
      %v8222 = vpop.f32.mrb[0].mxu0
      %v8223 = vadd.f32 0.0, %v8222
      %v8224 = vpop.f32.mrb[0].mxu0
      %v8225 = vadd.f32 0.0, %v8224
      %v8226 = vpop.f32.mrb[0].mxu0
      %v8227 = vadd.f32 0.0, %v8226
      %8228 = vmatprep.mubr.bf16.mxu0 0
      %8229 = vmatmul.mubr.bf16.gmra.mrb[0].mxu0 %v8003
      %v8230 = vpop.f32.mrb[0].mxu0
      %v8231 = vadd.f32 0.0, %v8230
      %v8232 = vpop.f32.mrb[0].mxu0
      %v8233 = vadd.f32 0.0, %v8232
      %v8234 = vpop.f32.mrb[0].mxu0
      %v8235 = vadd.f32 0.0, %v8234
      %v8236 = vpop.f32.mrb[0].mxu0
      %v8237 = vadd.f32 0.0, %v8236
      %8238 = vmatprep.mubr.bf16.mxu0 0
      %8239 = vmatmul.mubr.bf16.gmra.mrb[0].mxu0 %v8006
      %v8240 = vpop.f32.mrb[0].mxu0
      %v8241 = vadd.f32 0.0, %v8240
      %v8242 = vpop.f32.mrb[0].mxu0
      %v8243 = vadd.f32 0.0, %v8242
      %v8244 = vpop.f32.mrb[0].mxu0
      %v8245 = vadd.f32 0.0, %v8244
      %v8246 = vpop.f32.mrb[0].mxu0
      %v8247 = vadd.f32 0.0, %v8246
      %8248 = vdwg.mxu0
      %v8249 = vmax.f32 %v8091, %v8093
      %8250 = vmax.xlane.f32.xlu0 %v8249
      %v8251 = vpop.xlane.xlu0 %8250
      %v8252 = vmax.f32 %v8095, %v8097
      %8253 = vmax.xlane.f32.xlu0 %v8252
      %v8254 = vpop.xlane.xlu0 %8253
      %v8255 = vmax.f32 %v8101, %v8103
      %8256 = vmax.xlane.f32.xlu0 %v8255
      %v8257 = vpop.xlane.xlu0 %8256
      %v8258 = vmax.f32 %v8105, %v8107
      %8259 = vmax.xlane.f32.xlu0 %v8258
      %v8260 = vpop.xlane.xlu0 %8259
      %v8261 = vmax.f32 %v8111, %v8113
      %8262 = vmax.xlane.f32.xlu0 %v8261
      %v8263 = vpop.xlane.xlu0 %8262
      %v8264 = vmax.f32 %v8115, %v8117
      %8265 = vmax.xlane.f32.xlu0 %v8264
      %v8266 = vpop.xlane.xlu0 %8265
      %v8267 = vmax.f32 %v8121, %v8123
      %8268 = vmax.xlane.f32.xlu0 %v8267
      %v8269 = vpop.xlane.xlu0 %8268
      %v8270 = vmax.f32 %v8125, %v8127
      %8271 = vmax.xlane.f32.xlu0 %v8270
      %v8272 = vpop.xlane.xlu0 %8271
      %v8273 = vmax.f32 %v8131, %v8133
      %8274 = vmax.xlane.f32.xlu0 %v8273
      %v8275 = vpop.xlane.xlu0 %8274
      %v8276 = vmax.f32 %v8135, %v8137
      %8277 = vmax.xlane.f32.xlu0 %v8276
      %v8278 = vpop.xlane.xlu0 %8277
      %v8279 = vmax.f32 %v8141, %v8143
      %8280 = vmax.xlane.f32.xlu0 %v8279
      %v8281 = vpop.xlane.xlu0 %8280
      %v8282 = vmax.f32 %v8145, %v8147
      %8283 = vmax.xlane.f32.xlu0 %v8282
      %v8284 = vpop.xlane.xlu0 %8283
      %v8285 = vmax.f32 %v8151, %v8153
      %8286 = vmax.xlane.f32.xlu0 %v8285
      %v8287 = vpop.xlane.xlu0 %8286
      %v8288 = vmax.f32 %v8155, %v8157
      %8289 = vmax.xlane.f32.xlu0 %v8288
      %v8290 = vpop.xlane.xlu0 %8289
      %v8291 = vmax.f32 %v8161, %v8163
      %8292 = vmax.xlane.f32.xlu0 %v8291
      %v8293 = vpop.xlane.xlu0 %8292
      %v8294 = vmax.f32 %v8165, %v8167
      %8295 = vmax.xlane.f32.xlu0 %v8294
      %v8296 = vpop.xlane.xlu0 %8295
      %v8297 = vmax.f32 %v8171, %v8173
      %8298 = vmax.xlane.f32.xlu0 %v8297
      %v8299 = vpop.xlane.xlu0 %8298
      %v8300 = vmax.f32 %v8175, %v8177
      %8301 = vmax.xlane.f32.xlu0 %v8300
      %v8302 = vpop.xlane.xlu0 %8301
      %v8303 = vmax.f32 %v8181, %v8183
      %8304 = vmax.xlane.f32.xlu0 %v8303
      %v8305 = vpop.xlane.xlu0 %8304
      %v8306 = vmax.f32 %v8185, %v8187
      %8307 = vmax.xlane.f32.xlu0 %v8306
      %v8308 = vpop.xlane.xlu0 %8307
      %v8309 = vmax.f32 %v8191, %v8193
      %8310 = vmax.xlane.f32.xlu0 %v8309
      %v8311 = vpop.xlane.xlu0 %8310
      %v8312 = vmax.f32 %v8195, %v8197
      %8313 = vmax.xlane.f32.xlu0 %v8312
      %v8314 = vpop.xlane.xlu0 %8313
      %v8315 = vmax.f32 %v8201, %v8203
      %8316 = vmax.xlane.f32.xlu0 %v8315
      %v8317 = vpop.xlane.xlu0 %8316
      %v8318 = vmax.f32 %v8205, %v8207
      %8319 = vmax.xlane.f32.xlu0 %v8318
      %v8320 = vpop.xlane.xlu0 %8319
      %v8321 = vmax.f32 %v8211, %v8213
      %8322 = vmax.xlane.f32.xlu0 %v8321
      %v8323 = vpop.xlane.xlu0 %8322
      %v8324 = vmax.f32 %v8215, %v8217
      %8325 = vmax.xlane.f32.xlu0 %v8324
      %v8326 = vpop.xlane.xlu0 %8325
      %v8327 = vmax.f32 %v8221, %v8223
      %8328 = vmax.xlane.f32.xlu0 %v8327
      %v8329 = vpop.xlane.xlu0 %8328
      %v8330 = vmax.f32 %v8225, %v8227
      %8331 = vmax.xlane.f32.xlu0 %v8330
      %v8332 = vpop.xlane.xlu0 %8331
      %v8333 = vmax.f32 %v8231, %v8233
      %8334 = vmax.xlane.f32.xlu0 %v8333
      %v8335 = vpop.xlane.xlu0 %8334
      %v8336 = vmax.f32 %v8235, %v8237
      %8337 = vmax.xlane.f32.xlu0 %v8336
      %v8338 = vpop.xlane.xlu0 %8337
      %v8339 = vmax.f32 %v8241, %v8243
      %8340 = vmax.xlane.f32.xlu0 %v8339
      %v8341 = vpop.xlane.xlu0 %8340
      %v8342 = vmax.f32 %v8245, %v8247
      %8343 = vmax.xlane.f32.xlu0 %v8342
      %v8344 = vpop.xlane.xlu0 %8343
      %v8345 = vsub.f32 %v8091, %v8251
      %v8346 = vsub.f32 %v8093, %v8251
      %v8347 = vsub.f32 %v8095, %v8254
      %v8348 = vsub.f32 %v8097, %v8254
      %v8349 = vsub.f32 %v8101, %v8257
      %v8350 = vsub.f32 %v8103, %v8257
      %v8351 = vsub.f32 %v8105, %v8260
      %v8352 = vsub.f32 %v8107, %v8260
      %v8353 = vsub.f32 %v8111, %v8263
      %v8354 = vsub.f32 %v8113, %v8263
      %v8355 = vsub.f32 %v8115, %v8266
      %v8356 = vsub.f32 %v8117, %v8266
      %v8357 = vsub.f32 %v8121, %v8269
      %v8358 = vsub.f32 %v8123, %v8269
      %v8359 = vsub.f32 %v8125, %v8272
      %v8360 = vsub.f32 %v8127, %v8272
      %v8361 = vsub.f32 %v8131, %v8275
      %v8362 = vsub.f32 %v8133, %v8275
      %v8363 = vsub.f32 %v8135, %v8278
      %v8364 = vsub.f32 %v8137, %v8278
      %v8365 = vsub.f32 %v8141, %v8281
      %v8366 = vsub.f32 %v8143, %v8281
      %v8367 = vsub.f32 %v8145, %v8284
      %v8368 = vsub.f32 %v8147, %v8284
      %v8369 = vsub.f32 %v8151, %v8287
      %v8370 = vsub.f32 %v8153, %v8287
      %v8371 = vsub.f32 %v8155, %v8290
      %v8372 = vsub.f32 %v8157, %v8290
      %v8373 = vsub.f32 %v8161, %v8293
      %v8374 = vsub.f32 %v8163, %v8293
      %v8375 = vsub.f32 %v8165, %v8296
      %v8376 = vsub.f32 %v8167, %v8296
      %v8377 = vsub.f32 %v8171, %v8299
      %v8378 = vsub.f32 %v8173, %v8299
      %v8379 = vsub.f32 %v8175, %v8302
      %v8380 = vsub.f32 %v8177, %v8302
      %v8381 = vsub.f32 %v8181, %v8305
      %v8382 = vsub.f32 %v8183, %v8305
      %v8383 = vsub.f32 %v8185, %v8308
      %v8384 = vsub.f32 %v8187, %v8308
      %v8385 = vsub.f32 %v8191, %v8311
      %v8386 = vsub.f32 %v8193, %v8311
      %v8387 = vsub.f32 %v8195, %v8314
      %v8388 = vsub.f32 %v8197, %v8314
      %v8389 = vsub.f32 %v8201, %v8317
      %v8390 = vsub.f32 %v8203, %v8317
      %v8391 = vsub.f32 %v8205, %v8320
      %v8392 = vsub.f32 %v8207, %v8320
      %v8393 = vsub.f32 %v8211, %v8323
      %v8394 = vsub.f32 %v8213, %v8323
      %v8395 = vsub.f32 %v8215, %v8326
      %v8396 = vsub.f32 %v8217, %v8326
      %v8397 = vsub.f32 %v8221, %v8329
      %v8398 = vsub.f32 %v8223, %v8329
      %v8399 = vsub.f32 %v8225, %v8332
      %v8400 = vsub.f32 %v8227, %v8332
      %v8401 = vsub.f32 %v8231, %v8335
      %v8402 = vsub.f32 %v8233, %v8335
      %v8403 = vsub.f32 %v8235, %v8338
      %v8404 = vsub.f32 %v8237, %v8338
      %v8405 = vsub.f32 %v8241, %v8341
      %v8406 = vsub.f32 %v8243, %v8341
      %v8407 = vsub.f32 %v8245, %v8344
      %v8408 = vsub.f32 %v8247, %v8344
      %v8409 = vmul.f32 %v8345, 1.442695
      %v8410 = vpow.pop %v8409
      %v8411 = vmul.f32 %v8346, 1.442695
      %v8412 = vpow.pop %v8411
      %v8413 = vmul.f32 %v8347, 1.442695
      %v8414 = vpow.pop %v8413
      %v8415 = vmul.f32 %v8348, 1.442695
      %v8416 = vpow.pop %v8415
      %v8417 = vmul.f32 %v8349, 1.442695
      %v8418 = vpow.pop %v8417
      %v8419 = vmul.f32 %v8350, 1.442695
      %v8420 = vpow.pop %v8419
      %v8421 = vmul.f32 %v8351, 1.442695
      %v8422 = vpow.pop %v8421
      %v8423 = vmul.f32 %v8352, 1.442695
      %v8424 = vpow.pop %v8423
      %v8425 = vmul.f32 %v8353, 1.442695
      %v8426 = vpow.pop %v8425
      %v8427 = vmul.f32 %v8354, 1.442695
      %v8428 = vpow.pop %v8427
      %v8429 = vmul.f32 %v8355, 1.442695
      %v8430 = vpow.pop %v8429
      %v8431 = vmul.f32 %v8356, 1.442695
      %v8432 = vpow.pop %v8431
      %v8433 = vmul.f32 %v8357, 1.442695
      %v8434 = vpow.pop %v8433
      %v8435 = vmul.f32 %v8358, 1.442695
      %v8436 = vpow.pop %v8435
      %v8437 = vmul.f32 %v8359, 1.442695
      %v8438 = vpow.pop %v8437
      %v8439 = vmul.f32 %v8360, 1.442695
      %v8440 = vpow.pop %v8439
      %v8441 = vmul.f32 %v8361, 1.442695
      %v8442 = vpow.pop %v8441
      %v8443 = vmul.f32 %v8362, 1.442695
      %v8444 = vpow.pop %v8443
      %v8445 = vmul.f32 %v8363, 1.442695
      %v8446 = vpow.pop %v8445
      %v8447 = vmul.f32 %v8364, 1.442695
      %v8448 = vpow.pop %v8447
      %v8449 = vmul.f32 %v8365, 1.442695
      %v8450 = vpow.pop %v8449
      %v8451 = vmul.f32 %v8366, 1.442695
      %v8452 = vpow.pop %v8451
      %v8453 = vmul.f32 %v8367, 1.442695
      %v8454 = vpow.pop %v8453
      %v8455 = vmul.f32 %v8368, 1.442695
      %v8456 = vpow.pop %v8455
      %v8457 = vmul.f32 %v8369, 1.442695
      %v8458 = vpow.pop %v8457
      %v8459 = vmul.f32 %v8370, 1.442695
      %v8460 = vpow.pop %v8459
      %v8461 = vmul.f32 %v8371, 1.442695
      %v8462 = vpow.pop %v8461
      %v8463 = vmul.f32 %v8372, 1.442695
      %v8464 = vpow.pop %v8463
      %v8465 = vmul.f32 %v8373, 1.442695
      %v8466 = vpow.pop %v8465
      %v8467 = vmul.f32 %v8374, 1.442695
      %v8468 = vpow.pop %v8467
      %v8469 = vmul.f32 %v8375, 1.442695
      %v8470 = vpow.pop %v8469
      %v8471 = vmul.f32 %v8376, 1.442695
      %v8472 = vpow.pop %v8471
      %v8473 = vmul.f32 %v8377, 1.442695
      %v8474 = vpow.pop %v8473
      %v8475 = vmul.f32 %v8378, 1.442695
      %v8476 = vpow.pop %v8475
      %v8477 = vmul.f32 %v8379, 1.442695
      %v8478 = vpow.pop %v8477
      %v8479 = vmul.f32 %v8380, 1.442695
      %v8480 = vpow.pop %v8479
      %v8481 = vmul.f32 %v8381, 1.442695
      %v8482 = vpow.pop %v8481
      %v8483 = vmul.f32 %v8382, 1.442695
      %v8484 = vpow.pop %v8483
      %v8485 = vmul.f32 %v8383, 1.442695
      %v8486 = vpow.pop %v8485
      %v8487 = vmul.f32 %v8384, 1.442695
      %v8488 = vpow.pop %v8487
      %v8489 = vmul.f32 %v8385, 1.442695
      %v8490 = vpow.pop %v8489
      %v8491 = vmul.f32 %v8386, 1.442695
      %v8492 = vpow.pop %v8491
      %v8493 = vmul.f32 %v8387, 1.442695
      %v8494 = vpow.pop %v8493
      %v8495 = vmul.f32 %v8388, 1.442695
      %v8496 = vpow.pop %v8495
      %v8497 = vmul.f32 %v8389, 1.442695
      %v8498 = vpow.pop %v8497
      %v8499 = vmul.f32 %v8390, 1.442695
      %v8500 = vpow.pop %v8499
      %v8501 = vmul.f32 %v8391, 1.442695
      %v8502 = vpow.pop %v8501
      %v8503 = vmul.f32 %v8392, 1.442695
      %v8504 = vpow.pop %v8503
      %v8505 = vmul.f32 %v8393, 1.442695
      %v8506 = vpow.pop %v8505
      %v8507 = vmul.f32 %v8394, 1.442695
      %v8508 = vpow.pop %v8507
      %v8509 = vmul.f32 %v8395, 1.442695
      %v8510 = vpow.pop %v8509
      %v8511 = vmul.f32 %v8396, 1.442695
      %v8512 = vpow.pop %v8511
      %v8513 = vmul.f32 %v8397, 1.442695
      %v8514 = vpow.pop %v8513
      %v8515 = vmul.f32 %v8398, 1.442695
      %v8516 = vpow.pop %v8515
      %v8517 = vmul.f32 %v8399, 1.442695
      %v8518 = vpow.pop %v8517
      %v8519 = vmul.f32 %v8400, 1.442695
      %v8520 = vpow.pop %v8519
      %v8521 = vmul.f32 %v8401, 1.442695
      %v8522 = vpow.pop %v8521
      %v8523 = vmul.f32 %v8402, 1.442695
      %v8524 = vpow.pop %v8523
      %v8525 = vmul.f32 %v8403, 1.442695
      %v8526 = vpow.pop %v8525
      %v8527 = vmul.f32 %v8404, 1.442695
      %v8528 = vpow.pop %v8527
      %v8529 = vmul.f32 %v8405, 1.442695
      %v8530 = vpow.pop %v8529
      %v8531 = vmul.f32 %v8406, 1.442695
      %v8532 = vpow.pop %v8531
      %v8533 = vmul.f32 %v8407, 1.442695
      %v8534 = vpow.pop %v8533
      %v8535 = vmul.f32 %v8408, 1.442695
      %v8536 = vpow.pop %v8535
      %v8537 = vadd.f32 %v8410, %v8412
      %8538 = vadd.xlane.f32.xlu0 %v8537
      %v8539 = vpop.xlane.xlu0 %8538
      %v8540 = vadd.f32 %v8414, %v8416
      %8541 = vadd.xlane.f32.xlu0 %v8540
      %v8542 = vpop.xlane.xlu0 %8541
      %v8543 = vadd.f32 %v8418, %v8420
      %8544 = vadd.xlane.f32.xlu0 %v8543
      %v8545 = vpop.xlane.xlu0 %8544
      %v8546 = vadd.f32 %v8422, %v8424
      %8547 = vadd.xlane.f32.xlu0 %v8546
      %v8548 = vpop.xlane.xlu0 %8547
      %v8549 = vadd.f32 %v8426, %v8428
      %8550 = vadd.xlane.f32.xlu0 %v8549
      %v8551 = vpop.xlane.xlu0 %8550
      %v8552 = vadd.f32 %v8430, %v8432
      %8553 = vadd.xlane.f32.xlu0 %v8552
      %v8554 = vpop.xlane.xlu0 %8553
      %v8555 = vadd.f32 %v8434, %v8436
      %8556 = vadd.xlane.f32.xlu0 %v8555
      %v8557 = vpop.xlane.xlu0 %8556
      %v8558 = vadd.f32 %v8438, %v8440
      %8559 = vadd.xlane.f32.xlu0 %v8558
      %v8560 = vpop.xlane.xlu0 %8559
      %v8561 = vadd.f32 %v8442, %v8444
      %8562 = vadd.xlane.f32.xlu0 %v8561
      %v8563 = vpop.xlane.xlu0 %8562
      %v8564 = vadd.f32 %v8446, %v8448
      %8565 = vadd.xlane.f32.xlu0 %v8564
      %v8566 = vpop.xlane.xlu0 %8565
      %v8567 = vadd.f32 %v8450, %v8452
      %8568 = vadd.xlane.f32.xlu0 %v8567
      %v8569 = vpop.xlane.xlu0 %8568
      %v8570 = vadd.f32 %v8454, %v8456
      %8571 = vadd.xlane.f32.xlu0 %v8570
      %v8572 = vpop.xlane.xlu0 %8571
      %v8573 = vadd.f32 %v8458, %v8460
      %8574 = vadd.xlane.f32.xlu0 %v8573
      %v8575 = vpop.xlane.xlu0 %8574
      %v8576 = vadd.f32 %v8462, %v8464
      %8577 = vadd.xlane.f32.xlu0 %v8576
      %v8578 = vpop.xlane.xlu0 %8577
      %v8579 = vadd.f32 %v8466, %v8468
      %8580 = vadd.xlane.f32.xlu0 %v8579
      %v8581 = vpop.xlane.xlu0 %8580
      %v8582 = vadd.f32 %v8470, %v8472
      %8583 = vadd.xlane.f32.xlu0 %v8582
      %v8584 = vpop.xlane.xlu0 %8583
      %v8585 = vadd.f32 %v8474, %v8476
      %8586 = vadd.xlane.f32.xlu0 %v8585
      %v8587 = vpop.xlane.xlu0 %8586
      %v8588 = vadd.f32 %v8478, %v8480
      %8589 = vadd.xlane.f32.xlu0 %v8588
      %v8590 = vpop.xlane.xlu0 %8589
      %v8591 = vadd.f32 %v8482, %v8484
      %8592 = vadd.xlane.f32.xlu0 %v8591
      %v8593 = vpop.xlane.xlu0 %8592
      %v8594 = vadd.f32 %v8486, %v8488
      %8595 = vadd.xlane.f32.xlu0 %v8594
      %v8596 = vpop.xlane.xlu0 %8595
      %v8597 = vadd.f32 %v8490, %v8492
      %8598 = vadd.xlane.f32.xlu0 %v8597
      %v8599 = vpop.xlane.xlu0 %8598
      %v8600 = vadd.f32 %v8494, %v8496
      %8601 = vadd.xlane.f32.xlu0 %v8600
      %v8602 = vpop.xlane.xlu0 %8601
      %v8603 = vadd.f32 %v8498, %v8500
      %8604 = vadd.xlane.f32.xlu0 %v8603
      %v8605 = vpop.xlane.xlu0 %8604
      %v8606 = vadd.f32 %v8502, %v8504
      %8607 = vadd.xlane.f32.xlu0 %v8606
      %v8608 = vpop.xlane.xlu0 %8607
      %v8609 = vadd.f32 %v8506, %v8508
      %8610 = vadd.xlane.f32.xlu0 %v8609
      %v8611 = vpop.xlane.xlu0 %8610
      %v8612 = vadd.f32 %v8510, %v8512
      %8613 = vadd.xlane.f32.xlu0 %v8612
      %v8614 = vpop.xlane.xlu0 %8613
      %v8615 = vadd.f32 %v8514, %v8516
      %8616 = vadd.xlane.f32.xlu0 %v8615
      %v8617 = vpop.xlane.xlu0 %8616
      %v8618 = vadd.f32 %v8518, %v8520
      %8619 = vadd.xlane.f32.xlu0 %v8618
      %v8620 = vpop.xlane.xlu0 %8619
      %v8621 = vadd.f32 %v8522, %v8524
      %8622 = vadd.xlane.f32.xlu0 %v8621
      %v8623 = vpop.xlane.xlu0 %8622
      %v8624 = vadd.f32 %v8526, %v8528
      %8625 = vadd.xlane.f32.xlu0 %v8624
      %v8626 = vpop.xlane.xlu0 %8625
      %v8627 = vadd.f32 %v8530, %v8532
      %8628 = vadd.xlane.f32.xlu0 %v8627
      %v8629 = vpop.xlane.xlu0 %8628
      %v8630 = vadd.f32 %v8534, %v8536
      %8631 = vadd.xlane.f32.xlu0 %v8630
      %v8632 = vpop.xlane.xlu0 %8631
      %v8633 = vpack.c.bf16 %v8414, %v8410
      %v8634 = vpack.c.bf16 %v8416, %v8412
      %v8635 = vpack.c.bf16 %v8422, %v8418
      %v8636 = vpack.c.bf16 %v8424, %v8420
      %v8637 = vpack.c.bf16 %v8430, %v8426
      %v8638 = vpack.c.bf16 %v8432, %v8428
      %v8639 = vpack.c.bf16 %v8438, %v8434
      %v8640 = vpack.c.bf16 %v8440, %v8436
      %v8641 = vpack.c.bf16 %v8446, %v8442
      %v8642 = vpack.c.bf16 %v8448, %v8444
      %v8643 = vpack.c.bf16 %v8454, %v8450
      %v8644 = vpack.c.bf16 %v8456, %v8452
      %v8645 = vpack.c.bf16 %v8462, %v8458
      %v8646 = vpack.c.bf16 %v8464, %v8460
      %v8647 = vpack.c.bf16 %v8470, %v8466
      %v8648 = vpack.c.bf16 %v8472, %v8468
      %v8649 = vpack.c.bf16 %v8478, %v8474
      %v8650 = vpack.c.bf16 %v8480, %v8476
      %v8651 = vpack.c.bf16 %v8486, %v8482
      %v8652 = vpack.c.bf16 %v8488, %v8484
      %v8653 = vpack.c.bf16 %v8494, %v8490
      %v8654 = vpack.c.bf16 %v8496, %v8492
      %v8655 = vpack.c.bf16 %v8502, %v8498
      %v8656 = vpack.c.bf16 %v8504, %v8500
      %v8657 = vpack.c.bf16 %v8510, %v8506
      %v8658 = vpack.c.bf16 %v8512, %v8508
      %v8659 = vpack.c.bf16 %v8518, %v8514
      %v8660 = vpack.c.bf16 %v8520, %v8516
      %v8661 = vpack.c.bf16 %v8526, %v8522
      %v8662 = vpack.c.bf16 %v8528, %v8524
      %v8663 = vpack.c.bf16 %v8534, %v8530
      %v8664 = vpack.c.bf16 %v8536, %v8532
      %8665 = vrot.lane.b32.xlu0 %v585, 36
      %v8666 = vpop.permute.xlu0 %8665
      %8667 = vrot.lane.b32.xlu0 %v586, 36
      %v8668 = vpop.permute.xlu0 %8667
      %8669 = vrot.lane.b32.xlu0 %v587, 36
      %v8670 = vpop.permute.xlu0 %8669
      %8671 = vrot.lane.b32.xlu0 %v588, 36
      %v8672 = vpop.permute.xlu0 %8671
      %8673 = vrot.lane.b32.xlu0 %v589, 36
      %v8674 = vpop.permute.xlu0 %8673
      %8675 = vrot.lane.b32.xlu0 %v590, 36
      %v8676 = vpop.permute.xlu0 %8675
      %8677 = vrot.lane.b32.xlu0 %v591, 36
      %v8678 = vpop.permute.xlu0 %8677
      %8679 = vrot.lane.b32.xlu0 %v592, 36
      %v8680 = vpop.permute.xlu0 %8679
      %8681 = vrot.lane.b32.xlu0 %v593, 36
      %v8682 = vpop.permute.xlu0 %8681
      %8683 = vrot.lane.b32.xlu0 %v594, 36
      %v8684 = vpop.permute.xlu0 %8683
      %8685 = vrot.lane.b32.xlu0 %v595, 36
      %v8686 = vpop.permute.xlu0 %8685
      %8687 = vrot.lane.b32.xlu0 %v596, 36
      %v8688 = vpop.permute.xlu0 %8687
      %8689 = vrot.lane.b32.xlu0 %v597, 36
      %v8690 = vpop.permute.xlu0 %8689
      %8691 = vrot.lane.b32.xlu0 %v598, 36
      %v8692 = vpop.permute.xlu0 %8691
      %8693 = vrot.lane.b32.xlu0 %v599, 36
      %v8694 = vpop.permute.xlu0 %8693
      %8695 = vrot.lane.b32.xlu0 %v600, 36
      %v8696 = vpop.permute.xlu0 %8695
      %8713 = vmatprep.subr.bf16.mxu0 0
      %8714 = vmatpush1.bf16.msra.mxu0 %v8666
      %8715 = vmatprep.subr.bf16.mxu0 0
      %8716 = vmatpush1.bf16.msra.mxu0 %v8668
      %8717 = vmatprep.subr.bf16.mxu0 0
      %8718 = vmatpush1.bf16.msra.mxu0 %v8670
      %8719 = vmatprep.subr.bf16.mxu0 0
      %8720 = vmatpush1.bf16.msra.mxu0 %v8672
      %8721 = vmatprep.subr.bf16.mxu0 0
      %8722 = vmatpush1.bf16.msra.mxu0 %v8674
      %8723 = vmatprep.subr.bf16.mxu0 0
      %8724 = vmatpush1.bf16.msra.mxu0 %v8676
      %8725 = vmatprep.subr.bf16.mxu0 0
      %8726 = vmatpush1.bf16.msra.mxu0 %v8678
      %8727 = vmatprep.subr.bf16.mxu0 0
      %8728 = vmatpush1.bf16.msra.mxu0 %v8680
      %8729 = vmatprep.subr.bf16.mxu0 0
      %8730 = vmatpush1.bf16.msra.mxu0 %v8682
      %8731 = vmatprep.subr.bf16.mxu0 0
      %8732 = vmatpush1.bf16.msra.mxu0 %v8684
      %8733 = vmatprep.subr.bf16.mxu0 0
      %8734 = vmatpush1.bf16.msra.mxu0 %v8686
      %8735 = vmatprep.subr.bf16.mxu0 0
      %8736 = vmatpush1.bf16.msra.mxu0 %v8688
      %8737 = vmatprep.subr.bf16.mxu0 0
      %8738 = vmatpush1.bf16.msra.mxu0 %v8690
      %8739 = vmatprep.subr.bf16.mxu0 0
      %8740 = vmatpush1.bf16.msra.mxu0 %v8692
      %8741 = vmatprep.subr.bf16.mxu0 0
      %8742 = vmatpush1.bf16.msra.mxu0 %v8694
      %8743 = vmatprep.subr.bf16.mxu0 0
      %8744 = vmatpush1.bf16.msra.mxu0 %v8696
      %8745 = vmatprep.mubr.bf16.mxu0 %v8634
      %8746 = vmatmul.mubr.bf16.gmra.mrb[0].mxu0 %v8633
      %v8747 = vpop.f32.mrb[0].mxu0
      %v8748 = vadd.f32 0.0, %v8747
      %v8749 = vpop.f32.mrb[0].mxu0
      %v8750 = vpop.f32.mrb[0].mxu0
      %v8751 = vadd.f32 0.0, %v8750
      %v8752 = vpop.f32.mrb[0].mxu0
      %8753 = vmatprep.mubr.bf16.mxu0 %v8636
      %8754 = vmatmul.mubr.bf16.gmra.mrb[0].mxu0 %v8635
      %v8755 = vpop.f32.mrb[0].mxu0
      %v8756 = vadd.f32 0.0, %v8755
      %v8757 = vpop.f32.mrb[0].mxu0
      %v8758 = vpop.f32.mrb[0].mxu0
      %v8759 = vadd.f32 0.0, %v8758
      %v8760 = vpop.f32.mrb[0].mxu0
      %8761 = vmatprep.mubr.bf16.mxu0 %v8638
      %8762 = vmatmul.mubr.bf16.gmra.mrb[0].mxu0 %v8637
      %v8763 = vpop.f32.mrb[0].mxu0
      %v8764 = vadd.f32 0.0, %v8763
      %v8765 = vpop.f32.mrb[0].mxu0
      %v8766 = vpop.f32.mrb[0].mxu0
      %v8767 = vadd.f32 0.0, %v8766
      %v8768 = vpop.f32.mrb[0].mxu0
      %8769 = vmatprep.mubr.bf16.mxu0 %v8640
      %8770 = vmatmul.mubr.bf16.gmra.mrb[0].mxu0 %v8639
      %v8771 = vpop.f32.mrb[0].mxu0
      %v8772 = vadd.f32 0.0, %v8771
      %v8773 = vpop.f32.mrb[0].mxu0
      %v8774 = vpop.f32.mrb[0].mxu0
      %v8775 = vadd.f32 0.0, %v8774
      %v8776 = vpop.f32.mrb[0].mxu0
      %8777 = vmatprep.mubr.bf16.mxu0 %v8642
      %8778 = vmatmul.mubr.bf16.gmra.mrb[0].mxu0 %v8641
      %v8779 = vpop.f32.mrb[0].mxu0
      %v8780 = vadd.f32 0.0, %v8779
      %v8781 = vpop.f32.mrb[0].mxu0
      %v8782 = vpop.f32.mrb[0].mxu0
      %v8783 = vadd.f32 0.0, %v8782
      %v8784 = vpop.f32.mrb[0].mxu0
      %8785 = vmatprep.mubr.bf16.mxu0 %v8644
      %8786 = vmatmul.mubr.bf16.gmra.mrb[0].mxu0 %v8643
      %v8787 = vpop.f32.mrb[0].mxu0
      %v8788 = vadd.f32 0.0, %v8787
      %v8789 = vpop.f32.mrb[0].mxu0
      %v8790 = vpop.f32.mrb[0].mxu0
      %v8791 = vadd.f32 0.0, %v8790
      %v8792 = vpop.f32.mrb[0].mxu0
      %8793 = vmatprep.mubr.bf16.mxu0 %v8646
      %8794 = vmatmul.mubr.bf16.gmra.mrb[0].mxu0 %v8645
      %v8795 = vpop.f32.mrb[0].mxu0
      %v8796 = vadd.f32 0.0, %v8795
      %v8797 = vpop.f32.mrb[0].mxu0
      %v8798 = vpop.f32.mrb[0].mxu0
      %v8799 = vadd.f32 0.0, %v8798
      %v8800 = vpop.f32.mrb[0].mxu0
      %8801 = vmatprep.mubr.bf16.mxu0 %v8648
      %8802 = vmatmul.mubr.bf16.gmra.mrb[0].mxu0 %v8647
      %v8803 = vpop.f32.mrb[0].mxu0
      %v8804 = vadd.f32 0.0, %v8803
      %v8805 = vpop.f32.mrb[0].mxu0
      %v8806 = vpop.f32.mrb[0].mxu0
      %v8807 = vadd.f32 0.0, %v8806
      %v8808 = vpop.f32.mrb[0].mxu0
      %8809 = vmatprep.mubr.bf16.mxu0 %v8650
      %8810 = vmatmul.mubr.bf16.gmra.mrb[0].mxu0 %v8649
      %v8811 = vpop.f32.mrb[0].mxu0
      %v8812 = vadd.f32 0.0, %v8811
      %v8813 = vpop.f32.mrb[0].mxu0
      %v8814 = vpop.f32.mrb[0].mxu0
      %v8815 = vadd.f32 0.0, %v8814
      %v8816 = vpop.f32.mrb[0].mxu0
      %8817 = vmatprep.mubr.bf16.mxu0 %v8652
      %8818 = vmatmul.mubr.bf16.gmra.mrb[0].mxu0 %v8651
      %v8819 = vpop.f32.mrb[0].mxu0
      %v8820 = vadd.f32 0.0, %v8819
      %v8821 = vpop.f32.mrb[0].mxu0
      %v8822 = vpop.f32.mrb[0].mxu0
      %v8823 = vadd.f32 0.0, %v8822
      %v8824 = vpop.f32.mrb[0].mxu0
      %8825 = vmatprep.mubr.bf16.mxu0 %v8654
      %8826 = vmatmul.mubr.bf16.gmra.mrb[0].mxu0 %v8653
      %v8827 = vpop.f32.mrb[0].mxu0
      %v8828 = vadd.f32 0.0, %v8827
      %v8829 = vpop.f32.mrb[0].mxu0
      %v8830 = vpop.f32.mrb[0].mxu0
      %v8831 = vadd.f32 0.0, %v8830
      %v8832 = vpop.f32.mrb[0].mxu0
      %8833 = vmatprep.mubr.bf16.mxu0 %v8656
      %8834 = vmatmul.mubr.bf16.gmra.mrb[0].mxu0 %v8655
      %v8835 = vpop.f32.mrb[0].mxu0
      %v8836 = vadd.f32 0.0, %v8835
      %v8837 = vpop.f32.mrb[0].mxu0
      %v8838 = vpop.f32.mrb[0].mxu0
      %v8839 = vadd.f32 0.0, %v8838
      %v8840 = vpop.f32.mrb[0].mxu0
      %8841 = vmatprep.mubr.bf16.mxu0 %v8658
      %8842 = vmatmul.mubr.bf16.gmra.mrb[0].mxu0 %v8657
      %v8843 = vpop.f32.mrb[0].mxu0
      %v8844 = vadd.f32 0.0, %v8843
      %v8845 = vpop.f32.mrb[0].mxu0
      %v8846 = vpop.f32.mrb[0].mxu0
      %v8847 = vadd.f32 0.0, %v8846
      %v8848 = vpop.f32.mrb[0].mxu0
      %8849 = vmatprep.mubr.bf16.mxu0 %v8660
      %8850 = vmatmul.mubr.bf16.gmra.mrb[0].mxu0 %v8659
      %v8851 = vpop.f32.mrb[0].mxu0
      %v8852 = vadd.f32 0.0, %v8851
      %v8853 = vpop.f32.mrb[0].mxu0
      %v8854 = vpop.f32.mrb[0].mxu0
      %v8855 = vadd.f32 0.0, %v8854
      %v8856 = vpop.f32.mrb[0].mxu0
      %8857 = vmatprep.mubr.bf16.mxu0 %v8662
      %8858 = vmatmul.mubr.bf16.gmra.mrb[0].mxu0 %v8661
      %v8859 = vpop.f32.mrb[0].mxu0
      %v8860 = vadd.f32 0.0, %v8859
      %v8861 = vpop.f32.mrb[0].mxu0
      %v8862 = vpop.f32.mrb[0].mxu0
      %v8863 = vadd.f32 0.0, %v8862
      %v8864 = vpop.f32.mrb[0].mxu0
      %8865 = vmatprep.mubr.bf16.mxu0 %v8664
      %8866 = vmatmul.mubr.bf16.gmra.mrb[0].mxu0 %v8663
      %v8867 = vpop.f32.mrb[0].mxu0
      %v8868 = vadd.f32 0.0, %v8867
      %v8869 = vpop.f32.mrb[0].mxu0
      %v8870 = vpop.f32.mrb[0].mxu0
      %v8871 = vadd.f32 0.0, %v8870
      %v8872 = vpop.f32.mrb[0].mxu0
      %8873 = vdwg.mxu0
      %v8874 = vrcp.pop %v8539
      %v8875 = vrcp.pop %v8542
      %v8876 = vrcp.pop %v8545
      %v8877 = vrcp.pop %v8548
      %v8878 = vrcp.pop %v8551
      %v8879 = vrcp.pop %v8554
      %v8880 = vrcp.pop %v8557
      %v8881 = vrcp.pop %v8560
      %v8882 = vrcp.pop %v8563
      %v8883 = vrcp.pop %v8566
      %v8884 = vrcp.pop %v8569
      %v8885 = vrcp.pop %v8572
      %v8886 = vrcp.pop %v8575
      %v8887 = vrcp.pop %v8578
      %v8888 = vrcp.pop %v8581
      %v8889 = vrcp.pop %v8584
      %v8890 = vrcp.pop %v8587
      %v8891 = vrcp.pop %v8590
      %v8892 = vrcp.pop %v8593
      %v8893 = vrcp.pop %v8596
      %v8894 = vrcp.pop %v8599
      %v8895 = vrcp.pop %v8602
      %v8896 = vrcp.pop %v8605
      %v8897 = vrcp.pop %v8608
      %v8898 = vrcp.pop %v8611
      %v8899 = vrcp.pop %v8614
      %v8900 = vrcp.pop %v8617
      %v8901 = vrcp.pop %v8620
      %v8902 = vrcp.pop %v8623
      %v8903 = vrcp.pop %v8626
      %v8904 = vrcp.pop %v8629
      %v8905 = vrcp.pop %v8632
      %v8906 = vmul.f32 %v8748, %v8874
      %v8907 = vmul.f32 %v8751, %v8875
      %v8908 = vmul.f32 %v8756, %v8876
      %v8909 = vmul.f32 %v8759, %v8877
      %v8910 = vmul.f32 %v8764, %v8878
      %v8911 = vmul.f32 %v8767, %v8879
      %v8912 = vmul.f32 %v8772, %v8880
      %v8913 = vmul.f32 %v8775, %v8881
      %v8914 = vmul.f32 %v8780, %v8882
      %v8915 = vmul.f32 %v8783, %v8883
      %v8916 = vmul.f32 %v8788, %v8884
      %v8917 = vmul.f32 %v8791, %v8885
      %v8918 = vmul.f32 %v8796, %v8886
      %v8919 = vmul.f32 %v8799, %v8887
      %v8920 = vmul.f32 %v8804, %v8888
      %v8921 = vmul.f32 %v8807, %v8889
      %v8922 = vmul.f32 %v8812, %v8890
      %v8923 = vmul.f32 %v8815, %v8891
      %v8924 = vmul.f32 %v8820, %v8892
      %v8925 = vmul.f32 %v8823, %v8893
      %v8926 = vmul.f32 %v8828, %v8894
      %v8927 = vmul.f32 %v8831, %v8895
      %v8928 = vmul.f32 %v8836, %v8896
      %v8929 = vmul.f32 %v8839, %v8897
      %v8930 = vmul.f32 %v8844, %v8898
      %v8931 = vmul.f32 %v8847, %v8899
      %v8932 = vmul.f32 %v8852, %v8900
      %v8933 = vmul.f32 %v8855, %v8901
      %v8934 = vmul.f32 %v8860, %v8902
      %v8935 = vmul.f32 %v8863, %v8903
      %v8936 = vmul.f32 %v8868, %v8904
      %v8937 = vmul.f32 %v8871, %v8905
      %8970 = vrot.lane.b32.xlu0 %v2654, 4
      %v8971 = vpop.permute.xlu0 %8970
      %8972 = vrot.lane.b32.xlu0 %v2655, 4
      %v8973 = vpop.permute.xlu0 %8972
      %8974 = vrot.lane.b32.xlu0 %v2656, 4
      %v8975 = vpop.permute.xlu0 %8974
      %8976 = vrot.lane.b32.xlu0 %v2657, 4
      %v8977 = vpop.permute.xlu0 %8976
      %8978 = vrot.lane.b32.xlu0 %v2658, 4
      %v8979 = vpop.permute.xlu0 %8978
      %8980 = vrot.lane.b32.xlu0 %v2659, 4
      %v8981 = vpop.permute.xlu0 %8980
      %8982 = vrot.lane.b32.xlu0 %v2660, 4
      %v8983 = vpop.permute.xlu0 %8982
      %8984 = vrot.lane.b32.xlu0 %v2661, 4
      %v8985 = vpop.permute.xlu0 %8984
      %8986 = vrot.lane.b32.xlu0 %v2662, 4
      %v8987 = vpop.permute.xlu0 %8986
      %8988 = vrot.lane.b32.xlu0 %v2663, 4
      %v8989 = vpop.permute.xlu0 %8988
      %8990 = vrot.lane.b32.xlu0 %v2664, 4
      %v8991 = vpop.permute.xlu0 %8990
      %8992 = vrot.lane.b32.xlu0 %v2665, 4
      %v8993 = vpop.permute.xlu0 %8992
      %8994 = vrot.lane.b32.xlu0 %v2666, 4
      %v8995 = vpop.permute.xlu0 %8994
      %8996 = vrot.lane.b32.xlu0 %v2667, 4
      %v8997 = vpop.permute.xlu0 %8996
      %8998 = vrot.lane.b32.xlu0 %v2668, 4
      %v8999 = vpop.permute.xlu0 %8998
      %9000 = vrot.lane.b32.xlu0 %v2669, 4
      %v9001 = vpop.permute.xlu0 %9000
      %9002 = vrot.lane.b32.xlu0 %v2670, 4
      %v9003 = vpop.permute.xlu0 %9002
      %9004 = vrot.lane.b32.xlu0 %v2671, 4
      %v9005 = vpop.permute.xlu0 %9004
      %9006 = vrot.lane.b32.xlu0 %v2672, 4
      %v9007 = vpop.permute.xlu0 %9006
      %9008 = vrot.lane.b32.xlu0 %v2673, 4
      %v9009 = vpop.permute.xlu0 %9008
      %9010 = vrot.lane.b32.xlu0 %v2674, 4
      %v9011 = vpop.permute.xlu0 %9010
      %9012 = vrot.lane.b32.xlu0 %v2675, 4
      %v9013 = vpop.permute.xlu0 %9012
      %9014 = vrot.lane.b32.xlu0 %v2676, 4
      %v9015 = vpop.permute.xlu0 %9014
      %9016 = vrot.lane.b32.xlu0 %v2677, 4
      %v9017 = vpop.permute.xlu0 %9016
      %9018 = vrot.lane.b32.xlu0 %v2678, 4
      %v9019 = vpop.permute.xlu0 %9018
      %9020 = vrot.lane.b32.xlu0 %v2679, 4
      %v9021 = vpop.permute.xlu0 %9020
      %9022 = vrot.lane.b32.xlu0 %v2680, 4
      %v9023 = vpop.permute.xlu0 %9022
      %9024 = vrot.lane.b32.xlu0 %v2681, 4
      %v9025 = vpop.permute.xlu0 %9024
      %9026 = vrot.lane.b32.xlu0 %v2682, 4
      %v9027 = vpop.permute.xlu0 %9026
      %9028 = vrot.lane.b32.xlu0 %v2683, 4
      %v9029 = vpop.permute.xlu0 %9028
      %9030 = vrot.lane.b32.xlu0 %v2684, 4
      %v9031 = vpop.permute.xlu0 %9030
      %9032 = vrot.lane.b32.xlu0 %v2685, 4
      %v9033 = vpop.permute.xlu0 %9032
      %9098 = vrot.lane.b32.xlu0 %v3696, 8
      %v9099 = vpop.permute.xlu0 %9098
      %9100 = vrot.lane.b32.xlu0 %v3697, 8
      %v9101 = vpop.permute.xlu0 %9100
      %9102 = vrot.lane.b32.xlu0 %v3698, 8
      %v9103 = vpop.permute.xlu0 %9102
      %9104 = vrot.lane.b32.xlu0 %v3699, 8
      %v9105 = vpop.permute.xlu0 %9104
      %9106 = vrot.lane.b32.xlu0 %v3700, 8
      %v9107 = vpop.permute.xlu0 %9106
      %9108 = vrot.lane.b32.xlu0 %v3701, 8
      %v9109 = vpop.permute.xlu0 %9108
      %9110 = vrot.lane.b32.xlu0 %v3702, 8
      %v9111 = vpop.permute.xlu0 %9110
      %9112 = vrot.lane.b32.xlu0 %v3703, 8
      %v9113 = vpop.permute.xlu0 %9112
      %9114 = vrot.lane.b32.xlu0 %v3704, 8
      %v9115 = vpop.permute.xlu0 %9114
      %9116 = vrot.lane.b32.xlu0 %v3705, 8
      %v9117 = vpop.permute.xlu0 %9116
      %9118 = vrot.lane.b32.xlu0 %v3706, 8
      %v9119 = vpop.permute.xlu0 %9118
      %9120 = vrot.lane.b32.xlu0 %v3707, 8
      %v9121 = vpop.permute.xlu0 %9120
      %9122 = vrot.lane.b32.xlu0 %v3708, 8
      %v9123 = vpop.permute.xlu0 %9122
      %9124 = vrot.lane.b32.xlu0 %v3709, 8
      %v9125 = vpop.permute.xlu0 %9124
      %9126 = vrot.lane.b32.xlu0 %v3710, 8
      %v9127 = vpop.permute.xlu0 %9126
      %9128 = vrot.lane.b32.xlu0 %v3711, 8
      %v9129 = vpop.permute.xlu0 %9128
      %9130 = vrot.lane.b32.xlu0 %v3712, 8
      %v9131 = vpop.permute.xlu0 %9130
      %9132 = vrot.lane.b32.xlu0 %v3713, 8
      %v9133 = vpop.permute.xlu0 %9132
      %9134 = vrot.lane.b32.xlu0 %v3714, 8
      %v9135 = vpop.permute.xlu0 %9134
      %9136 = vrot.lane.b32.xlu0 %v3715, 8
      %v9137 = vpop.permute.xlu0 %9136
      %9138 = vrot.lane.b32.xlu0 %v3716, 8
      %v9139 = vpop.permute.xlu0 %9138
      %9140 = vrot.lane.b32.xlu0 %v3717, 8
      %v9141 = vpop.permute.xlu0 %9140
      %9142 = vrot.lane.b32.xlu0 %v3718, 8
      %v9143 = vpop.permute.xlu0 %9142
      %9144 = vrot.lane.b32.xlu0 %v3719, 8
      %v9145 = vpop.permute.xlu0 %9144
      %9146 = vrot.lane.b32.xlu0 %v3720, 8
      %v9147 = vpop.permute.xlu0 %9146
      %9148 = vrot.lane.b32.xlu0 %v3721, 8
      %v9149 = vpop.permute.xlu0 %9148
      %9150 = vrot.lane.b32.xlu0 %v3722, 8
      %v9151 = vpop.permute.xlu0 %9150
      %9152 = vrot.lane.b32.xlu0 %v3723, 8
      %v9153 = vpop.permute.xlu0 %9152
      %9154 = vrot.lane.b32.xlu0 %v3724, 8
      %v9155 = vpop.permute.xlu0 %9154
      %9156 = vrot.lane.b32.xlu0 %v3725, 8
      %v9157 = vpop.permute.xlu0 %9156
      %9158 = vrot.lane.b32.xlu0 %v3726, 8
      %v9159 = vpop.permute.xlu0 %9158
      %9160 = vrot.lane.b32.xlu0 %v3727, 8
      %v9161 = vpop.permute.xlu0 %9160
      %9226 = vrot.lane.b32.xlu0 %v4738, 12
      %v9227 = vpop.permute.xlu0 %9226
      %9228 = vrot.lane.b32.xlu0 %v4739, 12
      %v9229 = vpop.permute.xlu0 %9228
      %9230 = vrot.lane.b32.xlu0 %v4740, 12
      %v9231 = vpop.permute.xlu0 %9230
      %9232 = vrot.lane.b32.xlu0 %v4741, 12
      %v9233 = vpop.permute.xlu0 %9232
      %9234 = vrot.lane.b32.xlu0 %v4742, 12
      %v9235 = vpop.permute.xlu0 %9234
      %9236 = vrot.lane.b32.xlu0 %v4743, 12
      %v9237 = vpop.permute.xlu0 %9236
      %9238 = vrot.lane.b32.xlu0 %v4744, 12
      %v9239 = vpop.permute.xlu0 %9238
      %9240 = vrot.lane.b32.xlu0 %v4745, 12
      %v9241 = vpop.permute.xlu0 %9240
      %9242 = vrot.lane.b32.xlu0 %v4746, 12
      %v9243 = vpop.permute.xlu0 %9242
      %9244 = vrot.lane.b32.xlu0 %v4747, 12
      %v9245 = vpop.permute.xlu0 %9244
      %9246 = vrot.lane.b32.xlu0 %v4748, 12
      %v9247 = vpop.permute.xlu0 %9246
      %9248 = vrot.lane.b32.xlu0 %v4749, 12
      %v9249 = vpop.permute.xlu0 %9248
      %9250 = vrot.lane.b32.xlu0 %v4750, 12
      %v9251 = vpop.permute.xlu0 %9250
      %9252 = vrot.lane.b32.xlu0 %v4751, 12
      %v9253 = vpop.permute.xlu0 %9252
      %9254 = vrot.lane.b32.xlu0 %v4752, 12
      %v9255 = vpop.permute.xlu0 %9254
      %9256 = vrot.lane.b32.xlu0 %v4753, 12
      %v9257 = vpop.permute.xlu0 %9256
      %9258 = vrot.lane.b32.xlu0 %v4754, 12
      %v9259 = vpop.permute.xlu0 %9258
      %9260 = vrot.lane.b32.xlu0 %v4755, 12
      %v9261 = vpop.permute.xlu0 %9260
      %9262 = vrot.lane.b32.xlu0 %v4756, 12
      %v9263 = vpop.permute.xlu0 %9262
      %9264 = vrot.lane.b32.xlu0 %v4757, 12
      %v9265 = vpop.permute.xlu0 %9264
      %9266 = vrot.lane.b32.xlu0 %v4758, 12
      %v9267 = vpop.permute.xlu0 %9266
      %9268 = vrot.lane.b32.xlu0 %v4759, 12
      %v9269 = vpop.permute.xlu0 %9268
      %9270 = vrot.lane.b32.xlu0 %v4760, 12
      %v9271 = vpop.permute.xlu0 %9270
      %9272 = vrot.lane.b32.xlu0 %v4761, 12
      %v9273 = vpop.permute.xlu0 %9272
      %9274 = vrot.lane.b32.xlu0 %v4762, 12
      %v9275 = vpop.permute.xlu0 %9274
      %9276 = vrot.lane.b32.xlu0 %v4763, 12
      %v9277 = vpop.permute.xlu0 %9276
      %9278 = vrot.lane.b32.xlu0 %v4764, 12
      %v9279 = vpop.permute.xlu0 %9278
      %9280 = vrot.lane.b32.xlu0 %v4765, 12
      %v9281 = vpop.permute.xlu0 %9280
      %9282 = vrot.lane.b32.xlu0 %v4766, 12
      %v9283 = vpop.permute.xlu0 %9282
      %9284 = vrot.lane.b32.xlu0 %v4767, 12
      %v9285 = vpop.permute.xlu0 %9284
      %9286 = vrot.lane.b32.xlu0 %v4768, 12
      %v9287 = vpop.permute.xlu0 %9286
      %9288 = vrot.lane.b32.xlu0 %v4769, 12
      %v9289 = vpop.permute.xlu0 %9288
      %9354 = vrot.lane.b32.xlu0 %v5780, 16
      %v9355 = vpop.permute.xlu0 %9354
      %9356 = vrot.lane.b32.xlu0 %v5781, 16
      %v9357 = vpop.permute.xlu0 %9356
      %9358 = vrot.lane.b32.xlu0 %v5782, 16
      %v9359 = vpop.permute.xlu0 %9358
      %9360 = vrot.lane.b32.xlu0 %v5783, 16
      %v9361 = vpop.permute.xlu0 %9360
      %9362 = vrot.lane.b32.xlu0 %v5784, 16
      %v9363 = vpop.permute.xlu0 %9362
      %9364 = vrot.lane.b32.xlu0 %v5785, 16
      %v9365 = vpop.permute.xlu0 %9364
      %9366 = vrot.lane.b32.xlu0 %v5786, 16
      %v9367 = vpop.permute.xlu0 %9366
      %9368 = vrot.lane.b32.xlu0 %v5787, 16
      %v9369 = vpop.permute.xlu0 %9368
      %9370 = vrot.lane.b32.xlu0 %v5788, 16
      %v9371 = vpop.permute.xlu0 %9370
      %9372 = vrot.lane.b32.xlu0 %v5789, 16
      %v9373 = vpop.permute.xlu0 %9372
      %9374 = vrot.lane.b32.xlu0 %v5790, 16
      %v9375 = vpop.permute.xlu0 %9374
      %9376 = vrot.lane.b32.xlu0 %v5791, 16
      %v9377 = vpop.permute.xlu0 %9376
      %9378 = vrot.lane.b32.xlu0 %v5792, 16
      %v9379 = vpop.permute.xlu0 %9378
      %9380 = vrot.lane.b32.xlu0 %v5793, 16
      %v9381 = vpop.permute.xlu0 %9380
      %9382 = vrot.lane.b32.xlu0 %v5794, 16
      %v9383 = vpop.permute.xlu0 %9382
      %9384 = vrot.lane.b32.xlu0 %v5795, 16
      %v9385 = vpop.permute.xlu0 %9384
      %9386 = vrot.lane.b32.xlu0 %v5796, 16
      %v9387 = vpop.permute.xlu0 %9386
      %9388 = vrot.lane.b32.xlu0 %v5797, 16
      %v9389 = vpop.permute.xlu0 %9388
      %9390 = vrot.lane.b32.xlu0 %v5798, 16
      %v9391 = vpop.permute.xlu0 %9390
      %9392 = vrot.lane.b32.xlu0 %v5799, 16
      %v9393 = vpop.permute.xlu0 %9392
      %9394 = vrot.lane.b32.xlu0 %v5800, 16
      %v9395 = vpop.permute.xlu0 %9394
      %9396 = vrot.lane.b32.xlu0 %v5801, 16
      %v9397 = vpop.permute.xlu0 %9396
      %9398 = vrot.lane.b32.xlu0 %v5802, 16
      %v9399 = vpop.permute.xlu0 %9398
      %9400 = vrot.lane.b32.xlu0 %v5803, 16
      %v9401 = vpop.permute.xlu0 %9400
      %9402 = vrot.lane.b32.xlu0 %v5804, 16
      %v9403 = vpop.permute.xlu0 %9402
      %9404 = vrot.lane.b32.xlu0 %v5805, 16
      %v9405 = vpop.permute.xlu0 %9404
      %9406 = vrot.lane.b32.xlu0 %v5806, 16
      %v9407 = vpop.permute.xlu0 %9406
      %9408 = vrot.lane.b32.xlu0 %v5807, 16
      %v9409 = vpop.permute.xlu0 %9408
      %9410 = vrot.lane.b32.xlu0 %v5808, 16
      %v9411 = vpop.permute.xlu0 %9410
      %9412 = vrot.lane.b32.xlu0 %v5809, 16
      %v9413 = vpop.permute.xlu0 %9412
      %9414 = vrot.lane.b32.xlu0 %v5810, 16
      %v9415 = vpop.permute.xlu0 %9414
      %9416 = vrot.lane.b32.xlu0 %v5811, 16
      %v9417 = vpop.permute.xlu0 %9416
      %9482 = vrot.lane.b32.xlu0 %v6822, 20
      %v9483 = vpop.permute.xlu0 %9482
      %9484 = vrot.lane.b32.xlu0 %v6823, 20
      %v9485 = vpop.permute.xlu0 %9484
      %9486 = vrot.lane.b32.xlu0 %v6824, 20
      %v9487 = vpop.permute.xlu0 %9486
      %9488 = vrot.lane.b32.xlu0 %v6825, 20
      %v9489 = vpop.permute.xlu0 %9488
      %9490 = vrot.lane.b32.xlu0 %v6826, 20
      %v9491 = vpop.permute.xlu0 %9490
      %9492 = vrot.lane.b32.xlu0 %v6827, 20
      %v9493 = vpop.permute.xlu0 %9492
      %9494 = vrot.lane.b32.xlu0 %v6828, 20
      %v9495 = vpop.permute.xlu0 %9494
      %9496 = vrot.lane.b32.xlu0 %v6829, 20
      %v9497 = vpop.permute.xlu0 %9496
      %9498 = vrot.lane.b32.xlu0 %v6830, 20
      %v9499 = vpop.permute.xlu0 %9498
      %9500 = vrot.lane.b32.xlu0 %v6831, 20
      %v9501 = vpop.permute.xlu0 %9500
      %9502 = vrot.lane.b32.xlu0 %v6832, 20
      %v9503 = vpop.permute.xlu0 %9502
      %9504 = vrot.lane.b32.xlu0 %v6833, 20
      %v9505 = vpop.permute.xlu0 %9504
      %9506 = vrot.lane.b32.xlu0 %v6834, 20
      %v9507 = vpop.permute.xlu0 %9506
      %9508 = vrot.lane.b32.xlu0 %v6835, 20
      %v9509 = vpop.permute.xlu0 %9508
      %9510 = vrot.lane.b32.xlu0 %v6836, 20
      %v9511 = vpop.permute.xlu0 %9510
      %9512 = vrot.lane.b32.xlu0 %v6837, 20
      %v9513 = vpop.permute.xlu0 %9512
      %9514 = vrot.lane.b32.xlu0 %v6838, 20
      %v9515 = vpop.permute.xlu0 %9514
      %9516 = vrot.lane.b32.xlu0 %v6839, 20
      %v9517 = vpop.permute.xlu0 %9516
      %9518 = vrot.lane.b32.xlu0 %v6840, 20
      %v9519 = vpop.permute.xlu0 %9518
      %9520 = vrot.lane.b32.xlu0 %v6841, 20
      %v9521 = vpop.permute.xlu0 %9520
      %9522 = vrot.lane.b32.xlu0 %v6842, 20
      %v9523 = vpop.permute.xlu0 %9522
      %9524 = vrot.lane.b32.xlu0 %v6843, 20
      %v9525 = vpop.permute.xlu0 %9524
      %9526 = vrot.lane.b32.xlu0 %v6844, 20
      %v9527 = vpop.permute.xlu0 %9526
      %9528 = vrot.lane.b32.xlu0 %v6845, 20
      %v9529 = vpop.permute.xlu0 %9528
      %9530 = vrot.lane.b32.xlu0 %v6846, 20
      %v9531 = vpop.permute.xlu0 %9530
      %9532 = vrot.lane.b32.xlu0 %v6847, 20
      %v9533 = vpop.permute.xlu0 %9532
      %9534 = vrot.lane.b32.xlu0 %v6848, 20
      %v9535 = vpop.permute.xlu0 %9534
      %9536 = vrot.lane.b32.xlu0 %v6849, 20
      %v9537 = vpop.permute.xlu0 %9536
      %9538 = vrot.lane.b32.xlu0 %v6850, 20
      %v9539 = vpop.permute.xlu0 %9538
      %9540 = vrot.lane.b32.xlu0 %v6851, 20
      %v9541 = vpop.permute.xlu0 %9540
      %9542 = vrot.lane.b32.xlu0 %v6852, 20
      %v9543 = vpop.permute.xlu0 %9542
      %9544 = vrot.lane.b32.xlu0 %v6853, 20
      %v9545 = vpop.permute.xlu0 %9544
      %9610 = vrot.lane.b32.xlu0 %v7864, 24
      %v9611 = vpop.permute.xlu0 %9610
      %9612 = vrot.lane.b32.xlu0 %v7865, 24
      %v9613 = vpop.permute.xlu0 %9612
      %9614 = vrot.lane.b32.xlu0 %v7866, 24
      %v9615 = vpop.permute.xlu0 %9614
      %9616 = vrot.lane.b32.xlu0 %v7867, 24
      %v9617 = vpop.permute.xlu0 %9616
      %9618 = vrot.lane.b32.xlu0 %v7868, 24
      %v9619 = vpop.permute.xlu0 %9618
      %9620 = vrot.lane.b32.xlu0 %v7869, 24
      %v9621 = vpop.permute.xlu0 %9620
      %9622 = vrot.lane.b32.xlu0 %v7870, 24
      %v9623 = vpop.permute.xlu0 %9622
      %9624 = vrot.lane.b32.xlu0 %v7871, 24
      %v9625 = vpop.permute.xlu0 %9624
      %9626 = vrot.lane.b32.xlu0 %v7872, 24
      %v9627 = vpop.permute.xlu0 %9626
      %9628 = vrot.lane.b32.xlu0 %v7873, 24
      %v9629 = vpop.permute.xlu0 %9628
      %9630 = vrot.lane.b32.xlu0 %v7874, 24
      %v9631 = vpop.permute.xlu0 %9630
      %9632 = vrot.lane.b32.xlu0 %v7875, 24
      %v9633 = vpop.permute.xlu0 %9632
      %9634 = vrot.lane.b32.xlu0 %v7876, 24
      %v9635 = vpop.permute.xlu0 %9634
      %9636 = vrot.lane.b32.xlu0 %v7877, 24
      %v9637 = vpop.permute.xlu0 %9636
      %9638 = vrot.lane.b32.xlu0 %v7878, 24
      %v9639 = vpop.permute.xlu0 %9638
      %9640 = vrot.lane.b32.xlu0 %v7879, 24
      %v9641 = vpop.permute.xlu0 %9640
      %9642 = vrot.lane.b32.xlu0 %v7880, 24
      %v9643 = vpop.permute.xlu0 %9642
      %9644 = vrot.lane.b32.xlu0 %v7881, 24
      %v9645 = vpop.permute.xlu0 %9644
      %9646 = vrot.lane.b32.xlu0 %v7882, 24
      %v9647 = vpop.permute.xlu0 %9646
      %9648 = vrot.lane.b32.xlu0 %v7883, 24
      %v9649 = vpop.permute.xlu0 %9648
      %9650 = vrot.lane.b32.xlu0 %v7884, 24
      %v9651 = vpop.permute.xlu0 %9650
      %9652 = vrot.lane.b32.xlu0 %v7885, 24
      %v9653 = vpop.permute.xlu0 %9652
      %9654 = vrot.lane.b32.xlu0 %v7886, 24
      %v9655 = vpop.permute.xlu0 %9654
      %9656 = vrot.lane.b32.xlu0 %v7887, 24
      %v9657 = vpop.permute.xlu0 %9656
      %9658 = vrot.lane.b32.xlu0 %v7888, 24
      %v9659 = vpop.permute.xlu0 %9658
      %9660 = vrot.lane.b32.xlu0 %v7889, 24
      %v9661 = vpop.permute.xlu0 %9660
      %9662 = vrot.lane.b32.xlu0 %v7890, 24
      %v9663 = vpop.permute.xlu0 %9662
      %9664 = vrot.lane.b32.xlu0 %v7891, 24
      %v9665 = vpop.permute.xlu0 %9664
      %9666 = vrot.lane.b32.xlu0 %v7892, 24
      %v9667 = vpop.permute.xlu0 %9666
      %9668 = vrot.lane.b32.xlu0 %v7893, 24
      %v9669 = vpop.permute.xlu0 %9668
      %9670 = vrot.lane.b32.xlu0 %v7894, 24
      %v9671 = vpop.permute.xlu0 %9670
      %9672 = vrot.lane.b32.xlu0 %v7895, 24
      %v9673 = vpop.permute.xlu0 %9672
      %9738 = vrot.lane.b32.xlu0 %v8906, 28
      %v9739 = vpop.permute.xlu0 %9738
      %9740 = vrot.lane.b32.xlu0 %v8907, 28
      %v9741 = vpop.permute.xlu0 %9740
      %9742 = vrot.lane.b32.xlu0 %v8908, 28
      %v9743 = vpop.permute.xlu0 %9742
      %9744 = vrot.lane.b32.xlu0 %v8909, 28
      %v9745 = vpop.permute.xlu0 %9744
      %9746 = vrot.lane.b32.xlu0 %v8910, 28
      %v9747 = vpop.permute.xlu0 %9746
      %9748 = vrot.lane.b32.xlu0 %v8911, 28
      %v9749 = vpop.permute.xlu0 %9748
      %9750 = vrot.lane.b32.xlu0 %v8912, 28
      %v9751 = vpop.permute.xlu0 %9750
      %9752 = vrot.lane.b32.xlu0 %v8913, 28
      %v9753 = vpop.permute.xlu0 %9752
      %9754 = vrot.lane.b32.xlu0 %v8914, 28
      %v9755 = vpop.permute.xlu0 %9754
      %9756 = vrot.lane.b32.xlu0 %v8915, 28
      %v9757 = vpop.permute.xlu0 %9756
      %9758 = vrot.lane.b32.xlu0 %v8916, 28
      %v9759 = vpop.permute.xlu0 %9758
      %9760 = vrot.lane.b32.xlu0 %v8917, 28
      %v9761 = vpop.permute.xlu0 %9760
      %9762 = vrot.lane.b32.xlu0 %v8918, 28
      %v9763 = vpop.permute.xlu0 %9762
      %9764 = vrot.lane.b32.xlu0 %v8919, 28
      %v9765 = vpop.permute.xlu0 %9764
      %9766 = vrot.lane.b32.xlu0 %v8920, 28
      %v9767 = vpop.permute.xlu0 %9766
      %9768 = vrot.lane.b32.xlu0 %v8921, 28
      %v9769 = vpop.permute.xlu0 %9768
      %9770 = vrot.lane.b32.xlu0 %v8922, 28
      %v9771 = vpop.permute.xlu0 %9770
      %9772 = vrot.lane.b32.xlu0 %v8923, 28
      %v9773 = vpop.permute.xlu0 %9772
      %9774 = vrot.lane.b32.xlu0 %v8924, 28
      %v9775 = vpop.permute.xlu0 %9774
      %9776 = vrot.lane.b32.xlu0 %v8925, 28
      %v9777 = vpop.permute.xlu0 %9776
      %9778 = vrot.lane.b32.xlu0 %v8926, 28
      %v9779 = vpop.permute.xlu0 %9778
      %9780 = vrot.lane.b32.xlu0 %v8927, 28
      %v9781 = vpop.permute.xlu0 %9780
      %9782 = vrot.lane.b32.xlu0 %v8928, 28
      %v9783 = vpop.permute.xlu0 %9782
      %9784 = vrot.lane.b32.xlu0 %v8929, 28
      %v9785 = vpop.permute.xlu0 %9784
      %9786 = vrot.lane.b32.xlu0 %v8930, 28
      %v9787 = vpop.permute.xlu0 %9786
      %9788 = vrot.lane.b32.xlu0 %v8931, 28
      %v9789 = vpop.permute.xlu0 %9788
      %9790 = vrot.lane.b32.xlu0 %v8932, 28
      %v9791 = vpop.permute.xlu0 %9790
      %9792 = vrot.lane.b32.xlu0 %v8933, 28
      %v9793 = vpop.permute.xlu0 %9792
      %9794 = vrot.lane.b32.xlu0 %v8934, 28
      %v9795 = vpop.permute.xlu0 %9794
      %9796 = vrot.lane.b32.xlu0 %v8935, 28
      %v9797 = vpop.permute.xlu0 %9796
      %9798 = vrot.lane.b32.xlu0 %v8936, 28
      %v9799 = vpop.permute.xlu0 %9798
      %9800 = vrot.lane.b32.xlu0 %v8937, 28
      %v9801 = vpop.permute.xlu0 %9800
      %v9834 = vsel %vm649, %v1596, %v8971
      %v9835 = vsel %vm649, %v1597, %v8973
      %v9836 = vsel %vm649, %v1598, %v8975
      %v9837 = vsel %vm649, %v1599, %v8977
      %v9838 = vsel %vm649, %v1600, %v8979
      %v9839 = vsel %vm649, %v1601, %v8981
      %v9840 = vsel %vm649, %v1602, %v8983
      %v9841 = vsel %vm649, %v1603, %v8985
      %v9842 = vsel %vm649, %v1604, %v8987
      %v9843 = vsel %vm649, %v1605, %v8989
      %v9844 = vsel %vm649, %v1606, %v8991
      %v9845 = vsel %vm649, %v1607, %v8993
      %v9846 = vsel %vm649, %v1608, %v8995
      %v9847 = vsel %vm649, %v1609, %v8997
      %v9848 = vsel %vm649, %v1610, %v8999
      %v9849 = vsel %vm649, %v1611, %v9001
      %v9850 = vsel %vm649, %v1612, %v9003
      %v9851 = vsel %vm649, %v1613, %v9005
      %v9852 = vsel %vm649, %v1614, %v9007
      %v9853 = vsel %vm649, %v1615, %v9009
      %v9854 = vsel %vm649, %v1616, %v9011
      %v9855 = vsel %vm649, %v1617, %v9013
      %v9856 = vsel %vm649, %v1618, %v9015
      %v9857 = vsel %vm649, %v1619, %v9017
      %v9858 = vsel %vm649, %v1620, %v9019
      %v9859 = vsel %vm649, %v1621, %v9021
      %v9860 = vsel %vm649, %v1622, %v9023
      %v9861 = vsel %vm649, %v1623, %v9025
      %v9862 = vsel %vm649, %v1624, %v9027
      %v9863 = vsel %vm649, %v1625, %v9029
      %v9864 = vsel %vm649, %v1626, %v9031
      %v9865 = vsel %vm649, %v1627, %v9033
      %vm9866 = vcmask 64512
      %v9867 = vsel %vm9866, %v9834, %v9099
      %v9868 = vsel %vm9866, %v9835, %v9101
      %v9869 = vsel %vm9866, %v9836, %v9103
      %v9870 = vsel %vm9866, %v9837, %v9105
      %v9871 = vsel %vm9866, %v9838, %v9107
      %v9872 = vsel %vm9866, %v9839, %v9109
      %v9873 = vsel %vm9866, %v9840, %v9111
      %v9874 = vsel %vm9866, %v9841, %v9113
      %v9875 = vsel %vm9866, %v9842, %v9115
      %v9876 = vsel %vm9866, %v9843, %v9117
      %v9877 = vsel %vm9866, %v9844, %v9119
      %v9878 = vsel %vm9866, %v9845, %v9121
      %v9879 = vsel %vm9866, %v9846, %v9123
      %v9880 = vsel %vm9866, %v9847, %v9125
      %v9881 = vsel %vm9866, %v9848, %v9127
      %v9882 = vsel %vm9866, %v9849, %v9129
      %v9883 = vsel %vm9866, %v9850, %v9131
      %v9884 = vsel %vm9866, %v9851, %v9133
      %v9885 = vsel %vm9866, %v9852, %v9135
      %v9886 = vsel %vm9866, %v9853, %v9137
      %v9887 = vsel %vm9866, %v9854, %v9139
      %v9888 = vsel %vm9866, %v9855, %v9141
      %v9889 = vsel %vm9866, %v9856, %v9143
      %v9890 = vsel %vm9866, %v9857, %v9145
      %v9891 = vsel %vm9866, %v9858, %v9147
      %v9892 = vsel %vm9866, %v9859, %v9149
      %v9893 = vsel %vm9866, %v9860, %v9151
      %v9894 = vsel %vm9866, %v9861, %v9153
      %v9895 = vsel %vm9866, %v9862, %v9155
      %v9896 = vsel %vm9866, %v9863, %v9157
      %v9897 = vsel %vm9866, %v9864, %v9159
      %v9898 = vsel %vm9866, %v9865, %v9161
      %vm9899 = vcmask 97280
      %v9900 = vsel %vm9899, %v9867, %v9227
      %v9901 = vsel %vm9899, %v9868, %v9229
      %v9902 = vsel %vm9899, %v9869, %v9231
      %v9903 = vsel %vm9899, %v9870, %v9233
      %v9904 = vsel %vm9899, %v9871, %v9235
      %v9905 = vsel %vm9899, %v9872, %v9237
      %v9906 = vsel %vm9899, %v9873, %v9239
      %v9907 = vsel %vm9899, %v9874, %v9241
      %v9908 = vsel %vm9899, %v9875, %v9243
      %v9909 = vsel %vm9899, %v9876, %v9245
      %v9910 = vsel %vm9899, %v9877, %v9247
      %v9911 = vsel %vm9899, %v9878, %v9249
      %v9912 = vsel %vm9899, %v9879, %v9251
      %v9913 = vsel %vm9899, %v9880, %v9253
      %v9914 = vsel %vm9899, %v9881, %v9255
      %v9915 = vsel %vm9899, %v9882, %v9257
      %v9916 = vsel %vm9899, %v9883, %v9259
      %v9917 = vsel %vm9899, %v9884, %v9261
      %v9918 = vsel %vm9899, %v9885, %v9263
      %v9919 = vsel %vm9899, %v9886, %v9265
      %v9920 = vsel %vm9899, %v9887, %v9267
      %v9921 = vsel %vm9899, %v9888, %v9269
      %v9922 = vsel %vm9899, %v9889, %v9271
      %v9923 = vsel %vm9899, %v9890, %v9273
      %v9924 = vsel %vm9899, %v9891, %v9275
      %v9925 = vsel %vm9899, %v9892, %v9277
      %v9926 = vsel %vm9899, %v9893, %v9279
      %v9927 = vsel %vm9899, %v9894, %v9281
      %v9928 = vsel %vm9899, %v9895, %v9283
      %v9929 = vsel %vm9899, %v9896, %v9285
      %v9930 = vsel %vm9899, %v9897, %v9287
      %v9931 = vsel %vm9899, %v9898, %v9289
      %vm9932 = vcmask 130048
      %v9933 = vsel %vm9932, %v9900, %v9355
      %v9934 = vsel %vm9932, %v9901, %v9357
      %v9935 = vsel %vm9932, %v9902, %v9359
      %v9936 = vsel %vm9932, %v9903, %v9361
      %v9937 = vsel %vm9932, %v9904, %v9363
      %v9938 = vsel %vm9932, %v9905, %v9365
      %v9939 = vsel %vm9932, %v9906, %v9367
      %v9940 = vsel %vm9932, %v9907, %v9369
      %v9941 = vsel %vm9932, %v9908, %v9371
      %v9942 = vsel %vm9932, %v9909, %v9373
      %v9943 = vsel %vm9932, %v9910, %v9375
      %v9944 = vsel %vm9932, %v9911, %v9377
      %v9945 = vsel %vm9932, %v9912, %v9379
      %v9946 = vsel %vm9932, %v9913, %v9381
      %v9947 = vsel %vm9932, %v9914, %v9383
      %v9948 = vsel %vm9932, %v9915, %v9385
      %v9949 = vsel %vm9932, %v9916, %v9387
      %v9950 = vsel %vm9932, %v9917, %v9389
      %v9951 = vsel %vm9932, %v9918, %v9391
      %v9952 = vsel %vm9932, %v9919, %v9393
      %v9953 = vsel %vm9932, %v9920, %v9395
      %v9954 = vsel %vm9932, %v9921, %v9397
      %v9955 = vsel %vm9932, %v9922, %v9399
      %v9956 = vsel %vm9932, %v9923, %v9401
      %v9957 = vsel %vm9932, %v9924, %v9403
      %v9958 = vsel %vm9932, %v9925, %v9405
      %v9959 = vsel %vm9932, %v9926, %v9407
      %v9960 = vsel %vm9932, %v9927, %v9409
      %v9961 = vsel %vm9932, %v9928, %v9411
      %v9962 = vsel %vm9932, %v9929, %v9413
      %v9963 = vsel %vm9932, %v9930, %v9415
      %v9964 = vsel %vm9932, %v9931, %v9417
      %vm9965 = vcmask 162816
      %v9966 = vsel %vm9965, %v9933, %v9483
      %v9967 = vsel %vm9965, %v9934, %v9485
      %v9968 = vsel %vm9965, %v9935, %v9487
      %v9969 = vsel %vm9965, %v9936, %v9489
      %v9970 = vsel %vm9965, %v9937, %v9491
      %v9971 = vsel %vm9965, %v9938, %v9493
      %v9972 = vsel %vm9965, %v9939, %v9495
      %v9973 = vsel %vm9965, %v9940, %v9497
      %v9974 = vsel %vm9965, %v9941, %v9499
      %v9975 = vsel %vm9965, %v9942, %v9501
      %v9976 = vsel %vm9965, %v9943, %v9503
      %v9977 = vsel %vm9965, %v9944, %v9505
      %v9978 = vsel %vm9965, %v9945, %v9507
      %v9979 = vsel %vm9965, %v9946, %v9509
      %v9980 = vsel %vm9965, %v9947, %v9511
      %v9981 = vsel %vm9965, %v9948, %v9513
      %v9982 = vsel %vm9965, %v9949, %v9515
      %v9983 = vsel %vm9965, %v9950, %v9517
      %v9984 = vsel %vm9965, %v9951, %v9519
      %v9985 = vsel %vm9965, %v9952, %v9521
      %v9986 = vsel %vm9965, %v9953, %v9523
      %v9987 = vsel %vm9965, %v9954, %v9525
      %v9988 = vsel %vm9965, %v9955, %v9527
      %v9989 = vsel %vm9965, %v9956, %v9529
      %v9990 = vsel %vm9965, %v9957, %v9531
      %v9991 = vsel %vm9965, %v9958, %v9533
      %v9992 = vsel %vm9965, %v9959, %v9535
      %v9993 = vsel %vm9965, %v9960, %v9537
      %v9994 = vsel %vm9965, %v9961, %v9539
      %v9995 = vsel %vm9965, %v9962, %v9541
      %v9996 = vsel %vm9965, %v9963, %v9543
      %v9997 = vsel %vm9965, %v9964, %v9545
      %vm9998 = vcmask 195584
      %v9999 = vsel %vm9998, %v9966, %v9611
      %v10000 = vsel %vm9998, %v9967, %v9613
      %v10001 = vsel %vm9998, %v9968, %v9615
      %v10002 = vsel %vm9998, %v9969, %v9617
      %v10003 = vsel %vm9998, %v9970, %v9619
      %v10004 = vsel %vm9998, %v9971, %v9621
      %v10005 = vsel %vm9998, %v9972, %v9623
      %v10006 = vsel %vm9998, %v9973, %v9625
      %v10007 = vsel %vm9998, %v9974, %v9627
      %v10008 = vsel %vm9998, %v9975, %v9629
      %v10009 = vsel %vm9998, %v9976, %v9631
      %v10010 = vsel %vm9998, %v9977, %v9633
      %v10011 = vsel %vm9998, %v9978, %v9635
      %v10012 = vsel %vm9998, %v9979, %v9637
      %v10013 = vsel %vm9998, %v9980, %v9639
      %v10014 = vsel %vm9998, %v9981, %v9641
      %v10015 = vsel %vm9998, %v9982, %v9643
      %v10016 = vsel %vm9998, %v9983, %v9645
      %v10017 = vsel %vm9998, %v9984, %v9647
      %v10018 = vsel %vm9998, %v9985, %v9649
      %v10019 = vsel %vm9998, %v9986, %v9651
      %v10020 = vsel %vm9998, %v9987, %v9653
      %v10021 = vsel %vm9998, %v9988, %v9655
      %v10022 = vsel %vm9998, %v9989, %v9657
      %v10023 = vsel %vm9998, %v9990, %v9659
      %v10024 = vsel %vm9998, %v9991, %v9661
      %v10025 = vsel %vm9998, %v9992, %v9663
      %v10026 = vsel %vm9998, %v9993, %v9665
      %v10027 = vsel %vm9998, %v9994, %v9667
      %v10028 = vsel %vm9998, %v9995, %v9669
      %v10029 = vsel %vm9998, %v9996, %v9671
      %v10030 = vsel %vm9998, %v9997, %v9673
      %vm10031 = vcmask 228352
      %v10032 = vsel %vm10031, %v9999, %v9739
      %v10033 = vsel %vm10031, %v10000, %v9741
      %v10034 = vsel %vm10031, %v10001, %v9743
      %v10035 = vsel %vm10031, %v10002, %v9745
      %v10036 = vsel %vm10031, %v10003, %v9747
      %v10037 = vsel %vm10031, %v10004, %v9749
      %v10038 = vsel %vm10031, %v10005, %v9751
      %v10039 = vsel %vm10031, %v10006, %v9753
      %v10040 = vsel %vm10031, %v10007, %v9755
      %v10041 = vsel %vm10031, %v10008, %v9757
      %v10042 = vsel %vm10031, %v10009, %v9759
      %v10043 = vsel %vm10031, %v10010, %v9761
      %v10044 = vsel %vm10031, %v10011, %v9763
      %v10045 = vsel %vm10031, %v10012, %v9765
      %v10046 = vsel %vm10031, %v10013, %v9767
      %v10047 = vsel %vm10031, %v10014, %v9769
      %v10048 = vsel %vm10031, %v10015, %v9771
      %v10049 = vsel %vm10031, %v10016, %v9773
      %v10050 = vsel %vm10031, %v10017, %v9775
      %v10051 = vsel %vm10031, %v10018, %v9777
      %v10052 = vsel %vm10031, %v10019, %v9779
      %v10053 = vsel %vm10031, %v10020, %v9781
      %v10054 = vsel %vm10031, %v10021, %v9783
      %v10055 = vsel %vm10031, %v10022, %v9785
      %v10056 = vsel %vm10031, %v10023, %v9787
      %v10057 = vsel %vm10031, %v10024, %v9789
      %v10058 = vsel %vm10031, %v10025, %v9791
      %v10059 = vsel %vm10031, %v10026, %v9793
      %v10060 = vsel %vm10031, %v10027, %v9795
      %v10061 = vsel %vm10031, %v10028, %v9797
      %v10062 = vsel %vm10031, %v10029, %v9799
      %v10063 = vsel %vm10031, %v10030, %v9801
      %v10064 = vpack.c.bf16 %v10033, %v10032
      %v10065 = vpack.c.bf16 %v10035, %v10034
      %v10066 = vpack.c.bf16 %v10037, %v10036
      %v10067 = vpack.c.bf16 %v10039, %v10038
      %v10068 = vpack.c.bf16 %v10041, %v10040
      %v10069 = vpack.c.bf16 %v10043, %v10042
      %v10070 = vpack.c.bf16 %v10045, %v10044
      %v10071 = vpack.c.bf16 %v10047, %v10046
      %v10072 = vpack.c.bf16 %v10049, %v10048
      %v10073 = vpack.c.bf16 %v10051, %v10050
      %v10074 = vpack.c.bf16 %v10053, %v10052
      %v10075 = vpack.c.bf16 %v10055, %v10054
      %v10076 = vpack.c.bf16 %v10057, %v10056
      %v10077 = vpack.c.bf16 %v10059, %v10058
      %v10078 = vpack.c.bf16 %v10061, %v10060
      %v10079 = vpack.c.bf16 %v10063, %v10062
      %v10080 = vld [vmem:[%s2] sm:$0xf]
      %v10081 = vld [vmem:[%s2 + $0x4] sm:$0xf]
      %v10082 = vld [vmem:[%s2 + $0x8] sm:$0xf]
      %v10083 = vld [vmem:[%s2 + $0xc] sm:$0xf]
      %v10084 = vld [vmem:[%s3] sm:$0x1]
      %v10086 = vlaneseq
      %v10087 = vshrl.u32 %v10086, 7
      %v10088 = vsub.s32 0, %v10087
      %v10089 = vrot.slane %v10084, %v10088
      %v10095 = vunpack.c.l.b16 %v10080
      %v10096 = vunpack.c.l.b16 %v10081
      %v10097 = vunpack.c.l.b16 %v10082
      %v10098 = vunpack.c.l.b16 %v10083
      %v10099 = vpack.c.b16 %v10096, %v10095
      %v10100 = vpack.c.b16 %v10098, %v10097
      %v10104 = vsel %vm327, %v10064, 0
      %v10107 = vsel %vm327, %v10065, 0
      %v10110 = vsel %vm327, %v10066, 0
      %v10113 = vsel %vm327, %v10067, 0
      %v10116 = vsel %vm327, %v10068, 0
      %v10119 = vsel %vm327, %v10069, 0
      %v10122 = vsel %vm327, %v10070, 0
      %v10125 = vsel %vm327, %v10071, 0
      %v10128 = vsel %vm327, %v10072, 0
      %v10131 = vsel %vm327, %v10073, 0
      %v10134 = vsel %vm327, %v10074, 0
      %v10137 = vsel %vm327, %v10075, 0
      %v10140 = vsel %vm327, %v10076, 0
      %v10143 = vsel %vm327, %v10077, 0
      %v10146 = vsel %vm327, %v10078, 0
      %v10149 = vsel %vm327, %v10079, 0
      %10151 = vmatprep.subr.bf16.mxu0 0
      %10152 = vmatpush1.bf16.msra.mxu0 %v10099
      %10153 = vmatprep.subr.bf16.mxu0 0
      %10154 = vmatpush1.bf16.msra.mxu0 %v10100
      %10155 = vmatprep.subr.bf16.mxu0 0
      %10156 = vmatpush1.bf16.msra.mxu0 0
      %10157 = vmatprep.subr.bf16.mxu0 0
      %10158 = vmatpush1.bf16.msra.mxu0 0
      %10159 = vmatprep.subr.bf16.mxu0 0
      %10160 = vmatpush1.bf16.msra.mxu0 0
      %10161 = vmatprep.subr.bf16.mxu0 0
      %10162 = vmatpush1.bf16.msra.mxu0 0
      %10163 = vmatprep.subr.bf16.mxu0 0
      %10164 = vmatpush1.bf16.msra.mxu0 0
      %10165 = vmatprep.subr.bf16.mxu0 0
      %10166 = vmatpush1.bf16.msra.mxu0 0
      %10167 = vmatprep.subr.bf16.mxu0 0
      %10168 = vmatpush1.bf16.msra.mxu0 0
      %10169 = vmatprep.subr.bf16.mxu0 0
      %10170 = vmatpush1.bf16.msra.mxu0 0
      %10171 = vmatprep.subr.bf16.mxu0 0
      %10172 = vmatpush1.bf16.msra.mxu0 0
      %10173 = vmatprep.subr.bf16.mxu0 0
      %10174 = vmatpush1.bf16.msra.mxu0 0
      %10175 = vmatprep.subr.bf16.mxu0 0
      %10176 = vmatpush1.bf16.msra.mxu0 0
      %10177 = vmatprep.subr.bf16.mxu0 0
      %10178 = vmatpush1.bf16.msra.mxu0 0
      %10179 = vmatprep.subr.bf16.mxu0 0
      %10180 = vmatpush1.bf16.msra.mxu0 0
      %10181 = vmatprep.subr.bf16.mxu0 0
      %10182 = vmatpush1.bf16.msra.mxu0 0
      %10183 = vmatprep.mubr.bf16.mxu0 0
      %10184 = vmatmul.mubr.bf16.gmra.mrb[0].mxu0 %v10104
      %v10185 = vpop.f32.mrb[0].mxu0
      %v10186 = vadd.f32 %v10089, %v10185
      %v10187 = vpop.f32.mrb[0].mxu0
      %v10188 = vpop.f32.mrb[0].mxu0
      %v10189 = vadd.f32 %v10089, %v10188
      %v10190 = vpop.f32.mrb[0].mxu0
      %10191 = vmatprep.mubr.bf16.mxu0 0
      %10192 = vmatmul.mubr.bf16.gmra.mrb[0].mxu0 %v10107
      %v10193 = vpop.f32.mrb[0].mxu0
      %v10194 = vadd.f32 %v10089, %v10193
      %v10195 = vpop.f32.mrb[0].mxu0
      %v10196 = vpop.f32.mrb[0].mxu0
      %v10197 = vadd.f32 %v10089, %v10196
      %v10198 = vpop.f32.mrb[0].mxu0
      %10199 = vmatprep.mubr.bf16.mxu0 0
      %10200 = vmatmul.mubr.bf16.gmra.mrb[0].mxu0 %v10110
      %v10201 = vpop.f32.mrb[0].mxu0
      %v10202 = vadd.f32 %v10089, %v10201
      %v10203 = vpop.f32.mrb[0].mxu0
      %v10204 = vpop.f32.mrb[0].mxu0
      %v10205 = vadd.f32 %v10089, %v10204
      %v10206 = vpop.f32.mrb[0].mxu0
      %10207 = vmatprep.mubr.bf16.mxu0 0
      %10208 = vmatmul.mubr.bf16.gmra.mrb[0].mxu0 %v10113
      %v10209 = vpop.f32.mrb[0].mxu0
      %v10210 = vadd.f32 %v10089, %v10209
      %v10211 = vpop.f32.mrb[0].mxu0
      %v10212 = vpop.f32.mrb[0].mxu0
      %v10213 = vadd.f32 %v10089, %v10212
      %v10214 = vpop.f32.mrb[0].mxu0
      %10215 = vmatprep.mubr.bf16.mxu0 0
      %10216 = vmatmul.mubr.bf16.gmra.mrb[0].mxu0 %v10116
      %v10217 = vpop.f32.mrb[0].mxu0
      %v10218 = vadd.f32 %v10089, %v10217
      %v10219 = vpop.f32.mrb[0].mxu0
      %v10220 = vpop.f32.mrb[0].mxu0
      %v10221 = vadd.f32 %v10089, %v10220
      %v10222 = vpop.f32.mrb[0].mxu0
      %10223 = vmatprep.mubr.bf16.mxu0 0
      %10224 = vmatmul.mubr.bf16.gmra.mrb[0].mxu0 %v10119
      %v10225 = vpop.f32.mrb[0].mxu0
      %v10226 = vadd.f32 %v10089, %v10225
      %v10227 = vpop.f32.mrb[0].mxu0
      %v10228 = vpop.f32.mrb[0].mxu0
      %v10229 = vadd.f32 %v10089, %v10228
      %v10230 = vpop.f32.mrb[0].mxu0
      %10231 = vmatprep.mubr.bf16.mxu0 0
      %10232 = vmatmul.mubr.bf16.gmra.mrb[0].mxu0 %v10122
      %v10233 = vpop.f32.mrb[0].mxu0
      %v10234 = vadd.f32 %v10089, %v10233
      %v10235 = vpop.f32.mrb[0].mxu0
      %v10236 = vpop.f32.mrb[0].mxu0
      %v10237 = vadd.f32 %v10089, %v10236
      %v10238 = vpop.f32.mrb[0].mxu0
      %10239 = vmatprep.mubr.bf16.mxu0 0
      %10240 = vmatmul.mubr.bf16.gmra.mrb[0].mxu0 %v10125
      %v10241 = vpop.f32.mrb[0].mxu0
      %v10242 = vadd.f32 %v10089, %v10241
      %v10243 = vpop.f32.mrb[0].mxu0
      %v10244 = vpop.f32.mrb[0].mxu0
      %v10245 = vadd.f32 %v10089, %v10244
      %v10246 = vpop.f32.mrb[0].mxu0
      %10247 = vmatprep.mubr.bf16.mxu0 0
      %10248 = vmatmul.mubr.bf16.gmra.mrb[0].mxu0 %v10128
      %v10249 = vpop.f32.mrb[0].mxu0
      %v10250 = vadd.f32 %v10089, %v10249
      %v10251 = vpop.f32.mrb[0].mxu0
      %v10252 = vpop.f32.mrb[0].mxu0
      %v10253 = vadd.f32 %v10089, %v10252
      %v10254 = vpop.f32.mrb[0].mxu0
      %10255 = vmatprep.mubr.bf16.mxu0 0
      %10256 = vmatmul.mubr.bf16.gmra.mrb[0].mxu0 %v10131
      %v10257 = vpop.f32.mrb[0].mxu0
      %v10258 = vadd.f32 %v10089, %v10257
      %v10259 = vpop.f32.mrb[0].mxu0
      %v10260 = vpop.f32.mrb[0].mxu0
      %v10261 = vadd.f32 %v10089, %v10260
      %v10262 = vpop.f32.mrb[0].mxu0
      %10263 = vmatprep.mubr.bf16.mxu0 0
      %10264 = vmatmul.mubr.bf16.gmra.mrb[0].mxu0 %v10134
      %v10265 = vpop.f32.mrb[0].mxu0
      %v10266 = vadd.f32 %v10089, %v10265
      %v10267 = vpop.f32.mrb[0].mxu0
      %v10268 = vpop.f32.mrb[0].mxu0
      %v10269 = vadd.f32 %v10089, %v10268
      %v10270 = vpop.f32.mrb[0].mxu0
      %10271 = vmatprep.mubr.bf16.mxu0 0
      %10272 = vmatmul.mubr.bf16.gmra.mrb[0].mxu0 %v10137
      %v10273 = vpop.f32.mrb[0].mxu0
      %v10274 = vadd.f32 %v10089, %v10273
      %v10275 = vpop.f32.mrb[0].mxu0
      %v10276 = vpop.f32.mrb[0].mxu0
      %v10277 = vadd.f32 %v10089, %v10276
      %v10278 = vpop.f32.mrb[0].mxu0
      %10279 = vmatprep.mubr.bf16.mxu0 0
      %10280 = vmatmul.mubr.bf16.gmra.mrb[0].mxu0 %v10140
      %v10281 = vpop.f32.mrb[0].mxu0
      %v10282 = vadd.f32 %v10089, %v10281
      %v10283 = vpop.f32.mrb[0].mxu0
      %v10284 = vpop.f32.mrb[0].mxu0
      %v10285 = vadd.f32 %v10089, %v10284
      %v10286 = vpop.f32.mrb[0].mxu0
      %10287 = vmatprep.mubr.bf16.mxu0 0
      %10288 = vmatmul.mubr.bf16.gmra.mrb[0].mxu0 %v10143
      %v10289 = vpop.f32.mrb[0].mxu0
      %v10290 = vadd.f32 %v10089, %v10289
      %v10291 = vpop.f32.mrb[0].mxu0
      %v10292 = vpop.f32.mrb[0].mxu0
      %v10293 = vadd.f32 %v10089, %v10292
      %v10294 = vpop.f32.mrb[0].mxu0
      %10295 = vmatprep.mubr.bf16.mxu0 0
      %10296 = vmatmul.mubr.bf16.gmra.mrb[0].mxu0 %v10146
      %v10297 = vpop.f32.mrb[0].mxu0
      %v10298 = vadd.f32 %v10089, %v10297
      %v10299 = vpop.f32.mrb[0].mxu0
      %v10300 = vpop.f32.mrb[0].mxu0
      %v10301 = vadd.f32 %v10089, %v10300
      %v10302 = vpop.f32.mrb[0].mxu0
      %10303 = vmatprep.mubr.bf16.mxu0 0
      %10304 = vmatmul.mubr.bf16.gmra.mrb[0].mxu0 %v10149
      %v10305 = vpop.f32.mrb[0].mxu0
      %v10306 = vadd.f32 %v10089, %v10305
      %v10307 = vpop.f32.mrb[0].mxu0
      %v10308 = vpop.f32.mrb[0].mxu0
      %v10309 = vadd.f32 %v10089, %v10308
      %v10310 = vpop.f32.mrb[0].mxu0
      %10311 = vdwg.mxu0
      %10312 = vst.msk [vmem:[%s197] sm:$0xff] %vm327, %v10186
      %10313 = vst.msk [vmem:[%s197 + $0x8] sm:$0xff] %vm327, %v10189
      %10314 = vst.msk [vmem:[%s197 + $0x10] sm:$0xff] %vm327, %v10194
      %10315 = vst.msk [vmem:[%s197 + $0x18] sm:$0xff] %vm327, %v10197
      %10316 = vst.msk [vmem:[%s197 + $0x20] sm:$0xff] %vm327, %v10202
      %10317 = vst.msk [vmem:[%s197 + $0x28] sm:$0xff] %vm327, %v10205
      %10318 = vst.msk [vmem:[%s197 + $0x30] sm:$0xff] %vm327, %v10210
      %10319 = vst.msk [vmem:[%s197 + $0x38] sm:$0xff] %vm327, %v10213
      %10320 = vst.msk [vmem:[%s197 + $0x40] sm:$0xff] %vm327, %v10218
      %10321 = vst.msk [vmem:[%s197 + $0x48] sm:$0xff] %vm327, %v10221
      %10322 = vst.msk [vmem:[%s197 + $0x50] sm:$0xff] %vm327, %v10226
      %10323 = vst.msk [vmem:[%s197 + $0x58] sm:$0xff] %vm327, %v10229
      %10324 = vst.msk [vmem:[%s197 + $0x60] sm:$0xff] %vm327, %v10234
      %10325 = vst.msk [vmem:[%s197 + $0x68] sm:$0xff] %vm327, %v10237
      %10326 = vst.msk [vmem:[%s197 + $0x70] sm:$0xff] %vm327, %v10242
      %10327 = vst.msk [vmem:[%s197 + $0x78] sm:$0xff] %vm327, %v10245
      %10328 = vst.msk [vmem:[%s197 + $0x80] sm:$0xff] %vm327, %v10250
      %10329 = vst.msk [vmem:[%s197 + $0x88] sm:$0xff] %vm327, %v10253
      %10330 = vst.msk [vmem:[%s197 + $0x90] sm:$0xff] %vm327, %v10258
      %10331 = vst.msk [vmem:[%s197 + $0x98] sm:$0xff] %vm327, %v10261
      %10332 = vst.msk [vmem:[%s197 + $0xa0] sm:$0xff] %vm327, %v10266
      %10333 = vst.msk [vmem:[%s197 + $0xa8] sm:$0xff] %vm327, %v10269
      %10334 = vst.msk [vmem:[%s197 + $0xb0] sm:$0xff] %vm327, %v10274
      %10335 = vst.msk [vmem:[%s197 + $0xb8] sm:$0xff] %vm327, %v10277
      %10336 = vst.msk [vmem:[%s197 + $0xc0] sm:$0xff] %vm327, %v10282
      %10337 = vst.msk [vmem:[%s197 + $0xc8] sm:$0xff] %vm327, %v10285
      %10338 = vst.msk [vmem:[%s197 + $0xd0] sm:$0xff] %vm327, %v10290
      %10339 = vst.msk [vmem:[%s197 + $0xd8] sm:$0xff] %vm327, %v10293
      %10340 = vst.msk [vmem:[%s197 + $0xe0] sm:$0xff] %vm327, %v10298
      %10341 = vst.msk [vmem:[%s197 + $0xe8] sm:$0xff] %vm327, %v10301
      %10342 = vst.msk [vmem:[%s197 + $0xf0] sm:$0xff] %vm327, %v10306
      %10343 = vst.msk [vmem:[%s197 + $0xf8] sm:$0xff] %vm327, %v10309
      %p10344 = scmp.lt.s32.totalorder %s15, 1
      %s10345 = scalar_select %p10344, %s15, 1
      %s10346 = smul.addr %s10345, 32
      %s10347 = smul.addr %s10346, 8
      %s10348 = scalar_lea.vmem %s4, %s10347
      // Predicated region
      $region37: #{tpu_custom_call.1} parent=35 // pred_check
        %p10349 = pneg %p122
      $region38: #{tpu_custom_call.1} parent=35 // pred_check_branch
        %10351 = sbr.rel (%p10349) target = $region40
      $region39: #{tpu_custom_call.1} parent=35 // pred_region
        _
      $region40: #{tpu_custom_call.1} parent=35 // pred_fallthru
        _
    $region36: #{tpu_custom_call.1} parent=5 // pred_fallthru
      _
    %p10352 = scmp.le.s32.totalorder 2, %s10
    // Predicated region
    $region41: #{tpu_custom_call.1} parent=5 // pred_check
      %p10353 = pneg %p10352
    $region42: #{tpu_custom_call.1} parent=5 // pred_check_branch
      %10355 = sbr.rel (%p10353) target = $region44
    $region43: #{tpu_custom_call.1} parent=5 // pred_region
      %s10356 = ssub.s32 %s10, 2
      // Predicated region
      $region45: #{tpu_custom_call.1} parent=43 // pred_check
        %p10357 = pneg %p128
      $region46: #{tpu_custom_call.1} parent=43 // pred_check_branch
        %10359 = sbr.rel (%p10357) target = $region48
      $region47: #{tpu_custom_call.1} parent=43 // pred_region
        %p10360 = scmp.lt.s32.totalorder %s16, 1
        %s10361 = scalar_select %p10360, %s16, 1
        %s10362 = smul.addr %s10361, 32
        %s10363 = smul.addr %s10362, 8
        %s10364 = scalar_lea.vmem %s4, %s10363
      $region48: #{tpu_custom_call.1} parent=43 // pred_fallthru
        _
    $region44: #{tpu_custom_call.1} parent=5 // pred_fallthru
      _
  $region6: #{tpu_custom_call.1} parent=0 // loop_footer
    %s14 = sadd.s32 1, %s10
  $region7: #{tpu_custom_call.1} parent=0 // loop_footer_branch
    %9 = sbr.rel target = $region3
  $region8: #{tpu_custom_call.1} parent=0 // loop_exit
    _

</llo_original>
